<compile_context>
chip_gen: v5e
topology: v5e:2x2
jax: 0.10.0
libtpu: 0.0.40
codegen_flags: <defaults>
</compile_context>

<pallas_src>
import functools

import jax
import jax.numpy as jnp
from jax.experimental import pallas as pl
from jax.experimental.pallas import tpu as pltpu


# ----------------------------------------------------------------------------
# Pallas kernels
# ----------------------------------------------------------------------------

def matmul_act_kernel(lhs_ref, rhs_ref, b_ref, o_ref, *, activation):
    """o = act(lhs @ rhs + bias). One MXU matmul, f32 accumulation."""
    acc = jnp.dot(lhs_ref[...], rhs_ref[...], preferred_element_type=jnp.float32)
    acc = acc + b_ref[...]
    if activation == "relu":
        acc = jnp.maximum(acc, 0.0)
    elif activation == "sigmoid":
        acc = jax.nn.sigmoid(acc)
    o_ref[...] = acc.astype(o_ref.dtype)


def conv_pool_kernel(lhs_ref, rhs_ref, b_ref, o_ref):
    """conv2 (single matmul) + ReLU + fused 2x2 max-pool.

    lhs rows are ordered [pool_window p in 0..3][b][i][j], so the pool is an
    elementwise max over four contiguous row blocks of the conv output.
    """
    h = jnp.dot(lhs_ref[...], rhs_ref[...], preferred_element_type=jnp.float32)
    h = jnp.maximum(h + b_ref[...], 0.0)
    r = o_ref.shape[0]
    p = jnp.maximum(jnp.maximum(h[0:r], h[r:2 * r]),
                    jnp.maximum(h[2 * r:3 * r], h[3 * r:4 * r]))
    o_ref[...] = p.astype(o_ref.dtype)


def encode_decode_kernel(feat_ref, wml_ref, bml_ref, eps_ref, wfc_ref, bfc_ref,
                         mean_ref, logvar_ref, hdec_ref):
    """Fused: [mean|log_var] = feat @ Wml + b ; z = mean + eps*exp(.5*logvar);
    hdec = relu(z @ Wfc + b)."""
    L = mean_ref.shape[1]
    ml = jnp.dot(feat_ref[...], wml_ref[...],
                 preferred_element_type=jnp.float32) + bml_ref[...]
    mean = ml[:, :L]
    logvar = ml[:, L:]
    z = mean + eps_ref[...] * jnp.exp(0.5 * logvar)
    h = jnp.dot(z.astype(wfc_ref.dtype), wfc_ref[...],
                preferred_element_type=jnp.float32) + bfc_ref[...]
    h = jnp.maximum(h, 0.0)                               # relu3
    mean_ref[...] = mean.astype(mean_ref.dtype)
    logvar_ref[...] = logvar.astype(logvar_ref.dtype)
    hdec_ref[...] = h.astype(hdec_ref.dtype)


# ----------------------------------------------------------------------------
# pallas_call wrappers (problem is tiny: full arrays live in VMEM, no grid)
# ----------------------------------------------------------------------------

def _vmem():
    return pl.BlockSpec(memory_space=pltpu.MemorySpace.VMEM)


def matmul_act(lhs, rhs, bias, activation, out_dtype):
    m, n = lhs.shape[0], rhs.shape[1]
    return pl.pallas_call(
        functools.partial(matmul_act_kernel, activation=activation),
        out_shape=jax.ShapeDtypeStruct((m, n), out_dtype),
        in_specs=[_vmem(), _vmem(), _vmem()],
        out_specs=_vmem(),
    )(lhs, rhs, bias)


def conv_pool(taps, rhs, bias, out_dtype):
    r = taps.shape[0] // 4
    n = rhs.shape[1]
    return pl.pallas_call(
        conv_pool_kernel,
        out_shape=jax.ShapeDtypeStruct((r, n), out_dtype),
        in_specs=[_vmem(), _vmem(), _vmem()],
        out_specs=_vmem(),
    )(taps, rhs, bias)


def encode_decode(feat, wml, bml, eps, wfc, bfc, latent):
    b = feat.shape[0]
    hidden = wfc.shape[1]
    return pl.pallas_call(
        encode_decode_kernel,
        out_shape=(jax.ShapeDtypeStruct((b, latent), jnp.float32),
                   jax.ShapeDtypeStruct((b, latent), jnp.float32),
                   jax.ShapeDtypeStruct((b, hidden), jnp.bfloat16)),
        in_specs=[_vmem()] * 6,
        out_specs=(_vmem(), _vmem(), _vmem()),
    )(feat, wml, bml, eps, wfc, bfc)


# ----------------------------------------------------------------------------
# XLA glue: tap gathers (built directly in the (rows, K*K*Cin) matmul layout)
# ----------------------------------------------------------------------------

def _conv_taps(x_nhwc, k):
    """(B,H,W,C) -> (B*Ho*Wo, k*k*C), row = (b,h,w), col = (di*k+dj)*C + c."""
    B, H, W, C = x_nhwc.shape
    Ho, Wo = H - k + 1, W - k + 1
    cols = [x_nhwc[:, i:i + Ho, j:j + Wo, :] for i in range(k) for j in range(k)]
    return jnp.concatenate(cols, axis=-1).reshape(B * Ho * Wo, k * k * C), (B, Ho, Wo)


def _conv2_pool_taps(h1):
    """conv2 taps with pool-friendly row ordering: 4 blocks of (B*12*12) rows,
    block p holding conv2 pixel (2i + p//2, 2j + p%2) for pooled pixel (i,j)."""
    B = h1.shape[0]
    full = jnp.concatenate([h1[:, i:i + 24, j:j + 24, :]
                            for i in range(3) for j in range(3)], axis=-1)  # (B,24,24,288)
    blocks = [full[:, pr::2, pc::2, :].reshape(B * 144, 288)
              for pr in range(2) for pc in range(2)]
    return jnp.concatenate(blocks, axis=0)                                   # (4*B*144, 288)


def _conv_taps_T(x_nhwc, k, pad):
    """Transposed taps: (k*k*C, B*Ho*Wo). Used so the Cout=1 final layer writes
    a lane-dense (1, B*Ho*Wo) output instead of (B*Ho*Wo, 1)."""
    xc = jnp.transpose(x_nhwc, (3, 0, 1, 2))                     # (C,B,H,W)
    xc = jnp.pad(xc, ((0, 0), (0, 0), (pad, pad), (pad, pad)))
    C, B, H, W = xc.shape
    Ho, Wo = H - k + 1, W - k + 1
    rows = [xc[:, :, i:i + Ho, j:j + Wo].reshape(C, B * Ho * Wo)
            for i in range(k) for j in range(k)]
    return jnp.concatenate(rows, axis=0)                         # (k*k*C, B*Ho*Wo)


# ----------------------------------------------------------------------------
# Parameters: PyTorch layouts -> kernel-ready layouts (done once)
# ----------------------------------------------------------------------------

def init_params(key, latent=32):
    ks = jax.random.split(key, 14)
    hidden = 16 * 12 * 12

    def w(k, shape, scale=0.05):
        return jax.random.normal(k, shape, jnp.float32) * scale

    return {  # PyTorch parameter layouts
        "conv1_w": w(ks[0], (32, 1, 3, 3)),   "conv1_b": w(ks[1], (32,)),
        "conv2_w": w(ks[2], (16, 32, 3, 3)),  "conv2_b": w(ks[3], (16,)),
        "em_w":  w(ks[4], (latent, hidden)),  "em_b":  w(ks[5], (latent,)),
        "elv_w": w(ks[6], (latent, hidden)),  "elv_b": w(ks[7], (latent,)),
        "fc_w":  w(ks[8], (hidden, latent)),  "fc_b":  w(ks[9], (hidden,)),
        "dc1_w": w(ks[10], (16, 32, 3, 3)),   "dc1_b": w(ks[11], (32,)),
        "dc2_w": w(ks[12], (32, 1, 3, 3)),    "dc2_b": w(ks[13], (1,)),
    }


def prepare_params(params, latent):
    bf16, f32 = jnp.bfloat16, jnp.float32

    def conv_w(w):     # Conv2d (Cout,Cin,KH,KW) -> (KH*KW*Cin, Cout)
        co, ci, kh, kw = w.shape
        return jnp.transpose(w, (2, 3, 1, 0)).reshape(kh * kw * ci, co).astype(bf16)

    def deconv_w(w):   # ConvTranspose2d (Cin,Cout,KH,KW) -> flipped-conv weight
        ci, co, kh, kw = w.shape
        wc = jnp.transpose(w, (2, 3, 0, 1))[::-1, ::-1]          # (KH,KW,Cin,Cout)
        return wc.reshape(kh * kw * ci, co).astype(bf16)

    def row(b):
        return b.reshape(1, -1).astype(f32)

    # Permute flattened-feature axis from PyTorch NCHW order (c*144+s) to the
    # kernel's channels-last order (s*16+c), so the flatten is a free reshape.
    def perm_in(w):    # Linear weight (L, 2304)
        L = w.shape[0]
        return w.reshape(L, 16, 144).transpose(0, 2, 1).reshape(L, 16 * 144)

    wml = jnp.concatenate([perm_in(params["em_w"]),
                           perm_in(params["elv_w"])], axis=0).T.astype(bf16)   # (2304, 2L)
    bml = jnp.concatenate([params["em_b"], params["elv_b"]]).reshape(1, -1).astype(f32)

    fc_wp = params["fc_w"].reshape(16, 144, latent).transpose(1, 0, 2).reshape(16 * 144, latent)
    wfc = fc_wp.T.astype(bf16)                                                  # (L, 2304)
    bfc = params["fc_b"].reshape(16, 144).T.reshape(1, 16 * 144).astype(f32)

    return {
        "w1": conv_w(params["conv1_w"]),   "b1": row(params["conv1_b"]),
        "w2": conv_w(params["conv2_w"]),   "b2": row(params["conv2_b"]),
        "wml": wml, "bml": bml, "wfc": wfc, "bfc": bfc,
        "wd1": deconv_w(params["dc1_w"]),  "bd1": row(params["dc1_b"]),
        "wd2T": deconv_w(params["dc2_w"]).T, "bd2": row(params["dc2_b"]),       # (1, 288)
    }


# ----------------------------------------------------------------------------
# Forward
# ----------------------------------------------------------------------------

def deconvvae_forward(prep, x_nchw, eps_key, latent):
    B = x_nchw.shape[0]
    bf16 = jnp.bfloat16
    x = jnp.transpose(x_nchw, (0, 2, 3, 1)).astype(bf16)            # (B,28,28,1)

    # ---- encode ----
    t1, _ = _conv_taps(x, 3)                                        # (B*676, 9)
    h1 = matmul_act(t1, prep["w1"], prep["b1"], "relu", bf16)       # (B*676, 32)
    h1 = h1.reshape(B, 26, 26, 32)

    t2 = _conv2_pool_taps(h1)                                       # (4*B*144, 288)
    pooled = conv_pool(t2, prep["w2"], prep["b2"], bf16)            # (B*144, 16)
    feat = pooled.reshape(B, 16 * 144)        # free reshape; linear weights pre-permuted

    eps = jax.random.normal(eps_key, (B, latent), jnp.float32)      # ~ torch.randn_like(std)
    mean, log_var, hdec = encode_decode(feat, prep["wml"], prep["bml"],
                                        eps, prep["wfc"], prep["bfc"], latent)

    # ---- decode ----
    d = hdec.reshape(B, 12, 12, 16)                                 # channels-last (weights permuted)
    d = jnp.repeat(jnp.repeat(d, 2, axis=1), 2, axis=2)             # nearest x2 -> (B,24,24,16)
    d = jnp.pad(d, ((0, 0), (2, 2), (2, 2), (0, 0)))                # full pad for flipped-conv deconv
    t3, _ = _conv_taps(d, 3)                                        # (B*676, 144)
    d1 = matmul_act(t3, prep["wd1"], prep["bd1"], "relu", bf16)     # (B*676, 32)
    d1 = d1.reshape(B, 26, 26, 32)

    t4T = _conv_taps_T(d1, 3, pad=2)                                # (288, B*784)
    y = matmul_act(prep["wd2T"], t4T, prep["bd2"], "sigmoid", jnp.float32)  # (1, B*784) lane-dense
    x_prime = y.reshape(B, 1, 28, 28)
    return x_prime, mean, log_var


# ----------------------------------------------------------------------------

if __name__ == "__main__":
    key = jax.random.PRNGKey(0)
    pkey, xkey, ekey = jax.random.split(key, 3)

    # Shapes implied by the module: decode() views to (B,16,12,12) => 1x28x28
    # input and hidden_size = 2304. Pick batch=2, latent_size=32.
    B, C, H = 2, 1, 28
    LATENT = 32

    params = init_params(pkey, latent=LATENT)
    prep = prepare_params(params, latent=LATENT)
    x = jax.random.uniform(xkey, (B, C, H, H), jnp.float32)

    fwd = jax.jit(functools.partial(deconvvae_forward, latent=LATENT))
    x_prime, mean, log_var = fwd(prep, x, ekey)
    jax.block_until_ready((x_prime, mean, log_var))

    assert x_prime.shape == (B, C, H, H)
    assert mean.shape == (B, LATENT) and log_var.shape == (B, LATENT)
    assert bool(jnp.all(jnp.isfinite(x_prime)))
    assert bool(jnp.all((x_prime >= 0.0) & (x_prime <= 1.0)))
    print("KERNEL_OK")
</pallas_src>

<mosaic_0001>
module attributes {stable_mosaic.version = 11 : i64} {
  func.func @matmul_act_kernel(%arg0: memref<1352x9xbf16, #tpu.memory_space<vmem>>, %arg1: memref<9x32xbf16, #tpu.memory_space<vmem>>, %arg2: memref<1x32xf32, #tpu.memory_space<vmem>>, %arg3: memref<1352x32xbf16, #tpu.memory_space<vmem>>) attributes {dimension_semantics = [], scalar_prefetch = 0 : i64, scratch_operands = 0 : i64, tpu.core_type = #tpu.core_type<tc>} {
    %c0 = arith.constant 0 : index
    %c0_0 = arith.constant 0 : index
    %0 = vector.load %arg0[%c0, %c0_0] : memref<1352x9xbf16, #tpu.memory_space<vmem>>, vector<1352x9xbf16>
    %c0_1 = arith.constant 0 : index
    %c0_2 = arith.constant 0 : index
    %1 = vector.load %arg1[%c0_1, %c0_2] : memref<9x32xbf16, #tpu.memory_space<vmem>>, vector<9x32xbf16>
    %cst = arith.constant dense<0.000000e+00> : vector<1352x32xf32>
    %2 = tpu.matmul %0, %1, %cst {dimension_numbers = #tpu.dot_dimension_numbers<[1], [0], [0], [1], [0, 0, 1, 1], [], []>} : vector<1352x9xbf16>, vector<9x32xbf16>, vector<1352x32xf32> -> vector<1352x32xf32>
    %c0_3 = arith.constant 0 : index
    %c0_4 = arith.constant 0 : index
    %3 = vector.load %arg2[%c0_3, %c0_4] : memref<1x32xf32, #tpu.memory_space<vmem>>, vector<1x32xf32>
    %4 = vector.broadcast %3 : vector<1x32xf32> to vector<1352x32xf32>
    %5 = arith.addf %2, %4 : vector<1352x32xf32>
    %cst_5 = arith.constant 0.000000e+00 : f32
    %6 = vector.broadcast %cst_5 : f32 to vector<1352x32xf32>
    %7 = arith.maximumf %5, %6 : vector<1352x32xf32>
    %8 = arith.truncf %7 : vector<1352x32xf32> to vector<1352x32xbf16>
    %c0_6 = arith.constant 0 : index
    %c0_7 = arith.constant 0 : index
    %9 = vector.load %arg3[%c0_6, %c0_7] : memref<1352x32xbf16, #tpu.memory_space<vmem>>, vector<1352x32xbf16>
    tpu.vector_store %arg3[%c0_6, %c0_7], %8 {strides = array<i32>} : memref<1352x32xbf16, #tpu.memory_space<vmem>>, vector<1352x32xbf16>,
    return
  }
}

module attributes {stable_mosaic.version = 11 : i64} {
  func.func @conv_pool_kernel(%arg0: memref<1152x288xbf16, #tpu.memory_space<vmem>>, %arg1: memref<288x16xbf16, #tpu.memory_space<vmem>>, %arg2: memref<1x16xf32, #tpu.memory_space<vmem>>, %arg3: memref<288x16xbf16, #tpu.memory_space<vmem>>) attributes {dimension_semantics = [], scalar_prefetch = 0 : i64, scratch_operands = 0 : i64, tpu.core_type = #tpu.core_type<tc>} {
    %c0 = arith.constant 0 : index
    %c0_0 = arith.constant 0 : index
    %0 = vector.load %arg0[%c0, %c0_0] : memref<1152x288xbf16, #tpu.memory_space<vmem>>, vector<1152x288xbf16>
    %c0_1 = arith.constant 0 : index
    %c0_2 = arith.constant 0 : index
    %1 = vector.load %arg1[%c0_1, %c0_2] : memref<288x16xbf16, #tpu.memory_space<vmem>>, vector<288x16xbf16>
    %cst = arith.constant dense<0.000000e+00> : vector<1152x16xf32>
    %2 = tpu.matmul %0, %1, %cst {dimension_numbers = #tpu.dot_dimension_numbers<[1], [0], [0], [1], [0, 0, 1, 1], [], []>} : vector<1152x288xbf16>, vector<288x16xbf16>, vector<1152x16xf32> -> vector<1152x16xf32>
    %c0_3 = arith.constant 0 : index
    %c0_4 = arith.constant 0 : index
    %3 = vector.load %arg2[%c0_3, %c0_4] : memref<1x16xf32, #tpu.memory_space<vmem>>, vector<1x16xf32>
    %4 = vector.broadcast %3 : vector<1x16xf32> to vector<1152x16xf32>
    %5 = arith.addf %2, %4 : vector<1152x16xf32>
    %cst_5 = arith.constant 0.000000e+00 : f32
    %6 = vector.broadcast %cst_5 : f32 to vector<1152x16xf32>
    %7 = arith.maximumf %5, %6 : vector<1152x16xf32>
    %8 = vector.extract_strided_slice %7 {offsets = [0, 0], sizes = [288, 16], strides = [1, 1]} : vector<1152x16xf32> to vector<288x16xf32>
    %9 = vector.extract_strided_slice %7 {offsets = [288, 0], sizes = [288, 16], strides = [1, 1]} : vector<1152x16xf32> to vector<288x16xf32>
    %10 = arith.maximumf %8, %9 : vector<288x16xf32>
    %11 = vector.extract_strided_slice %7 {offsets = [576, 0], sizes = [288, 16], strides = [1, 1]} : vector<1152x16xf32> to vector<288x16xf32>
    %12 = vector.extract_strided_slice %7 {offsets = [864, 0], sizes = [288, 16], strides = [1, 1]} : vector<1152x16xf32> to vector<288x16xf32>
    %13 = arith.maximumf %11, %12 : vector<288x16xf32>
    %14 = arith.maximumf %10, %13 : vector<288x16xf32>
    %15 = arith.truncf %14 : vector<288x16xf32> to vector<288x16xbf16>
    %c0_6 = arith.constant 0 : index
    %c0_7 = arith.constant 0 : index
    %16 = vector.load %arg3[%c0_6, %c0_7] : memref<288x16xbf16, #tpu.memory_space<vmem>>, vector<288x16xbf16>
    tpu.vector_store %arg3[%c0_6, %c0_7], %15 {strides = array<i32>} : memref<288x16xbf16, #tpu.memory_space<vmem>>, vector<288x16xbf16>,
    return
  }
}

module attributes {stable_mosaic.version = 11 : i64} {
  func.func @encode_decode_kernel(%arg0: memref<2x2304xbf16, #tpu.memory_space<vmem>>, %arg1: memref<2304x64xbf16, #tpu.memory_space<vmem>>, %arg2: memref<1x64xf32, #tpu.memory_space<vmem>>, %arg3: memref<2x32xf32, #tpu.memory_space<vmem>>, %arg4: memref<32x2304xbf16, #tpu.memory_space<vmem>>, %arg5: memref<1x2304xf32, #tpu.memory_space<vmem>>, %arg6: memref<2x32xf32, #tpu.memory_space<vmem>>, %arg7: memref<2x32xf32, #tpu.memory_space<vmem>>, %arg8: memref<2x2304xbf16, #tpu.memory_space<vmem>>) attributes {dimension_semantics = [], scalar_prefetch = 0 : i64, scratch_operands = 0 : i64, tpu.core_type = #tpu.core_type<tc>} {
    %c0 = arith.constant 0 : index
    %c0_0 = arith.constant 0 : index
    %0 = vector.load %arg0[%c0, %c0_0] : memref<2x2304xbf16, #tpu.memory_space<vmem>>, vector<2x2304xbf16>
    %c0_1 = arith.constant 0 : index
    %c0_2 = arith.constant 0 : index
    %1 = vector.load %arg1[%c0_1, %c0_2] : memref<2304x64xbf16, #tpu.memory_space<vmem>>, vector<2304x64xbf16>
    %cst = arith.constant dense<0.000000e+00> : vector<2x64xf32>
    %2 = tpu.matmul %0, %1, %cst {dimension_numbers = #tpu.dot_dimension_numbers<[1], [0], [0], [1], [0, 0, 1, 1], [], []>} : vector<2x2304xbf16>, vector<2304x64xbf16>, vector<2x64xf32> -> vector<2x64xf32>
    %c0_3 = arith.constant 0 : index
    %c0_4 = arith.constant 0 : index
    %3 = vector.load %arg2[%c0_3, %c0_4] : memref<1x64xf32, #tpu.memory_space<vmem>>, vector<1x64xf32>
    %4 = vector.broadcast %3 : vector<1x64xf32> to vector<2x64xf32>
    %5 = arith.addf %2, %4 : vector<2x64xf32>
    %6 = vector.extract_strided_slice %5 {offsets = [0, 0], sizes = [2, 32], strides = [1, 1]} : vector<2x64xf32> to vector<2x32xf32>
    %7 = vector.extract_strided_slice %5 {offsets = [0, 32], sizes = [2, 32], strides = [1, 1]} : vector<2x64xf32> to vector<2x32xf32>
    %c0_5 = arith.constant 0 : index
    %c0_6 = arith.constant 0 : index
    %8 = vector.load %arg3[%c0_5, %c0_6] : memref<2x32xf32, #tpu.memory_space<vmem>>, vector<2x32xf32>
    %cst_7 = arith.constant 5.000000e-01 : f32
    %9 = vector.broadcast %cst_7 : f32 to vector<2x32xf32>
    %10 = arith.mulf %9, %7 : vector<2x32xf32>
    %11 = math.exp %10 : vector<2x32xf32>
    %12 = arith.mulf %8, %11 : vector<2x32xf32>
    %13 = arith.addf %6, %12 : vector<2x32xf32>
    %14 = arith.truncf %13 : vector<2x32xf32> to vector<2x32xbf16>
    %c0_8 = arith.constant 0 : index
    %c0_9 = arith.constant 0 : index
    %15 = vector.load %arg4[%c0_8, %c0_9] : memref<32x2304xbf16, #tpu.memory_space<vmem>>, vector<32x2304xbf16>
    %cst_10 = arith.constant dense<0.000000e+00> : vector<2x2304xf32>
    %16 = tpu.matmul %14, %15, %cst_10 {dimension_numbers = #tpu.dot_dimension_numbers<[1], [0], [0], [1], [0, 0, 1, 1], [], []>} : vector<2x32xbf16>, vector<32x2304xbf16>, vector<2x2304xf32> -> vector<2x2304xf32>
    %c0_11 = arith.constant 0 : index
    %c0_12 = arith.constant 0 : index
    %17 = vector.load %arg5[%c0_11, %c0_12] : memref<1x2304xf32, #tpu.memory_space<vmem>>, vector<1x2304xf32>
    %18 = vector.broadcast %17 : vector<1x2304xf32> to vector<2x2304xf32>
    %19 = arith.addf %16, %18 : vector<2x2304xf32>
    %cst_13 = arith.constant 0.000000e+00 : f32
    %20 = vector.broadcast %cst_13 : f32 to vector<2x2304xf32>
    %21 = arith.maximumf %19, %20 : vector<2x2304xf32>
    %c0_14 = arith.constant 0 : index
    %c0_15 = arith.constant 0 : index
    %22 = vector.load %arg6[%c0_14, %c0_15] : memref<2x32xf32, #tpu.memory_space<vmem>>, vector<2x32xf32>
    tpu.vector_store %arg6[%c0_14, %c0_15], %6 {strides = array<i32>} : memref<2x32xf32, #tpu.memory_space<vmem>>, vector<2x32xf32>,
    %c0_16 = arith.constant 0 : index
    %c0_17 = arith.constant 0 : index
    %23 = vector.load %arg7[%c0_16, %c0_17] : memref<2x32xf32, #tpu.memory_space<vmem>>, vector<2x32xf32>
    tpu.vector_store %arg7[%c0_16, %c0_17], %7 {strides = array<i32>} : memref<2x32xf32, #tpu.memory_space<vmem>>, vector<2x32xf32>,
    %24 = arith.truncf %21 : vector<2x2304xf32> to vector<2x2304xbf16>
    %c0_18 = arith.constant 0 : index
    %c0_19 = arith.constant 0 : index
    %25 = vector.load %arg8[%c0_18, %c0_19] : memref<2x2304xbf16, #tpu.memory_space<vmem>>, vector<2x2304xbf16>
    tpu.vector_store %arg8[%c0_18, %c0_19], %24 {strides = array<i32>} : memref<2x2304xbf16, #tpu.memory_space<vmem>>, vector<2x2304xbf16>,
    return
  }
}

module attributes {stable_mosaic.version = 11 : i64} {
  func.func @matmul_act_kernel(%arg0: memref<1352x144xbf16, #tpu.memory_space<vmem>>, %arg1: memref<144x32xbf16, #tpu.memory_space<vmem>>, %arg2: memref<1x32xf32, #tpu.memory_space<vmem>>, %arg3: memref<1352x32xbf16, #tpu.memory_space<vmem>>) attributes {dimension_semantics = [], scalar_prefetch = 0 : i64, scratch_operands = 0 : i64, tpu.core_type = #tpu.core_type<tc>} {
    %c0 = arith.constant 0 : index
    %c0_0 = arith.constant 0 : index
    %0 = vector.load %arg0[%c0, %c0_0] : memref<1352x144xbf16, #tpu.memory_space<vmem>>, vector<1352x144xbf16>
    %c0_1 = arith.constant 0 : index
    %c0_2 = arith.constant 0 : index
    %1 = vector.load %arg1[%c0_1, %c0_2] : memref<144x32xbf16, #tpu.memory_space<vmem>>, vector<144x32xbf16>
    %cst = arith.constant dense<0.000000e+00> : vector<1352x32xf32>
    %2 = tpu.matmul %0, %1, %cst {dimension_numbers = #tpu.dot_dimension_numbers<[1], [0], [0], [1], [0, 0, 1, 1], [], []>} : vector<1352x144xbf16>, vector<144x32xbf16>, vector<1352x32xf32> -> vector<1352x32xf32>
    %c0_3 = arith.constant 0 : index
    %c0_4 = arith.constant 0 : index
    %3 = vector.load %arg2[%c0_3, %c0_4] : memref<1x32xf32, #tpu.memory_space<vmem>>, vector<1x32xf32>
    %4 = vector.broadcast %3 : vector<1x32xf32> to vector<1352x32xf32>
    %5 = arith.addf %2, %4 : vector<1352x32xf32>
    %cst_5 = arith.constant 0.000000e+00 : f32
    %6 = vector.broadcast %cst_5 : f32 to vector<1352x32xf32>
    %7 = arith.maximumf %5, %6 : vector<1352x32xf32>
    %8 = arith.truncf %7 : vector<1352x32xf32> to vector<1352x32xbf16>
    %c0_6 = arith.constant 0 : index
    %c0_7 = arith.constant 0 : index
    %9 = vector.load %arg3[%c0_6, %c0_7] : memref<1352x32xbf16, #tpu.memory_space<vmem>>, vector<1352x32xbf16>
    tpu.vector_store %arg3[%c0_6, %c0_7], %8 {strides = array<i32>} : memref<1352x32xbf16, #tpu.memory_space<vmem>>, vector<1352x32xbf16>,
    return
  }
}

module attributes {stable_mosaic.version = 11 : i64} {
  func.func @matmul_act_kernel(%arg0: memref<1x288xbf16, #tpu.memory_space<vmem>>, %arg1: memref<288x1568xbf16, #tpu.memory_space<vmem>>, %arg2: memref<1x1xf32, #tpu.memory_space<vmem>>, %arg3: memref<1x1568xf32, #tpu.memory_space<vmem>>) attributes {dimension_semantics = [], scalar_prefetch = 0 : i64, scratch_operands = 0 : i64, tpu.core_type = #tpu.core_type<tc>} {
    %c0 = arith.constant 0 : index
    %c0_0 = arith.constant 0 : index
    %0 = vector.load %arg0[%c0, %c0_0] : memref<1x288xbf16, #tpu.memory_space<vmem>>, vector<1x288xbf16>
    %c0_1 = arith.constant 0 : index
    %c0_2 = arith.constant 0 : index
    %1 = vector.load %arg1[%c0_1, %c0_2] : memref<288x1568xbf16, #tpu.memory_space<vmem>>, vector<288x1568xbf16>
    %cst = arith.constant dense<0.000000e+00> : vector<1x1568xf32>
    %2 = tpu.matmul %0, %1, %cst {dimension_numbers = #tpu.dot_dimension_numbers<[1], [0], [0], [1], [0, 0, 1, 1], [], []>} : vector<1x288xbf16>, vector<288x1568xbf16>, vector<1x1568xf32> -> vector<1x1568xf32>
    %c0_3 = arith.constant 0 : index
    %c0_4 = arith.constant 0 : index
    %3 = vector.load %arg2[%c0_3, %c0_4] : memref<1x1xf32, #tpu.memory_space<vmem>>, vector<1x1xf32>
    %4 = vector.broadcast %3 : vector<1x1xf32> to vector<1x1568xf32>
    %5 = arith.addf %2, %4 : vector<1x1568xf32>
    %6 = arith.negf %5 : vector<1x1568xf32>
    %7 = math.exp %6 : vector<1x1568xf32>
    %cst_5 = arith.constant 1.000000e+00 : f32
    %8 = vector.broadcast %cst_5 : f32 to vector<1x1568xf32>
    %9 = arith.addf %8, %7 : vector<1x1568xf32>
    %10 = arith.divf %8, %9 : vector<1x1568xf32>
    %c0_6 = arith.constant 0 : index
    %c0_7 = arith.constant 0 : index
    %11 = vector.load %arg3[%c0_6, %c0_7] : memref<1x1568xf32, #tpu.memory_space<vmem>>, vector<1x1568xf32>
    tpu.vector_store %arg3[%c0_6, %c0_7], %10 {strides = array<i32>} : memref<1x1568xf32, #tpu.memory_space<vmem>>, vector<1x1568xf32>,
    return
  }
}

</mosaic_0001>

<llo_original>
// kernel: deconvvae_forward.5
$region0: #{deconvvae_forward.5}
  #allocation0 [shape = 'u32[]', space=smem, size = 0x4, offset = 0x4, fixed_abs, tag = 'smem constant byte address 0x4 - core index']
  #allocation1 [shape = 'u32[72,128]{1,0:T(1,128)}', space=vmem, size = 0x9000, scoped, tag = 'internal scratch']
  %s0 = inlined_call_operand.vmem [shape: bf16[1352,9], index: 0, kind: input, shape index: {}]
  %s1 = inlined_call_operand.vmem [shape: bf16[9,32], index: 1, kind: input, shape index: {}]
  %s2 = inlined_call_operand.vmem [shape: f32[1,32], index: 2, kind: input, shape index: {}]
  %s3 = inlined_call_operand.vmem [shape: bf16[1352,32], index: 3, kind: output, shape index: {}]
  %s4 = sld [smem:[#allocation0]]
  $region22: #{deconvvae_forward.5} parent=0
    _
  %s6 = ssub.s32 1, %s4
  %s7 = scalar_select 0, %s6, %s4
  // Predicated region
  $region2: #{deconvvae_forward.5} parent=0 // pred_check
    _
  $region3: #{deconvvae_forward.5} parent=0 // pred_check_branch
    %9 = sbr.rel (0) target = $region5
  $region4: #{deconvvae_forward.5} parent=0 // pred_region
    _
  $region5: #{deconvvae_forward.5} parent=0 // pred_fallthru
    _
  // Predicated region
  $region6: #{deconvvae_forward.5} parent=0 // pred_check
    _
  $region7: #{deconvvae_forward.5} parent=0 // pred_check_branch
    %11 = sbr.rel (0) target = $region9
  $region8: #{deconvvae_forward.5} parent=0 // pred_region
    _
  $region9: #{deconvvae_forward.5} parent=0 // pred_fallthru
    _
  // Predicated region
  $region10: #{deconvvae_forward.5} parent=0 // pred_check
    _
  $region11: #{deconvvae_forward.5} parent=0 // pred_check_branch
    %13 = sbr.rel (0) target = $region13
  $region12: #{deconvvae_forward.5} parent=0 // pred_region
    _
  $region13: #{deconvvae_forward.5} parent=0 // pred_fallthru
    _
  %v15 = vld [vmem:[%s0] sm:$0xf]
  %v16 = vld [vmem:[%s0 + $0x4] sm:$0xf]
  %v17 = vld [vmem:[%s0 + $0x8] sm:$0xf]
  %v18 = vld [vmem:[%s0 + $0xc] sm:$0xf]
  %v19 = vld [vmem:[%s0 + $0x10] sm:$0xf]
  %v20 = vld [vmem:[%s0 + $0x14] sm:$0xf]
  %v21 = vld [vmem:[%s0 + $0x18] sm:$0xf]
  %v22 = vld [vmem:[%s0 + $0x1c] sm:$0xf]
  %v23 = vld [vmem:[%s0 + $0x20] sm:$0xf]
  %v24 = vld [vmem:[%s0 + $0x24] sm:$0xf]
  %v25 = vld [vmem:[%s0 + $0x28] sm:$0xf]
  %v26 = vld [vmem:[%s0 + $0x2c] sm:$0xf]
  %v27 = vld [vmem:[%s0 + $0x30] sm:$0xf]
  %v28 = vld [vmem:[%s0 + $0x34] sm:$0xf]
  %v29 = vld [vmem:[%s0 + $0x38] sm:$0xf]
  %v30 = vld [vmem:[%s0 + $0x3c] sm:$0xf]
  %v31 = vld [vmem:[%s0 + $0x40] sm:$0xf]
  %v32 = vld [vmem:[%s0 + $0x44] sm:$0xf]
  %v33 = vld [vmem:[%s0 + $0x48] sm:$0xf]
  %v34 = vld [vmem:[%s0 + $0x4c] sm:$0xf]
  %v35 = vld [vmem:[%s0 + $0x50] sm:$0xf]
  %v36 = vld [vmem:[%s0 + $0x54] sm:$0xf]
  %v37 = vld [vmem:[%s0 + $0x58] sm:$0xf]
  %v38 = vld [vmem:[%s0 + $0x5c] sm:$0xf]
  %v39 = vld [vmem:[%s0 + $0x60] sm:$0xf]
  %v40 = vld [vmem:[%s0 + $0x64] sm:$0xf]
  %v41 = vld [vmem:[%s0 + $0x68] sm:$0xf]
  %v42 = vld [vmem:[%s0 + $0x6c] sm:$0xf]
  %v43 = vld [vmem:[%s0 + $0x70] sm:$0xf]
  %v44 = vld [vmem:[%s0 + $0x74] sm:$0xf]
  %v45 = vld [vmem:[%s0 + $0x78] sm:$0xf]
  %v46 = vld [vmem:[%s0 + $0x7c] sm:$0xf]
  %v47 = vld [vmem:[%s0 + $0x80] sm:$0xf]
  %v48 = vld [vmem:[%s0 + $0x84] sm:$0xf]
  %v49 = vld [vmem:[%s0 + $0x88] sm:$0xf]
  %v50 = vld [vmem:[%s0 + $0x8c] sm:$0xf]
  %v51 = vld [vmem:[%s0 + $0x90] sm:$0xf]
  %v52 = vld [vmem:[%s0 + $0x94] sm:$0xf]
  %v53 = vld [vmem:[%s0 + $0x98] sm:$0xf]
  %v54 = vld [vmem:[%s0 + $0x9c] sm:$0xf]
  %v55 = vld [vmem:[%s0 + $0xa0] sm:$0xf]
  %v56 = vld [vmem:[%s0 + $0xa4] sm:$0xf]
  %v57 = vld [vmem:[%s0 + $0xa8] sm:$0xf]
  %v58 = vld [vmem:[%s0 + $0xac] sm:$0xf]
  %v59 = vld [vmem:[%s0 + $0xb0] sm:$0xf]
  %v60 = vld [vmem:[%s0 + $0xb4] sm:$0xf]
  %v61 = vld [vmem:[%s0 + $0xb8] sm:$0xf]
  %v62 = vld [vmem:[%s0 + $0xbc] sm:$0xf]
  %v63 = vld [vmem:[%s0 + $0xc0] sm:$0xf]
  %v64 = vld [vmem:[%s0 + $0xc4] sm:$0xf]
  %v65 = vld [vmem:[%s0 + $0xc8] sm:$0xf]
  %v66 = vld [vmem:[%s0 + $0xcc] sm:$0xf]
  %v67 = vld [vmem:[%s0 + $0xd0] sm:$0xf]
  %v68 = vld [vmem:[%s0 + $0xd4] sm:$0xf]
  %v69 = vld [vmem:[%s0 + $0xd8] sm:$0xf]
  %v70 = vld [vmem:[%s0 + $0xdc] sm:$0xf]
  %v71 = vld [vmem:[%s0 + $0xe0] sm:$0xf]
  %v72 = vld [vmem:[%s0 + $0xe4] sm:$0xf]
  %v73 = vld [vmem:[%s0 + $0xe8] sm:$0xf]
  %v74 = vld [vmem:[%s0 + $0xec] sm:$0xf]
  %v75 = vld [vmem:[%s0 + $0xf0] sm:$0xf]
  %v76 = vld [vmem:[%s0 + $0xf4] sm:$0xf]
  %v77 = vld [vmem:[%s0 + $0xf8] sm:$0xf]
  %v78 = vld [vmem:[%s0 + $0xfc] sm:$0xf]
  %v79 = vld [vmem:[%s0 + $0x100] sm:$0xf]
  %v80 = vld [vmem:[%s0 + $0x104] sm:$0xf]
  %v81 = vld [vmem:[%s0 + $0x108] sm:$0xf]
  %v82 = vld [vmem:[%s0 + $0x10c] sm:$0xf]
  %v83 = vld [vmem:[%s0 + $0x110] sm:$0xf]
  %v84 = vld [vmem:[%s0 + $0x114] sm:$0xf]
  %v85 = vld [vmem:[%s0 + $0x118] sm:$0xf]
  %v86 = vld [vmem:[%s0 + $0x11c] sm:$0xf]
  %v87 = vld [vmem:[%s0 + $0x120] sm:$0xf]
  %v88 = vld [vmem:[%s0 + $0x124] sm:$0xf]
  %v89 = vld [vmem:[%s0 + $0x128] sm:$0xf]
  %v90 = vld [vmem:[%s0 + $0x12c] sm:$0xf]
  %v91 = vld [vmem:[%s0 + $0x130] sm:$0xf]
  %v92 = vld [vmem:[%s0 + $0x134] sm:$0xf]
  %v93 = vld [vmem:[%s0 + $0x138] sm:$0xf]
  %v94 = vld [vmem:[%s0 + $0x13c] sm:$0xf]
  %v95 = vld [vmem:[%s0 + $0x140] sm:$0xf]
  %v96 = vld [vmem:[%s0 + $0x144] sm:$0xf]
  %v97 = vld [vmem:[%s0 + $0x148] sm:$0xf]
  %v98 = vld [vmem:[%s0 + $0x14c] sm:$0xf]
  %v99 = vld [vmem:[%s0 + $0x150] sm:$0xf]
  %v100 = vld [vmem:[%s0 + $0x154] sm:$0xf]
  %v101 = vld [vmem:[%s0 + $0x158] sm:$0xf]
  %v102 = vld [vmem:[%s0 + $0x15c] sm:$0xf]
  %v103 = vld [vmem:[%s0 + $0x160] sm:$0xf]
  %v104 = vld [vmem:[%s0 + $0x164] sm:$0xf]
  %v105 = vld [vmem:[%s0 + $0x168] sm:$0xf]
  %v106 = vld [vmem:[%s0 + $0x16c] sm:$0xf]
  %v107 = vld [vmem:[%s0 + $0x170] sm:$0xf]
  %v108 = vld [vmem:[%s0 + $0x174] sm:$0xf]
  %v109 = vld [vmem:[%s0 + $0x178] sm:$0xf]
  %v110 = vld [vmem:[%s0 + $0x17c] sm:$0xf]
  %v111 = vld [vmem:[%s0 + $0x180] sm:$0xf]
  %v112 = vld [vmem:[%s0 + $0x184] sm:$0xf]
  %v113 = vld [vmem:[%s0 + $0x188] sm:$0xf]
  %v114 = vld [vmem:[%s0 + $0x18c] sm:$0xf]
  %v115 = vld [vmem:[%s0 + $0x190] sm:$0xf]
  %v116 = vld [vmem:[%s0 + $0x194] sm:$0xf]
  %v117 = vld [vmem:[%s0 + $0x198] sm:$0xf]
  %v118 = vld [vmem:[%s0 + $0x19c] sm:$0xf]
  %v119 = vld [vmem:[%s0 + $0x1a0] sm:$0xf]
  %v120 = vld [vmem:[%s0 + $0x1a4] sm:$0xf]
  %v121 = vld [vmem:[%s0 + $0x1a8] sm:$0xf]
  %v122 = vld [vmem:[%s0 + $0x1ac] sm:$0xf]
  %v123 = vld [vmem:[%s0 + $0x1b0] sm:$0xf]
  %v124 = vld [vmem:[%s0 + $0x1b4] sm:$0xf]
  %v125 = vld [vmem:[%s0 + $0x1b8] sm:$0xf]
  %v126 = vld [vmem:[%s0 + $0x1bc] sm:$0xf]
  %v127 = vld [vmem:[%s0 + $0x1c0] sm:$0xf]
  %v128 = vld [vmem:[%s0 + $0x1c4] sm:$0xf]
  %v129 = vld [vmem:[%s0 + $0x1c8] sm:$0xf]
  %v130 = vld [vmem:[%s0 + $0x1cc] sm:$0xf]
  %v131 = vld [vmem:[%s0 + $0x1d0] sm:$0xf]
  %v132 = vld [vmem:[%s0 + $0x1d4] sm:$0xf]
  %v133 = vld [vmem:[%s0 + $0x1d8] sm:$0xf]
  %v134 = vld [vmem:[%s0 + $0x1dc] sm:$0xf]
  %v135 = vld [vmem:[%s0 + $0x1e0] sm:$0xf]
  %v136 = vld [vmem:[%s0 + $0x1e4] sm:$0xf]
  %v137 = vld [vmem:[%s0 + $0x1e8] sm:$0xf]
  %v138 = vld [vmem:[%s0 + $0x1ec] sm:$0xf]
  %v139 = vld [vmem:[%s0 + $0x1f0] sm:$0xf]
  %v140 = vld [vmem:[%s0 + $0x1f4] sm:$0xf]
  %v141 = vld [vmem:[%s0 + $0x1f8] sm:$0xf]
  %v142 = vld [vmem:[%s0 + $0x1fc] sm:$0xf]
  %v143 = vld [vmem:[%s0 + $0x200] sm:$0xf]
  %v144 = vld [vmem:[%s0 + $0x204] sm:$0xf]
  %v145 = vld [vmem:[%s0 + $0x208] sm:$0xf]
  %v146 = vld [vmem:[%s0 + $0x20c] sm:$0xf]
  %v147 = vld [vmem:[%s0 + $0x210] sm:$0xf]
  %v148 = vld [vmem:[%s0 + $0x214] sm:$0xf]
  %v149 = vld [vmem:[%s0 + $0x218] sm:$0xf]
  %v150 = vld [vmem:[%s0 + $0x21c] sm:$0xf]
  %v151 = vld [vmem:[%s0 + $0x220] sm:$0xf]
  %v152 = vld [vmem:[%s0 + $0x224] sm:$0xf]
  %v153 = vld [vmem:[%s0 + $0x228] sm:$0xf]
  %v154 = vld [vmem:[%s0 + $0x22c] sm:$0xf]
  %v155 = vld [vmem:[%s0 + $0x230] sm:$0xf]
  %v156 = vld [vmem:[%s0 + $0x234] sm:$0xf]
  %v157 = vld [vmem:[%s0 + $0x238] sm:$0xf]
  %v158 = vld [vmem:[%s0 + $0x23c] sm:$0xf]
  %v159 = vld [vmem:[%s0 + $0x240] sm:$0xf]
  %v160 = vld [vmem:[%s0 + $0x244] sm:$0xf]
  %v161 = vld [vmem:[%s0 + $0x248] sm:$0xf]
  %v162 = vld [vmem:[%s0 + $0x24c] sm:$0xf]
  %v163 = vld [vmem:[%s0 + $0x250] sm:$0xf]
  %v164 = vld [vmem:[%s0 + $0x254] sm:$0xf]
  %v165 = vld [vmem:[%s0 + $0x258] sm:$0xf]
  %v166 = vld [vmem:[%s0 + $0x25c] sm:$0xf]
  %v167 = vld [vmem:[%s0 + $0x260] sm:$0xf]
  %v168 = vld [vmem:[%s0 + $0x264] sm:$0xf]
  %v169 = vld [vmem:[%s0 + $0x268] sm:$0xf]
  %v170 = vld [vmem:[%s0 + $0x26c] sm:$0xf]
  %v171 = vld [vmem:[%s0 + $0x270] sm:$0xf]
  %v172 = vld [vmem:[%s0 + $0x274] sm:$0xf]
  %v173 = vld [vmem:[%s0 + $0x278] sm:$0xf]
  %v174 = vld [vmem:[%s0 + $0x27c] sm:$0xf]
  %v175 = vld [vmem:[%s0 + $0x280] sm:$0xf]
  %v176 = vld [vmem:[%s0 + $0x284] sm:$0xf]
  %v177 = vld [vmem:[%s0 + $0x288] sm:$0xf]
  %v178 = vld [vmem:[%s0 + $0x28c] sm:$0xf]
  %v179 = vld [vmem:[%s0 + $0x290] sm:$0xf]
  %v180 = vld [vmem:[%s0 + $0x294] sm:$0xf]
  %v181 = vld [vmem:[%s0 + $0x298] sm:$0xf]
  %v182 = vld [vmem:[%s0 + $0x29c] sm:$0xf]
  %v183 = vld [vmem:[%s0 + $0x2a0] sm:$0xf]
  %v184 = vld [vmem:[%s1] sm:$0xf]
  %v185 = vld [vmem:[%s1 + $0x4] sm:$0x1]
  %v186 = vld [vmem:[%s2] sm:$0x1]
  %v188 = vperm.slane %v186, 0
  %v359 = vunpack.c.l.b16 %v15
  %v360 = vunpack.c.l.b16 %v16
  %v361 = vunpack.c.l.b16 %v17
  %v362 = vunpack.c.l.b16 %v18
  %v363 = vunpack.c.l.b16 %v19
  %v364 = vunpack.c.l.b16 %v20
  %v365 = vunpack.c.l.b16 %v21
  %v366 = vunpack.c.l.b16 %v22
  %v367 = vunpack.c.l.b16 %v23
  %v368 = vunpack.c.l.b16 %v24
  %v369 = vunpack.c.l.b16 %v25
  %v370 = vunpack.c.l.b16 %v26
  %v371 = vunpack.c.l.b16 %v27
  %v372 = vunpack.c.l.b16 %v28
  %v373 = vunpack.c.l.b16 %v29
  %v374 = vunpack.c.l.b16 %v30
  %v375 = vunpack.c.l.b16 %v31
  %v376 = vunpack.c.l.b16 %v32
  %v377 = vunpack.c.l.b16 %v33
  %v378 = vunpack.c.l.b16 %v34
  %v379 = vunpack.c.l.b16 %v35
  %v380 = vunpack.c.l.b16 %v36
  %v381 = vunpack.c.l.b16 %v37
  %v382 = vunpack.c.l.b16 %v38
  %v383 = vunpack.c.l.b16 %v39
  %v384 = vunpack.c.l.b16 %v40
  %v385 = vunpack.c.l.b16 %v41
  %v386 = vunpack.c.l.b16 %v42
  %v387 = vunpack.c.l.b16 %v43
  %v388 = vunpack.c.l.b16 %v44
  %v389 = vunpack.c.l.b16 %v45
  %v390 = vunpack.c.l.b16 %v46
  %v391 = vunpack.c.l.b16 %v47
  %v392 = vunpack.c.l.b16 %v48
  %v393 = vunpack.c.l.b16 %v49
  %v394 = vunpack.c.l.b16 %v50
  %v395 = vunpack.c.l.b16 %v51
  %v396 = vunpack.c.l.b16 %v52
  %v397 = vunpack.c.l.b16 %v53
  %v398 = vunpack.c.l.b16 %v54
  %v399 = vunpack.c.l.b16 %v55
  %v400 = vunpack.c.l.b16 %v56
  %v401 = vunpack.c.l.b16 %v57
  %v402 = vunpack.c.l.b16 %v58
  %v403 = vunpack.c.l.b16 %v59
  %v404 = vunpack.c.l.b16 %v60
  %v405 = vunpack.c.l.b16 %v61
  %v406 = vunpack.c.l.b16 %v62
  %v407 = vunpack.c.l.b16 %v63
  %v408 = vunpack.c.l.b16 %v64
  %v409 = vunpack.c.l.b16 %v65
  %v410 = vunpack.c.l.b16 %v66
  %v411 = vunpack.c.l.b16 %v67
  %v412 = vunpack.c.l.b16 %v68
  %v413 = vunpack.c.l.b16 %v69
  %v414 = vunpack.c.l.b16 %v70
  %v415 = vunpack.c.l.b16 %v71
  %v416 = vunpack.c.l.b16 %v72
  %v417 = vunpack.c.l.b16 %v73
  %v418 = vunpack.c.l.b16 %v74
  %v419 = vunpack.c.l.b16 %v75
  %v420 = vunpack.c.l.b16 %v76
  %v421 = vunpack.c.l.b16 %v77
  %v422 = vunpack.c.l.b16 %v78
  %v423 = vunpack.c.l.b16 %v79
  %v424 = vunpack.c.l.b16 %v80
  %v425 = vunpack.c.l.b16 %v81
  %v426 = vunpack.c.l.b16 %v82
  %v427 = vunpack.c.l.b16 %v83
  %v428 = vunpack.c.l.b16 %v84
  %v429 = vunpack.c.l.b16 %v85
  %v430 = vunpack.c.l.b16 %v86
  %v431 = vunpack.c.l.b16 %v87
  %v432 = vunpack.c.l.b16 %v88
  %v433 = vunpack.c.l.b16 %v89
  %v434 = vunpack.c.l.b16 %v90
  %v435 = vunpack.c.l.b16 %v91
  %v436 = vunpack.c.l.b16 %v92
  %v437 = vunpack.c.l.b16 %v93
  %v438 = vunpack.c.l.b16 %v94
  %v439 = vunpack.c.l.b16 %v95
  %v440 = vunpack.c.l.b16 %v96
  %v441 = vunpack.c.l.b16 %v97
  %v442 = vunpack.c.l.b16 %v98
  %v443 = vunpack.c.l.b16 %v99
  %v444 = vunpack.c.l.b16 %v100
  %v445 = vunpack.c.l.b16 %v101
  %v446 = vunpack.c.l.b16 %v102
  %v447 = vunpack.c.l.b16 %v103
  %v448 = vunpack.c.l.b16 %v104
  %v449 = vunpack.c.l.b16 %v105
  %v450 = vunpack.c.l.b16 %v106
  %v451 = vunpack.c.l.b16 %v107
  %v452 = vunpack.c.l.b16 %v108
  %v453 = vunpack.c.l.b16 %v109
  %v454 = vunpack.c.l.b16 %v110
  %v455 = vunpack.c.l.b16 %v111
  %v456 = vunpack.c.l.b16 %v112
  %v457 = vunpack.c.l.b16 %v113
  %v458 = vunpack.c.l.b16 %v114
  %v459 = vunpack.c.l.b16 %v115
  %v460 = vunpack.c.l.b16 %v116
  %v461 = vunpack.c.l.b16 %v117
  %v462 = vunpack.c.l.b16 %v118
  %v463 = vunpack.c.l.b16 %v119
  %v464 = vunpack.c.l.b16 %v120
  %v465 = vunpack.c.l.b16 %v121
  %v466 = vunpack.c.l.b16 %v122
  %v467 = vunpack.c.l.b16 %v123
  %v468 = vunpack.c.l.b16 %v124
  %v469 = vunpack.c.l.b16 %v125
  %v470 = vunpack.c.l.b16 %v126
  %v471 = vunpack.c.l.b16 %v127
  %v472 = vunpack.c.l.b16 %v128
  %v473 = vunpack.c.l.b16 %v129
  %v474 = vunpack.c.l.b16 %v130
  %v475 = vunpack.c.l.b16 %v131
  %v476 = vunpack.c.l.b16 %v132
  %v477 = vunpack.c.l.b16 %v133
  %v478 = vunpack.c.l.b16 %v134
  %v479 = vunpack.c.l.b16 %v135
  %v480 = vunpack.c.l.b16 %v136
  %v481 = vunpack.c.l.b16 %v137
  %v482 = vunpack.c.l.b16 %v138
  %v483 = vunpack.c.l.b16 %v139
  %v484 = vunpack.c.l.b16 %v140
  %v485 = vunpack.c.l.b16 %v141
  %v486 = vunpack.c.l.b16 %v142
  %v487 = vunpack.c.l.b16 %v143
  %v488 = vunpack.c.l.b16 %v144
  %v489 = vunpack.c.l.b16 %v145
  %v490 = vunpack.c.l.b16 %v146
  %v491 = vunpack.c.l.b16 %v147
  %v492 = vunpack.c.l.b16 %v148
  %v493 = vunpack.c.l.b16 %v149
  %v494 = vunpack.c.l.b16 %v150
  %v495 = vunpack.c.l.b16 %v151
  %v496 = vunpack.c.l.b16 %v152
  %v497 = vunpack.c.l.b16 %v153
  %v498 = vunpack.c.l.b16 %v154
  %v499 = vunpack.c.l.b16 %v155
  %v500 = vunpack.c.l.b16 %v156
  %v501 = vunpack.c.l.b16 %v157
  %v502 = vunpack.c.l.b16 %v158
  %v503 = vunpack.c.l.b16 %v159
  %v504 = vunpack.c.l.b16 %v160
  %v505 = vunpack.c.l.b16 %v161
  %v506 = vunpack.c.l.b16 %v162
  %v507 = vunpack.c.l.b16 %v163
  %v508 = vunpack.c.l.b16 %v164
  %v509 = vunpack.c.l.b16 %v165
  %v510 = vunpack.c.l.b16 %v166
  %v511 = vunpack.c.l.b16 %v167
  %v512 = vunpack.c.l.b16 %v168
  %v513 = vunpack.c.l.b16 %v169
  %v514 = vunpack.c.l.b16 %v170
  %v515 = vunpack.c.l.b16 %v171
  %v516 = vunpack.c.l.b16 %v172
  %v517 = vunpack.c.l.b16 %v173
  %v518 = vunpack.c.l.b16 %v174
  %v519 = vunpack.c.l.b16 %v175
  %v520 = vunpack.c.l.b16 %v176
  %v521 = vunpack.c.l.b16 %v177
  %v522 = vunpack.c.l.b16 %v178
  %v523 = vunpack.c.l.b16 %v179
  %v524 = vunpack.c.l.b16 %v180
  %v525 = vunpack.c.l.b16 %v181
  %v526 = vunpack.c.l.b16 %v182
  %v527 = vunpack.c.l.b16 %v183
  %v528 = vpack.c.b16 %v360, %v359
  %v529 = vpack.c.b16 %v362, %v361
  %v530 = vpack.c.b16 %v364, %v363
  %v531 = vpack.c.b16 %v366, %v365
  %v532 = vpack.c.b16 %v368, %v367
  %v533 = vpack.c.b16 %v370, %v369
  %v534 = vpack.c.b16 %v372, %v371
  %v535 = vpack.c.b16 %v374, %v373
  %v536 = vpack.c.b16 %v376, %v375
  %v537 = vpack.c.b16 %v378, %v377
  %v538 = vpack.c.b16 %v380, %v379
  %v539 = vpack.c.b16 %v382, %v381
  %v540 = vpack.c.b16 %v384, %v383
  %v541 = vpack.c.b16 %v386, %v385
  %v542 = vpack.c.b16 %v388, %v387
  %v543 = vpack.c.b16 %v390, %v389
  %v544 = vpack.c.b16 %v392, %v391
  %v545 = vpack.c.b16 %v394, %v393
  %v546 = vpack.c.b16 %v396, %v395
  %v547 = vpack.c.b16 %v398, %v397
  %v548 = vpack.c.b16 %v400, %v399
  %v549 = vpack.c.b16 %v402, %v401
  %v550 = vpack.c.b16 %v404, %v403
  %v551 = vpack.c.b16 %v406, %v405
  %v552 = vpack.c.b16 %v408, %v407
  %v553 = vpack.c.b16 %v410, %v409
  %v554 = vpack.c.b16 %v412, %v411
  %v555 = vpack.c.b16 %v414, %v413
  %v556 = vpack.c.b16 %v416, %v415
  %v557 = vpack.c.b16 %v418, %v417
  %v558 = vpack.c.b16 %v420, %v419
  %v559 = vpack.c.b16 %v422, %v421
  %v560 = vpack.c.b16 %v424, %v423
  %v561 = vpack.c.b16 %v426, %v425
  %v562 = vpack.c.b16 %v428, %v427
  %v563 = vpack.c.b16 %v430, %v429
  %v564 = vpack.c.b16 %v432, %v431
  %v565 = vpack.c.b16 %v434, %v433
  %v566 = vpack.c.b16 %v436, %v435
  %v567 = vpack.c.b16 %v438, %v437
  %v568 = vpack.c.b16 %v440, %v439
  %v569 = vpack.c.b16 %v442, %v441
  %v570 = vpack.c.b16 %v444, %v443
  %v571 = vpack.c.b16 %v446, %v445
  %v572 = vpack.c.b16 %v448, %v447
  %v573 = vpack.c.b16 %v450, %v449
  %v574 = vpack.c.b16 %v452, %v451
  %v575 = vpack.c.b16 %v454, %v453
  %v576 = vpack.c.b16 %v456, %v455
  %v577 = vpack.c.b16 %v458, %v457
  %v578 = vpack.c.b16 %v460, %v459
  %v579 = vpack.c.b16 %v462, %v461
  %v580 = vpack.c.b16 %v464, %v463
  %v581 = vpack.c.b16 %v466, %v465
  %v582 = vpack.c.b16 %v468, %v467
  %v583 = vpack.c.b16 %v470, %v469
  %v584 = vpack.c.b16 %v472, %v471
  %v585 = vpack.c.b16 %v474, %v473
  %v586 = vpack.c.b16 %v476, %v475
  %v587 = vpack.c.b16 %v478, %v477
  %v588 = vpack.c.b16 %v480, %v479
  %v589 = vpack.c.b16 %v482, %v481
  %v590 = vpack.c.b16 %v484, %v483
  %v591 = vpack.c.b16 %v486, %v485
  %v592 = vpack.c.b16 %v488, %v487
  %v593 = vpack.c.b16 %v490, %v489
  %v594 = vpack.c.b16 %v492, %v491
  %v595 = vpack.c.b16 %v494, %v493
  %v596 = vpack.c.b16 %v496, %v495
  %v597 = vpack.c.b16 %v498, %v497
  %v598 = vpack.c.b16 %v500, %v499
  %v599 = vpack.c.b16 %v502, %v501
  %v600 = vpack.c.b16 %v504, %v503
  %v601 = vpack.c.b16 %v506, %v505
  %v602 = vpack.c.b16 %v508, %v507
  %v603 = vpack.c.b16 %v510, %v509
  %v604 = vpack.c.b16 %v512, %v511
  %v605 = vpack.c.b16 %v514, %v513
  %v606 = vpack.c.b16 %v516, %v515
  %v607 = vpack.c.b16 %v518, %v517
  %v608 = vpack.c.b16 %v520, %v519
  %v609 = vpack.c.b16 %v522, %v521
  %v610 = vpack.c.b16 %v524, %v523
  %v611 = vpack.c.b16 %v526, %v525
  %v612 = vpack.c.b16 %v527, %v527
  %v615 = vunpack.c.l.b16 %v184
  %v616 = vunpack.c.l.b16 %v185
  %v617 = vpack.c.b16 %v616, %v615
  %vm618 = vcmask 72704
  %v620 = vsel %vm618, %v528, 0
  %v623 = vsel %vm618, %v529, 0
  %v626 = vsel %vm618, %v530, 0
  %v629 = vsel %vm618, %v531, 0
  %v632 = vsel %vm618, %v532, 0
  %v635 = vsel %vm618, %v533, 0
  %v638 = vsel %vm618, %v534, 0
  %v641 = vsel %vm618, %v535, 0
  %v644 = vsel %vm618, %v536, 0
  %v647 = vsel %vm618, %v537, 0
  %v650 = vsel %vm618, %v538, 0
  %v653 = vsel %vm618, %v539, 0
  %v656 = vsel %vm618, %v540, 0
  %v659 = vsel %vm618, %v541, 0
  %v662 = vsel %vm618, %v542, 0
  %v665 = vsel %vm618, %v543, 0
  %v668 = vsel %vm618, %v544, 0
  %v671 = vsel %vm618, %v545, 0
  %v674 = vsel %vm618, %v546, 0
  %v677 = vsel %vm618, %v547, 0
  %v680 = vsel %vm618, %v548, 0
  %v683 = vsel %vm618, %v549, 0
  %v686 = vsel %vm618, %v550, 0
  %v689 = vsel %vm618, %v551, 0
  %v692 = vsel %vm618, %v552, 0
  %v695 = vsel %vm618, %v553, 0
  %v698 = vsel %vm618, %v554, 0
  %v701 = vsel %vm618, %v555, 0
  %v704 = vsel %vm618, %v556, 0
  %v707 = vsel %vm618, %v557, 0
  %v710 = vsel %vm618, %v558, 0
  %v713 = vsel %vm618, %v559, 0
  %v716 = vsel %vm618, %v560, 0
  %v719 = vsel %vm618, %v561, 0
  %v722 = vsel %vm618, %v562, 0
  %v725 = vsel %vm618, %v563, 0
  %v728 = vsel %vm618, %v564, 0
  %v731 = vsel %vm618, %v565, 0
  %v734 = vsel %vm618, %v566, 0
  %v737 = vsel %vm618, %v567, 0
  %v740 = vsel %vm618, %v568, 0
  %v743 = vsel %vm618, %v569, 0
  %v746 = vsel %vm618, %v570, 0
  %v749 = vsel %vm618, %v571, 0
  %v752 = vsel %vm618, %v572, 0
  %v755 = vsel %vm618, %v573, 0
  %v758 = vsel %vm618, %v574, 0
  %v761 = vsel %vm618, %v575, 0
  %v764 = vsel %vm618, %v576, 0
  %v767 = vsel %vm618, %v577, 0
  %v770 = vsel %vm618, %v578, 0
  %v773 = vsel %vm618, %v579, 0
  %v776 = vsel %vm618, %v580, 0
  %v779 = vsel %vm618, %v581, 0
  %v782 = vsel %vm618, %v582, 0
  %v785 = vsel %vm618, %v583, 0
  %v788 = vsel %vm618, %v584, 0
  %v791 = vsel %vm618, %v585, 0
  %v794 = vsel %vm618, %v586, 0
  %v797 = vsel %vm618, %v587, 0
  %v800 = vsel %vm618, %v588, 0
  %v803 = vsel %vm618, %v589, 0
  %v806 = vsel %vm618, %v590, 0
  %v809 = vsel %vm618, %v591, 0
  %v812 = vsel %vm618, %v592, 0
  %v815 = vsel %vm618, %v593, 0
  %v818 = vsel %vm618, %v594, 0
  %v821 = vsel %vm618, %v595, 0
  %v824 = vsel %vm618, %v596, 0
  %v827 = vsel %vm618, %v597, 0
  %v830 = vsel %vm618, %v598, 0
  %v833 = vsel %vm618, %v599, 0
  %v836 = vsel %vm618, %v600, 0
  %v839 = vsel %vm618, %v601, 0
  %v842 = vsel %vm618, %v602, 0
  %v845 = vsel %vm618, %v603, 0
  %v848 = vsel %vm618, %v604, 0
  %v851 = vsel %vm618, %v605, 0
  %v854 = vsel %vm618, %v606, 0
  %v857 = vsel %vm618, %v607, 0
  %v860 = vsel %vm618, %v608, 0
  %v863 = vsel %vm618, %v609, 0
  %v866 = vsel %vm618, %v610, 0
  %v869 = vsel %vm618, %v611, 0
  %v872 = vsel %vm618, %v612, 0
  %vm874 = vcmask 1043456
  %vm875 = vcmask 1044480
  %v876 = vsel %vm874, 4294967295, 65535
  %v877 = vsel %vm875, %v876, 0
  %v879 = vand.u32 %v617, %v877
  %881 = vmatpush.bf16.msra.mxu0 0
  %882 = vmatpush.bf16.msra.mxu0 0
  %883 = vmatpush.bf16.msra.mxu0 0
  %884 = vmatpush.bf16.msra.mxu0 0
  %885 = vmatpush.bf16.msra.mxu0 0
  %886 = vmatpush.bf16.msra.mxu0 0
  %887 = vmatpush.bf16.msra.mxu0 0
  %888 = vmatpush.bf16.msra.mxu0 %v879
  %889 = vmatmul.bf16.gmra.mxu0 %v620
  %v890 = vpop.f32.mrf.mxu0
  %v891 = vadd.f32 %v188, %v890
  %v892 = vpop.f32.mrf.mxu0
  %v893 = vadd.f32 %v188, %v892
  %894 = vmatmul.bf16.gmra.mxu0 %v623
  %v895 = vpop.f32.mrf.mxu0
  %v896 = vadd.f32 %v188, %v895
  %v897 = vpop.f32.mrf.mxu0
  %v898 = vadd.f32 %v188, %v897
  %899 = vmatmul.bf16.gmra.mxu0 %v626
  %v900 = vpop.f32.mrf.mxu0
  %v901 = vadd.f32 %v188, %v900
  %v902 = vpop.f32.mrf.mxu0
  %v903 = vadd.f32 %v188, %v902
  %904 = vmatmul.bf16.gmra.mxu0 %v629
  %v905 = vpop.f32.mrf.mxu0
  %v906 = vadd.f32 %v188, %v905
  %v907 = vpop.f32.mrf.mxu0
  %v908 = vadd.f32 %v188, %v907
  %909 = vmatmul.bf16.gmra.mxu0 %v632
  %v910 = vpop.f32.mrf.mxu0
  %v911 = vadd.f32 %v188, %v910
  %v912 = vpop.f32.mrf.mxu0
  %v913 = vadd.f32 %v188, %v912
  %914 = vmatmul.bf16.gmra.mxu0 %v635
  %v915 = vpop.f32.mrf.mxu0
  %v916 = vadd.f32 %v188, %v915
  %v917 = vpop.f32.mrf.mxu0
  %v918 = vadd.f32 %v188, %v917
  %919 = vmatmul.bf16.gmra.mxu0 %v638
  %v920 = vpop.f32.mrf.mxu0
  %v921 = vadd.f32 %v188, %v920
  %v922 = vpop.f32.mrf.mxu0
  %v923 = vadd.f32 %v188, %v922
  %924 = vmatmul.bf16.gmra.mxu0 %v641
  %v925 = vpop.f32.mrf.mxu0
  %v926 = vadd.f32 %v188, %v925
  %v927 = vpop.f32.mrf.mxu0
  %v928 = vadd.f32 %v188, %v927
  %929 = vmatmul.bf16.gmra.mxu0 %v644
  %v930 = vpop.f32.mrf.mxu0
  %v931 = vadd.f32 %v188, %v930
  %v932 = vpop.f32.mrf.mxu0
  %v933 = vadd.f32 %v188, %v932
  %934 = vmatmul.bf16.gmra.mxu0 %v647
  %v935 = vpop.f32.mrf.mxu0
  %v936 = vadd.f32 %v188, %v935
  %v937 = vpop.f32.mrf.mxu0
  %v938 = vadd.f32 %v188, %v937
  %939 = vmatmul.bf16.gmra.mxu0 %v650
  %v940 = vpop.f32.mrf.mxu0
  %v941 = vadd.f32 %v188, %v940
  %v942 = vpop.f32.mrf.mxu0
  %v943 = vadd.f32 %v188, %v942
  %944 = vmatmul.bf16.gmra.mxu0 %v653
  %v945 = vpop.f32.mrf.mxu0
  %v946 = vadd.f32 %v188, %v945
  %v947 = vpop.f32.mrf.mxu0
  %v948 = vadd.f32 %v188, %v947
  %949 = vmatmul.bf16.gmra.mxu0 %v656
  %v950 = vpop.f32.mrf.mxu0
  %v951 = vadd.f32 %v188, %v950
  %v952 = vpop.f32.mrf.mxu0
  %v953 = vadd.f32 %v188, %v952
  %954 = vmatmul.bf16.gmra.mxu0 %v659
  %v955 = vpop.f32.mrf.mxu0
  %v956 = vadd.f32 %v188, %v955
  %v957 = vpop.f32.mrf.mxu0
  %v958 = vadd.f32 %v188, %v957
  %959 = vmatmul.bf16.gmra.mxu0 %v662
  %v960 = vpop.f32.mrf.mxu0
  %v961 = vadd.f32 %v188, %v960
  %v962 = vpop.f32.mrf.mxu0
  %v963 = vadd.f32 %v188, %v962
  %964 = vmatmul.bf16.gmra.mxu0 %v665
  %v965 = vpop.f32.mrf.mxu0
  %v966 = vadd.f32 %v188, %v965
  %v967 = vpop.f32.mrf.mxu0
  %v968 = vadd.f32 %v188, %v967
  %969 = vmatmul.bf16.gmra.mxu0 %v668
  %v970 = vpop.f32.mrf.mxu0
  %v971 = vadd.f32 %v188, %v970
  %v972 = vpop.f32.mrf.mxu0
  %v973 = vadd.f32 %v188, %v972
  %974 = vmatmul.bf16.gmra.mxu0 %v671
  %v975 = vpop.f32.mrf.mxu0
  %v976 = vadd.f32 %v188, %v975
  %v977 = vpop.f32.mrf.mxu0
  %v978 = vadd.f32 %v188, %v977
  %979 = vmatmul.bf16.gmra.mxu0 %v674
  %v980 = vpop.f32.mrf.mxu0
  %v981 = vadd.f32 %v188, %v980
  %v982 = vpop.f32.mrf.mxu0
  %v983 = vadd.f32 %v188, %v982
  %984 = vmatmul.bf16.gmra.mxu0 %v677
  %v985 = vpop.f32.mrf.mxu0
  %v986 = vadd.f32 %v188, %v985
  %v987 = vpop.f32.mrf.mxu0
  %v988 = vadd.f32 %v188, %v987
  %989 = vmatmul.bf16.gmra.mxu0 %v680
  %v990 = vpop.f32.mrf.mxu0
  %v991 = vadd.f32 %v188, %v990
  %v992 = vpop.f32.mrf.mxu0
  %v993 = vadd.f32 %v188, %v992
  %994 = vmatmul.bf16.gmra.mxu0 %v683
  %v995 = vpop.f32.mrf.mxu0
  %v996 = vadd.f32 %v188, %v995
  %v997 = vpop.f32.mrf.mxu0
  %v998 = vadd.f32 %v188, %v997
  %999 = vmatmul.bf16.gmra.mxu0 %v686
  %v1000 = vpop.f32.mrf.mxu0
  %v1001 = vadd.f32 %v188, %v1000
  %v1002 = vpop.f32.mrf.mxu0
  %v1003 = vadd.f32 %v188, %v1002
  %1004 = vmatmul.bf16.gmra.mxu0 %v689
  %v1005 = vpop.f32.mrf.mxu0
  %v1006 = vadd.f32 %v188, %v1005
  %v1007 = vpop.f32.mrf.mxu0
  %v1008 = vadd.f32 %v188, %v1007
  %1009 = vmatmul.bf16.gmra.mxu0 %v692
  %v1010 = vpop.f32.mrf.mxu0
  %v1011 = vadd.f32 %v188, %v1010
  %v1012 = vpop.f32.mrf.mxu0
  %v1013 = vadd.f32 %v188, %v1012
  %1014 = vmatmul.bf16.gmra.mxu0 %v695
  %v1015 = vpop.f32.mrf.mxu0
  %v1016 = vadd.f32 %v188, %v1015
  %v1017 = vpop.f32.mrf.mxu0
  %v1018 = vadd.f32 %v188, %v1017
  %1019 = vmatmul.bf16.gmra.mxu0 %v698
  %v1020 = vpop.f32.mrf.mxu0
  %v1021 = vadd.f32 %v188, %v1020
  %v1022 = vpop.f32.mrf.mxu0
  %v1023 = vadd.f32 %v188, %v1022
  %1024 = vmatmul.bf16.gmra.mxu0 %v701
  %v1025 = vpop.f32.mrf.mxu0
  %v1026 = vadd.f32 %v188, %v1025
  %v1027 = vpop.f32.mrf.mxu0
  %v1028 = vadd.f32 %v188, %v1027
  %1029 = vmatmul.bf16.gmra.mxu0 %v704
  %v1030 = vpop.f32.mrf.mxu0
  %v1031 = vadd.f32 %v188, %v1030
  %v1032 = vpop.f32.mrf.mxu0
  %v1033 = vadd.f32 %v188, %v1032
  %1034 = vmatmul.bf16.gmra.mxu0 %v707
  %v1035 = vpop.f32.mrf.mxu0
  %v1036 = vadd.f32 %v188, %v1035
  %v1037 = vpop.f32.mrf.mxu0
  %v1038 = vadd.f32 %v188, %v1037
  %1039 = vmatmul.bf16.gmra.mxu0 %v710
  %v1040 = vpop.f32.mrf.mxu0
  %v1041 = vadd.f32 %v188, %v1040
  %v1042 = vpop.f32.mrf.mxu0
  %v1043 = vadd.f32 %v188, %v1042
  %1044 = vmatmul.bf16.gmra.mxu0 %v713
  %v1045 = vpop.f32.mrf.mxu0
  %v1046 = vadd.f32 %v188, %v1045
  %v1047 = vpop.f32.mrf.mxu0
  %v1048 = vadd.f32 %v188, %v1047
  %1049 = vmatmul.bf16.gmra.mxu0 %v716
  %v1050 = vpop.f32.mrf.mxu0
  %v1051 = vadd.f32 %v188, %v1050
  %v1052 = vpop.f32.mrf.mxu0
  %v1053 = vadd.f32 %v188, %v1052
  %1054 = vmatmul.bf16.gmra.mxu0 %v719
  %v1055 = vpop.f32.mrf.mxu0
  %v1056 = vadd.f32 %v188, %v1055
  %v1057 = vpop.f32.mrf.mxu0
  %v1058 = vadd.f32 %v188, %v1057
  %1059 = vmatmul.bf16.gmra.mxu0 %v722
  %v1060 = vpop.f32.mrf.mxu0
  %v1061 = vadd.f32 %v188, %v1060
  %v1062 = vpop.f32.mrf.mxu0
  %v1063 = vadd.f32 %v188, %v1062
  %1064 = vmatmul.bf16.gmra.mxu0 %v725
  %v1065 = vpop.f32.mrf.mxu0
  %v1066 = vadd.f32 %v188, %v1065
  %v1067 = vpop.f32.mrf.mxu0
  %v1068 = vadd.f32 %v188, %v1067
  %1069 = vmatmul.bf16.gmra.mxu0 %v728
  %v1070 = vpop.f32.mrf.mxu0
  %v1071 = vadd.f32 %v188, %v1070
  %v1072 = vpop.f32.mrf.mxu0
  %v1073 = vadd.f32 %v188, %v1072
  %1074 = vmatmul.bf16.gmra.mxu0 %v731
  %v1075 = vpop.f32.mrf.mxu0
  %v1076 = vadd.f32 %v188, %v1075
  %v1077 = vpop.f32.mrf.mxu0
  %v1078 = vadd.f32 %v188, %v1077
  %1079 = vmatmul.bf16.gmra.mxu0 %v734
  %v1080 = vpop.f32.mrf.mxu0
  %v1081 = vadd.f32 %v188, %v1080
  %v1082 = vpop.f32.mrf.mxu0
  %v1083 = vadd.f32 %v188, %v1082
  %1084 = vmatmul.bf16.gmra.mxu0 %v737
  %v1085 = vpop.f32.mrf.mxu0
  %v1086 = vadd.f32 %v188, %v1085
  %v1087 = vpop.f32.mrf.mxu0
  %v1088 = vadd.f32 %v188, %v1087
  %1089 = vmatmul.bf16.gmra.mxu0 %v740
  %v1090 = vpop.f32.mrf.mxu0
  %v1091 = vadd.f32 %v188, %v1090
  %v1092 = vpop.f32.mrf.mxu0
  %v1093 = vadd.f32 %v188, %v1092
  %1094 = vmatmul.bf16.gmra.mxu0 %v743
  %v1095 = vpop.f32.mrf.mxu0
  %v1096 = vadd.f32 %v188, %v1095
  %v1097 = vpop.f32.mrf.mxu0
  %v1098 = vadd.f32 %v188, %v1097
  %1099 = vmatmul.bf16.gmra.mxu0 %v746
  %v1100 = vpop.f32.mrf.mxu0
  %v1101 = vadd.f32 %v188, %v1100
  %v1102 = vpop.f32.mrf.mxu0
  %v1103 = vadd.f32 %v188, %v1102
  %1104 = vmatmul.bf16.gmra.mxu0 %v749
  %v1105 = vpop.f32.mrf.mxu0
  %v1106 = vadd.f32 %v188, %v1105
  %v1107 = vpop.f32.mrf.mxu0
  %v1108 = vadd.f32 %v188, %v1107
  %1109 = vmatmul.bf16.gmra.mxu0 %v752
  %v1110 = vpop.f32.mrf.mxu0
  %v1111 = vadd.f32 %v188, %v1110
  %v1112 = vpop.f32.mrf.mxu0
  %v1113 = vadd.f32 %v188, %v1112
  %1114 = vmatmul.bf16.gmra.mxu0 %v755
  %v1115 = vpop.f32.mrf.mxu0
  %v1116 = vadd.f32 %v188, %v1115
  %v1117 = vpop.f32.mrf.mxu0
  %v1118 = vadd.f32 %v188, %v1117
  %1119 = vmatmul.bf16.gmra.mxu0 %v758
  %v1120 = vpop.f32.mrf.mxu0
  %v1121 = vadd.f32 %v188, %v1120
  %v1122 = vpop.f32.mrf.mxu0
  %v1123 = vadd.f32 %v188, %v1122
  %1124 = vmatmul.bf16.gmra.mxu0 %v761
  %v1125 = vpop.f32.mrf.mxu0
  %v1126 = vadd.f32 %v188, %v1125
  %v1127 = vpop.f32.mrf.mxu0
  %v1128 = vadd.f32 %v188, %v1127
  %1129 = vmatmul.bf16.gmra.mxu0 %v764
  %v1130 = vpop.f32.mrf.mxu0
  %v1131 = vadd.f32 %v188, %v1130
  %v1132 = vpop.f32.mrf.mxu0
  %v1133 = vadd.f32 %v188, %v1132
  %1134 = vmatmul.bf16.gmra.mxu0 %v767
  %v1135 = vpop.f32.mrf.mxu0
  %v1136 = vadd.f32 %v188, %v1135
  %v1137 = vpop.f32.mrf.mxu0
  %v1138 = vadd.f32 %v188, %v1137
  %1139 = vmatmul.bf16.gmra.mxu0 %v770
  %v1140 = vpop.f32.mrf.mxu0
  %v1141 = vadd.f32 %v188, %v1140
  %v1142 = vpop.f32.mrf.mxu0
  %v1143 = vadd.f32 %v188, %v1142
  %1144 = vmatmul.bf16.gmra.mxu0 %v773
  %v1145 = vpop.f32.mrf.mxu0
  %v1146 = vadd.f32 %v188, %v1145
  %v1147 = vpop.f32.mrf.mxu0
  %v1148 = vadd.f32 %v188, %v1147
  %1149 = vmatmul.bf16.gmra.mxu0 %v776
  %v1150 = vpop.f32.mrf.mxu0
  %v1151 = vadd.f32 %v188, %v1150
  %v1152 = vpop.f32.mrf.mxu0
  %v1153 = vadd.f32 %v188, %v1152
  %1154 = vmatmul.bf16.gmra.mxu0 %v779
  %v1155 = vpop.f32.mrf.mxu0
  %v1156 = vadd.f32 %v188, %v1155
  %v1157 = vpop.f32.mrf.mxu0
  %v1158 = vadd.f32 %v188, %v1157
  %1159 = vmatmul.bf16.gmra.mxu0 %v782
  %v1160 = vpop.f32.mrf.mxu0
  %v1161 = vadd.f32 %v188, %v1160
  %v1162 = vpop.f32.mrf.mxu0
  %v1163 = vadd.f32 %v188, %v1162
  %1164 = vmatmul.bf16.gmra.mxu0 %v785
  %v1165 = vpop.f32.mrf.mxu0
  %v1166 = vadd.f32 %v188, %v1165
  %v1167 = vpop.f32.mrf.mxu0
  %v1168 = vadd.f32 %v188, %v1167
  %1169 = vmatmul.bf16.gmra.mxu0 %v788
  %v1170 = vpop.f32.mrf.mxu0
  %v1171 = vadd.f32 %v188, %v1170
  %v1172 = vpop.f32.mrf.mxu0
  %v1173 = vadd.f32 %v188, %v1172
  %1174 = vmatmul.bf16.gmra.mxu0 %v791
  %v1175 = vpop.f32.mrf.mxu0
  %v1176 = vadd.f32 %v188, %v1175
  %v1177 = vpop.f32.mrf.mxu0
  %v1178 = vadd.f32 %v188, %v1177
  %1179 = vmatmul.bf16.gmra.mxu0 %v794
  %v1180 = vpop.f32.mrf.mxu0
  %v1181 = vadd.f32 %v188, %v1180
  %v1182 = vpop.f32.mrf.mxu0
  %v1183 = vadd.f32 %v188, %v1182
  %1184 = vmatmul.bf16.gmra.mxu0 %v797
  %v1185 = vpop.f32.mrf.mxu0
  %v1186 = vadd.f32 %v188, %v1185
  %v1187 = vpop.f32.mrf.mxu0
  %v1188 = vadd.f32 %v188, %v1187
  %1189 = vmatmul.bf16.gmra.mxu0 %v800
  %v1190 = vpop.f32.mrf.mxu0
  %v1191 = vadd.f32 %v188, %v1190
  %v1192 = vpop.f32.mrf.mxu0
  %v1193 = vadd.f32 %v188, %v1192
  %1194 = vmatmul.bf16.gmra.mxu0 %v803
  %v1195 = vpop.f32.mrf.mxu0
  %v1196 = vadd.f32 %v188, %v1195
  %v1197 = vpop.f32.mrf.mxu0
  %v1198 = vadd.f32 %v188, %v1197
  %1199 = vmatmul.bf16.gmra.mxu0 %v806
  %v1200 = vpop.f32.mrf.mxu0
  %v1201 = vadd.f32 %v188, %v1200
  %v1202 = vpop.f32.mrf.mxu0
  %v1203 = vadd.f32 %v188, %v1202
  %1204 = vmatmul.bf16.gmra.mxu0 %v809
  %v1205 = vpop.f32.mrf.mxu0
  %v1206 = vadd.f32 %v188, %v1205
  %v1207 = vpop.f32.mrf.mxu0
  %v1208 = vadd.f32 %v188, %v1207
  %1209 = vmatmul.bf16.gmra.mxu0 %v812
  %v1210 = vpop.f32.mrf.mxu0
  %v1211 = vadd.f32 %v188, %v1210
  %v1212 = vpop.f32.mrf.mxu0
  %v1213 = vadd.f32 %v188, %v1212
  %1214 = vmatmul.bf16.gmra.mxu0 %v815
  %v1215 = vpop.f32.mrf.mxu0
  %v1216 = vadd.f32 %v188, %v1215
  %v1217 = vpop.f32.mrf.mxu0
  %v1218 = vadd.f32 %v188, %v1217
  %1219 = vmatmul.bf16.gmra.mxu0 %v818
  %v1220 = vpop.f32.mrf.mxu0
  %v1221 = vadd.f32 %v188, %v1220
  %v1222 = vpop.f32.mrf.mxu0
  %v1223 = vadd.f32 %v188, %v1222
  %1224 = vmatmul.bf16.gmra.mxu0 %v821
  %v1225 = vpop.f32.mrf.mxu0
  %v1226 = vadd.f32 %v188, %v1225
  %v1227 = vpop.f32.mrf.mxu0
  %v1228 = vadd.f32 %v188, %v1227
  %1229 = vmatmul.bf16.gmra.mxu0 %v824
  %v1230 = vpop.f32.mrf.mxu0
  %v1231 = vadd.f32 %v188, %v1230
  %v1232 = vpop.f32.mrf.mxu0
  %v1233 = vadd.f32 %v188, %v1232
  %1234 = vmatmul.bf16.gmra.mxu0 %v827
  %v1235 = vpop.f32.mrf.mxu0
  %v1236 = vadd.f32 %v188, %v1235
  %v1237 = vpop.f32.mrf.mxu0
  %v1238 = vadd.f32 %v188, %v1237
  %1239 = vmatmul.bf16.gmra.mxu0 %v830
  %v1240 = vpop.f32.mrf.mxu0
  %v1241 = vadd.f32 %v188, %v1240
  %v1242 = vpop.f32.mrf.mxu0
  %v1243 = vadd.f32 %v188, %v1242
  %1244 = vmatmul.bf16.gmra.mxu0 %v833
  %v1245 = vpop.f32.mrf.mxu0
  %v1246 = vadd.f32 %v188, %v1245
  %v1247 = vpop.f32.mrf.mxu0
  %v1248 = vadd.f32 %v188, %v1247
  %1249 = vmatmul.bf16.gmra.mxu0 %v836
  %v1250 = vpop.f32.mrf.mxu0
  %v1251 = vadd.f32 %v188, %v1250
  %v1252 = vpop.f32.mrf.mxu0
  %v1253 = vadd.f32 %v188, %v1252
  %1254 = vmatmul.bf16.gmra.mxu0 %v839
  %v1255 = vpop.f32.mrf.mxu0
  %v1256 = vadd.f32 %v188, %v1255
  %v1257 = vpop.f32.mrf.mxu0
  %v1258 = vadd.f32 %v188, %v1257
  %1259 = vmatmul.bf16.gmra.mxu0 %v842
  %v1260 = vpop.f32.mrf.mxu0
  %v1261 = vadd.f32 %v188, %v1260
  %v1262 = vpop.f32.mrf.mxu0
  %v1263 = vadd.f32 %v188, %v1262
  %1264 = vmatmul.bf16.gmra.mxu0 %v845
  %v1265 = vpop.f32.mrf.mxu0
  %v1266 = vadd.f32 %v188, %v1265
  %v1267 = vpop.f32.mrf.mxu0
  %v1268 = vadd.f32 %v188, %v1267
  %1269 = vmatmul.bf16.gmra.mxu0 %v848
  %v1270 = vpop.f32.mrf.mxu0
  %v1271 = vadd.f32 %v188, %v1270
  %v1272 = vpop.f32.mrf.mxu0
  %v1273 = vadd.f32 %v188, %v1272
  %1274 = vmatmul.bf16.gmra.mxu0 %v851
  %v1275 = vpop.f32.mrf.mxu0
  %v1276 = vadd.f32 %v188, %v1275
  %v1277 = vpop.f32.mrf.mxu0
  %v1278 = vadd.f32 %v188, %v1277
  %1279 = vmatmul.bf16.gmra.mxu0 %v854
  %v1280 = vpop.f32.mrf.mxu0
  %v1281 = vadd.f32 %v188, %v1280
  %v1282 = vpop.f32.mrf.mxu0
  %v1283 = vadd.f32 %v188, %v1282
  %1284 = vmatmul.bf16.gmra.mxu0 %v857
  %v1285 = vpop.f32.mrf.mxu0
  %v1286 = vadd.f32 %v188, %v1285
  %v1287 = vpop.f32.mrf.mxu0
  %v1288 = vadd.f32 %v188, %v1287
  %1289 = vmatmul.bf16.gmra.mxu0 %v860
  %v1290 = vpop.f32.mrf.mxu0
  %v1291 = vadd.f32 %v188, %v1290
  %v1292 = vpop.f32.mrf.mxu0
  %v1293 = vadd.f32 %v188, %v1292
  %1294 = vmatmul.bf16.gmra.mxu0 %v863
  %v1295 = vpop.f32.mrf.mxu0
  %v1296 = vadd.f32 %v188, %v1295
  %v1297 = vpop.f32.mrf.mxu0
  %v1298 = vadd.f32 %v188, %v1297
  %1299 = vmatmul.bf16.gmra.mxu0 %v866
  %v1300 = vpop.f32.mrf.mxu0
  %v1301 = vadd.f32 %v188, %v1300
  %v1302 = vpop.f32.mrf.mxu0
  %v1303 = vadd.f32 %v188, %v1302
  %1304 = vmatmul.bf16.gmra.mxu0 %v869
  %v1305 = vpop.f32.mrf.mxu0
  %v1306 = vadd.f32 %v188, %v1305
  %v1307 = vpop.f32.mrf.mxu0
  %v1308 = vadd.f32 %v188, %v1307
  %1309 = vmatmul.bf16.gmra.mxu0 %v872
  %v1310 = vpop.f32.mrf.mxu0
  %v1311 = vadd.f32 %v188, %v1310
  %v1312 = vpop.f32.mrf.mxu0
  %1313 = vdwg.mxu0
  %v1314 = vmax.f32 %v891, 0.0
  %v1315 = vmax.f32 %v893, 0.0
  %v1316 = vmax.f32 %v896, 0.0
  %v1317 = vmax.f32 %v898, 0.0
  %v1318 = vmax.f32 %v901, 0.0
  %v1319 = vmax.f32 %v903, 0.0
  %v1320 = vmax.f32 %v906, 0.0
  %v1321 = vmax.f32 %v908, 0.0
  %v1322 = vmax.f32 %v911, 0.0
  %v1323 = vmax.f32 %v913, 0.0
  %v1324 = vmax.f32 %v916, 0.0
  %v1325 = vmax.f32 %v918, 0.0
  %v1326 = vmax.f32 %v921, 0.0
  %v1327 = vmax.f32 %v923, 0.0
  %v1328 = vmax.f32 %v926, 0.0
  %v1329 = vmax.f32 %v928, 0.0
  %v1330 = vmax.f32 %v931, 0.0
  %v1331 = vmax.f32 %v933, 0.0
  %v1332 = vmax.f32 %v936, 0.0
  %v1333 = vmax.f32 %v938, 0.0
  %v1334 = vmax.f32 %v941, 0.0
  %v1335 = vmax.f32 %v943, 0.0
  %v1336 = vmax.f32 %v946, 0.0
  %v1337 = vmax.f32 %v948, 0.0
  %v1338 = vmax.f32 %v951, 0.0
  %v1339 = vmax.f32 %v953, 0.0
  %v1340 = vmax.f32 %v956, 0.0
  %v1341 = vmax.f32 %v958, 0.0
  %v1342 = vmax.f32 %v961, 0.0
  %v1343 = vmax.f32 %v963, 0.0
  %v1344 = vmax.f32 %v966, 0.0
  %v1345 = vmax.f32 %v968, 0.0
  %v1346 = vmax.f32 %v971, 0.0
  %v1347 = vmax.f32 %v973, 0.0
  %v1348 = vmax.f32 %v976, 0.0
  %v1349 = vmax.f32 %v978, 0.0
  %v1350 = vmax.f32 %v981, 0.0
  %v1351 = vmax.f32 %v983, 0.0
  %v1352 = vmax.f32 %v986, 0.0
  %v1353 = vmax.f32 %v988, 0.0
  %v1354 = vmax.f32 %v991, 0.0
  %v1355 = vmax.f32 %v993, 0.0
  %v1356 = vmax.f32 %v996, 0.0
  %v1357 = vmax.f32 %v998, 0.0
  %v1358 = vmax.f32 %v1001, 0.0
  %v1359 = vmax.f32 %v1003, 0.0
  %v1360 = vmax.f32 %v1006, 0.0
  %v1361 = vmax.f32 %v1008, 0.0
  %v1362 = vmax.f32 %v1011, 0.0
  %v1363 = vmax.f32 %v1013, 0.0
  %v1364 = vmax.f32 %v1016, 0.0
  %v1365 = vmax.f32 %v1018, 0.0
  %v1366 = vmax.f32 %v1021, 0.0
  %v1367 = vmax.f32 %v1023, 0.0
  %v1368 = vmax.f32 %v1026, 0.0
  %v1369 = vmax.f32 %v1028, 0.0
  %v1370 = vmax.f32 %v1031, 0.0
  %v1371 = vmax.f32 %v1033, 0.0
  %v1372 = vmax.f32 %v1036, 0.0
  %v1373 = vmax.f32 %v1038, 0.0
  %v1374 = vmax.f32 %v1041, 0.0
  %v1375 = vmax.f32 %v1043, 0.0
  %v1376 = vmax.f32 %v1046, 0.0
  %v1377 = vmax.f32 %v1048, 0.0
  %v1378 = vmax.f32 %v1051, 0.0
  %v1379 = vmax.f32 %v1053, 0.0
  %v1380 = vmax.f32 %v1056, 0.0
  %v1381 = vmax.f32 %v1058, 0.0
  %v1382 = vmax.f32 %v1061, 0.0
  %v1383 = vmax.f32 %v1063, 0.0
  %v1384 = vmax.f32 %v1066, 0.0
  %v1385 = vmax.f32 %v1068, 0.0
  %v1386 = vmax.f32 %v1071, 0.0
  %v1387 = vmax.f32 %v1073, 0.0
  %v1388 = vmax.f32 %v1076, 0.0
  %v1389 = vmax.f32 %v1078, 0.0
  %v1390 = vmax.f32 %v1081, 0.0
  %v1391 = vmax.f32 %v1083, 0.0
  %v1392 = vmax.f32 %v1086, 0.0
  %v1393 = vmax.f32 %v1088, 0.0
  %v1394 = vmax.f32 %v1091, 0.0
  %v1395 = vmax.f32 %v1093, 0.0
  %v1396 = vmax.f32 %v1096, 0.0
  %v1397 = vmax.f32 %v1098, 0.0
  %v1398 = vmax.f32 %v1101, 0.0
  %v1399 = vmax.f32 %v1103, 0.0
  %v1400 = vmax.f32 %v1106, 0.0
  %v1401 = vmax.f32 %v1108, 0.0
  %v1402 = vmax.f32 %v1111, 0.0
  %v1403 = vmax.f32 %v1113, 0.0
  %v1404 = vmax.f32 %v1116, 0.0
  %v1405 = vmax.f32 %v1118, 0.0
  %v1406 = vmax.f32 %v1121, 0.0
  %v1407 = vmax.f32 %v1123, 0.0
  %v1408 = vmax.f32 %v1126, 0.0
  %v1409 = vmax.f32 %v1128, 0.0
  %v1410 = vmax.f32 %v1131, 0.0
  %v1411 = vmax.f32 %v1133, 0.0
  %v1412 = vmax.f32 %v1136, 0.0
  %v1413 = vmax.f32 %v1138, 0.0
  %v1414 = vmax.f32 %v1141, 0.0
  %v1415 = vmax.f32 %v1143, 0.0
  %v1416 = vmax.f32 %v1146, 0.0
  %v1417 = vmax.f32 %v1148, 0.0
  %v1418 = vmax.f32 %v1151, 0.0
  %v1419 = vmax.f32 %v1153, 0.0
  %v1420 = vmax.f32 %v1156, 0.0
  %v1421 = vmax.f32 %v1158, 0.0
  %v1422 = vmax.f32 %v1161, 0.0
  %v1423 = vmax.f32 %v1163, 0.0
  %v1424 = vmax.f32 %v1166, 0.0
  %v1425 = vmax.f32 %v1168, 0.0
  %v1426 = vmax.f32 %v1171, 0.0
  %v1427 = vmax.f32 %v1173, 0.0
  %v1428 = vmax.f32 %v1176, 0.0
  %v1429 = vmax.f32 %v1178, 0.0
  %v1430 = vmax.f32 %v1181, 0.0
  %v1431 = vmax.f32 %v1183, 0.0
  %v1432 = vmax.f32 %v1186, 0.0
  %v1433 = vmax.f32 %v1188, 0.0
  %v1434 = vmax.f32 %v1191, 0.0
  %v1435 = vmax.f32 %v1193, 0.0
  %v1436 = vmax.f32 %v1196, 0.0
  %v1437 = vmax.f32 %v1198, 0.0
  %v1438 = vmax.f32 %v1201, 0.0
  %v1439 = vmax.f32 %v1203, 0.0
  %v1440 = vmax.f32 %v1206, 0.0
  %v1441 = vmax.f32 %v1208, 0.0
  %v1442 = vmax.f32 %v1211, 0.0
  %v1443 = vmax.f32 %v1213, 0.0
  %v1444 = vmax.f32 %v1216, 0.0
  %v1445 = vmax.f32 %v1218, 0.0
  %v1446 = vmax.f32 %v1221, 0.0
  %v1447 = vmax.f32 %v1223, 0.0
  %v1448 = vmax.f32 %v1226, 0.0
  %v1449 = vmax.f32 %v1228, 0.0
  %v1450 = vmax.f32 %v1231, 0.0
  %v1451 = vmax.f32 %v1233, 0.0
  %v1452 = vmax.f32 %v1236, 0.0
  %v1453 = vmax.f32 %v1238, 0.0
  %v1454 = vmax.f32 %v1241, 0.0
  %v1455 = vmax.f32 %v1243, 0.0
  %v1456 = vmax.f32 %v1246, 0.0
  %v1457 = vmax.f32 %v1248, 0.0
  %v1458 = vmax.f32 %v1251, 0.0
  %v1459 = vmax.f32 %v1253, 0.0
  %v1460 = vmax.f32 %v1256, 0.0
  %v1461 = vmax.f32 %v1258, 0.0
  %v1462 = vmax.f32 %v1261, 0.0
  %v1463 = vmax.f32 %v1263, 0.0
  %v1464 = vmax.f32 %v1266, 0.0
  %v1465 = vmax.f32 %v1268, 0.0
  %v1466 = vmax.f32 %v1271, 0.0
  %v1467 = vmax.f32 %v1273, 0.0
  %v1468 = vmax.f32 %v1276, 0.0
  %v1469 = vmax.f32 %v1278, 0.0
  %v1470 = vmax.f32 %v1281, 0.0
  %v1471 = vmax.f32 %v1283, 0.0
  %v1472 = vmax.f32 %v1286, 0.0
  %v1473 = vmax.f32 %v1288, 0.0
  %v1474 = vmax.f32 %v1291, 0.0
  %v1475 = vmax.f32 %v1293, 0.0
  %v1476 = vmax.f32 %v1296, 0.0
  %v1477 = vmax.f32 %v1298, 0.0
  %v1478 = vmax.f32 %v1301, 0.0
  %v1479 = vmax.f32 %v1303, 0.0
  %v1480 = vmax.f32 %v1306, 0.0
  %v1481 = vmax.f32 %v1308, 0.0
  %v1482 = vmax.f32 %v1311, 0.0
  %v1483 = vpack.c.bf16 %v1314, %v1314
  %v1484 = vpack.c.bf16 %v1315, %v1315
  %v1485 = vpack.c.bf16 %v1316, %v1316
  %v1486 = vpack.c.bf16 %v1317, %v1317
  %v1487 = vpack.c.bf16 %v1318, %v1318
  %v1488 = vpack.c.bf16 %v1319, %v1319
  %v1489 = vpack.c.bf16 %v1320, %v1320
  %v1490 = vpack.c.bf16 %v1321, %v1321
  %v1491 = vpack.c.bf16 %v1322, %v1322
  %v1492 = vpack.c.bf16 %v1323, %v1323
  %v1493 = vpack.c.bf16 %v1324, %v1324
  %v1494 = vpack.c.bf16 %v1325, %v1325
  %v1495 = vpack.c.bf16 %v1326, %v1326
  %v1496 = vpack.c.bf16 %v1327, %v1327
  %v1497 = vpack.c.bf16 %v1328, %v1328
  %v1498 = vpack.c.bf16 %v1329, %v1329
  %v1499 = vpack.c.bf16 %v1330, %v1330
  %v1500 = vpack.c.bf16 %v1331, %v1331
  %v1501 = vpack.c.bf16 %v1332, %v1332
  %v1502 = vpack.c.bf16 %v1333, %v1333
  %v1503 = vpack.c.bf16 %v1334, %v1334
  %v1504 = vpack.c.bf16 %v1335, %v1335
  %v1505 = vpack.c.bf16 %v1336, %v1336
  %v1506 = vpack.c.bf16 %v1337, %v1337
  %v1507 = vpack.c.bf16 %v1338, %v1338
  %v1508 = vpack.c.bf16 %v1339, %v1339
  %v1509 = vpack.c.bf16 %v1340, %v1340
  %v1510 = vpack.c.bf16 %v1341, %v1341
  %v1511 = vpack.c.bf16 %v1342, %v1342
  %v1512 = vpack.c.bf16 %v1343, %v1343
  %v1513 = vpack.c.bf16 %v1344, %v1344
  %v1514 = vpack.c.bf16 %v1345, %v1345
  %v1515 = vpack.c.bf16 %v1346, %v1346
  %v1516 = vpack.c.bf16 %v1347, %v1347
  %v1517 = vpack.c.bf16 %v1348, %v1348
  %v1518 = vpack.c.bf16 %v1349, %v1349
  %v1519 = vpack.c.bf16 %v1350, %v1350
  %v1520 = vpack.c.bf16 %v1351, %v1351
  %v1521 = vpack.c.bf16 %v1352, %v1352
  %v1522 = vpack.c.bf16 %v1353, %v1353
  %v1523 = vpack.c.bf16 %v1354, %v1354
  %v1524 = vpack.c.bf16 %v1355, %v1355
  %v1525 = vpack.c.bf16 %v1356, %v1356
  %v1526 = vpack.c.bf16 %v1357, %v1357
  %v1527 = vpack.c.bf16 %v1358, %v1358
  %v1528 = vpack.c.bf16 %v1359, %v1359
  %v1529 = vpack.c.bf16 %v1360, %v1360
  %v1530 = vpack.c.bf16 %v1361, %v1361
  %v1531 = vpack.c.bf16 %v1362, %v1362
  %v1532 = vpack.c.bf16 %v1363, %v1363
  %v1533 = vpack.c.bf16 %v1364, %v1364
  %v1534 = vpack.c.bf16 %v1365, %v1365
  %v1535 = vpack.c.bf16 %v1366, %v1366
  %v1536 = vpack.c.bf16 %v1367, %v1367
  %v1537 = vpack.c.bf16 %v1368, %v1368
  %v1538 = vpack.c.bf16 %v1369, %v1369
  %v1539 = vpack.c.bf16 %v1370, %v1370
  %v1540 = vpack.c.bf16 %v1371, %v1371
  %v1541 = vpack.c.bf16 %v1372, %v1372
  %v1542 = vpack.c.bf16 %v1373, %v1373
  %v1543 = vpack.c.bf16 %v1374, %v1374
  %v1544 = vpack.c.bf16 %v1375, %v1375
  %v1545 = vpack.c.bf16 %v1376, %v1376
  %v1546 = vpack.c.bf16 %v1377, %v1377
  %v1547 = vpack.c.bf16 %v1378, %v1378
  %v1548 = vpack.c.bf16 %v1379, %v1379
  %v1549 = vpack.c.bf16 %v1380, %v1380
  %v1550 = vpack.c.bf16 %v1381, %v1381
  %v1551 = vpack.c.bf16 %v1382, %v1382
  %v1552 = vpack.c.bf16 %v1383, %v1383
  %v1553 = vpack.c.bf16 %v1384, %v1384
  %v1554 = vpack.c.bf16 %v1385, %v1385
  %v1555 = vpack.c.bf16 %v1386, %v1386
  %v1556 = vpack.c.bf16 %v1387, %v1387
  %v1557 = vpack.c.bf16 %v1388, %v1388
  %v1558 = vpack.c.bf16 %v1389, %v1389
  %v1559 = vpack.c.bf16 %v1390, %v1390
  %v1560 = vpack.c.bf16 %v1391, %v1391
  %v1561 = vpack.c.bf16 %v1392, %v1392
  %v1562 = vpack.c.bf16 %v1393, %v1393
  %v1563 = vpack.c.bf16 %v1394, %v1394
  %v1564 = vpack.c.bf16 %v1395, %v1395
  %v1565 = vpack.c.bf16 %v1396, %v1396
  %v1566 = vpack.c.bf16 %v1397, %v1397
  %v1567 = vpack.c.bf16 %v1398, %v1398
  %v1568 = vpack.c.bf16 %v1399, %v1399
  %v1569 = vpack.c.bf16 %v1400, %v1400
  %v1570 = vpack.c.bf16 %v1401, %v1401
  %v1571 = vpack.c.bf16 %v1402, %v1402
  %v1572 = vpack.c.bf16 %v1403, %v1403
  %v1573 = vpack.c.bf16 %v1404, %v1404
  %v1574 = vpack.c.bf16 %v1405, %v1405
  %v1575 = vpack.c.bf16 %v1406, %v1406
  %v1576 = vpack.c.bf16 %v1407, %v1407
  %v1577 = vpack.c.bf16 %v1408, %v1408
  %v1578 = vpack.c.bf16 %v1409, %v1409
  %v1579 = vpack.c.bf16 %v1410, %v1410
  %v1580 = vpack.c.bf16 %v1411, %v1411
  %v1581 = vpack.c.bf16 %v1412, %v1412
  %v1582 = vpack.c.bf16 %v1413, %v1413
  %v1583 = vpack.c.bf16 %v1414, %v1414
  %v1584 = vpack.c.bf16 %v1415, %v1415
  %v1585 = vpack.c.bf16 %v1416, %v1416
  %v1586 = vpack.c.bf16 %v1417, %v1417
  %v1587 = vpack.c.bf16 %v1418, %v1418
  %v1588 = vpack.c.bf16 %v1419, %v1419
  %v1589 = vpack.c.bf16 %v1420, %v1420
  %v1590 = vpack.c.bf16 %v1421, %v1421
  %v1591 = vpack.c.bf16 %v1422, %v1422
  %v1592 = vpack.c.bf16 %v1423, %v1423
  %v1593 = vpack.c.bf16 %v1424, %v1424
  %v1594 = vpack.c.bf16 %v1425, %v1425
  %v1595 = vpack.c.bf16 %v1426, %v1426
  %v1596 = vpack.c.bf16 %v1427, %v1427
  %v1597 = vpack.c.bf16 %v1428, %v1428
  %v1598 = vpack.c.bf16 %v1429, %v1429
  %v1599 = vpack.c.bf16 %v1430, %v1430
  %v1600 = vpack.c.bf16 %v1431, %v1431
  %v1601 = vpack.c.bf16 %v1432, %v1432
  %v1602 = vpack.c.bf16 %v1433, %v1433
  %v1603 = vpack.c.bf16 %v1434, %v1434
  %v1604 = vpack.c.bf16 %v1435, %v1435
  %v1605 = vpack.c.bf16 %v1436, %v1436
  %v1606 = vpack.c.bf16 %v1437, %v1437
  %v1607 = vpack.c.bf16 %v1438, %v1438
  %v1608 = vpack.c.bf16 %v1439, %v1439
  %v1609 = vpack.c.bf16 %v1440, %v1440
  %v1610 = vpack.c.bf16 %v1441, %v1441
  %v1611 = vpack.c.bf16 %v1442, %v1442
  %v1612 = vpack.c.bf16 %v1443, %v1443
  %v1613 = vpack.c.bf16 %v1444, %v1444
  %v1614 = vpack.c.bf16 %v1445, %v1445
  %v1615 = vpack.c.bf16 %v1446, %v1446
  %v1616 = vpack.c.bf16 %v1447, %v1447
  %v1617 = vpack.c.bf16 %v1448, %v1448
  %v1618 = vpack.c.bf16 %v1449, %v1449
  %v1619 = vpack.c.bf16 %v1450, %v1450
  %v1620 = vpack.c.bf16 %v1451, %v1451
  %v1621 = vpack.c.bf16 %v1452, %v1452
  %v1622 = vpack.c.bf16 %v1453, %v1453
  %v1623 = vpack.c.bf16 %v1454, %v1454
  %v1624 = vpack.c.bf16 %v1455, %v1455
  %v1625 = vpack.c.bf16 %v1456, %v1456
  %v1626 = vpack.c.bf16 %v1457, %v1457
  %v1627 = vpack.c.bf16 %v1458, %v1458
  %v1628 = vpack.c.bf16 %v1459, %v1459
  %v1629 = vpack.c.bf16 %v1460, %v1460
  %v1630 = vpack.c.bf16 %v1461, %v1461
  %v1631 = vpack.c.bf16 %v1462, %v1462
  %v1632 = vpack.c.bf16 %v1463, %v1463
  %v1633 = vpack.c.bf16 %v1464, %v1464
  %v1634 = vpack.c.bf16 %v1465, %v1465
  %v1635 = vpack.c.bf16 %v1466, %v1466
  %v1636 = vpack.c.bf16 %v1467, %v1467
  %v1637 = vpack.c.bf16 %v1468, %v1468
  %v1638 = vpack.c.bf16 %v1469, %v1469
  %v1639 = vpack.c.bf16 %v1470, %v1470
  %v1640 = vpack.c.bf16 %v1471, %v1471
  %v1641 = vpack.c.bf16 %v1472, %v1472
  %v1642 = vpack.c.bf16 %v1473, %v1473
  %v1643 = vpack.c.bf16 %v1474, %v1474
  %v1644 = vpack.c.bf16 %v1475, %v1475
  %v1645 = vpack.c.bf16 %v1476, %v1476
  %v1646 = vpack.c.bf16 %v1477, %v1477
  %v1647 = vpack.c.bf16 %v1478, %v1478
  %v1648 = vpack.c.bf16 %v1479, %v1479
  %v1649 = vpack.c.bf16 %v1480, %v1480
  %v1650 = vpack.c.bf16 %v1481, %v1481
  %v1651 = vpack.c.bf16 %v1482, %v1482
  %vm1652 = vcmask 257024
  %1653 = vst.msk [vmem:[%s3] sm:$0xf] %vm1652, %v1483
  %1654 = vst.msk [vmem:[%s3 + $0x4] sm:$0xf] %vm1652, %v1484
  %1655 = vst.msk [vmem:[%s3 + $0x8] sm:$0xf] %vm1652, %v1485
  %1656 = vst.msk [vmem:[%s3 + $0xc] sm:$0xf] %vm1652, %v1486
  %1657 = vst.msk [vmem:[%s3 + $0x10] sm:$0xf] %vm1652, %v1487
  %1658 = vst.msk [vmem:[%s3 + $0x14] sm:$0xf] %vm1652, %v1488
  %1659 = vst.msk [vmem:[%s3 + $0x18] sm:$0xf] %vm1652, %v1489
  %1660 = vst.msk [vmem:[%s3 + $0x1c] sm:$0xf] %vm1652, %v1490
  %1661 = vst.msk [vmem:[%s3 + $0x20] sm:$0xf] %vm1652, %v1491
  %1662 = vst.msk [vmem:[%s3 + $0x24] sm:$0xf] %vm1652, %v1492
  %1663 = vst.msk [vmem:[%s3 + $0x28] sm:$0xf] %vm1652, %v1493
  %1664 = vst.msk [vmem:[%s3 + $0x2c] sm:$0xf] %vm1652, %v1494
  %1665 = vst.msk [vmem:[%s3 + $0x30] sm:$0xf] %vm1652, %v1495
  %1666 = vst.msk [vmem:[%s3 + $0x34] sm:$0xf] %vm1652, %v1496
  %1667 = vst.msk [vmem:[%s3 + $0x38] sm:$0xf] %vm1652, %v1497
  %1668 = vst.msk [vmem:[%s3 + $0x3c] sm:$0xf] %vm1652, %v1498
  %1669 = vst.msk [vmem:[%s3 + $0x40] sm:$0xf] %vm1652, %v1499
  %1670 = vst.msk [vmem:[%s3 + $0x44] sm:$0xf] %vm1652, %v1500
  %1671 = vst.msk [vmem:[%s3 + $0x48] sm:$0xf] %vm1652, %v1501
  %1672 = vst.msk [vmem:[%s3 + $0x4c] sm:$0xf] %vm1652, %v1502
  %1673 = vst.msk [vmem:[%s3 + $0x50] sm:$0xf] %vm1652, %v1503
  %1674 = vst.msk [vmem:[%s3 + $0x54] sm:$0xf] %vm1652, %v1504
  %1675 = vst.msk [vmem:[%s3 + $0x58] sm:$0xf] %vm1652, %v1505
  %1676 = vst.msk [vmem:[%s3 + $0x5c] sm:$0xf] %vm1652, %v1506
  %1677 = vst.msk [vmem:[%s3 + $0x60] sm:$0xf] %vm1652, %v1507
  %1678 = vst.msk [vmem:[%s3 + $0x64] sm:$0xf] %vm1652, %v1508
  %1679 = vst.msk [vmem:[%s3 + $0x68] sm:$0xf] %vm1652, %v1509
  %1680 = vst.msk [vmem:[%s3 + $0x6c] sm:$0xf] %vm1652, %v1510
  %1681 = vst.msk [vmem:[%s3 + $0x70] sm:$0xf] %vm1652, %v1511
  %1682 = vst.msk [vmem:[%s3 + $0x74] sm:$0xf] %vm1652, %v1512
  %1683 = vst.msk [vmem:[%s3 + $0x78] sm:$0xf] %vm1652, %v1513
  %1684 = vst.msk [vmem:[%s3 + $0x7c] sm:$0xf] %vm1652, %v1514
  %1685 = vst.msk [vmem:[%s3 + $0x80] sm:$0xf] %vm1652, %v1515
  %1686 = vst.msk [vmem:[%s3 + $0x84] sm:$0xf] %vm1652, %v1516
  %1687 = vst.msk [vmem:[%s3 + $0x88] sm:$0xf] %vm1652, %v1517
  %1688 = vst.msk [vmem:[%s3 + $0x8c] sm:$0xf] %vm1652, %v1518
  %1689 = vst.msk [vmem:[%s3 + $0x90] sm:$0xf] %vm1652, %v1519
  %1690 = vst.msk [vmem:[%s3 + $0x94] sm:$0xf] %vm1652, %v1520
  %1691 = vst.msk [vmem:[%s3 + $0x98] sm:$0xf] %vm1652, %v1521
  %1692 = vst.msk [vmem:[%s3 + $0x9c] sm:$0xf] %vm1652, %v1522
  %1693 = vst.msk [vmem:[%s3 + $0xa0] sm:$0xf] %vm1652, %v1523
  %1694 = vst.msk [vmem:[%s3 + $0xa4] sm:$0xf] %vm1652, %v1524
  %1695 = vst.msk [vmem:[%s3 + $0xa8] sm:$0xf] %vm1652, %v1525
  %1696 = vst.msk [vmem:[%s3 + $0xac] sm:$0xf] %vm1652, %v1526
  %1697 = vst.msk [vmem:[%s3 + $0xb0] sm:$0xf] %vm1652, %v1527
  %1698 = vst.msk [vmem:[%s3 + $0xb4] sm:$0xf] %vm1652, %v1528
  %1699 = vst.msk [vmem:[%s3 + $0xb8] sm:$0xf] %vm1652, %v1529
  %1700 = vst.msk [vmem:[%s3 + $0xbc] sm:$0xf] %vm1652, %v1530
  %1701 = vst.msk [vmem:[%s3 + $0xc0] sm:$0xf] %vm1652, %v1531
  %1702 = vst.msk [vmem:[%s3 + $0xc4] sm:$0xf] %vm1652, %v1532
  %1703 = vst.msk [vmem:[%s3 + $0xc8] sm:$0xf] %vm1652, %v1533
  %1704 = vst.msk [vmem:[%s3 + $0xcc] sm:$0xf] %vm1652, %v1534
  %1705 = vst.msk [vmem:[%s3 + $0xd0] sm:$0xf] %vm1652, %v1535
  %1706 = vst.msk [vmem:[%s3 + $0xd4] sm:$0xf] %vm1652, %v1536
  %1707 = vst.msk [vmem:[%s3 + $0xd8] sm:$0xf] %vm1652, %v1537
  %1708 = vst.msk [vmem:[%s3 + $0xdc] sm:$0xf] %vm1652, %v1538
  %1709 = vst.msk [vmem:[%s3 + $0xe0] sm:$0xf] %vm1652, %v1539
  %1710 = vst.msk [vmem:[%s3 + $0xe4] sm:$0xf] %vm1652, %v1540
  %1711 = vst.msk [vmem:[%s3 + $0xe8] sm:$0xf] %vm1652, %v1541
  %1712 = vst.msk [vmem:[%s3 + $0xec] sm:$0xf] %vm1652, %v1542
  %1713 = vst.msk [vmem:[%s3 + $0xf0] sm:$0xf] %vm1652, %v1543
  %1714 = vst.msk [vmem:[%s3 + $0xf4] sm:$0xf] %vm1652, %v1544
  %1715 = vst.msk [vmem:[%s3 + $0xf8] sm:$0xf] %vm1652, %v1545
  %1716 = vst.msk [vmem:[%s3 + $0xfc] sm:$0xf] %vm1652, %v1546
  %1717 = vst.msk [vmem:[%s3 + $0x100] sm:$0xf] %vm1652, %v1547
  %1718 = vst.msk [vmem:[%s3 + $0x104] sm:$0xf] %vm1652, %v1548
  %1719 = vst.msk [vmem:[%s3 + $0x108] sm:$0xf] %vm1652, %v1549
  %1720 = vst.msk [vmem:[%s3 + $0x10c] sm:$0xf] %vm1652, %v1550
  %1721 = vst.msk [vmem:[%s3 + $0x110] sm:$0xf] %vm1652, %v1551
  %1722 = vst.msk [vmem:[%s3 + $0x114] sm:$0xf] %vm1652, %v1552
  %1723 = vst.msk [vmem:[%s3 + $0x118] sm:$0xf] %vm1652, %v1553
  %1724 = vst.msk [vmem:[%s3 + $0x11c] sm:$0xf] %vm1652, %v1554
  %1725 = vst.msk [vmem:[%s3 + $0x120] sm:$0xf] %vm1652, %v1555
  %1726 = vst.msk [vmem:[%s3 + $0x124] sm:$0xf] %vm1652, %v1556
  %1727 = vst.msk [vmem:[%s3 + $0x128] sm:$0xf] %vm1652, %v1557
  %1728 = vst.msk [vmem:[%s3 + $0x12c] sm:$0xf] %vm1652, %v1558
  %1729 = vst.msk [vmem:[%s3 + $0x130] sm:$0xf] %vm1652, %v1559
  %1730 = vst.msk [vmem:[%s3 + $0x134] sm:$0xf] %vm1652, %v1560
  %1731 = vst.msk [vmem:[%s3 + $0x138] sm:$0xf] %vm1652, %v1561
  %1732 = vst.msk [vmem:[%s3 + $0x13c] sm:$0xf] %vm1652, %v1562
  %1733 = vst.msk [vmem:[%s3 + $0x140] sm:$0xf] %vm1652, %v1563
  %1734 = vst.msk [vmem:[%s3 + $0x144] sm:$0xf] %vm1652, %v1564
  %1735 = vst.msk [vmem:[%s3 + $0x148] sm:$0xf] %vm1652, %v1565
  %1736 = vst.msk [vmem:[%s3 + $0x14c] sm:$0xf] %vm1652, %v1566
  %1737 = vst.msk [vmem:[%s3 + $0x150] sm:$0xf] %vm1652, %v1567
  %1738 = vst.msk [vmem:[%s3 + $0x154] sm:$0xf] %vm1652, %v1568
  %1739 = vst.msk [vmem:[%s3 + $0x158] sm:$0xf] %vm1652, %v1569
  %1740 = vst.msk [vmem:[%s3 + $0x15c] sm:$0xf] %vm1652, %v1570
  %1741 = vst.msk [vmem:[%s3 + $0x160] sm:$0xf] %vm1652, %v1571
  %1742 = vst.msk [vmem:[%s3 + $0x164] sm:$0xf] %vm1652, %v1572
  %1743 = vst.msk [vmem:[%s3 + $0x168] sm:$0xf] %vm1652, %v1573
  %1744 = vst.msk [vmem:[%s3 + $0x16c] sm:$0xf] %vm1652, %v1574
  %1745 = vst.msk [vmem:[%s3 + $0x170] sm:$0xf] %vm1652, %v1575
  %1746 = vst.msk [vmem:[%s3 + $0x174] sm:$0xf] %vm1652, %v1576
  %1747 = vst.msk [vmem:[%s3 + $0x178] sm:$0xf] %vm1652, %v1577
  %1748 = vst.msk [vmem:[%s3 + $0x17c] sm:$0xf] %vm1652, %v1578
  %1749 = vst.msk [vmem:[%s3 + $0x180] sm:$0xf] %vm1652, %v1579
  %1750 = vst.msk [vmem:[%s3 + $0x184] sm:$0xf] %vm1652, %v1580
  %1751 = vst.msk [vmem:[%s3 + $0x188] sm:$0xf] %vm1652, %v1581
  %1752 = vst.msk [vmem:[%s3 + $0x18c] sm:$0xf] %vm1652, %v1582
  %1753 = vst.msk [vmem:[%s3 + $0x190] sm:$0xf] %vm1652, %v1583
  %1754 = vst.msk [vmem:[%s3 + $0x194] sm:$0xf] %vm1652, %v1584
  %1755 = vst.msk [vmem:[%s3 + $0x198] sm:$0xf] %vm1652, %v1585
  %1756 = vst.msk [vmem:[%s3 + $0x19c] sm:$0xf] %vm1652, %v1586
  %1757 = vst.msk [vmem:[%s3 + $0x1a0] sm:$0xf] %vm1652, %v1587
  %1758 = vst.msk [vmem:[%s3 + $0x1a4] sm:$0xf] %vm1652, %v1588
  %1759 = vst.msk [vmem:[%s3 + $0x1a8] sm:$0xf] %vm1652, %v1589
  %1760 = vst.msk [vmem:[%s3 + $0x1ac] sm:$0xf] %vm1652, %v1590
  %1761 = vst.msk [vmem:[%s3 + $0x1b0] sm:$0xf] %vm1652, %v1591
  %1762 = vst.msk [vmem:[%s3 + $0x1b4] sm:$0xf] %vm1652, %v1592
  %1763 = vst.msk [vmem:[%s3 + $0x1b8] sm:$0xf] %vm1652, %v1593
  %1764 = vst.msk [vmem:[%s3 + $0x1bc] sm:$0xf] %vm1652, %v1594
  %1765 = vst.msk [vmem:[%s3 + $0x1c0] sm:$0xf] %vm1652, %v1595
  %1766 = vst.msk [vmem:[%s3 + $0x1c4] sm:$0xf] %vm1652, %v1596
  %1767 = vst.msk [vmem:[%s3 + $0x1c8] sm:$0xf] %vm1652, %v1597
  %1768 = vst.msk [vmem:[%s3 + $0x1cc] sm:$0xf] %vm1652, %v1598
  %1769 = vst.msk [vmem:[%s3 + $0x1d0] sm:$0xf] %vm1652, %v1599
  %1770 = vst.msk [vmem:[%s3 + $0x1d4] sm:$0xf] %vm1652, %v1600
  %1771 = vst.msk [vmem:[%s3 + $0x1d8] sm:$0xf] %vm1652, %v1601
  %1772 = vst.msk [vmem:[%s3 + $0x1dc] sm:$0xf] %vm1652, %v1602
  %1773 = vst.msk [vmem:[%s3 + $0x1e0] sm:$0xf] %vm1652, %v1603
  %1774 = vst.msk [vmem:[%s3 + $0x1e4] sm:$0xf] %vm1652, %v1604
  %1775 = vst.msk [vmem:[%s3 + $0x1e8] sm:$0xf] %vm1652, %v1605
  %1776 = vst.msk [vmem:[%s3 + $0x1ec] sm:$0xf] %vm1652, %v1606
  %1777 = vst.msk [vmem:[%s3 + $0x1f0] sm:$0xf] %vm1652, %v1607
  %1778 = vst.msk [vmem:[%s3 + $0x1f4] sm:$0xf] %vm1652, %v1608
  %1779 = vst.msk [vmem:[%s3 + $0x1f8] sm:$0xf] %vm1652, %v1609
  %1780 = vst.msk [vmem:[%s3 + $0x1fc] sm:$0xf] %vm1652, %v1610
  %1781 = vst.msk [vmem:[%s3 + $0x200] sm:$0xf] %vm1652, %v1611
  %1782 = vst.msk [vmem:[%s3 + $0x204] sm:$0xf] %vm1652, %v1612
  %1783 = vst.msk [vmem:[%s3 + $0x208] sm:$0xf] %vm1652, %v1613
  %1784 = vst.msk [vmem:[%s3 + $0x20c] sm:$0xf] %vm1652, %v1614
  %1785 = vst.msk [vmem:[%s3 + $0x210] sm:$0xf] %vm1652, %v1615
  %1786 = vst.msk [vmem:[%s3 + $0x214] sm:$0xf] %vm1652, %v1616
  %1787 = vst.msk [vmem:[%s3 + $0x218] sm:$0xf] %vm1652, %v1617
  %1788 = vst.msk [vmem:[%s3 + $0x21c] sm:$0xf] %vm1652, %v1618
  %1789 = vst.msk [vmem:[%s3 + $0x220] sm:$0xf] %vm1652, %v1619
  %1790 = vst.msk [vmem:[%s3 + $0x224] sm:$0xf] %vm1652, %v1620
  %1791 = vst.msk [vmem:[%s3 + $0x228] sm:$0xf] %vm1652, %v1621
  %1792 = vst.msk [vmem:[%s3 + $0x22c] sm:$0xf] %vm1652, %v1622
  %1793 = vst.msk [vmem:[%s3 + $0x230] sm:$0xf] %vm1652, %v1623
  %1794 = vst.msk [vmem:[%s3 + $0x234] sm:$0xf] %vm1652, %v1624
  %1795 = vst.msk [vmem:[%s3 + $0x238] sm:$0xf] %vm1652, %v1625
  %1796 = vst.msk [vmem:[%s3 + $0x23c] sm:$0xf] %vm1652, %v1626
  %1797 = vst.msk [vmem:[%s3 + $0x240] sm:$0xf] %vm1652, %v1627
  %1798 = vst.msk [vmem:[%s3 + $0x244] sm:$0xf] %vm1652, %v1628
  %1799 = vst.msk [vmem:[%s3 + $0x248] sm:$0xf] %vm1652, %v1629
  %1800 = vst.msk [vmem:[%s3 + $0x24c] sm:$0xf] %vm1652, %v1630
  %1801 = vst.msk [vmem:[%s3 + $0x250] sm:$0xf] %vm1652, %v1631
  %1802 = vst.msk [vmem:[%s3 + $0x254] sm:$0xf] %vm1652, %v1632
  %1803 = vst.msk [vmem:[%s3 + $0x258] sm:$0xf] %vm1652, %v1633
  %1804 = vst.msk [vmem:[%s3 + $0x25c] sm:$0xf] %vm1652, %v1634
  %1805 = vst.msk [vmem:[%s3 + $0x260] sm:$0xf] %vm1652, %v1635
  %1806 = vst.msk [vmem:[%s3 + $0x264] sm:$0xf] %vm1652, %v1636
  %1807 = vst.msk [vmem:[%s3 + $0x268] sm:$0xf] %vm1652, %v1637
  %1808 = vst.msk [vmem:[%s3 + $0x26c] sm:$0xf] %vm1652, %v1638
  %1809 = vst.msk [vmem:[%s3 + $0x270] sm:$0xf] %vm1652, %v1639
  %1810 = vst.msk [vmem:[%s3 + $0x274] sm:$0xf] %vm1652, %v1640
  %1811 = vst.msk [vmem:[%s3 + $0x278] sm:$0xf] %vm1652, %v1641
  %1812 = vst.msk [vmem:[%s3 + $0x27c] sm:$0xf] %vm1652, %v1642
  %1813 = vst.msk [vmem:[%s3 + $0x280] sm:$0xf] %vm1652, %v1643
  %1814 = vst.msk [vmem:[%s3 + $0x284] sm:$0xf] %vm1652, %v1644
  %1815 = vst.msk [vmem:[%s3 + $0x288] sm:$0xf] %vm1652, %v1645
  %1816 = vst.msk [vmem:[%s3 + $0x28c] sm:$0xf] %vm1652, %v1646
  %1817 = vst.msk [vmem:[%s3 + $0x290] sm:$0xf] %vm1652, %v1647
  %1818 = vst.msk [vmem:[%s3 + $0x294] sm:$0xf] %vm1652, %v1648
  %1819 = vst.msk [vmem:[%s3 + $0x298] sm:$0xf] %vm1652, %v1649
  %1820 = vst.msk [vmem:[%s3 + $0x29c] sm:$0xf] %vm1652, %v1650
  %1821 = vst.msk [vmem:[%s3 + $0x2a0] sm:$0xf] %vm1652, %v1651
  // Predicated region
  $region14: #{deconvvae_forward.5} parent=0 // pred_check
    _
  $region15: #{deconvvae_forward.5} parent=0 // pred_check_branch
    %1823 = sbr.rel (0) target = $region17
  $region16: #{deconvvae_forward.5} parent=0 // pred_region
    _
  $region17: #{deconvvae_forward.5} parent=0 // pred_fallthru
    _
  // Predicated region
  $region18: #{deconvvae_forward.5} parent=0 // pred_check
    _
  $region19: #{deconvvae_forward.5} parent=0 // pred_check_branch
    %1825 = sbr.rel (0) target = $region21
  $region20: #{deconvvae_forward.5} parent=0 // pred_region
    _
  $region21: #{deconvvae_forward.5} parent=0 // pred_fallthru
    _

// kernel: deconvvae_forward.6
$region0: #{deconvvae_forward.6}
  #allocation0 [shape = 'u32[]', space=smem, size = 0x4, offset = 0x4, fixed_abs, tag = 'smem constant byte address 0x4 - core index']
  #allocation1 [shape = 'u32[72,128]{1,0:T(1,128)}', space=vmem, size = 0x9000, scoped, tag = 'internal scratch']
  %s0 = inlined_call_operand.vmem [shape: bf16[1152,288], index: 0, kind: input, shape index: {}]
  %s1 = inlined_call_operand.vmem [shape: bf16[288,16], index: 1, kind: input, shape index: {}]
  %s2 = inlined_call_operand.vmem [shape: f32[1,16], index: 2, kind: input, shape index: {}]
  %s3 = inlined_call_operand.vmem [shape: bf16[288,16], index: 3, kind: output, shape index: {}]
  %s4 = sld [smem:[#allocation0]]
  $region22: #{deconvvae_forward.6} parent=0
    _
  %s6 = ssub.s32 1, %s4
  %s7 = scalar_select 0, %s6, %s4
  // Predicated region
  $region2: #{deconvvae_forward.6} parent=0 // pred_check
    _
  $region3: #{deconvvae_forward.6} parent=0 // pred_check_branch
    %9 = sbr.rel (0) target = $region5
  $region4: #{deconvvae_forward.6} parent=0 // pred_region
    _
  $region5: #{deconvvae_forward.6} parent=0 // pred_fallthru
    _
  // Predicated region
  $region6: #{deconvvae_forward.6} parent=0 // pred_check
    _
  $region7: #{deconvvae_forward.6} parent=0 // pred_check_branch
    %11 = sbr.rel (0) target = $region9
  $region8: #{deconvvae_forward.6} parent=0 // pred_region
    _
  $region9: #{deconvvae_forward.6} parent=0 // pred_fallthru
    _
  // Predicated region
  $region10: #{deconvvae_forward.6} parent=0 // pred_check
    _
  $region11: #{deconvvae_forward.6} parent=0 // pred_check_branch
    %13 = sbr.rel (0) target = $region13
  $region12: #{deconvvae_forward.6} parent=0 // pred_region
    _
  $region13: #{deconvvae_forward.6} parent=0 // pred_fallthru
    _
  %v15 = vld [vmem:[%s0] sm:$0xff]
  %v16 = vld [vmem:[%s0 + $0x8] sm:$0xf]
  %v17 = vld [vmem:[%s0 + $0xc] sm:$0xff]
  %v18 = vld [vmem:[%s0 + $0x14] sm:$0xf]
  %v19 = vld [vmem:[%s0 + $0x18] sm:$0xff]
  %v20 = vld [vmem:[%s0 + $0x20] sm:$0xf]
  %v21 = vld [vmem:[%s0 + $0x24] sm:$0xff]
  %v22 = vld [vmem:[%s0 + $0x2c] sm:$0xf]
  %v23 = vld [vmem:[%s0 + $0x30] sm:$0xff]
  %v24 = vld [vmem:[%s0 + $0x38] sm:$0xf]
  %v25 = vld [vmem:[%s0 + $0x3c] sm:$0xff]
  %v26 = vld [vmem:[%s0 + $0x44] sm:$0xf]
  %v27 = vld [vmem:[%s0 + $0x48] sm:$0xff]
  %v28 = vld [vmem:[%s0 + $0x50] sm:$0xf]
  %v29 = vld [vmem:[%s0 + $0x54] sm:$0xff]
  %v30 = vld [vmem:[%s0 + $0x5c] sm:$0xf]
  %v31 = vld [vmem:[%s0 + $0x60] sm:$0xff]
  %v32 = vld [vmem:[%s0 + $0x68] sm:$0xf]
  %v33 = vld [vmem:[%s0 + $0x6c] sm:$0xff]
  %v34 = vld [vmem:[%s0 + $0x74] sm:$0xf]
  %v35 = vld [vmem:[%s0 + $0x78] sm:$0xff]
  %v36 = vld [vmem:[%s0 + $0x80] sm:$0xf]
  %v37 = vld [vmem:[%s0 + $0x84] sm:$0xff]
  %v38 = vld [vmem:[%s0 + $0x8c] sm:$0xf]
  %v39 = vld [vmem:[%s0 + $0x90] sm:$0xff]
  %v40 = vld [vmem:[%s0 + $0x98] sm:$0xf]
  %v41 = vld [vmem:[%s0 + $0x9c] sm:$0xff]
  %v42 = vld [vmem:[%s0 + $0xa4] sm:$0xf]
  %v43 = vld [vmem:[%s0 + $0xa8] sm:$0xff]
  %v44 = vld [vmem:[%s0 + $0xb0] sm:$0xf]
  %v45 = vld [vmem:[%s0 + $0xb4] sm:$0xff]
  %v46 = vld [vmem:[%s0 + $0xbc] sm:$0xf]
  %v47 = vld [vmem:[%s0 + $0xc0] sm:$0xff]
  %v48 = vld [vmem:[%s0 + $0xc8] sm:$0xf]
  %v49 = vld [vmem:[%s0 + $0xcc] sm:$0xff]
  %v50 = vld [vmem:[%s0 + $0xd4] sm:$0xf]
  %v51 = vld [vmem:[%s0 + $0xd8] sm:$0xff]
  %v52 = vld [vmem:[%s0 + $0xe0] sm:$0xf]
  %v53 = vld [vmem:[%s0 + $0xe4] sm:$0xff]
  %v54 = vld [vmem:[%s0 + $0xec] sm:$0xf]
  %v55 = vld [vmem:[%s0 + $0xf0] sm:$0xff]
  %v56 = vld [vmem:[%s0 + $0xf8] sm:$0xf]
  %v57 = vld [vmem:[%s0 + $0xfc] sm:$0xff]
  %v58 = vld [vmem:[%s0 + $0x104] sm:$0xf]
  %v59 = vld [vmem:[%s0 + $0x108] sm:$0xff]
  %v60 = vld [vmem:[%s0 + $0x110] sm:$0xf]
  %v61 = vld [vmem:[%s0 + $0x114] sm:$0xff]
  %v62 = vld [vmem:[%s0 + $0x11c] sm:$0xf]
  %v63 = vld [vmem:[%s0 + $0x120] sm:$0xff]
  %v64 = vld [vmem:[%s0 + $0x128] sm:$0xf]
  %v65 = vld [vmem:[%s0 + $0x12c] sm:$0xff]
  %v66 = vld [vmem:[%s0 + $0x134] sm:$0xf]
  %v67 = vld [vmem:[%s0 + $0x138] sm:$0xff]
  %v68 = vld [vmem:[%s0 + $0x140] sm:$0xf]
  %v69 = vld [vmem:[%s0 + $0x144] sm:$0xff]
  %v70 = vld [vmem:[%s0 + $0x14c] sm:$0xf]
  %v71 = vld [vmem:[%s0 + $0x150] sm:$0xff]
  %v72 = vld [vmem:[%s0 + $0x158] sm:$0xf]
  %v73 = vld [vmem:[%s0 + $0x15c] sm:$0xff]
  %v74 = vld [vmem:[%s0 + $0x164] sm:$0xf]
  %v75 = vld [vmem:[%s0 + $0x168] sm:$0xff]
  %v76 = vld [vmem:[%s0 + $0x170] sm:$0xf]
  %v77 = vld [vmem:[%s0 + $0x174] sm:$0xff]
  %v78 = vld [vmem:[%s0 + $0x17c] sm:$0xf]
  %v79 = vld [vmem:[%s0 + $0x180] sm:$0xff]
  %v80 = vld [vmem:[%s0 + $0x188] sm:$0xf]
  %v81 = vld [vmem:[%s0 + $0x18c] sm:$0xff]
  %v82 = vld [vmem:[%s0 + $0x194] sm:$0xf]
  %v83 = vld [vmem:[%s0 + $0x198] sm:$0xff]
  %v84 = vld [vmem:[%s0 + $0x1a0] sm:$0xf]
  %v85 = vld [vmem:[%s0 + $0x1a4] sm:$0xff]
  %v86 = vld [vmem:[%s0 + $0x1ac] sm:$0xf]
  %v87 = vld [vmem:[%s0 + $0x1b0] sm:$0xff]
  %v88 = vld [vmem:[%s0 + $0x1b8] sm:$0xf]
  %v89 = vld [vmem:[%s0 + $0x1bc] sm:$0xff]
  %v90 = vld [vmem:[%s0 + $0x1c4] sm:$0xf]
  %v91 = vld [vmem:[%s0 + $0x1c8] sm:$0xff]
  %v92 = vld [vmem:[%s0 + $0x1d0] sm:$0xf]
  %v93 = vld [vmem:[%s0 + $0x1d4] sm:$0xff]
  %v94 = vld [vmem:[%s0 + $0x1dc] sm:$0xf]
  %v95 = vld [vmem:[%s0 + $0x1e0] sm:$0xff]
  %v96 = vld [vmem:[%s0 + $0x1e8] sm:$0xf]
  %v97 = vld [vmem:[%s0 + $0x1ec] sm:$0xff]
  %v98 = vld [vmem:[%s0 + $0x1f4] sm:$0xf]
  %v99 = vld [vmem:[%s0 + $0x1f8] sm:$0xff]
  %v100 = vld [vmem:[%s0 + $0x200] sm:$0xf]
  %v101 = vld [vmem:[%s0 + $0x204] sm:$0xff]
  %v102 = vld [vmem:[%s0 + $0x20c] sm:$0xf]
  %v103 = vld [vmem:[%s0 + $0x210] sm:$0xff]
  %v104 = vld [vmem:[%s0 + $0x218] sm:$0xf]
  %v105 = vld [vmem:[%s0 + $0x21c] sm:$0xff]
  %v106 = vld [vmem:[%s0 + $0x224] sm:$0xf]
  %v107 = vld [vmem:[%s0 + $0x228] sm:$0xff]
  %v108 = vld [vmem:[%s0 + $0x230] sm:$0xf]
  %v109 = vld [vmem:[%s0 + $0x234] sm:$0xff]
  %v110 = vld [vmem:[%s0 + $0x23c] sm:$0xf]
  %v111 = vld [vmem:[%s0 + $0x240] sm:$0xff]
  %v112 = vld [vmem:[%s0 + $0x248] sm:$0xf]
  %v113 = vld [vmem:[%s0 + $0x24c] sm:$0xff]
  %v114 = vld [vmem:[%s0 + $0x254] sm:$0xf]
  %v115 = vld [vmem:[%s0 + $0x258] sm:$0xff]
  %v116 = vld [vmem:[%s0 + $0x260] sm:$0xf]
  %v117 = vld [vmem:[%s0 + $0x264] sm:$0xff]
  %v118 = vld [vmem:[%s0 + $0x26c] sm:$0xf]
  %v119 = vld [vmem:[%s0 + $0x270] sm:$0xff]
  %v120 = vld [vmem:[%s0 + $0x278] sm:$0xf]
  %v121 = vld [vmem:[%s0 + $0x27c] sm:$0xff]
  %v122 = vld [vmem:[%s0 + $0x284] sm:$0xf]
  %v123 = vld [vmem:[%s0 + $0x288] sm:$0xff]
  %v124 = vld [vmem:[%s0 + $0x290] sm:$0xf]
  %v125 = vld [vmem:[%s0 + $0x294] sm:$0xff]
  %v126 = vld [vmem:[%s0 + $0x29c] sm:$0xf]
  %v127 = vld [vmem:[%s0 + $0x2a0] sm:$0xff]
  %v128 = vld [vmem:[%s0 + $0x2a8] sm:$0xf]
  %v129 = vld [vmem:[%s0 + $0x2ac] sm:$0xff]
  %v130 = vld [vmem:[%s0 + $0x2b4] sm:$0xf]
  %v131 = vld [vmem:[%s0 + $0x2b8] sm:$0xff]
  %v132 = vld [vmem:[%s0 + $0x2c0] sm:$0xf]
  %v133 = vld [vmem:[%s0 + $0x2c4] sm:$0xff]
  %v134 = vld [vmem:[%s0 + $0x2cc] sm:$0xf]
  %v135 = vld [vmem:[%s0 + $0x2d0] sm:$0xff]
  %v136 = vld [vmem:[%s0 + $0x2d8] sm:$0xf]
  %v137 = vld [vmem:[%s0 + $0x2dc] sm:$0xff]
  %v138 = vld [vmem:[%s0 + $0x2e4] sm:$0xf]
  %v139 = vld [vmem:[%s0 + $0x2e8] sm:$0xff]
  %v140 = vld [vmem:[%s0 + $0x2f0] sm:$0xf]
  %v141 = vld [vmem:[%s0 + $0x2f4] sm:$0xff]
  %v142 = vld [vmem:[%s0 + $0x2fc] sm:$0xf]
  %v143 = vld [vmem:[%s0 + $0x300] sm:$0xff]
  %v144 = vld [vmem:[%s0 + $0x308] sm:$0xf]
  %v145 = vld [vmem:[%s0 + $0x30c] sm:$0xff]
  %v146 = vld [vmem:[%s0 + $0x314] sm:$0xf]
  %v147 = vld [vmem:[%s0 + $0x318] sm:$0xff]
  %v148 = vld [vmem:[%s0 + $0x320] sm:$0xf]
  %v149 = vld [vmem:[%s0 + $0x324] sm:$0xff]
  %v150 = vld [vmem:[%s0 + $0x32c] sm:$0xf]
  %v151 = vld [vmem:[%s0 + $0x330] sm:$0xff]
  %v152 = vld [vmem:[%s0 + $0x338] sm:$0xf]
  %v153 = vld [vmem:[%s0 + $0x33c] sm:$0xff]
  %v154 = vld [vmem:[%s0 + $0x344] sm:$0xf]
  %v155 = vld [vmem:[%s0 + $0x348] sm:$0xff]
  %v156 = vld [vmem:[%s0 + $0x350] sm:$0xf]
  %v157 = vld [vmem:[%s0 + $0x354] sm:$0xff]
  %v158 = vld [vmem:[%s0 + $0x35c] sm:$0xf]
  %v159 = vld [vmem:[%s0 + $0x360] sm:$0xff]
  %v160 = vld [vmem:[%s0 + $0x368] sm:$0xf]
  %v161 = vld [vmem:[%s0 + $0x36c] sm:$0xff]
  %v162 = vld [vmem:[%s0 + $0x374] sm:$0xf]
  %v163 = vld [vmem:[%s0 + $0x378] sm:$0xff]
  %v164 = vld [vmem:[%s0 + $0x380] sm:$0xf]
  %v165 = vld [vmem:[%s0 + $0x384] sm:$0xff]
  %v166 = vld [vmem:[%s0 + $0x38c] sm:$0xf]
  %v167 = vld [vmem:[%s0 + $0x390] sm:$0xff]
  %v168 = vld [vmem:[%s0 + $0x398] sm:$0xf]
  %v169 = vld [vmem:[%s0 + $0x39c] sm:$0xff]
  %v170 = vld [vmem:[%s0 + $0x3a4] sm:$0xf]
  %v171 = vld [vmem:[%s0 + $0x3a8] sm:$0xff]
  %v172 = vld [vmem:[%s0 + $0x3b0] sm:$0xf]
  %v173 = vld [vmem:[%s0 + $0x3b4] sm:$0xff]
  %v174 = vld [vmem:[%s0 + $0x3bc] sm:$0xf]
  %v175 = vld [vmem:[%s0 + $0x3c0] sm:$0xff]
  %v176 = vld [vmem:[%s0 + $0x3c8] sm:$0xf]
  %v177 = vld [vmem:[%s0 + $0x3cc] sm:$0xff]
  %v178 = vld [vmem:[%s0 + $0x3d4] sm:$0xf]
  %v179 = vld [vmem:[%s0 + $0x3d8] sm:$0xff]
  %v180 = vld [vmem:[%s0 + $0x3e0] sm:$0xf]
  %v181 = vld [vmem:[%s0 + $0x3e4] sm:$0xff]
  %v182 = vld [vmem:[%s0 + $0x3ec] sm:$0xf]
  %v183 = vld [vmem:[%s0 + $0x3f0] sm:$0xff]
  %v184 = vld [vmem:[%s0 + $0x3f8] sm:$0xf]
  %v185 = vld [vmem:[%s0 + $0x3fc] sm:$0xff]
  %v186 = vld [vmem:[%s0 + $0x404] sm:$0xf]
  %v187 = vld [vmem:[%s0 + $0x408] sm:$0xff]
  %v188 = vld [vmem:[%s0 + $0x410] sm:$0xf]
  %v189 = vld [vmem:[%s0 + $0x414] sm:$0xff]
  %v190 = vld [vmem:[%s0 + $0x41c] sm:$0xf]
  %v191 = vld [vmem:[%s0 + $0x420] sm:$0xff]
  %v192 = vld [vmem:[%s0 + $0x428] sm:$0xf]
  %v193 = vld [vmem:[%s0 + $0x42c] sm:$0xff]
  %v194 = vld [vmem:[%s0 + $0x434] sm:$0xf]
  %v195 = vld [vmem:[%s0 + $0x438] sm:$0xff]
  %v196 = vld [vmem:[%s0 + $0x440] sm:$0xf]
  %v197 = vld [vmem:[%s0 + $0x444] sm:$0xff]
  %v198 = vld [vmem:[%s0 + $0x44c] sm:$0xf]
  %v199 = vld [vmem:[%s0 + $0x450] sm:$0xff]
  %v200 = vld [vmem:[%s0 + $0x458] sm:$0xf]
  %v201 = vld [vmem:[%s0 + $0x45c] sm:$0xff]
  %v202 = vld [vmem:[%s0 + $0x464] sm:$0xf]
  %v203 = vld [vmem:[%s0 + $0x468] sm:$0xff]
  %v204 = vld [vmem:[%s0 + $0x470] sm:$0xf]
  %v205 = vld [vmem:[%s0 + $0x474] sm:$0xff]
  %v206 = vld [vmem:[%s0 + $0x47c] sm:$0xf]
  %v207 = vld [vmem:[%s0 + $0x480] sm:$0xff]
  %v208 = vld [vmem:[%s0 + $0x488] sm:$0xf]
  %v209 = vld [vmem:[%s0 + $0x48c] sm:$0xff]
  %v210 = vld [vmem:[%s0 + $0x494] sm:$0xf]
  %v211 = vld [vmem:[%s0 + $0x498] sm:$0xff]
  %v212 = vld [vmem:[%s0 + $0x4a0] sm:$0xf]
  %v213 = vld [vmem:[%s0 + $0x4a4] sm:$0xff]
  %v214 = vld [vmem:[%s0 + $0x4ac] sm:$0xf]
  %v215 = vld [vmem:[%s0 + $0x4b0] sm:$0xff]
  %v216 = vld [vmem:[%s0 + $0x4b8] sm:$0xf]
  %v217 = vld [vmem:[%s0 + $0x4bc] sm:$0xff]
  %v218 = vld [vmem:[%s0 + $0x4c4] sm:$0xf]
  %v219 = vld [vmem:[%s0 + $0x4c8] sm:$0xff]
  %v220 = vld [vmem:[%s0 + $0x4d0] sm:$0xf]
  %v221 = vld [vmem:[%s0 + $0x4d4] sm:$0xff]
  %v222 = vld [vmem:[%s0 + $0x4dc] sm:$0xf]
  %v223 = vld [vmem:[%s0 + $0x4e0] sm:$0xff]
  %v224 = vld [vmem:[%s0 + $0x4e8] sm:$0xf]
  %v225 = vld [vmem:[%s0 + $0x4ec] sm:$0xff]
  %v226 = vld [vmem:[%s0 + $0x4f4] sm:$0xf]
  %v227 = vld [vmem:[%s0 + $0x4f8] sm:$0xff]
  %v228 = vld [vmem:[%s0 + $0x500] sm:$0xf]
  %v229 = vld [vmem:[%s0 + $0x504] sm:$0xff]
  %v230 = vld [vmem:[%s0 + $0x50c] sm:$0xf]
  %v231 = vld [vmem:[%s0 + $0x510] sm:$0xff]
  %v232 = vld [vmem:[%s0 + $0x518] sm:$0xf]
  %v233 = vld [vmem:[%s0 + $0x51c] sm:$0xff]
  %v234 = vld [vmem:[%s0 + $0x524] sm:$0xf]
  %v235 = vld [vmem:[%s0 + $0x528] sm:$0xff]
  %v236 = vld [vmem:[%s0 + $0x530] sm:$0xf]
  %v237 = vld [vmem:[%s0 + $0x534] sm:$0xff]
  %v238 = vld [vmem:[%s0 + $0x53c] sm:$0xf]
  %v239 = vld [vmem:[%s0 + $0x540] sm:$0xff]
  %v240 = vld [vmem:[%s0 + $0x548] sm:$0xf]
  %v241 = vld [vmem:[%s0 + $0x54c] sm:$0xff]
  %v242 = vld [vmem:[%s0 + $0x554] sm:$0xf]
  %v243 = vld [vmem:[%s0 + $0x558] sm:$0xff]
  %v244 = vld [vmem:[%s0 + $0x560] sm:$0xf]
  %v245 = vld [vmem:[%s0 + $0x564] sm:$0xff]
  %v246 = vld [vmem:[%s0 + $0x56c] sm:$0xf]
  %v247 = vld [vmem:[%s0 + $0x570] sm:$0xff]
  %v248 = vld [vmem:[%s0 + $0x578] sm:$0xf]
  %v249 = vld [vmem:[%s0 + $0x57c] sm:$0xff]
  %v250 = vld [vmem:[%s0 + $0x584] sm:$0xf]
  %v251 = vld [vmem:[%s0 + $0x588] sm:$0xff]
  %v252 = vld [vmem:[%s0 + $0x590] sm:$0xf]
  %v253 = vld [vmem:[%s0 + $0x594] sm:$0xff]
  %v254 = vld [vmem:[%s0 + $0x59c] sm:$0xf]
  %v255 = vld [vmem:[%s0 + $0x5a0] sm:$0xff]
  %v256 = vld [vmem:[%s0 + $0x5a8] sm:$0xf]
  %v257 = vld [vmem:[%s0 + $0x5ac] sm:$0xff]
  %v258 = vld [vmem:[%s0 + $0x5b4] sm:$0xf]
  %v259 = vld [vmem:[%s0 + $0x5b8] sm:$0xff]
  %v260 = vld [vmem:[%s0 + $0x5c0] sm:$0xf]
  %v261 = vld [vmem:[%s0 + $0x5c4] sm:$0xff]
  %v262 = vld [vmem:[%s0 + $0x5cc] sm:$0xf]
  %v263 = vld [vmem:[%s0 + $0x5d0] sm:$0xff]
  %v264 = vld [vmem:[%s0 + $0x5d8] sm:$0xf]
  %v265 = vld [vmem:[%s0 + $0x5dc] sm:$0xff]
  %v266 = vld [vmem:[%s0 + $0x5e4] sm:$0xf]
  %v267 = vld [vmem:[%s0 + $0x5e8] sm:$0xff]
  %v268 = vld [vmem:[%s0 + $0x5f0] sm:$0xf]
  %v269 = vld [vmem:[%s0 + $0x5f4] sm:$0xff]
  %v270 = vld [vmem:[%s0 + $0x5fc] sm:$0xf]
  %v271 = vld [vmem:[%s0 + $0x600] sm:$0xff]
  %v272 = vld [vmem:[%s0 + $0x608] sm:$0xf]
  %v273 = vld [vmem:[%s0 + $0x60c] sm:$0xff]
  %v274 = vld [vmem:[%s0 + $0x614] sm:$0xf]
  %v275 = vld [vmem:[%s0 + $0x618] sm:$0xff]
  %v276 = vld [vmem:[%s0 + $0x620] sm:$0xf]
  %v277 = vld [vmem:[%s0 + $0x624] sm:$0xff]
  %v278 = vld [vmem:[%s0 + $0x62c] sm:$0xf]
  %v279 = vld [vmem:[%s0 + $0x630] sm:$0xff]
  %v280 = vld [vmem:[%s0 + $0x638] sm:$0xf]
  %v281 = vld [vmem:[%s0 + $0x63c] sm:$0xff]
  %v282 = vld [vmem:[%s0 + $0x644] sm:$0xf]
  %v283 = vld [vmem:[%s0 + $0x648] sm:$0xff]
  %v284 = vld [vmem:[%s0 + $0x650] sm:$0xf]
  %v285 = vld [vmem:[%s0 + $0x654] sm:$0xff]
  %v286 = vld [vmem:[%s0 + $0x65c] sm:$0xf]
  %v287 = vld [vmem:[%s0 + $0x660] sm:$0xff]
  %v288 = vld [vmem:[%s0 + $0x668] sm:$0xf]
  %v289 = vld [vmem:[%s0 + $0x66c] sm:$0xff]
  %v290 = vld [vmem:[%s0 + $0x674] sm:$0xf]
  %v291 = vld [vmem:[%s0 + $0x678] sm:$0xff]
  %v292 = vld [vmem:[%s0 + $0x680] sm:$0xf]
  %v293 = vld [vmem:[%s0 + $0x684] sm:$0xff]
  %v294 = vld [vmem:[%s0 + $0x68c] sm:$0xf]
  %v295 = vld [vmem:[%s0 + $0x690] sm:$0xff]
  %v296 = vld [vmem:[%s0 + $0x698] sm:$0xf]
  %v297 = vld [vmem:[%s0 + $0x69c] sm:$0xff]
  %v298 = vld [vmem:[%s0 + $0x6a4] sm:$0xf]
  %v299 = vld [vmem:[%s0 + $0x6a8] sm:$0xff]
  %v300 = vld [vmem:[%s0 + $0x6b0] sm:$0xf]
  %v301 = vld [vmem:[%s0 + $0x6b4] sm:$0xff]
  %v302 = vld [vmem:[%s0 + $0x6bc] sm:$0xf]
  %v303 = vld [vmem:[%s1] sm:$0xf]
  %v304 = vld [vmem:[%s1 + $0x4] sm:$0xf]
  %v305 = vld [vmem:[%s1 + $0x8] sm:$0xf]
  %v306 = vld [vmem:[%s1 + $0xc] sm:$0xf]
  %v307 = vld [vmem:[%s1 + $0x10] sm:$0xf]
  %v308 = vld [vmem:[%s1 + $0x14] sm:$0xf]
  %v309 = vld [vmem:[%s1 + $0x18] sm:$0xf]
  %v310 = vld [vmem:[%s1 + $0x1c] sm:$0xf]
  %v311 = vld [vmem:[%s1 + $0x20] sm:$0xf]
  %v312 = vld [vmem:[%s1 + $0x24] sm:$0xf]
  %v313 = vld [vmem:[%s1 + $0x28] sm:$0xf]
  %v314 = vld [vmem:[%s1 + $0x2c] sm:$0xf]
  %v315 = vld [vmem:[%s1 + $0x30] sm:$0xf]
  %v316 = vld [vmem:[%s1 + $0x34] sm:$0xf]
  %v317 = vld [vmem:[%s1 + $0x38] sm:$0xf]
  %v318 = vld [vmem:[%s1 + $0x3c] sm:$0xf]
  %v319 = vld [vmem:[%s1 + $0x40] sm:$0xf]
  %v320 = vld [vmem:[%s1 + $0x44] sm:$0xf]
  %v321 = vld [vmem:[%s1 + $0x48] sm:$0xf]
  %v322 = vld [vmem:[%s1 + $0x4c] sm:$0xf]
  %v323 = vld [vmem:[%s1 + $0x50] sm:$0xf]
  %v324 = vld [vmem:[%s1 + $0x54] sm:$0xf]
  %v325 = vld [vmem:[%s1 + $0x58] sm:$0xf]
  %v326 = vld [vmem:[%s1 + $0x5c] sm:$0xf]
  %v327 = vld [vmem:[%s1 + $0x60] sm:$0xf]
  %v328 = vld [vmem:[%s1 + $0x64] sm:$0xf]
  %v329 = vld [vmem:[%s1 + $0x68] sm:$0xf]
  %v330 = vld [vmem:[%s1 + $0x6c] sm:$0xf]
  %v331 = vld [vmem:[%s1 + $0x70] sm:$0xf]
  %v332 = vld [vmem:[%s1 + $0x74] sm:$0xf]
  %v333 = vld [vmem:[%s1 + $0x78] sm:$0xf]
  %v334 = vld [vmem:[%s1 + $0x7c] sm:$0xf]
  %v335 = vld [vmem:[%s1 + $0x80] sm:$0xf]
  %v336 = vld [vmem:[%s1 + $0x84] sm:$0xf]
  %v337 = vld [vmem:[%s1 + $0x88] sm:$0xf]
  %v338 = vld [vmem:[%s1 + $0x8c] sm:$0xf]
  %v339 = vld [vmem:[%s2] sm:$0x1]
  %v341 = vperm.slane %v339, 0
  %v631 = vunpack.c.l.b16 %v15
  %v632 = vunpack.c.h.b16 %v15
  %v633 = vunpack.c.l.b16 %v16
  %v634 = vunpack.c.l.b16 %v17
  %v635 = vunpack.c.h.b16 %v17
  %v636 = vunpack.c.l.b16 %v18
  %v637 = vunpack.c.l.b16 %v19
  %v638 = vunpack.c.h.b16 %v19
  %v639 = vunpack.c.l.b16 %v20
  %v640 = vunpack.c.l.b16 %v21
  %v641 = vunpack.c.h.b16 %v21
  %v642 = vunpack.c.l.b16 %v22
  %v643 = vunpack.c.l.b16 %v23
  %v644 = vunpack.c.h.b16 %v23
  %v645 = vunpack.c.l.b16 %v24
  %v646 = vunpack.c.l.b16 %v25
  %v647 = vunpack.c.h.b16 %v25
  %v648 = vunpack.c.l.b16 %v26
  %v649 = vunpack.c.l.b16 %v27
  %v650 = vunpack.c.h.b16 %v27
  %v651 = vunpack.c.l.b16 %v28
  %v652 = vunpack.c.l.b16 %v29
  %v653 = vunpack.c.h.b16 %v29
  %v654 = vunpack.c.l.b16 %v30
  %v655 = vunpack.c.l.b16 %v31
  %v656 = vunpack.c.h.b16 %v31
  %v657 = vunpack.c.l.b16 %v32
  %v658 = vunpack.c.l.b16 %v33
  %v659 = vunpack.c.h.b16 %v33
  %v660 = vunpack.c.l.b16 %v34
  %v661 = vunpack.c.l.b16 %v35
  %v662 = vunpack.c.h.b16 %v35
  %v663 = vunpack.c.l.b16 %v36
  %v664 = vunpack.c.l.b16 %v37
  %v665 = vunpack.c.h.b16 %v37
  %v666 = vunpack.c.l.b16 %v38
  %v667 = vunpack.c.l.b16 %v39
  %v668 = vunpack.c.h.b16 %v39
  %v669 = vunpack.c.l.b16 %v40
  %v670 = vunpack.c.l.b16 %v41
  %v671 = vunpack.c.h.b16 %v41
  %v672 = vunpack.c.l.b16 %v42
  %v673 = vunpack.c.l.b16 %v43
  %v674 = vunpack.c.h.b16 %v43
  %v675 = vunpack.c.l.b16 %v44
  %v676 = vunpack.c.l.b16 %v45
  %v677 = vunpack.c.h.b16 %v45
  %v678 = vunpack.c.l.b16 %v46
  %v679 = vunpack.c.l.b16 %v47
  %v680 = vunpack.c.h.b16 %v47
  %v681 = vunpack.c.l.b16 %v48
  %v682 = vunpack.c.l.b16 %v49
  %v683 = vunpack.c.h.b16 %v49
  %v684 = vunpack.c.l.b16 %v50
  %v685 = vunpack.c.l.b16 %v51
  %v686 = vunpack.c.h.b16 %v51
  %v687 = vunpack.c.l.b16 %v52
  %v688 = vunpack.c.l.b16 %v53
  %v689 = vunpack.c.h.b16 %v53
  %v690 = vunpack.c.l.b16 %v54
  %v691 = vunpack.c.l.b16 %v55
  %v692 = vunpack.c.h.b16 %v55
  %v693 = vunpack.c.l.b16 %v56
  %v694 = vunpack.c.l.b16 %v57
  %v695 = vunpack.c.h.b16 %v57
  %v696 = vunpack.c.l.b16 %v58
  %v697 = vunpack.c.l.b16 %v59
  %v698 = vunpack.c.h.b16 %v59
  %v699 = vunpack.c.l.b16 %v60
  %v700 = vunpack.c.l.b16 %v61
  %v701 = vunpack.c.h.b16 %v61
  %v702 = vunpack.c.l.b16 %v62
  %v703 = vunpack.c.l.b16 %v63
  %v704 = vunpack.c.h.b16 %v63
  %v705 = vunpack.c.l.b16 %v64
  %v706 = vunpack.c.l.b16 %v65
  %v707 = vunpack.c.h.b16 %v65
  %v708 = vunpack.c.l.b16 %v66
  %v709 = vunpack.c.l.b16 %v67
  %v710 = vunpack.c.h.b16 %v67
  %v711 = vunpack.c.l.b16 %v68
  %v712 = vunpack.c.l.b16 %v69
  %v713 = vunpack.c.h.b16 %v69
  %v714 = vunpack.c.l.b16 %v70
  %v715 = vunpack.c.l.b16 %v71
  %v716 = vunpack.c.h.b16 %v71
  %v717 = vunpack.c.l.b16 %v72
  %v718 = vunpack.c.l.b16 %v73
  %v719 = vunpack.c.h.b16 %v73
  %v720 = vunpack.c.l.b16 %v74
  %v721 = vunpack.c.l.b16 %v75
  %v722 = vunpack.c.h.b16 %v75
  %v723 = vunpack.c.l.b16 %v76
  %v724 = vunpack.c.l.b16 %v77
  %v725 = vunpack.c.h.b16 %v77
  %v726 = vunpack.c.l.b16 %v78
  %v727 = vunpack.c.l.b16 %v79
  %v728 = vunpack.c.h.b16 %v79
  %v729 = vunpack.c.l.b16 %v80
  %v730 = vunpack.c.l.b16 %v81
  %v731 = vunpack.c.h.b16 %v81
  %v732 = vunpack.c.l.b16 %v82
  %v733 = vunpack.c.l.b16 %v83
  %v734 = vunpack.c.h.b16 %v83
  %v735 = vunpack.c.l.b16 %v84
  %v736 = vunpack.c.l.b16 %v85
  %v737 = vunpack.c.h.b16 %v85
  %v738 = vunpack.c.l.b16 %v86
  %v739 = vunpack.c.l.b16 %v87
  %v740 = vunpack.c.h.b16 %v87
  %v741 = vunpack.c.l.b16 %v88
  %v742 = vunpack.c.l.b16 %v89
  %v743 = vunpack.c.h.b16 %v89
  %v744 = vunpack.c.l.b16 %v90
  %v745 = vunpack.c.l.b16 %v91
  %v746 = vunpack.c.h.b16 %v91
  %v747 = vunpack.c.l.b16 %v92
  %v748 = vunpack.c.l.b16 %v93
  %v749 = vunpack.c.h.b16 %v93
  %v750 = vunpack.c.l.b16 %v94
  %v751 = vunpack.c.l.b16 %v95
  %v752 = vunpack.c.h.b16 %v95
  %v753 = vunpack.c.l.b16 %v96
  %v754 = vunpack.c.l.b16 %v97
  %v755 = vunpack.c.h.b16 %v97
  %v756 = vunpack.c.l.b16 %v98
  %v757 = vunpack.c.l.b16 %v99
  %v758 = vunpack.c.h.b16 %v99
  %v759 = vunpack.c.l.b16 %v100
  %v760 = vunpack.c.l.b16 %v101
  %v761 = vunpack.c.h.b16 %v101
  %v762 = vunpack.c.l.b16 %v102
  %v763 = vunpack.c.l.b16 %v103
  %v764 = vunpack.c.h.b16 %v103
  %v765 = vunpack.c.l.b16 %v104
  %v766 = vunpack.c.l.b16 %v105
  %v767 = vunpack.c.h.b16 %v105
  %v768 = vunpack.c.l.b16 %v106
  %v769 = vunpack.c.l.b16 %v107
  %v770 = vunpack.c.h.b16 %v107
  %v771 = vunpack.c.l.b16 %v108
  %v772 = vunpack.c.l.b16 %v109
  %v773 = vunpack.c.h.b16 %v109
  %v774 = vunpack.c.l.b16 %v110
  %v775 = vunpack.c.l.b16 %v111
  %v776 = vunpack.c.h.b16 %v111
  %v777 = vunpack.c.l.b16 %v112
  %v778 = vunpack.c.l.b16 %v113
  %v779 = vunpack.c.h.b16 %v113
  %v780 = vunpack.c.l.b16 %v114
  %v781 = vunpack.c.l.b16 %v115
  %v782 = vunpack.c.h.b16 %v115
  %v783 = vunpack.c.l.b16 %v116
  %v784 = vunpack.c.l.b16 %v117
  %v785 = vunpack.c.h.b16 %v117
  %v786 = vunpack.c.l.b16 %v118
  %v787 = vunpack.c.l.b16 %v119
  %v788 = vunpack.c.h.b16 %v119
  %v789 = vunpack.c.l.b16 %v120
  %v790 = vunpack.c.l.b16 %v121
  %v791 = vunpack.c.h.b16 %v121
  %v792 = vunpack.c.l.b16 %v122
  %v793 = vunpack.c.l.b16 %v123
  %v794 = vunpack.c.h.b16 %v123
  %v795 = vunpack.c.l.b16 %v124
  %v796 = vunpack.c.l.b16 %v125
  %v797 = vunpack.c.h.b16 %v125
  %v798 = vunpack.c.l.b16 %v126
  %v799 = vunpack.c.l.b16 %v127
  %v800 = vunpack.c.h.b16 %v127
  %v801 = vunpack.c.l.b16 %v128
  %v802 = vunpack.c.l.b16 %v129
  %v803 = vunpack.c.h.b16 %v129
  %v804 = vunpack.c.l.b16 %v130
  %v805 = vunpack.c.l.b16 %v131
  %v806 = vunpack.c.h.b16 %v131
  %v807 = vunpack.c.l.b16 %v132
  %v808 = vunpack.c.l.b16 %v133
  %v809 = vunpack.c.h.b16 %v133
  %v810 = vunpack.c.l.b16 %v134
  %v811 = vunpack.c.l.b16 %v135
  %v812 = vunpack.c.h.b16 %v135
  %v813 = vunpack.c.l.b16 %v136
  %v814 = vunpack.c.l.b16 %v137
  %v815 = vunpack.c.h.b16 %v137
  %v816 = vunpack.c.l.b16 %v138
  %v817 = vunpack.c.l.b16 %v139
  %v818 = vunpack.c.h.b16 %v139
  %v819 = vunpack.c.l.b16 %v140
  %v820 = vunpack.c.l.b16 %v141
  %v821 = vunpack.c.h.b16 %v141
  %v822 = vunpack.c.l.b16 %v142
  %v823 = vunpack.c.l.b16 %v143
  %v824 = vunpack.c.h.b16 %v143
  %v825 = vunpack.c.l.b16 %v144
  %v826 = vunpack.c.l.b16 %v145
  %v827 = vunpack.c.h.b16 %v145
  %v828 = vunpack.c.l.b16 %v146
  %v829 = vunpack.c.l.b16 %v147
  %v830 = vunpack.c.h.b16 %v147
  %v831 = vunpack.c.l.b16 %v148
  %v832 = vunpack.c.l.b16 %v149
  %v833 = vunpack.c.h.b16 %v149
  %v834 = vunpack.c.l.b16 %v150
  %v835 = vunpack.c.l.b16 %v151
  %v836 = vunpack.c.h.b16 %v151
  %v837 = vunpack.c.l.b16 %v152
  %v838 = vunpack.c.l.b16 %v153
  %v839 = vunpack.c.h.b16 %v153
  %v840 = vunpack.c.l.b16 %v154
  %v841 = vunpack.c.l.b16 %v155
  %v842 = vunpack.c.h.b16 %v155
  %v843 = vunpack.c.l.b16 %v156
  %v844 = vunpack.c.l.b16 %v157
  %v845 = vunpack.c.h.b16 %v157
  %v846 = vunpack.c.l.b16 %v158
  %v847 = vunpack.c.l.b16 %v159
  %v848 = vunpack.c.h.b16 %v159
  %v849 = vunpack.c.l.b16 %v160
  %v850 = vunpack.c.l.b16 %v161
  %v851 = vunpack.c.h.b16 %v161
  %v852 = vunpack.c.l.b16 %v162
  %v853 = vunpack.c.l.b16 %v163
  %v854 = vunpack.c.h.b16 %v163
  %v855 = vunpack.c.l.b16 %v164
  %v856 = vunpack.c.l.b16 %v165
  %v857 = vunpack.c.h.b16 %v165
  %v858 = vunpack.c.l.b16 %v166
  %v859 = vunpack.c.l.b16 %v167
  %v860 = vunpack.c.h.b16 %v167
  %v861 = vunpack.c.l.b16 %v168
  %v862 = vunpack.c.l.b16 %v169
  %v863 = vunpack.c.h.b16 %v169
  %v864 = vunpack.c.l.b16 %v170
  %v865 = vunpack.c.l.b16 %v171
  %v866 = vunpack.c.h.b16 %v171
  %v867 = vunpack.c.l.b16 %v172
  %v868 = vunpack.c.l.b16 %v173
  %v869 = vunpack.c.h.b16 %v173
  %v870 = vunpack.c.l.b16 %v174
  %v871 = vunpack.c.l.b16 %v175
  %v872 = vunpack.c.h.b16 %v175
  %v873 = vunpack.c.l.b16 %v176
  %v874 = vunpack.c.l.b16 %v177
  %v875 = vunpack.c.h.b16 %v177
  %v876 = vunpack.c.l.b16 %v178
  %v877 = vunpack.c.l.b16 %v179
  %v878 = vunpack.c.h.b16 %v179
  %v879 = vunpack.c.l.b16 %v180
  %v880 = vunpack.c.l.b16 %v181
  %v881 = vunpack.c.h.b16 %v181
  %v882 = vunpack.c.l.b16 %v182
  %v883 = vunpack.c.l.b16 %v183
  %v884 = vunpack.c.h.b16 %v183
  %v885 = vunpack.c.l.b16 %v184
  %v886 = vunpack.c.l.b16 %v185
  %v887 = vunpack.c.h.b16 %v185
  %v888 = vunpack.c.l.b16 %v186
  %v889 = vunpack.c.l.b16 %v187
  %v890 = vunpack.c.h.b16 %v187
  %v891 = vunpack.c.l.b16 %v188
  %v892 = vunpack.c.l.b16 %v189
  %v893 = vunpack.c.h.b16 %v189
  %v894 = vunpack.c.l.b16 %v190
  %v895 = vunpack.c.l.b16 %v191
  %v896 = vunpack.c.h.b16 %v191
  %v897 = vunpack.c.l.b16 %v192
  %v898 = vunpack.c.l.b16 %v193
  %v899 = vunpack.c.h.b16 %v193
  %v900 = vunpack.c.l.b16 %v194
  %v901 = vunpack.c.l.b16 %v195
  %v902 = vunpack.c.h.b16 %v195
  %v903 = vunpack.c.l.b16 %v196
  %v904 = vunpack.c.l.b16 %v197
  %v905 = vunpack.c.h.b16 %v197
  %v906 = vunpack.c.l.b16 %v198
  %v907 = vunpack.c.l.b16 %v199
  %v908 = vunpack.c.h.b16 %v199
  %v909 = vunpack.c.l.b16 %v200
  %v910 = vunpack.c.l.b16 %v201
  %v911 = vunpack.c.h.b16 %v201
  %v912 = vunpack.c.l.b16 %v202
  %v913 = vunpack.c.l.b16 %v203
  %v914 = vunpack.c.h.b16 %v203
  %v915 = vunpack.c.l.b16 %v204
  %v916 = vunpack.c.l.b16 %v205
  %v917 = vunpack.c.h.b16 %v205
  %v918 = vunpack.c.l.b16 %v206
  %v919 = vunpack.c.l.b16 %v207
  %v920 = vunpack.c.h.b16 %v207
  %v921 = vunpack.c.l.b16 %v208
  %v922 = vunpack.c.l.b16 %v209
  %v923 = vunpack.c.h.b16 %v209
  %v924 = vunpack.c.l.b16 %v210
  %v925 = vunpack.c.l.b16 %v211
  %v926 = vunpack.c.h.b16 %v211
  %v927 = vunpack.c.l.b16 %v212
  %v928 = vunpack.c.l.b16 %v213
  %v929 = vunpack.c.h.b16 %v213
  %v930 = vunpack.c.l.b16 %v214
  %v931 = vunpack.c.l.b16 %v215
  %v932 = vunpack.c.h.b16 %v215
  %v933 = vunpack.c.l.b16 %v216
  %v934 = vunpack.c.l.b16 %v217
  %v935 = vunpack.c.h.b16 %v217
  %v936 = vunpack.c.l.b16 %v218
  %v937 = vunpack.c.l.b16 %v219
  %v938 = vunpack.c.h.b16 %v219
  %v939 = vunpack.c.l.b16 %v220
  %v940 = vunpack.c.l.b16 %v221
  %v941 = vunpack.c.h.b16 %v221
  %v942 = vunpack.c.l.b16 %v222
  %v943 = vunpack.c.l.b16 %v223
  %v944 = vunpack.c.h.b16 %v223
  %v945 = vunpack.c.l.b16 %v224
  %v946 = vunpack.c.l.b16 %v225
  %v947 = vunpack.c.h.b16 %v225
  %v948 = vunpack.c.l.b16 %v226
  %v949 = vunpack.c.l.b16 %v227
  %v950 = vunpack.c.h.b16 %v227
  %v951 = vunpack.c.l.b16 %v228
  %v952 = vunpack.c.l.b16 %v229
  %v953 = vunpack.c.h.b16 %v229
  %v954 = vunpack.c.l.b16 %v230
  %v955 = vunpack.c.l.b16 %v231
  %v956 = vunpack.c.h.b16 %v231
  %v957 = vunpack.c.l.b16 %v232
  %v958 = vunpack.c.l.b16 %v233
  %v959 = vunpack.c.h.b16 %v233
  %v960 = vunpack.c.l.b16 %v234
  %v961 = vunpack.c.l.b16 %v235
  %v962 = vunpack.c.h.b16 %v235
  %v963 = vunpack.c.l.b16 %v236
  %v964 = vunpack.c.l.b16 %v237
  %v965 = vunpack.c.h.b16 %v237
  %v966 = vunpack.c.l.b16 %v238
  %v967 = vunpack.c.l.b16 %v239
  %v968 = vunpack.c.h.b16 %v239
  %v969 = vunpack.c.l.b16 %v240
  %v970 = vunpack.c.l.b16 %v241
  %v971 = vunpack.c.h.b16 %v241
  %v972 = vunpack.c.l.b16 %v242
  %v973 = vunpack.c.l.b16 %v243
  %v974 = vunpack.c.h.b16 %v243
  %v975 = vunpack.c.l.b16 %v244
  %v976 = vunpack.c.l.b16 %v245
  %v977 = vunpack.c.h.b16 %v245
  %v978 = vunpack.c.l.b16 %v246
  %v979 = vunpack.c.l.b16 %v247
  %v980 = vunpack.c.h.b16 %v247
  %v981 = vunpack.c.l.b16 %v248
  %v982 = vunpack.c.l.b16 %v249
  %v983 = vunpack.c.h.b16 %v249
  %v984 = vunpack.c.l.b16 %v250
  %v985 = vunpack.c.l.b16 %v251
  %v986 = vunpack.c.h.b16 %v251
  %v987 = vunpack.c.l.b16 %v252
  %v988 = vunpack.c.l.b16 %v253
  %v989 = vunpack.c.h.b16 %v253
  %v990 = vunpack.c.l.b16 %v254
  %v991 = vunpack.c.l.b16 %v255
  %v992 = vunpack.c.h.b16 %v255
  %v993 = vunpack.c.l.b16 %v256
  %v994 = vunpack.c.l.b16 %v257
  %v995 = vunpack.c.h.b16 %v257
  %v996 = vunpack.c.l.b16 %v258
  %v997 = vunpack.c.l.b16 %v259
  %v998 = vunpack.c.h.b16 %v259
  %v999 = vunpack.c.l.b16 %v260
  %v1000 = vunpack.c.l.b16 %v261
  %v1001 = vunpack.c.h.b16 %v261
  %v1002 = vunpack.c.l.b16 %v262
  %v1003 = vunpack.c.l.b16 %v263
  %v1004 = vunpack.c.h.b16 %v263
  %v1005 = vunpack.c.l.b16 %v264
  %v1006 = vunpack.c.l.b16 %v265
  %v1007 = vunpack.c.h.b16 %v265
  %v1008 = vunpack.c.l.b16 %v266
  %v1009 = vunpack.c.l.b16 %v267
  %v1010 = vunpack.c.h.b16 %v267
  %v1011 = vunpack.c.l.b16 %v268
  %v1012 = vunpack.c.l.b16 %v269
  %v1013 = vunpack.c.h.b16 %v269
  %v1014 = vunpack.c.l.b16 %v270
  %v1015 = vunpack.c.l.b16 %v271
  %v1016 = vunpack.c.h.b16 %v271
  %v1017 = vunpack.c.l.b16 %v272
  %v1018 = vunpack.c.l.b16 %v273
  %v1019 = vunpack.c.h.b16 %v273
  %v1020 = vunpack.c.l.b16 %v274
  %v1021 = vunpack.c.l.b16 %v275
  %v1022 = vunpack.c.h.b16 %v275
  %v1023 = vunpack.c.l.b16 %v276
  %v1024 = vunpack.c.l.b16 %v277
  %v1025 = vunpack.c.h.b16 %v277
  %v1026 = vunpack.c.l.b16 %v278
  %v1027 = vunpack.c.l.b16 %v279
  %v1028 = vunpack.c.h.b16 %v279
  %v1029 = vunpack.c.l.b16 %v280
  %v1030 = vunpack.c.l.b16 %v281
  %v1031 = vunpack.c.h.b16 %v281
  %v1032 = vunpack.c.l.b16 %v282
  %v1033 = vunpack.c.l.b16 %v283
  %v1034 = vunpack.c.h.b16 %v283
  %v1035 = vunpack.c.l.b16 %v284
  %v1036 = vunpack.c.l.b16 %v285
  %v1037 = vunpack.c.h.b16 %v285
  %v1038 = vunpack.c.l.b16 %v286
  %v1039 = vunpack.c.l.b16 %v287
  %v1040 = vunpack.c.h.b16 %v287
  %v1041 = vunpack.c.l.b16 %v288
  %v1042 = vunpack.c.l.b16 %v289
  %v1043 = vunpack.c.h.b16 %v289
  %v1044 = vunpack.c.l.b16 %v290
  %v1045 = vunpack.c.l.b16 %v291
  %v1046 = vunpack.c.h.b16 %v291
  %v1047 = vunpack.c.l.b16 %v292
  %v1048 = vunpack.c.l.b16 %v293
  %v1049 = vunpack.c.h.b16 %v293
  %v1050 = vunpack.c.l.b16 %v294
  %v1051 = vunpack.c.l.b16 %v295
  %v1052 = vunpack.c.h.b16 %v295
  %v1053 = vunpack.c.l.b16 %v296
  %v1054 = vunpack.c.l.b16 %v297
  %v1055 = vunpack.c.h.b16 %v297
  %v1056 = vunpack.c.l.b16 %v298
  %v1057 = vunpack.c.l.b16 %v299
  %v1058 = vunpack.c.h.b16 %v299
  %v1059 = vunpack.c.l.b16 %v300
  %v1060 = vunpack.c.l.b16 %v301
  %v1061 = vunpack.c.h.b16 %v301
  %v1062 = vunpack.c.l.b16 %v302
  %v1063 = vpack.c.b16 %v634, %v631
  %v1064 = vpack.c.b16 %v635, %v632
  %v1065 = vpack.c.b16 %v636, %v633
  %v1066 = vpack.c.b16 %v640, %v637
  %v1067 = vpack.c.b16 %v641, %v638
  %v1068 = vpack.c.b16 %v642, %v639
  %v1069 = vpack.c.b16 %v646, %v643
  %v1070 = vpack.c.b16 %v647, %v644
  %v1071 = vpack.c.b16 %v648, %v645
  %v1072 = vpack.c.b16 %v652, %v649
  %v1073 = vpack.c.b16 %v653, %v650
  %v1074 = vpack.c.b16 %v654, %v651
  %v1075 = vpack.c.b16 %v658, %v655
  %v1076 = vpack.c.b16 %v659, %v656
  %v1077 = vpack.c.b16 %v660, %v657
  %v1078 = vpack.c.b16 %v664, %v661
  %v1079 = vpack.c.b16 %v665, %v662
  %v1080 = vpack.c.b16 %v666, %v663
  %v1081 = vpack.c.b16 %v670, %v667
  %v1082 = vpack.c.b16 %v671, %v668
  %v1083 = vpack.c.b16 %v672, %v669
  %v1084 = vpack.c.b16 %v676, %v673
  %v1085 = vpack.c.b16 %v677, %v674
  %v1086 = vpack.c.b16 %v678, %v675
  %v1087 = vpack.c.b16 %v682, %v679
  %v1088 = vpack.c.b16 %v683, %v680
  %v1089 = vpack.c.b16 %v684, %v681
  %v1090 = vpack.c.b16 %v688, %v685
  %v1091 = vpack.c.b16 %v689, %v686
  %v1092 = vpack.c.b16 %v690, %v687
  %v1093 = vpack.c.b16 %v694, %v691
  %v1094 = vpack.c.b16 %v695, %v692
  %v1095 = vpack.c.b16 %v696, %v693
  %v1096 = vpack.c.b16 %v700, %v697
  %v1097 = vpack.c.b16 %v701, %v698
  %v1098 = vpack.c.b16 %v702, %v699
  %v1099 = vpack.c.b16 %v706, %v703
  %v1100 = vpack.c.b16 %v707, %v704
  %v1101 = vpack.c.b16 %v708, %v705
  %v1102 = vpack.c.b16 %v712, %v709
  %v1103 = vpack.c.b16 %v713, %v710
  %v1104 = vpack.c.b16 %v714, %v711
  %v1105 = vpack.c.b16 %v718, %v715
  %v1106 = vpack.c.b16 %v719, %v716
  %v1107 = vpack.c.b16 %v720, %v717
  %v1108 = vpack.c.b16 %v724, %v721
  %v1109 = vpack.c.b16 %v725, %v722
  %v1110 = vpack.c.b16 %v726, %v723
  %v1111 = vpack.c.b16 %v730, %v727
  %v1112 = vpack.c.b16 %v731, %v728
  %v1113 = vpack.c.b16 %v732, %v729
  %v1114 = vpack.c.b16 %v736, %v733
  %v1115 = vpack.c.b16 %v737, %v734
  %v1116 = vpack.c.b16 %v738, %v735
  %v1117 = vpack.c.b16 %v742, %v739
  %v1118 = vpack.c.b16 %v743, %v740
  %v1119 = vpack.c.b16 %v744, %v741
  %v1120 = vpack.c.b16 %v748, %v745
  %v1121 = vpack.c.b16 %v749, %v746
  %v1122 = vpack.c.b16 %v750, %v747
  %v1123 = vpack.c.b16 %v754, %v751
  %v1124 = vpack.c.b16 %v755, %v752
  %v1125 = vpack.c.b16 %v756, %v753
  %v1126 = vpack.c.b16 %v760, %v757
  %v1127 = vpack.c.b16 %v761, %v758
  %v1128 = vpack.c.b16 %v762, %v759
  %v1129 = vpack.c.b16 %v766, %v763
  %v1130 = vpack.c.b16 %v767, %v764
  %v1131 = vpack.c.b16 %v768, %v765
  %v1132 = vpack.c.b16 %v772, %v769
  %v1133 = vpack.c.b16 %v773, %v770
  %v1134 = vpack.c.b16 %v774, %v771
  %v1135 = vpack.c.b16 %v778, %v775
  %v1136 = vpack.c.b16 %v779, %v776
  %v1137 = vpack.c.b16 %v780, %v777
  %v1138 = vpack.c.b16 %v784, %v781
  %v1139 = vpack.c.b16 %v785, %v782
  %v1140 = vpack.c.b16 %v786, %v783
  %v1141 = vpack.c.b16 %v790, %v787
  %v1142 = vpack.c.b16 %v791, %v788
  %v1143 = vpack.c.b16 %v792, %v789
  %v1144 = vpack.c.b16 %v796, %v793
  %v1145 = vpack.c.b16 %v797, %v794
  %v1146 = vpack.c.b16 %v798, %v795
  %v1147 = vpack.c.b16 %v802, %v799
  %v1148 = vpack.c.b16 %v803, %v800
  %v1149 = vpack.c.b16 %v804, %v801
  %v1150 = vpack.c.b16 %v808, %v805
  %v1151 = vpack.c.b16 %v809, %v806
  %v1152 = vpack.c.b16 %v810, %v807
  %v1153 = vpack.c.b16 %v814, %v811
  %v1154 = vpack.c.b16 %v815, %v812
  %v1155 = vpack.c.b16 %v816, %v813
  %v1156 = vpack.c.b16 %v820, %v817
  %v1157 = vpack.c.b16 %v821, %v818
  %v1158 = vpack.c.b16 %v822, %v819
  %v1159 = vpack.c.b16 %v826, %v823
  %v1160 = vpack.c.b16 %v827, %v824
  %v1161 = vpack.c.b16 %v828, %v825
  %v1162 = vpack.c.b16 %v832, %v829
  %v1163 = vpack.c.b16 %v833, %v830
  %v1164 = vpack.c.b16 %v834, %v831
  %v1165 = vpack.c.b16 %v838, %v835
  %v1166 = vpack.c.b16 %v839, %v836
  %v1167 = vpack.c.b16 %v840, %v837
  %v1168 = vpack.c.b16 %v844, %v841
  %v1169 = vpack.c.b16 %v845, %v842
  %v1170 = vpack.c.b16 %v846, %v843
  %v1171 = vpack.c.b16 %v850, %v847
  %v1172 = vpack.c.b16 %v851, %v848
  %v1173 = vpack.c.b16 %v852, %v849
  %v1174 = vpack.c.b16 %v856, %v853
  %v1175 = vpack.c.b16 %v857, %v854
  %v1176 = vpack.c.b16 %v858, %v855
  %v1177 = vpack.c.b16 %v862, %v859
  %v1178 = vpack.c.b16 %v863, %v860
  %v1179 = vpack.c.b16 %v864, %v861
  %v1180 = vpack.c.b16 %v868, %v865
  %v1181 = vpack.c.b16 %v869, %v866
  %v1182 = vpack.c.b16 %v870, %v867
  %v1183 = vpack.c.b16 %v874, %v871
  %v1184 = vpack.c.b16 %v875, %v872
  %v1185 = vpack.c.b16 %v876, %v873
  %v1186 = vpack.c.b16 %v880, %v877
  %v1187 = vpack.c.b16 %v881, %v878
  %v1188 = vpack.c.b16 %v882, %v879
  %v1189 = vpack.c.b16 %v886, %v883
  %v1190 = vpack.c.b16 %v887, %v884
  %v1191 = vpack.c.b16 %v888, %v885
  %v1192 = vpack.c.b16 %v892, %v889
  %v1193 = vpack.c.b16 %v893, %v890
  %v1194 = vpack.c.b16 %v894, %v891
  %v1195 = vpack.c.b16 %v898, %v895
  %v1196 = vpack.c.b16 %v899, %v896
  %v1197 = vpack.c.b16 %v900, %v897
  %v1198 = vpack.c.b16 %v904, %v901
  %v1199 = vpack.c.b16 %v905, %v902
  %v1200 = vpack.c.b16 %v906, %v903
  %v1201 = vpack.c.b16 %v910, %v907
  %v1202 = vpack.c.b16 %v911, %v908
  %v1203 = vpack.c.b16 %v912, %v909
  %v1204 = vpack.c.b16 %v916, %v913
  %v1205 = vpack.c.b16 %v917, %v914
  %v1206 = vpack.c.b16 %v918, %v915
  %v1207 = vpack.c.b16 %v922, %v919
  %v1208 = vpack.c.b16 %v923, %v920
  %v1209 = vpack.c.b16 %v924, %v921
  %v1210 = vpack.c.b16 %v928, %v925
  %v1211 = vpack.c.b16 %v929, %v926
  %v1212 = vpack.c.b16 %v930, %v927
  %v1213 = vpack.c.b16 %v934, %v931
  %v1214 = vpack.c.b16 %v935, %v932
  %v1215 = vpack.c.b16 %v936, %v933
  %v1216 = vpack.c.b16 %v940, %v937
  %v1217 = vpack.c.b16 %v941, %v938
  %v1218 = vpack.c.b16 %v942, %v939
  %v1219 = vpack.c.b16 %v946, %v943
  %v1220 = vpack.c.b16 %v947, %v944
  %v1221 = vpack.c.b16 %v948, %v945
  %v1222 = vpack.c.b16 %v952, %v949
  %v1223 = vpack.c.b16 %v953, %v950
  %v1224 = vpack.c.b16 %v954, %v951
  %v1225 = vpack.c.b16 %v958, %v955
  %v1226 = vpack.c.b16 %v959, %v956
  %v1227 = vpack.c.b16 %v960, %v957
  %v1228 = vpack.c.b16 %v964, %v961
  %v1229 = vpack.c.b16 %v965, %v962
  %v1230 = vpack.c.b16 %v966, %v963
  %v1231 = vpack.c.b16 %v970, %v967
  %v1232 = vpack.c.b16 %v971, %v968
  %v1233 = vpack.c.b16 %v972, %v969
  %v1234 = vpack.c.b16 %v976, %v973
  %v1235 = vpack.c.b16 %v977, %v974
  %v1236 = vpack.c.b16 %v978, %v975
  %v1237 = vpack.c.b16 %v982, %v979
  %v1238 = vpack.c.b16 %v983, %v980
  %v1239 = vpack.c.b16 %v984, %v981
  %v1240 = vpack.c.b16 %v988, %v985
  %v1241 = vpack.c.b16 %v989, %v986
  %v1242 = vpack.c.b16 %v990, %v987
  %v1243 = vpack.c.b16 %v994, %v991
  %v1244 = vpack.c.b16 %v995, %v992
  %v1245 = vpack.c.b16 %v996, %v993
  %v1246 = vpack.c.b16 %v1000, %v997
  %v1247 = vpack.c.b16 %v1001, %v998
  %v1248 = vpack.c.b16 %v1002, %v999
  %v1249 = vpack.c.b16 %v1006, %v1003
  %v1250 = vpack.c.b16 %v1007, %v1004
  %v1251 = vpack.c.b16 %v1008, %v1005
  %v1252 = vpack.c.b16 %v1012, %v1009
  %v1253 = vpack.c.b16 %v1013, %v1010
  %v1254 = vpack.c.b16 %v1014, %v1011
  %v1255 = vpack.c.b16 %v1018, %v1015
  %v1256 = vpack.c.b16 %v1019, %v1016
  %v1257 = vpack.c.b16 %v1020, %v1017
  %v1258 = vpack.c.b16 %v1024, %v1021
  %v1259 = vpack.c.b16 %v1025, %v1022
  %v1260 = vpack.c.b16 %v1026, %v1023
  %v1261 = vpack.c.b16 %v1030, %v1027
  %v1262 = vpack.c.b16 %v1031, %v1028
  %v1263 = vpack.c.b16 %v1032, %v1029
  %v1264 = vpack.c.b16 %v1036, %v1033
  %v1265 = vpack.c.b16 %v1037, %v1034
  %v1266 = vpack.c.b16 %v1038, %v1035
  %v1267 = vpack.c.b16 %v1042, %v1039
  %v1268 = vpack.c.b16 %v1043, %v1040
  %v1269 = vpack.c.b16 %v1044, %v1041
  %v1270 = vpack.c.b16 %v1048, %v1045
  %v1271 = vpack.c.b16 %v1049, %v1046
  %v1272 = vpack.c.b16 %v1050, %v1047
  %v1273 = vpack.c.b16 %v1054, %v1051
  %v1274 = vpack.c.b16 %v1055, %v1052
  %v1275 = vpack.c.b16 %v1056, %v1053
  %v1276 = vpack.c.b16 %v1060, %v1057
  %v1277 = vpack.c.b16 %v1061, %v1058
  %v1278 = vpack.c.b16 %v1062, %v1059
  %v1459 = vunpack.c.l.b16 %v303
  %v1460 = vunpack.c.l.b16 %v304
  %v1461 = vunpack.c.l.b16 %v305
  %v1462 = vunpack.c.l.b16 %v306
  %v1463 = vunpack.c.l.b16 %v307
  %v1464 = vunpack.c.l.b16 %v308
  %v1465 = vunpack.c.l.b16 %v309
  %v1466 = vunpack.c.l.b16 %v310
  %v1467 = vunpack.c.l.b16 %v311
  %v1468 = vunpack.c.l.b16 %v312
  %v1469 = vunpack.c.l.b16 %v313
  %v1470 = vunpack.c.l.b16 %v314
  %v1471 = vunpack.c.l.b16 %v315
  %v1472 = vunpack.c.l.b16 %v316
  %v1473 = vunpack.c.l.b16 %v317
  %v1474 = vunpack.c.l.b16 %v318
  %v1475 = vunpack.c.l.b16 %v319
  %v1476 = vunpack.c.l.b16 %v320
  %v1477 = vunpack.c.l.b16 %v321
  %v1478 = vunpack.c.l.b16 %v322
  %v1479 = vunpack.c.l.b16 %v323
  %v1480 = vunpack.c.l.b16 %v324
  %v1481 = vunpack.c.l.b16 %v325
  %v1482 = vunpack.c.l.b16 %v326
  %v1483 = vunpack.c.l.b16 %v327
  %v1484 = vunpack.c.l.b16 %v328
  %v1485 = vunpack.c.l.b16 %v329
  %v1486 = vunpack.c.l.b16 %v330
  %v1487 = vunpack.c.l.b16 %v331
  %v1488 = vunpack.c.l.b16 %v332
  %v1489 = vunpack.c.l.b16 %v333
  %v1490 = vunpack.c.l.b16 %v334
  %v1491 = vunpack.c.l.b16 %v335
  %v1492 = vunpack.c.l.b16 %v336
  %v1493 = vunpack.c.l.b16 %v337
  %v1494 = vunpack.c.l.b16 %v338
  %v1495 = vpack.c.b16 %v1460, %v1459
  %v1496 = vpack.c.b16 %v1462, %v1461
  %v1497 = vpack.c.b16 %v1464, %v1463
  %v1498 = vpack.c.b16 %v1466, %v1465
  %v1499 = vpack.c.b16 %v1468, %v1467
  %v1500 = vpack.c.b16 %v1470, %v1469
  %v1501 = vpack.c.b16 %v1472, %v1471
  %v1502 = vpack.c.b16 %v1474, %v1473
  %v1503 = vpack.c.b16 %v1476, %v1475
  %v1504 = vpack.c.b16 %v1478, %v1477
  %v1505 = vpack.c.b16 %v1480, %v1479
  %v1506 = vpack.c.b16 %v1482, %v1481
  %v1507 = vpack.c.b16 %v1484, %v1483
  %v1508 = vpack.c.b16 %v1486, %v1485
  %v1509 = vpack.c.b16 %v1488, %v1487
  %v1510 = vpack.c.b16 %v1490, %v1489
  %v1511 = vpack.c.b16 %v1492, %v1491
  %v1512 = vpack.c.b16 %v1494, %v1493
  %vm1531 = vcmask 261120
  %v1533 = vsel %vm1531, %v1065, 0
  %v1536 = vsel %vm1531, %v1068, 0
  %v1539 = vsel %vm1531, %v1071, 0
  %v1542 = vsel %vm1531, %v1074, 0
  %v1545 = vsel %vm1531, %v1077, 0
  %v1548 = vsel %vm1531, %v1080, 0
  %v1551 = vsel %vm1531, %v1083, 0
  %v1554 = vsel %vm1531, %v1086, 0
  %v1557 = vsel %vm1531, %v1089, 0
  %v1560 = vsel %vm1531, %v1092, 0
  %v1563 = vsel %vm1531, %v1095, 0
  %v1566 = vsel %vm1531, %v1098, 0
  %v1569 = vsel %vm1531, %v1101, 0
  %v1572 = vsel %vm1531, %v1104, 0
  %v1575 = vsel %vm1531, %v1107, 0
  %v1578 = vsel %vm1531, %v1110, 0
  %v1581 = vsel %vm1531, %v1113, 0
  %v1584 = vsel %vm1531, %v1116, 0
  %v1587 = vsel %vm1531, %v1119, 0
  %v1590 = vsel %vm1531, %v1122, 0
  %v1593 = vsel %vm1531, %v1125, 0
  %v1596 = vsel %vm1531, %v1128, 0
  %v1599 = vsel %vm1531, %v1131, 0
  %v1602 = vsel %vm1531, %v1134, 0
  %v1605 = vsel %vm1531, %v1137, 0
  %v1608 = vsel %vm1531, %v1140, 0
  %v1611 = vsel %vm1531, %v1143, 0
  %v1614 = vsel %vm1531, %v1146, 0
  %v1617 = vsel %vm1531, %v1149, 0
  %v1620 = vsel %vm1531, %v1152, 0
  %v1623 = vsel %vm1531, %v1155, 0
  %v1626 = vsel %vm1531, %v1158, 0
  %v1629 = vsel %vm1531, %v1161, 0
  %v1632 = vsel %vm1531, %v1164, 0
  %v1635 = vsel %vm1531, %v1167, 0
  %v1638 = vsel %vm1531, %v1170, 0
  %v1641 = vsel %vm1531, %v1173, 0
  %v1644 = vsel %vm1531, %v1176, 0
  %v1647 = vsel %vm1531, %v1179, 0
  %v1650 = vsel %vm1531, %v1182, 0
  %v1653 = vsel %vm1531, %v1185, 0
  %v1656 = vsel %vm1531, %v1188, 0
  %v1659 = vsel %vm1531, %v1191, 0
  %v1662 = vsel %vm1531, %v1194, 0
  %v1665 = vsel %vm1531, %v1197, 0
  %v1668 = vsel %vm1531, %v1200, 0
  %v1671 = vsel %vm1531, %v1203, 0
  %v1674 = vsel %vm1531, %v1206, 0
  %v1677 = vsel %vm1531, %v1209, 0
  %v1680 = vsel %vm1531, %v1212, 0
  %v1683 = vsel %vm1531, %v1215, 0
  %v1686 = vsel %vm1531, %v1218, 0
  %v1689 = vsel %vm1531, %v1221, 0
  %v1692 = vsel %vm1531, %v1224, 0
  %v1695 = vsel %vm1531, %v1227, 0
  %v1698 = vsel %vm1531, %v1230, 0
  %v1701 = vsel %vm1531, %v1233, 0
  %v1704 = vsel %vm1531, %v1236, 0
  %v1707 = vsel %vm1531, %v1239, 0
  %v1710 = vsel %vm1531, %v1242, 0
  %v1713 = vsel %vm1531, %v1245, 0
  %v1716 = vsel %vm1531, %v1248, 0
  %v1719 = vsel %vm1531, %v1251, 0
  %v1722 = vsel %vm1531, %v1254, 0
  %v1725 = vsel %vm1531, %v1257, 0
  %v1728 = vsel %vm1531, %v1260, 0
  %v1731 = vsel %vm1531, %v1263, 0
  %v1734 = vsel %vm1531, %v1266, 0
  %v1737 = vsel %vm1531, %v1269, 0
  %v1740 = vsel %vm1531, %v1272, 0
  %v1743 = vsel %vm1531, %v1275, 0
  %v1746 = vsel %vm1531, %v1278, 0
  %1748 = vmatpush.bf16.msra.mxu0 %v1502
  %1749 = vmatpush.bf16.msra.mxu0 %v1501
  %1750 = vmatpush.bf16.msra.mxu0 %v1500
  %1751 = vmatpush.bf16.msra.mxu0 %v1499
  %1752 = vmatpush.bf16.msra.mxu0 %v1498
  %1753 = vmatpush.bf16.msra.mxu0 %v1497
  %1754 = vmatpush.bf16.msra.mxu0 %v1496
  %1755 = vmatpush.bf16.msra.mxu0 %v1495
  %1756 = vmatmul.bf16.gmra.mxu0 %v1063
  %v1757 = vpop.f32.mrf.mxu0
  %v1758 = vadd.f32 %v341, %v1757
  %v1759 = vpop.f32.mrf.mxu0
  %v1760 = vadd.f32 %v341, %v1759
  %1761 = vmatmul.bf16.gmra.mxu0 %v1066
  %v1762 = vpop.f32.mrf.mxu0
  %v1763 = vadd.f32 %v341, %v1762
  %v1764 = vpop.f32.mrf.mxu0
  %v1765 = vadd.f32 %v341, %v1764
  %1766 = vmatmul.bf16.gmra.mxu0 %v1069
  %v1767 = vpop.f32.mrf.mxu0
  %v1768 = vadd.f32 %v341, %v1767
  %v1769 = vpop.f32.mrf.mxu0
  %v1770 = vadd.f32 %v341, %v1769
  %1771 = vmatmul.bf16.gmra.mxu0 %v1072
  %v1772 = vpop.f32.mrf.mxu0
  %v1773 = vadd.f32 %v341, %v1772
  %v1774 = vpop.f32.mrf.mxu0
  %v1775 = vadd.f32 %v341, %v1774
  %1776 = vmatmul.bf16.gmra.mxu0 %v1075
  %v1777 = vpop.f32.mrf.mxu0
  %v1778 = vadd.f32 %v341, %v1777
  %v1779 = vpop.f32.mrf.mxu0
  %v1780 = vadd.f32 %v341, %v1779
  %1781 = vmatmul.bf16.gmra.mxu0 %v1078
  %v1782 = vpop.f32.mrf.mxu0
  %v1783 = vadd.f32 %v341, %v1782
  %v1784 = vpop.f32.mrf.mxu0
  %v1785 = vadd.f32 %v341, %v1784
  %1786 = vmatmul.bf16.gmra.mxu0 %v1081
  %v1787 = vpop.f32.mrf.mxu0
  %v1788 = vadd.f32 %v341, %v1787
  %v1789 = vpop.f32.mrf.mxu0
  %v1790 = vadd.f32 %v341, %v1789
  %1791 = vmatmul.bf16.gmra.mxu0 %v1084
  %v1792 = vpop.f32.mrf.mxu0
  %v1793 = vadd.f32 %v341, %v1792
  %v1794 = vpop.f32.mrf.mxu0
  %v1795 = vadd.f32 %v341, %v1794
  %1796 = vmatmul.bf16.gmra.mxu0 %v1087
  %v1797 = vpop.f32.mrf.mxu0
  %v1798 = vadd.f32 %v341, %v1797
  %v1799 = vpop.f32.mrf.mxu0
  %v1800 = vadd.f32 %v341, %v1799
  %1801 = vmatmul.bf16.gmra.mxu0 %v1090
  %v1802 = vpop.f32.mrf.mxu0
  %v1803 = vadd.f32 %v341, %v1802
  %v1804 = vpop.f32.mrf.mxu0
  %v1805 = vadd.f32 %v341, %v1804
  %1806 = vmatmul.bf16.gmra.mxu0 %v1093
  %v1807 = vpop.f32.mrf.mxu0
  %v1808 = vadd.f32 %v341, %v1807
  %v1809 = vpop.f32.mrf.mxu0
  %v1810 = vadd.f32 %v341, %v1809
  %1811 = vmatmul.bf16.gmra.mxu0 %v1096
  %v1812 = vpop.f32.mrf.mxu0
  %v1813 = vadd.f32 %v341, %v1812
  %v1814 = vpop.f32.mrf.mxu0
  %v1815 = vadd.f32 %v341, %v1814
  %1816 = vmatmul.bf16.gmra.mxu0 %v1099
  %v1817 = vpop.f32.mrf.mxu0
  %v1818 = vadd.f32 %v341, %v1817
  %v1819 = vpop.f32.mrf.mxu0
  %v1820 = vadd.f32 %v341, %v1819
  %1821 = vmatmul.bf16.gmra.mxu0 %v1102
  %v1822 = vpop.f32.mrf.mxu0
  %v1823 = vadd.f32 %v341, %v1822
  %v1824 = vpop.f32.mrf.mxu0
  %v1825 = vadd.f32 %v341, %v1824
  %1826 = vmatmul.bf16.gmra.mxu0 %v1105
  %v1827 = vpop.f32.mrf.mxu0
  %v1828 = vadd.f32 %v341, %v1827
  %v1829 = vpop.f32.mrf.mxu0
  %v1830 = vadd.f32 %v341, %v1829
  %1831 = vmatmul.bf16.gmra.mxu0 %v1108
  %v1832 = vpop.f32.mrf.mxu0
  %v1833 = vadd.f32 %v341, %v1832
  %v1834 = vpop.f32.mrf.mxu0
  %v1835 = vadd.f32 %v341, %v1834
  %1836 = vmatmul.bf16.gmra.mxu0 %v1111
  %v1837 = vpop.f32.mrf.mxu0
  %v1838 = vadd.f32 %v341, %v1837
  %v1839 = vpop.f32.mrf.mxu0
  %v1840 = vadd.f32 %v341, %v1839
  %1841 = vmatmul.bf16.gmra.mxu0 %v1114
  %v1842 = vpop.f32.mrf.mxu0
  %v1843 = vadd.f32 %v341, %v1842
  %v1844 = vpop.f32.mrf.mxu0
  %v1845 = vadd.f32 %v341, %v1844
  %1846 = vmatmul.bf16.gmra.mxu0 %v1117
  %v1847 = vpop.f32.mrf.mxu0
  %v1848 = vadd.f32 %v341, %v1847
  %v1849 = vpop.f32.mrf.mxu0
  %v1850 = vadd.f32 %v341, %v1849
  %1851 = vmatmul.bf16.gmra.mxu0 %v1120
  %v1852 = vpop.f32.mrf.mxu0
  %v1853 = vadd.f32 %v341, %v1852
  %v1854 = vpop.f32.mrf.mxu0
  %v1855 = vadd.f32 %v341, %v1854
  %1856 = vmatmul.bf16.gmra.mxu0 %v1123
  %v1857 = vpop.f32.mrf.mxu0
  %v1858 = vadd.f32 %v341, %v1857
  %v1859 = vpop.f32.mrf.mxu0
  %v1860 = vadd.f32 %v341, %v1859
  %1861 = vmatmul.bf16.gmra.mxu0 %v1126
  %v1862 = vpop.f32.mrf.mxu0
  %v1863 = vadd.f32 %v341, %v1862
  %v1864 = vpop.f32.mrf.mxu0
  %v1865 = vadd.f32 %v341, %v1864
  %1866 = vmatmul.bf16.gmra.mxu0 %v1129
  %v1867 = vpop.f32.mrf.mxu0
  %v1868 = vadd.f32 %v341, %v1867
  %v1869 = vpop.f32.mrf.mxu0
  %v1870 = vadd.f32 %v341, %v1869
  %1871 = vmatmul.bf16.gmra.mxu0 %v1132
  %v1872 = vpop.f32.mrf.mxu0
  %v1873 = vadd.f32 %v341, %v1872
  %v1874 = vpop.f32.mrf.mxu0
  %v1875 = vadd.f32 %v341, %v1874
  %1876 = vmatmul.bf16.gmra.mxu0 %v1135
  %v1877 = vpop.f32.mrf.mxu0
  %v1878 = vadd.f32 %v341, %v1877
  %v1879 = vpop.f32.mrf.mxu0
  %v1880 = vadd.f32 %v341, %v1879
  %1881 = vmatmul.bf16.gmra.mxu0 %v1138
  %v1882 = vpop.f32.mrf.mxu0
  %v1883 = vadd.f32 %v341, %v1882
  %v1884 = vpop.f32.mrf.mxu0
  %v1885 = vadd.f32 %v341, %v1884
  %1886 = vmatmul.bf16.gmra.mxu0 %v1141
  %v1887 = vpop.f32.mrf.mxu0
  %v1888 = vadd.f32 %v341, %v1887
  %v1889 = vpop.f32.mrf.mxu0
  %v1890 = vadd.f32 %v341, %v1889
  %1891 = vmatmul.bf16.gmra.mxu0 %v1144
  %v1892 = vpop.f32.mrf.mxu0
  %v1893 = vadd.f32 %v341, %v1892
  %v1894 = vpop.f32.mrf.mxu0
  %v1895 = vadd.f32 %v341, %v1894
  %1896 = vmatmul.bf16.gmra.mxu0 %v1147
  %v1897 = vpop.f32.mrf.mxu0
  %v1898 = vadd.f32 %v341, %v1897
  %v1899 = vpop.f32.mrf.mxu0
  %v1900 = vadd.f32 %v341, %v1899
  %1901 = vmatmul.bf16.gmra.mxu0 %v1150
  %v1902 = vpop.f32.mrf.mxu0
  %v1903 = vadd.f32 %v341, %v1902
  %v1904 = vpop.f32.mrf.mxu0
  %v1905 = vadd.f32 %v341, %v1904
  %1906 = vmatmul.bf16.gmra.mxu0 %v1153
  %v1907 = vpop.f32.mrf.mxu0
  %v1908 = vadd.f32 %v341, %v1907
  %v1909 = vpop.f32.mrf.mxu0
  %v1910 = vadd.f32 %v341, %v1909
  %1911 = vmatmul.bf16.gmra.mxu0 %v1156
  %v1912 = vpop.f32.mrf.mxu0
  %v1913 = vadd.f32 %v341, %v1912
  %v1914 = vpop.f32.mrf.mxu0
  %v1915 = vadd.f32 %v341, %v1914
  %1916 = vmatmul.bf16.gmra.mxu0 %v1159
  %v1917 = vpop.f32.mrf.mxu0
  %v1918 = vadd.f32 %v341, %v1917
  %v1919 = vpop.f32.mrf.mxu0
  %v1920 = vadd.f32 %v341, %v1919
  %1921 = vmatmul.bf16.gmra.mxu0 %v1162
  %v1922 = vpop.f32.mrf.mxu0
  %v1923 = vadd.f32 %v341, %v1922
  %v1924 = vpop.f32.mrf.mxu0
  %v1925 = vadd.f32 %v341, %v1924
  %1926 = vmatmul.bf16.gmra.mxu0 %v1165
  %v1927 = vpop.f32.mrf.mxu0
  %v1928 = vadd.f32 %v341, %v1927
  %v1929 = vpop.f32.mrf.mxu0
  %v1930 = vadd.f32 %v341, %v1929
  %1931 = vmatmul.bf16.gmra.mxu0 %v1168
  %v1932 = vpop.f32.mrf.mxu0
  %v1933 = vadd.f32 %v341, %v1932
  %v1934 = vpop.f32.mrf.mxu0
  %v1935 = vadd.f32 %v341, %v1934
  %1936 = vmatmul.bf16.gmra.mxu0 %v1171
  %v1937 = vpop.f32.mrf.mxu0
  %v1938 = vadd.f32 %v341, %v1937
  %v1939 = vpop.f32.mrf.mxu0
  %v1940 = vadd.f32 %v341, %v1939
  %1941 = vmatmul.bf16.gmra.mxu0 %v1174
  %v1942 = vpop.f32.mrf.mxu0
  %v1943 = vadd.f32 %v341, %v1942
  %v1944 = vpop.f32.mrf.mxu0
  %v1945 = vadd.f32 %v341, %v1944
  %1946 = vmatmul.bf16.gmra.mxu0 %v1177
  %v1947 = vpop.f32.mrf.mxu0
  %v1948 = vadd.f32 %v341, %v1947
  %v1949 = vpop.f32.mrf.mxu0
  %v1950 = vadd.f32 %v341, %v1949
  %1951 = vmatmul.bf16.gmra.mxu0 %v1180
  %v1952 = vpop.f32.mrf.mxu0
  %v1953 = vadd.f32 %v341, %v1952
  %v1954 = vpop.f32.mrf.mxu0
  %v1955 = vadd.f32 %v341, %v1954
  %1956 = vmatmul.bf16.gmra.mxu0 %v1183
  %v1957 = vpop.f32.mrf.mxu0
  %v1958 = vadd.f32 %v341, %v1957
  %v1959 = vpop.f32.mrf.mxu0
  %v1960 = vadd.f32 %v341, %v1959
  %1961 = vmatmul.bf16.gmra.mxu0 %v1186
  %v1962 = vpop.f32.mrf.mxu0
  %v1963 = vadd.f32 %v341, %v1962
  %v1964 = vpop.f32.mrf.mxu0
  %v1965 = vadd.f32 %v341, %v1964
  %1966 = vmatmul.bf16.gmra.mxu0 %v1189
  %v1967 = vpop.f32.mrf.mxu0
  %v1968 = vadd.f32 %v341, %v1967
  %v1969 = vpop.f32.mrf.mxu0
  %v1970 = vadd.f32 %v341, %v1969
  %1971 = vmatmul.bf16.gmra.mxu0 %v1192
  %v1972 = vpop.f32.mrf.mxu0
  %v1973 = vadd.f32 %v341, %v1972
  %v1974 = vpop.f32.mrf.mxu0
  %v1975 = vadd.f32 %v341, %v1974
  %1976 = vmatmul.bf16.gmra.mxu0 %v1195
  %v1977 = vpop.f32.mrf.mxu0
  %v1978 = vadd.f32 %v341, %v1977
  %v1979 = vpop.f32.mrf.mxu0
  %v1980 = vadd.f32 %v341, %v1979
  %1981 = vmatmul.bf16.gmra.mxu0 %v1198
  %v1982 = vpop.f32.mrf.mxu0
  %v1983 = vadd.f32 %v341, %v1982
  %v1984 = vpop.f32.mrf.mxu0
  %v1985 = vadd.f32 %v341, %v1984
  %1986 = vmatmul.bf16.gmra.mxu0 %v1201
  %v1987 = vpop.f32.mrf.mxu0
  %v1988 = vadd.f32 %v341, %v1987
  %v1989 = vpop.f32.mrf.mxu0
  %v1990 = vadd.f32 %v341, %v1989
  %1991 = vmatmul.bf16.gmra.mxu0 %v1204
  %v1992 = vpop.f32.mrf.mxu0
  %v1993 = vadd.f32 %v341, %v1992
  %v1994 = vpop.f32.mrf.mxu0
  %v1995 = vadd.f32 %v341, %v1994
  %1996 = vmatmul.bf16.gmra.mxu0 %v1207
  %v1997 = vpop.f32.mrf.mxu0
  %v1998 = vadd.f32 %v341, %v1997
  %v1999 = vpop.f32.mrf.mxu0
  %v2000 = vadd.f32 %v341, %v1999
  %2001 = vmatmul.bf16.gmra.mxu0 %v1210
  %v2002 = vpop.f32.mrf.mxu0
  %v2003 = vadd.f32 %v341, %v2002
  %v2004 = vpop.f32.mrf.mxu0
  %v2005 = vadd.f32 %v341, %v2004
  %2006 = vmatmul.bf16.gmra.mxu0 %v1213
  %v2007 = vpop.f32.mrf.mxu0
  %v2008 = vadd.f32 %v341, %v2007
  %v2009 = vpop.f32.mrf.mxu0
  %v2010 = vadd.f32 %v341, %v2009
  %2011 = vmatmul.bf16.gmra.mxu0 %v1216
  %v2012 = vpop.f32.mrf.mxu0
  %v2013 = vadd.f32 %v341, %v2012
  %v2014 = vpop.f32.mrf.mxu0
  %v2015 = vadd.f32 %v341, %v2014
  %2016 = vmatmul.bf16.gmra.mxu0 %v1219
  %v2017 = vpop.f32.mrf.mxu0
  %v2018 = vadd.f32 %v341, %v2017
  %v2019 = vpop.f32.mrf.mxu0
  %v2020 = vadd.f32 %v341, %v2019
  %2021 = vmatmul.bf16.gmra.mxu0 %v1222
  %v2022 = vpop.f32.mrf.mxu0
  %v2023 = vadd.f32 %v341, %v2022
  %v2024 = vpop.f32.mrf.mxu0
  %v2025 = vadd.f32 %v341, %v2024
  %2026 = vmatmul.bf16.gmra.mxu0 %v1225
  %v2027 = vpop.f32.mrf.mxu0
  %v2028 = vadd.f32 %v341, %v2027
  %v2029 = vpop.f32.mrf.mxu0
  %v2030 = vadd.f32 %v341, %v2029
  %2031 = vmatmul.bf16.gmra.mxu0 %v1228
  %v2032 = vpop.f32.mrf.mxu0
  %v2033 = vadd.f32 %v341, %v2032
  %v2034 = vpop.f32.mrf.mxu0
  %v2035 = vadd.f32 %v341, %v2034
  %2036 = vmatmul.bf16.gmra.mxu0 %v1231
  %v2037 = vpop.f32.mrf.mxu0
  %v2038 = vadd.f32 %v341, %v2037
  %v2039 = vpop.f32.mrf.mxu0
  %v2040 = vadd.f32 %v341, %v2039
  %2041 = vmatmul.bf16.gmra.mxu0 %v1234
  %v2042 = vpop.f32.mrf.mxu0
  %v2043 = vadd.f32 %v341, %v2042
  %v2044 = vpop.f32.mrf.mxu0
  %v2045 = vadd.f32 %v341, %v2044
  %2046 = vmatmul.bf16.gmra.mxu0 %v1237
  %v2047 = vpop.f32.mrf.mxu0
  %v2048 = vadd.f32 %v341, %v2047
  %v2049 = vpop.f32.mrf.mxu0
  %v2050 = vadd.f32 %v341, %v2049
  %2051 = vmatmul.bf16.gmra.mxu0 %v1240
  %v2052 = vpop.f32.mrf.mxu0
  %v2053 = vadd.f32 %v341, %v2052
  %v2054 = vpop.f32.mrf.mxu0
  %v2055 = vadd.f32 %v341, %v2054
  %2056 = vmatmul.bf16.gmra.mxu0 %v1243
  %v2057 = vpop.f32.mrf.mxu0
  %v2058 = vadd.f32 %v341, %v2057
  %v2059 = vpop.f32.mrf.mxu0
  %v2060 = vadd.f32 %v341, %v2059
  %2061 = vmatmul.bf16.gmra.mxu0 %v1246
  %v2062 = vpop.f32.mrf.mxu0
  %v2063 = vadd.f32 %v341, %v2062
  %v2064 = vpop.f32.mrf.mxu0
  %v2065 = vadd.f32 %v341, %v2064
  %2066 = vmatmul.bf16.gmra.mxu0 %v1249
  %v2067 = vpop.f32.mrf.mxu0
  %v2068 = vadd.f32 %v341, %v2067
  %v2069 = vpop.f32.mrf.mxu0
  %v2070 = vadd.f32 %v341, %v2069
  %2071 = vmatmul.bf16.gmra.mxu0 %v1252
  %v2072 = vpop.f32.mrf.mxu0
  %v2073 = vadd.f32 %v341, %v2072
  %v2074 = vpop.f32.mrf.mxu0
  %v2075 = vadd.f32 %v341, %v2074
  %2076 = vmatmul.bf16.gmra.mxu0 %v1255
  %v2077 = vpop.f32.mrf.mxu0
  %v2078 = vadd.f32 %v341, %v2077
  %v2079 = vpop.f32.mrf.mxu0
  %v2080 = vadd.f32 %v341, %v2079
  %2081 = vmatmul.bf16.gmra.mxu0 %v1258
  %v2082 = vpop.f32.mrf.mxu0
  %v2083 = vadd.f32 %v341, %v2082
  %v2084 = vpop.f32.mrf.mxu0
  %v2085 = vadd.f32 %v341, %v2084
  %2086 = vmatmul.bf16.gmra.mxu0 %v1261
  %v2087 = vpop.f32.mrf.mxu0
  %v2088 = vadd.f32 %v341, %v2087
  %v2089 = vpop.f32.mrf.mxu0
  %v2090 = vadd.f32 %v341, %v2089
  %2091 = vmatmul.bf16.gmra.mxu0 %v1264
  %v2092 = vpop.f32.mrf.mxu0
  %v2093 = vadd.f32 %v341, %v2092
  %v2094 = vpop.f32.mrf.mxu0
  %v2095 = vadd.f32 %v341, %v2094
  %2096 = vmatmul.bf16.gmra.mxu0 %v1267
  %v2097 = vpop.f32.mrf.mxu0
  %v2098 = vadd.f32 %v341, %v2097
  %v2099 = vpop.f32.mrf.mxu0
  %v2100 = vadd.f32 %v341, %v2099
  %2101 = vmatmul.bf16.gmra.mxu0 %v1270
  %v2102 = vpop.f32.mrf.mxu0
  %v2103 = vadd.f32 %v341, %v2102
  %v2104 = vpop.f32.mrf.mxu0
  %v2105 = vadd.f32 %v341, %v2104
  %2106 = vmatmul.bf16.gmra.mxu0 %v1273
  %v2107 = vpop.f32.mrf.mxu0
  %v2108 = vadd.f32 %v341, %v2107
  %v2109 = vpop.f32.mrf.mxu0
  %v2110 = vadd.f32 %v341, %v2109
  %2111 = vmatmul.bf16.gmra.mxu0 %v1276
  %v2112 = vpop.f32.mrf.mxu0
  %v2113 = vadd.f32 %v341, %v2112
  %v2114 = vpop.f32.mrf.mxu0
  %v2115 = vadd.f32 %v341, %v2114
  %2116 = vdwg.mxu0
  %2117 = vmatpush.bf16.msra.mxu0 %v1510
  %2118 = vmatpush.bf16.msra.mxu0 %v1509
  %2119 = vmatpush.bf16.msra.mxu0 %v1508
  %2120 = vmatpush.bf16.msra.mxu0 %v1507
  %2121 = vmatpush.bf16.msra.mxu0 %v1506
  %2122 = vmatpush.bf16.msra.mxu0 %v1505
  %2123 = vmatpush.bf16.msra.mxu0 %v1504
  %2124 = vmatpush.bf16.msra.mxu0 %v1503
  %2125 = vmatmul.bf16.gmra.mxu0 %v1064
  %v2126 = vpop.f32.mrf.mxu0
  %v2127 = vadd.f32 %v1758, %v2126
  %v2128 = vpop.f32.mrf.mxu0
  %v2129 = vadd.f32 %v1760, %v2128
  %2130 = vmatmul.bf16.gmra.mxu0 %v1067
  %v2131 = vpop.f32.mrf.mxu0
  %v2132 = vadd.f32 %v1763, %v2131
  %v2133 = vpop.f32.mrf.mxu0
  %v2134 = vadd.f32 %v1765, %v2133
  %2135 = vmatmul.bf16.gmra.mxu0 %v1070
  %v2136 = vpop.f32.mrf.mxu0
  %v2137 = vadd.f32 %v1768, %v2136
  %v2138 = vpop.f32.mrf.mxu0
  %v2139 = vadd.f32 %v1770, %v2138
  %2140 = vmatmul.bf16.gmra.mxu0 %v1073
  %v2141 = vpop.f32.mrf.mxu0
  %v2142 = vadd.f32 %v1773, %v2141
  %v2143 = vpop.f32.mrf.mxu0
  %v2144 = vadd.f32 %v1775, %v2143
  %2145 = vmatmul.bf16.gmra.mxu0 %v1076
  %v2146 = vpop.f32.mrf.mxu0
  %v2147 = vadd.f32 %v1778, %v2146
  %v2148 = vpop.f32.mrf.mxu0
  %v2149 = vadd.f32 %v1780, %v2148
  %2150 = vmatmul.bf16.gmra.mxu0 %v1079
  %v2151 = vpop.f32.mrf.mxu0
  %v2152 = vadd.f32 %v1783, %v2151
  %v2153 = vpop.f32.mrf.mxu0
  %v2154 = vadd.f32 %v1785, %v2153
  %2155 = vmatmul.bf16.gmra.mxu0 %v1082
  %v2156 = vpop.f32.mrf.mxu0
  %v2157 = vadd.f32 %v1788, %v2156
  %v2158 = vpop.f32.mrf.mxu0
  %v2159 = vadd.f32 %v1790, %v2158
  %2160 = vmatmul.bf16.gmra.mxu0 %v1085
  %v2161 = vpop.f32.mrf.mxu0
  %v2162 = vadd.f32 %v1793, %v2161
  %v2163 = vpop.f32.mrf.mxu0
  %v2164 = vadd.f32 %v1795, %v2163
  %2165 = vmatmul.bf16.gmra.mxu0 %v1088
  %v2166 = vpop.f32.mrf.mxu0
  %v2167 = vadd.f32 %v1798, %v2166
  %v2168 = vpop.f32.mrf.mxu0
  %v2169 = vadd.f32 %v1800, %v2168
  %2170 = vmatmul.bf16.gmra.mxu0 %v1091
  %v2171 = vpop.f32.mrf.mxu0
  %v2172 = vadd.f32 %v1803, %v2171
  %v2173 = vpop.f32.mrf.mxu0
  %v2174 = vadd.f32 %v1805, %v2173
  %2175 = vmatmul.bf16.gmra.mxu0 %v1094
  %v2176 = vpop.f32.mrf.mxu0
  %v2177 = vadd.f32 %v1808, %v2176
  %v2178 = vpop.f32.mrf.mxu0
  %v2179 = vadd.f32 %v1810, %v2178
  %2180 = vmatmul.bf16.gmra.mxu0 %v1097
  %v2181 = vpop.f32.mrf.mxu0
  %v2182 = vadd.f32 %v1813, %v2181
  %v2183 = vpop.f32.mrf.mxu0
  %v2184 = vadd.f32 %v1815, %v2183
  %2185 = vmatmul.bf16.gmra.mxu0 %v1100
  %v2186 = vpop.f32.mrf.mxu0
  %v2187 = vadd.f32 %v1818, %v2186
  %v2188 = vpop.f32.mrf.mxu0
  %v2189 = vadd.f32 %v1820, %v2188
  %2190 = vmatmul.bf16.gmra.mxu0 %v1103
  %v2191 = vpop.f32.mrf.mxu0
  %v2192 = vadd.f32 %v1823, %v2191
  %v2193 = vpop.f32.mrf.mxu0
  %v2194 = vadd.f32 %v1825, %v2193
  %2195 = vmatmul.bf16.gmra.mxu0 %v1106
  %v2196 = vpop.f32.mrf.mxu0
  %v2197 = vadd.f32 %v1828, %v2196
  %v2198 = vpop.f32.mrf.mxu0
  %v2199 = vadd.f32 %v1830, %v2198
  %2200 = vmatmul.bf16.gmra.mxu0 %v1109
  %v2201 = vpop.f32.mrf.mxu0
  %v2202 = vadd.f32 %v1833, %v2201
  %v2203 = vpop.f32.mrf.mxu0
  %v2204 = vadd.f32 %v1835, %v2203
  %2205 = vmatmul.bf16.gmra.mxu0 %v1112
  %v2206 = vpop.f32.mrf.mxu0
  %v2207 = vadd.f32 %v1838, %v2206
  %v2208 = vpop.f32.mrf.mxu0
  %v2209 = vadd.f32 %v1840, %v2208
  %2210 = vmatmul.bf16.gmra.mxu0 %v1115
  %v2211 = vpop.f32.mrf.mxu0
  %v2212 = vadd.f32 %v1843, %v2211
  %v2213 = vpop.f32.mrf.mxu0
  %v2214 = vadd.f32 %v1845, %v2213
  %2215 = vmatmul.bf16.gmra.mxu0 %v1118
  %v2216 = vpop.f32.mrf.mxu0
  %v2217 = vadd.f32 %v1848, %v2216
  %v2218 = vpop.f32.mrf.mxu0
  %v2219 = vadd.f32 %v1850, %v2218
  %2220 = vmatmul.bf16.gmra.mxu0 %v1121
  %v2221 = vpop.f32.mrf.mxu0
  %v2222 = vadd.f32 %v1853, %v2221
  %v2223 = vpop.f32.mrf.mxu0
  %v2224 = vadd.f32 %v1855, %v2223
  %2225 = vmatmul.bf16.gmra.mxu0 %v1124
  %v2226 = vpop.f32.mrf.mxu0
  %v2227 = vadd.f32 %v1858, %v2226
  %v2228 = vpop.f32.mrf.mxu0
  %v2229 = vadd.f32 %v1860, %v2228
  %2230 = vmatmul.bf16.gmra.mxu0 %v1127
  %v2231 = vpop.f32.mrf.mxu0
  %v2232 = vadd.f32 %v1863, %v2231
  %v2233 = vpop.f32.mrf.mxu0
  %v2234 = vadd.f32 %v1865, %v2233
  %2235 = vmatmul.bf16.gmra.mxu0 %v1130
  %v2236 = vpop.f32.mrf.mxu0
  %v2237 = vadd.f32 %v1868, %v2236
  %v2238 = vpop.f32.mrf.mxu0
  %v2239 = vadd.f32 %v1870, %v2238
  %2240 = vmatmul.bf16.gmra.mxu0 %v1133
  %v2241 = vpop.f32.mrf.mxu0
  %v2242 = vadd.f32 %v1873, %v2241
  %v2243 = vpop.f32.mrf.mxu0
  %v2244 = vadd.f32 %v1875, %v2243
  %2245 = vmatmul.bf16.gmra.mxu0 %v1136
  %v2246 = vpop.f32.mrf.mxu0
  %v2247 = vadd.f32 %v1878, %v2246
  %v2248 = vpop.f32.mrf.mxu0
  %v2249 = vadd.f32 %v1880, %v2248
  %2250 = vmatmul.bf16.gmra.mxu0 %v1139
  %v2251 = vpop.f32.mrf.mxu0
  %v2252 = vadd.f32 %v1883, %v2251
  %v2253 = vpop.f32.mrf.mxu0
  %v2254 = vadd.f32 %v1885, %v2253
  %2255 = vmatmul.bf16.gmra.mxu0 %v1142
  %v2256 = vpop.f32.mrf.mxu0
  %v2257 = vadd.f32 %v1888, %v2256
  %v2258 = vpop.f32.mrf.mxu0
  %v2259 = vadd.f32 %v1890, %v2258
  %2260 = vmatmul.bf16.gmra.mxu0 %v1145
  %v2261 = vpop.f32.mrf.mxu0
  %v2262 = vadd.f32 %v1893, %v2261
  %v2263 = vpop.f32.mrf.mxu0
  %v2264 = vadd.f32 %v1895, %v2263
  %2265 = vmatmul.bf16.gmra.mxu0 %v1148
  %v2266 = vpop.f32.mrf.mxu0
  %v2267 = vadd.f32 %v1898, %v2266
  %v2268 = vpop.f32.mrf.mxu0
  %v2269 = vadd.f32 %v1900, %v2268
  %2270 = vmatmul.bf16.gmra.mxu0 %v1151
  %v2271 = vpop.f32.mrf.mxu0
  %v2272 = vadd.f32 %v1903, %v2271
  %v2273 = vpop.f32.mrf.mxu0
  %v2274 = vadd.f32 %v1905, %v2273
  %2275 = vmatmul.bf16.gmra.mxu0 %v1154
  %v2276 = vpop.f32.mrf.mxu0
  %v2277 = vadd.f32 %v1908, %v2276
  %v2278 = vpop.f32.mrf.mxu0
  %v2279 = vadd.f32 %v1910, %v2278
  %2280 = vmatmul.bf16.gmra.mxu0 %v1157
  %v2281 = vpop.f32.mrf.mxu0
  %v2282 = vadd.f32 %v1913, %v2281
  %v2283 = vpop.f32.mrf.mxu0
  %v2284 = vadd.f32 %v1915, %v2283
  %2285 = vmatmul.bf16.gmra.mxu0 %v1160
  %v2286 = vpop.f32.mrf.mxu0
  %v2287 = vadd.f32 %v1918, %v2286
  %v2288 = vpop.f32.mrf.mxu0
  %v2289 = vadd.f32 %v1920, %v2288
  %2290 = vmatmul.bf16.gmra.mxu0 %v1163
  %v2291 = vpop.f32.mrf.mxu0
  %v2292 = vadd.f32 %v1923, %v2291
  %v2293 = vpop.f32.mrf.mxu0
  %v2294 = vadd.f32 %v1925, %v2293
  %2295 = vmatmul.bf16.gmra.mxu0 %v1166
  %v2296 = vpop.f32.mrf.mxu0
  %v2297 = vadd.f32 %v1928, %v2296
  %v2298 = vpop.f32.mrf.mxu0
  %v2299 = vadd.f32 %v1930, %v2298
  %2300 = vmatmul.bf16.gmra.mxu0 %v1169
  %v2301 = vpop.f32.mrf.mxu0
  %v2302 = vadd.f32 %v1933, %v2301
  %v2303 = vpop.f32.mrf.mxu0
  %v2304 = vadd.f32 %v1935, %v2303
  %2305 = vmatmul.bf16.gmra.mxu0 %v1172
  %v2306 = vpop.f32.mrf.mxu0
  %v2307 = vadd.f32 %v1938, %v2306
  %v2308 = vpop.f32.mrf.mxu0
  %v2309 = vadd.f32 %v1940, %v2308
  %2310 = vmatmul.bf16.gmra.mxu0 %v1175
  %v2311 = vpop.f32.mrf.mxu0
  %v2312 = vadd.f32 %v1943, %v2311
  %v2313 = vpop.f32.mrf.mxu0
  %v2314 = vadd.f32 %v1945, %v2313
  %2315 = vmatmul.bf16.gmra.mxu0 %v1178
  %v2316 = vpop.f32.mrf.mxu0
  %v2317 = vadd.f32 %v1948, %v2316
  %v2318 = vpop.f32.mrf.mxu0
  %v2319 = vadd.f32 %v1950, %v2318
  %2320 = vmatmul.bf16.gmra.mxu0 %v1181
  %v2321 = vpop.f32.mrf.mxu0
  %v2322 = vadd.f32 %v1953, %v2321
  %v2323 = vpop.f32.mrf.mxu0
  %v2324 = vadd.f32 %v1955, %v2323
  %2325 = vmatmul.bf16.gmra.mxu0 %v1184
  %v2326 = vpop.f32.mrf.mxu0
  %v2327 = vadd.f32 %v1958, %v2326
  %v2328 = vpop.f32.mrf.mxu0
  %v2329 = vadd.f32 %v1960, %v2328
  %2330 = vmatmul.bf16.gmra.mxu0 %v1187
  %v2331 = vpop.f32.mrf.mxu0
  %v2332 = vadd.f32 %v1963, %v2331
  %v2333 = vpop.f32.mrf.mxu0
  %v2334 = vadd.f32 %v1965, %v2333
  %2335 = vmatmul.bf16.gmra.mxu0 %v1190
  %v2336 = vpop.f32.mrf.mxu0
  %v2337 = vadd.f32 %v1968, %v2336
  %v2338 = vpop.f32.mrf.mxu0
  %v2339 = vadd.f32 %v1970, %v2338
  %2340 = vmatmul.bf16.gmra.mxu0 %v1193
  %v2341 = vpop.f32.mrf.mxu0
  %v2342 = vadd.f32 %v1973, %v2341
  %v2343 = vpop.f32.mrf.mxu0
  %v2344 = vadd.f32 %v1975, %v2343
  %2345 = vmatmul.bf16.gmra.mxu0 %v1196
  %v2346 = vpop.f32.mrf.mxu0
  %v2347 = vadd.f32 %v1978, %v2346
  %v2348 = vpop.f32.mrf.mxu0
  %v2349 = vadd.f32 %v1980, %v2348
  %2350 = vmatmul.bf16.gmra.mxu0 %v1199
  %v2351 = vpop.f32.mrf.mxu0
  %v2352 = vadd.f32 %v1983, %v2351
  %v2353 = vpop.f32.mrf.mxu0
  %v2354 = vadd.f32 %v1985, %v2353
  %2355 = vmatmul.bf16.gmra.mxu0 %v1202
  %v2356 = vpop.f32.mrf.mxu0
  %v2357 = vadd.f32 %v1988, %v2356
  %v2358 = vpop.f32.mrf.mxu0
  %v2359 = vadd.f32 %v1990, %v2358
  %2360 = vmatmul.bf16.gmra.mxu0 %v1205
  %v2361 = vpop.f32.mrf.mxu0
  %v2362 = vadd.f32 %v1993, %v2361
  %v2363 = vpop.f32.mrf.mxu0
  %v2364 = vadd.f32 %v1995, %v2363
  %2365 = vmatmul.bf16.gmra.mxu0 %v1208
  %v2366 = vpop.f32.mrf.mxu0
  %v2367 = vadd.f32 %v1998, %v2366
  %v2368 = vpop.f32.mrf.mxu0
  %v2369 = vadd.f32 %v2000, %v2368
  %2370 = vmatmul.bf16.gmra.mxu0 %v1211
  %v2371 = vpop.f32.mrf.mxu0
  %v2372 = vadd.f32 %v2003, %v2371
  %v2373 = vpop.f32.mrf.mxu0
  %v2374 = vadd.f32 %v2005, %v2373
  %2375 = vmatmul.bf16.gmra.mxu0 %v1214
  %v2376 = vpop.f32.mrf.mxu0
  %v2377 = vadd.f32 %v2008, %v2376
  %v2378 = vpop.f32.mrf.mxu0
  %v2379 = vadd.f32 %v2010, %v2378
  %2380 = vmatmul.bf16.gmra.mxu0 %v1217
  %v2381 = vpop.f32.mrf.mxu0
  %v2382 = vadd.f32 %v2013, %v2381
  %v2383 = vpop.f32.mrf.mxu0
  %v2384 = vadd.f32 %v2015, %v2383
  %2385 = vmatmul.bf16.gmra.mxu0 %v1220
  %v2386 = vpop.f32.mrf.mxu0
  %v2387 = vadd.f32 %v2018, %v2386
  %v2388 = vpop.f32.mrf.mxu0
  %v2389 = vadd.f32 %v2020, %v2388
  %2390 = vmatmul.bf16.gmra.mxu0 %v1223
  %v2391 = vpop.f32.mrf.mxu0
  %v2392 = vadd.f32 %v2023, %v2391
  %v2393 = vpop.f32.mrf.mxu0
  %v2394 = vadd.f32 %v2025, %v2393
  %2395 = vmatmul.bf16.gmra.mxu0 %v1226
  %v2396 = vpop.f32.mrf.mxu0
  %v2397 = vadd.f32 %v2028, %v2396
  %v2398 = vpop.f32.mrf.mxu0
  %v2399 = vadd.f32 %v2030, %v2398
  %2400 = vmatmul.bf16.gmra.mxu0 %v1229
  %v2401 = vpop.f32.mrf.mxu0
  %v2402 = vadd.f32 %v2033, %v2401
  %v2403 = vpop.f32.mrf.mxu0
  %v2404 = vadd.f32 %v2035, %v2403
  %2405 = vmatmul.bf16.gmra.mxu0 %v1232
  %v2406 = vpop.f32.mrf.mxu0
  %v2407 = vadd.f32 %v2038, %v2406
  %v2408 = vpop.f32.mrf.mxu0
  %v2409 = vadd.f32 %v2040, %v2408
  %2410 = vmatmul.bf16.gmra.mxu0 %v1235
  %v2411 = vpop.f32.mrf.mxu0
  %v2412 = vadd.f32 %v2043, %v2411
  %v2413 = vpop.f32.mrf.mxu0
  %v2414 = vadd.f32 %v2045, %v2413
  %2415 = vmatmul.bf16.gmra.mxu0 %v1238
  %v2416 = vpop.f32.mrf.mxu0
  %v2417 = vadd.f32 %v2048, %v2416
  %v2418 = vpop.f32.mrf.mxu0
  %v2419 = vadd.f32 %v2050, %v2418
  %2420 = vmatmul.bf16.gmra.mxu0 %v1241
  %v2421 = vpop.f32.mrf.mxu0
  %v2422 = vadd.f32 %v2053, %v2421
  %v2423 = vpop.f32.mrf.mxu0
  %v2424 = vadd.f32 %v2055, %v2423
  %2425 = vmatmul.bf16.gmra.mxu0 %v1244
  %v2426 = vpop.f32.mrf.mxu0
  %v2427 = vadd.f32 %v2058, %v2426
  %v2428 = vpop.f32.mrf.mxu0
  %v2429 = vadd.f32 %v2060, %v2428
  %2430 = vmatmul.bf16.gmra.mxu0 %v1247
  %v2431 = vpop.f32.mrf.mxu0
  %v2432 = vadd.f32 %v2063, %v2431
  %v2433 = vpop.f32.mrf.mxu0
  %v2434 = vadd.f32 %v2065, %v2433
  %2435 = vmatmul.bf16.gmra.mxu0 %v1250
  %v2436 = vpop.f32.mrf.mxu0
  %v2437 = vadd.f32 %v2068, %v2436
  %v2438 = vpop.f32.mrf.mxu0
  %v2439 = vadd.f32 %v2070, %v2438
  %2440 = vmatmul.bf16.gmra.mxu0 %v1253
  %v2441 = vpop.f32.mrf.mxu0
  %v2442 = vadd.f32 %v2073, %v2441
  %v2443 = vpop.f32.mrf.mxu0
  %v2444 = vadd.f32 %v2075, %v2443
  %2445 = vmatmul.bf16.gmra.mxu0 %v1256
  %v2446 = vpop.f32.mrf.mxu0
  %v2447 = vadd.f32 %v2078, %v2446
  %v2448 = vpop.f32.mrf.mxu0
  %v2449 = vadd.f32 %v2080, %v2448
  %2450 = vmatmul.bf16.gmra.mxu0 %v1259
  %v2451 = vpop.f32.mrf.mxu0
  %v2452 = vadd.f32 %v2083, %v2451
  %v2453 = vpop.f32.mrf.mxu0
  %v2454 = vadd.f32 %v2085, %v2453
  %2455 = vmatmul.bf16.gmra.mxu0 %v1262
  %v2456 = vpop.f32.mrf.mxu0
  %v2457 = vadd.f32 %v2088, %v2456
  %v2458 = vpop.f32.mrf.mxu0
  %v2459 = vadd.f32 %v2090, %v2458
  %2460 = vmatmul.bf16.gmra.mxu0 %v1265
  %v2461 = vpop.f32.mrf.mxu0
  %v2462 = vadd.f32 %v2093, %v2461
  %v2463 = vpop.f32.mrf.mxu0
  %v2464 = vadd.f32 %v2095, %v2463
  %2465 = vmatmul.bf16.gmra.mxu0 %v1268
  %v2466 = vpop.f32.mrf.mxu0
  %v2467 = vadd.f32 %v2098, %v2466
  %v2468 = vpop.f32.mrf.mxu0
  %v2469 = vadd.f32 %v2100, %v2468
  %2470 = vmatmul.bf16.gmra.mxu0 %v1271
  %v2471 = vpop.f32.mrf.mxu0
  %v2472 = vadd.f32 %v2103, %v2471
  %v2473 = vpop.f32.mrf.mxu0
  %v2474 = vadd.f32 %v2105, %v2473
  %2475 = vmatmul.bf16.gmra.mxu0 %v1274
  %v2476 = vpop.f32.mrf.mxu0
  %v2477 = vadd.f32 %v2108, %v2476
  %v2478 = vpop.f32.mrf.mxu0
  %v2479 = vadd.f32 %v2110, %v2478
  %2480 = vmatmul.bf16.gmra.mxu0 %v1277
  %v2481 = vpop.f32.mrf.mxu0
  %v2482 = vadd.f32 %v2113, %v2481
  %v2483 = vpop.f32.mrf.mxu0
  %v2484 = vadd.f32 %v2115, %v2483
  %2485 = vdwg.mxu0
  %2486 = vmatpush.bf16.msra.mxu0 0
  %2487 = vmatpush.bf16.msra.mxu0 0
  %2488 = vmatpush.bf16.msra.mxu0 0
  %2489 = vmatpush.bf16.msra.mxu0 0
  %2490 = vmatpush.bf16.msra.mxu0 0
  %2491 = vmatpush.bf16.msra.mxu0 0
  %2492 = vmatpush.bf16.msra.mxu0 %v1512
  %2493 = vmatpush.bf16.msra.mxu0 %v1511
  %2494 = vmatmul.bf16.gmra.mxu0 %v1533
  %v2495 = vpop.f32.mrf.mxu0
  %v2496 = vadd.f32 %v2127, %v2495
  %v2497 = vpop.f32.mrf.mxu0
  %v2498 = vadd.f32 %v2129, %v2497
  %2499 = vmatmul.bf16.gmra.mxu0 %v1536
  %v2500 = vpop.f32.mrf.mxu0
  %v2501 = vadd.f32 %v2132, %v2500
  %v2502 = vpop.f32.mrf.mxu0
  %v2503 = vadd.f32 %v2134, %v2502
  %2504 = vmatmul.bf16.gmra.mxu0 %v1539
  %v2505 = vpop.f32.mrf.mxu0
  %v2506 = vadd.f32 %v2137, %v2505
  %v2507 = vpop.f32.mrf.mxu0
  %v2508 = vadd.f32 %v2139, %v2507
  %2509 = vmatmul.bf16.gmra.mxu0 %v1542
  %v2510 = vpop.f32.mrf.mxu0
  %v2511 = vadd.f32 %v2142, %v2510
  %v2512 = vpop.f32.mrf.mxu0
  %v2513 = vadd.f32 %v2144, %v2512
  %2514 = vmatmul.bf16.gmra.mxu0 %v1545
  %v2515 = vpop.f32.mrf.mxu0
  %v2516 = vadd.f32 %v2147, %v2515
  %v2517 = vpop.f32.mrf.mxu0
  %v2518 = vadd.f32 %v2149, %v2517
  %2519 = vmatmul.bf16.gmra.mxu0 %v1548
  %v2520 = vpop.f32.mrf.mxu0
  %v2521 = vadd.f32 %v2152, %v2520
  %v2522 = vpop.f32.mrf.mxu0
  %v2523 = vadd.f32 %v2154, %v2522
  %2524 = vmatmul.bf16.gmra.mxu0 %v1551
  %v2525 = vpop.f32.mrf.mxu0
  %v2526 = vadd.f32 %v2157, %v2525
  %v2527 = vpop.f32.mrf.mxu0
  %v2528 = vadd.f32 %v2159, %v2527
  %2529 = vmatmul.bf16.gmra.mxu0 %v1554
  %v2530 = vpop.f32.mrf.mxu0
  %v2531 = vadd.f32 %v2162, %v2530
  %v2532 = vpop.f32.mrf.mxu0
  %v2533 = vadd.f32 %v2164, %v2532
  %2534 = vmatmul.bf16.gmra.mxu0 %v1557
  %v2535 = vpop.f32.mrf.mxu0
  %v2536 = vadd.f32 %v2167, %v2535
  %v2537 = vpop.f32.mrf.mxu0
  %v2538 = vadd.f32 %v2169, %v2537
  %2539 = vmatmul.bf16.gmra.mxu0 %v1560
  %v2540 = vpop.f32.mrf.mxu0
  %v2541 = vadd.f32 %v2172, %v2540
  %v2542 = vpop.f32.mrf.mxu0
  %v2543 = vadd.f32 %v2174, %v2542
  %2544 = vmatmul.bf16.gmra.mxu0 %v1563
  %v2545 = vpop.f32.mrf.mxu0
  %v2546 = vadd.f32 %v2177, %v2545
  %v2547 = vpop.f32.mrf.mxu0
  %v2548 = vadd.f32 %v2179, %v2547
  %2549 = vmatmul.bf16.gmra.mxu0 %v1566
  %v2550 = vpop.f32.mrf.mxu0
  %v2551 = vadd.f32 %v2182, %v2550
  %v2552 = vpop.f32.mrf.mxu0
  %v2553 = vadd.f32 %v2184, %v2552
  %2554 = vmatmul.bf16.gmra.mxu0 %v1569
  %v2555 = vpop.f32.mrf.mxu0
  %v2556 = vadd.f32 %v2187, %v2555
  %v2557 = vpop.f32.mrf.mxu0
  %v2558 = vadd.f32 %v2189, %v2557
  %2559 = vmatmul.bf16.gmra.mxu0 %v1572
  %v2560 = vpop.f32.mrf.mxu0
  %v2561 = vadd.f32 %v2192, %v2560
  %v2562 = vpop.f32.mrf.mxu0
  %v2563 = vadd.f32 %v2194, %v2562
  %2564 = vmatmul.bf16.gmra.mxu0 %v1575
  %v2565 = vpop.f32.mrf.mxu0
  %v2566 = vadd.f32 %v2197, %v2565
  %v2567 = vpop.f32.mrf.mxu0
  %v2568 = vadd.f32 %v2199, %v2567
  %2569 = vmatmul.bf16.gmra.mxu0 %v1578
  %v2570 = vpop.f32.mrf.mxu0
  %v2571 = vadd.f32 %v2202, %v2570
  %v2572 = vpop.f32.mrf.mxu0
  %v2573 = vadd.f32 %v2204, %v2572
  %2574 = vmatmul.bf16.gmra.mxu0 %v1581
  %v2575 = vpop.f32.mrf.mxu0
  %v2576 = vadd.f32 %v2207, %v2575
  %v2577 = vpop.f32.mrf.mxu0
  %v2578 = vadd.f32 %v2209, %v2577
  %2579 = vmatmul.bf16.gmra.mxu0 %v1584
  %v2580 = vpop.f32.mrf.mxu0
  %v2581 = vadd.f32 %v2212, %v2580
  %v2582 = vpop.f32.mrf.mxu0
  %v2583 = vadd.f32 %v2214, %v2582
  %2584 = vmatmul.bf16.gmra.mxu0 %v1587
  %v2585 = vpop.f32.mrf.mxu0
  %v2586 = vadd.f32 %v2217, %v2585
  %v2587 = vpop.f32.mrf.mxu0
  %v2588 = vadd.f32 %v2219, %v2587
  %2589 = vmatmul.bf16.gmra.mxu0 %v1590
  %v2590 = vpop.f32.mrf.mxu0
  %v2591 = vadd.f32 %v2222, %v2590
  %v2592 = vpop.f32.mrf.mxu0
  %v2593 = vadd.f32 %v2224, %v2592
  %2594 = vmatmul.bf16.gmra.mxu0 %v1593
  %v2595 = vpop.f32.mrf.mxu0
  %v2596 = vadd.f32 %v2227, %v2595
  %v2597 = vpop.f32.mrf.mxu0
  %v2598 = vadd.f32 %v2229, %v2597
  %2599 = vmatmul.bf16.gmra.mxu0 %v1596
  %v2600 = vpop.f32.mrf.mxu0
  %v2601 = vadd.f32 %v2232, %v2600
  %v2602 = vpop.f32.mrf.mxu0
  %v2603 = vadd.f32 %v2234, %v2602
  %2604 = vmatmul.bf16.gmra.mxu0 %v1599
  %v2605 = vpop.f32.mrf.mxu0
  %v2606 = vadd.f32 %v2237, %v2605
  %v2607 = vpop.f32.mrf.mxu0
  %v2608 = vadd.f32 %v2239, %v2607
  %2609 = vmatmul.bf16.gmra.mxu0 %v1602
  %v2610 = vpop.f32.mrf.mxu0
  %v2611 = vadd.f32 %v2242, %v2610
  %v2612 = vpop.f32.mrf.mxu0
  %v2613 = vadd.f32 %v2244, %v2612
  %2614 = vmatmul.bf16.gmra.mxu0 %v1605
  %v2615 = vpop.f32.mrf.mxu0
  %v2616 = vadd.f32 %v2247, %v2615
  %v2617 = vpop.f32.mrf.mxu0
  %v2618 = vadd.f32 %v2249, %v2617
  %2619 = vmatmul.bf16.gmra.mxu0 %v1608
  %v2620 = vpop.f32.mrf.mxu0
  %v2621 = vadd.f32 %v2252, %v2620
  %v2622 = vpop.f32.mrf.mxu0
  %v2623 = vadd.f32 %v2254, %v2622
  %2624 = vmatmul.bf16.gmra.mxu0 %v1611
  %v2625 = vpop.f32.mrf.mxu0
  %v2626 = vadd.f32 %v2257, %v2625
  %v2627 = vpop.f32.mrf.mxu0
  %v2628 = vadd.f32 %v2259, %v2627
  %2629 = vmatmul.bf16.gmra.mxu0 %v1614
  %v2630 = vpop.f32.mrf.mxu0
  %v2631 = vadd.f32 %v2262, %v2630
  %v2632 = vpop.f32.mrf.mxu0
  %v2633 = vadd.f32 %v2264, %v2632
  %2634 = vmatmul.bf16.gmra.mxu0 %v1617
  %v2635 = vpop.f32.mrf.mxu0
  %v2636 = vadd.f32 %v2267, %v2635
  %v2637 = vpop.f32.mrf.mxu0
  %v2638 = vadd.f32 %v2269, %v2637
  %2639 = vmatmul.bf16.gmra.mxu0 %v1620
  %v2640 = vpop.f32.mrf.mxu0
  %v2641 = vadd.f32 %v2272, %v2640
  %v2642 = vpop.f32.mrf.mxu0
  %v2643 = vadd.f32 %v2274, %v2642
  %2644 = vmatmul.bf16.gmra.mxu0 %v1623
  %v2645 = vpop.f32.mrf.mxu0
  %v2646 = vadd.f32 %v2277, %v2645
  %v2647 = vpop.f32.mrf.mxu0
  %v2648 = vadd.f32 %v2279, %v2647
  %2649 = vmatmul.bf16.gmra.mxu0 %v1626
  %v2650 = vpop.f32.mrf.mxu0
  %v2651 = vadd.f32 %v2282, %v2650
  %v2652 = vpop.f32.mrf.mxu0
  %v2653 = vadd.f32 %v2284, %v2652
  %2654 = vmatmul.bf16.gmra.mxu0 %v1629
  %v2655 = vpop.f32.mrf.mxu0
  %v2656 = vadd.f32 %v2287, %v2655
  %v2657 = vpop.f32.mrf.mxu0
  %v2658 = vadd.f32 %v2289, %v2657
  %2659 = vmatmul.bf16.gmra.mxu0 %v1632
  %v2660 = vpop.f32.mrf.mxu0
  %v2661 = vadd.f32 %v2292, %v2660
  %v2662 = vpop.f32.mrf.mxu0
  %v2663 = vadd.f32 %v2294, %v2662
  %2664 = vmatmul.bf16.gmra.mxu0 %v1635
  %v2665 = vpop.f32.mrf.mxu0
  %v2666 = vadd.f32 %v2297, %v2665
  %v2667 = vpop.f32.mrf.mxu0
  %v2668 = vadd.f32 %v2299, %v2667
  %2669 = vmatmul.bf16.gmra.mxu0 %v1638
  %v2670 = vpop.f32.mrf.mxu0
  %v2671 = vadd.f32 %v2302, %v2670
  %v2672 = vpop.f32.mrf.mxu0
  %v2673 = vadd.f32 %v2304, %v2672
  %2674 = vmatmul.bf16.gmra.mxu0 %v1641
  %v2675 = vpop.f32.mrf.mxu0
  %v2676 = vadd.f32 %v2307, %v2675
  %v2677 = vpop.f32.mrf.mxu0
  %v2678 = vadd.f32 %v2309, %v2677
  %2679 = vmatmul.bf16.gmra.mxu0 %v1644
  %v2680 = vpop.f32.mrf.mxu0
  %v2681 = vadd.f32 %v2312, %v2680
  %v2682 = vpop.f32.mrf.mxu0
  %v2683 = vadd.f32 %v2314, %v2682
  %2684 = vmatmul.bf16.gmra.mxu0 %v1647
  %v2685 = vpop.f32.mrf.mxu0
  %v2686 = vadd.f32 %v2317, %v2685
  %v2687 = vpop.f32.mrf.mxu0
  %v2688 = vadd.f32 %v2319, %v2687
  %2689 = vmatmul.bf16.gmra.mxu0 %v1650
  %v2690 = vpop.f32.mrf.mxu0
  %v2691 = vadd.f32 %v2322, %v2690
  %v2692 = vpop.f32.mrf.mxu0
  %v2693 = vadd.f32 %v2324, %v2692
  %2694 = vmatmul.bf16.gmra.mxu0 %v1653
  %v2695 = vpop.f32.mrf.mxu0
  %v2696 = vadd.f32 %v2327, %v2695
  %v2697 = vpop.f32.mrf.mxu0
  %v2698 = vadd.f32 %v2329, %v2697
  %2699 = vmatmul.bf16.gmra.mxu0 %v1656
  %v2700 = vpop.f32.mrf.mxu0
  %v2701 = vadd.f32 %v2332, %v2700
  %v2702 = vpop.f32.mrf.mxu0
  %v2703 = vadd.f32 %v2334, %v2702
  %2704 = vmatmul.bf16.gmra.mxu0 %v1659
  %v2705 = vpop.f32.mrf.mxu0
  %v2706 = vadd.f32 %v2337, %v2705
  %v2707 = vpop.f32.mrf.mxu0
  %v2708 = vadd.f32 %v2339, %v2707
  %2709 = vmatmul.bf16.gmra.mxu0 %v1662
  %v2710 = vpop.f32.mrf.mxu0
  %v2711 = vadd.f32 %v2342, %v2710
  %v2712 = vpop.f32.mrf.mxu0
  %v2713 = vadd.f32 %v2344, %v2712
  %2714 = vmatmul.bf16.gmra.mxu0 %v1665
  %v2715 = vpop.f32.mrf.mxu0
  %v2716 = vadd.f32 %v2347, %v2715
  %v2717 = vpop.f32.mrf.mxu0
  %v2718 = vadd.f32 %v2349, %v2717
  %2719 = vmatmul.bf16.gmra.mxu0 %v1668
  %v2720 = vpop.f32.mrf.mxu0
  %v2721 = vadd.f32 %v2352, %v2720
  %v2722 = vpop.f32.mrf.mxu0
  %v2723 = vadd.f32 %v2354, %v2722
  %2724 = vmatmul.bf16.gmra.mxu0 %v1671
  %v2725 = vpop.f32.mrf.mxu0
  %v2726 = vadd.f32 %v2357, %v2725
  %v2727 = vpop.f32.mrf.mxu0
  %v2728 = vadd.f32 %v2359, %v2727
  %2729 = vmatmul.bf16.gmra.mxu0 %v1674
  %v2730 = vpop.f32.mrf.mxu0
  %v2731 = vadd.f32 %v2362, %v2730
  %v2732 = vpop.f32.mrf.mxu0
  %v2733 = vadd.f32 %v2364, %v2732
  %2734 = vmatmul.bf16.gmra.mxu0 %v1677
  %v2735 = vpop.f32.mrf.mxu0
  %v2736 = vadd.f32 %v2367, %v2735
  %v2737 = vpop.f32.mrf.mxu0
  %v2738 = vadd.f32 %v2369, %v2737
  %2739 = vmatmul.bf16.gmra.mxu0 %v1680
  %v2740 = vpop.f32.mrf.mxu0
  %v2741 = vadd.f32 %v2372, %v2740
  %v2742 = vpop.f32.mrf.mxu0
  %v2743 = vadd.f32 %v2374, %v2742
  %2744 = vmatmul.bf16.gmra.mxu0 %v1683
  %v2745 = vpop.f32.mrf.mxu0
  %v2746 = vadd.f32 %v2377, %v2745
  %v2747 = vpop.f32.mrf.mxu0
  %v2748 = vadd.f32 %v2379, %v2747
  %2749 = vmatmul.bf16.gmra.mxu0 %v1686
  %v2750 = vpop.f32.mrf.mxu0
  %v2751 = vadd.f32 %v2382, %v2750
  %v2752 = vpop.f32.mrf.mxu0
  %v2753 = vadd.f32 %v2384, %v2752
  %2754 = vmatmul.bf16.gmra.mxu0 %v1689
  %v2755 = vpop.f32.mrf.mxu0
  %v2756 = vadd.f32 %v2387, %v2755
  %v2757 = vpop.f32.mrf.mxu0
  %v2758 = vadd.f32 %v2389, %v2757
  %2759 = vmatmul.bf16.gmra.mxu0 %v1692
  %v2760 = vpop.f32.mrf.mxu0
  %v2761 = vadd.f32 %v2392, %v2760
  %v2762 = vpop.f32.mrf.mxu0
  %v2763 = vadd.f32 %v2394, %v2762
  %2764 = vmatmul.bf16.gmra.mxu0 %v1695
  %v2765 = vpop.f32.mrf.mxu0
  %v2766 = vadd.f32 %v2397, %v2765
  %v2767 = vpop.f32.mrf.mxu0
  %v2768 = vadd.f32 %v2399, %v2767
  %2769 = vmatmul.bf16.gmra.mxu0 %v1698
  %v2770 = vpop.f32.mrf.mxu0
  %v2771 = vadd.f32 %v2402, %v2770
  %v2772 = vpop.f32.mrf.mxu0
  %v2773 = vadd.f32 %v2404, %v2772
  %2774 = vmatmul.bf16.gmra.mxu0 %v1701
  %v2775 = vpop.f32.mrf.mxu0
  %v2776 = vadd.f32 %v2407, %v2775
  %v2777 = vpop.f32.mrf.mxu0
  %v2778 = vadd.f32 %v2409, %v2777
  %2779 = vmatmul.bf16.gmra.mxu0 %v1704
  %v2780 = vpop.f32.mrf.mxu0
  %v2781 = vadd.f32 %v2412, %v2780
  %v2782 = vpop.f32.mrf.mxu0
  %v2783 = vadd.f32 %v2414, %v2782
  %2784 = vmatmul.bf16.gmra.mxu0 %v1707
  %v2785 = vpop.f32.mrf.mxu0
  %v2786 = vadd.f32 %v2417, %v2785
  %v2787 = vpop.f32.mrf.mxu0
  %v2788 = vadd.f32 %v2419, %v2787
  %2789 = vmatmul.bf16.gmra.mxu0 %v1710
  %v2790 = vpop.f32.mrf.mxu0
  %v2791 = vadd.f32 %v2422, %v2790
  %v2792 = vpop.f32.mrf.mxu0
  %v2793 = vadd.f32 %v2424, %v2792
  %2794 = vmatmul.bf16.gmra.mxu0 %v1713
  %v2795 = vpop.f32.mrf.mxu0
  %v2796 = vadd.f32 %v2427, %v2795
  %v2797 = vpop.f32.mrf.mxu0
  %v2798 = vadd.f32 %v2429, %v2797
  %2799 = vmatmul.bf16.gmra.mxu0 %v1716
  %v2800 = vpop.f32.mrf.mxu0
  %v2801 = vadd.f32 %v2432, %v2800
  %v2802 = vpop.f32.mrf.mxu0
  %v2803 = vadd.f32 %v2434, %v2802
  %2804 = vmatmul.bf16.gmra.mxu0 %v1719
  %v2805 = vpop.f32.mrf.mxu0
  %v2806 = vadd.f32 %v2437, %v2805
  %v2807 = vpop.f32.mrf.mxu0
  %v2808 = vadd.f32 %v2439, %v2807
  %2809 = vmatmul.bf16.gmra.mxu0 %v1722
  %v2810 = vpop.f32.mrf.mxu0
  %v2811 = vadd.f32 %v2442, %v2810
  %v2812 = vpop.f32.mrf.mxu0
  %v2813 = vadd.f32 %v2444, %v2812
  %2814 = vmatmul.bf16.gmra.mxu0 %v1725
  %v2815 = vpop.f32.mrf.mxu0
  %v2816 = vadd.f32 %v2447, %v2815
  %v2817 = vpop.f32.mrf.mxu0
  %v2818 = vadd.f32 %v2449, %v2817
  %2819 = vmatmul.bf16.gmra.mxu0 %v1728
  %v2820 = vpop.f32.mrf.mxu0
  %v2821 = vadd.f32 %v2452, %v2820
  %v2822 = vpop.f32.mrf.mxu0
  %v2823 = vadd.f32 %v2454, %v2822
  %2824 = vmatmul.bf16.gmra.mxu0 %v1731
  %v2825 = vpop.f32.mrf.mxu0
  %v2826 = vadd.f32 %v2457, %v2825
  %v2827 = vpop.f32.mrf.mxu0
  %v2828 = vadd.f32 %v2459, %v2827
  %2829 = vmatmul.bf16.gmra.mxu0 %v1734
  %v2830 = vpop.f32.mrf.mxu0
  %v2831 = vadd.f32 %v2462, %v2830
  %v2832 = vpop.f32.mrf.mxu0
  %v2833 = vadd.f32 %v2464, %v2832
  %2834 = vmatmul.bf16.gmra.mxu0 %v1737
  %v2835 = vpop.f32.mrf.mxu0
  %v2836 = vadd.f32 %v2467, %v2835
  %v2837 = vpop.f32.mrf.mxu0
  %v2838 = vadd.f32 %v2469, %v2837
  %2839 = vmatmul.bf16.gmra.mxu0 %v1740
  %v2840 = vpop.f32.mrf.mxu0
  %v2841 = vadd.f32 %v2472, %v2840
  %v2842 = vpop.f32.mrf.mxu0
  %v2843 = vadd.f32 %v2474, %v2842
  %2844 = vmatmul.bf16.gmra.mxu0 %v1743
  %v2845 = vpop.f32.mrf.mxu0
  %v2846 = vadd.f32 %v2477, %v2845
  %v2847 = vpop.f32.mrf.mxu0
  %v2848 = vadd.f32 %v2479, %v2847
  %2849 = vmatmul.bf16.gmra.mxu0 %v1746
  %v2850 = vpop.f32.mrf.mxu0
  %v2851 = vadd.f32 %v2482, %v2850
  %v2852 = vpop.f32.mrf.mxu0
  %v2853 = vadd.f32 %v2484, %v2852
  %2854 = vdwg.mxu0
  %v2855 = vmax.f32 %v2496, 0.0
  %v2856 = vmax.f32 %v2498, 0.0
  %v2857 = vmax.f32 %v2501, 0.0
  %v2858 = vmax.f32 %v2503, 0.0
  %v2859 = vmax.f32 %v2506, 0.0
  %v2860 = vmax.f32 %v2508, 0.0
  %v2861 = vmax.f32 %v2511, 0.0
  %v2862 = vmax.f32 %v2513, 0.0
  %v2863 = vmax.f32 %v2516, 0.0
  %v2864 = vmax.f32 %v2518, 0.0
  %v2865 = vmax.f32 %v2521, 0.0
  %v2866 = vmax.f32 %v2523, 0.0
  %v2867 = vmax.f32 %v2526, 0.0
  %v2868 = vmax.f32 %v2528, 0.0
  %v2869 = vmax.f32 %v2531, 0.0
  %v2870 = vmax.f32 %v2533, 0.0
  %v2871 = vmax.f32 %v2536, 0.0
  %v2872 = vmax.f32 %v2538, 0.0
  %v2873 = vmax.f32 %v2541, 0.0
  %v2874 = vmax.f32 %v2543, 0.0
  %v2875 = vmax.f32 %v2546, 0.0
  %v2876 = vmax.f32 %v2548, 0.0
  %v2877 = vmax.f32 %v2551, 0.0
  %v2878 = vmax.f32 %v2553, 0.0
  %v2879 = vmax.f32 %v2556, 0.0
  %v2880 = vmax.f32 %v2558, 0.0
  %v2881 = vmax.f32 %v2561, 0.0
  %v2882 = vmax.f32 %v2563, 0.0
  %v2883 = vmax.f32 %v2566, 0.0
  %v2884 = vmax.f32 %v2568, 0.0
  %v2885 = vmax.f32 %v2571, 0.0
  %v2886 = vmax.f32 %v2573, 0.0
  %v2887 = vmax.f32 %v2576, 0.0
  %v2888 = vmax.f32 %v2578, 0.0
  %v2889 = vmax.f32 %v2581, 0.0
  %v2890 = vmax.f32 %v2583, 0.0
  %v2891 = vmax.f32 %v2586, 0.0
  %v2892 = vmax.f32 %v2588, 0.0
  %v2893 = vmax.f32 %v2591, 0.0
  %v2894 = vmax.f32 %v2593, 0.0
  %v2895 = vmax.f32 %v2596, 0.0
  %v2896 = vmax.f32 %v2598, 0.0
  %v2897 = vmax.f32 %v2601, 0.0
  %v2898 = vmax.f32 %v2603, 0.0
  %v2899 = vmax.f32 %v2606, 0.0
  %v2900 = vmax.f32 %v2608, 0.0
  %v2901 = vmax.f32 %v2611, 0.0
  %v2902 = vmax.f32 %v2613, 0.0
  %v2903 = vmax.f32 %v2616, 0.0
  %v2904 = vmax.f32 %v2618, 0.0
  %v2905 = vmax.f32 %v2621, 0.0
  %v2906 = vmax.f32 %v2623, 0.0
  %v2907 = vmax.f32 %v2626, 0.0
  %v2908 = vmax.f32 %v2628, 0.0
  %v2909 = vmax.f32 %v2631, 0.0
  %v2910 = vmax.f32 %v2633, 0.0
  %v2911 = vmax.f32 %v2636, 0.0
  %v2912 = vmax.f32 %v2638, 0.0
  %v2913 = vmax.f32 %v2641, 0.0
  %v2914 = vmax.f32 %v2643, 0.0
  %v2915 = vmax.f32 %v2646, 0.0
  %v2916 = vmax.f32 %v2648, 0.0
  %v2917 = vmax.f32 %v2651, 0.0
  %v2918 = vmax.f32 %v2653, 0.0
  %v2919 = vmax.f32 %v2656, 0.0
  %v2920 = vmax.f32 %v2658, 0.0
  %v2921 = vmax.f32 %v2661, 0.0
  %v2922 = vmax.f32 %v2663, 0.0
  %v2923 = vmax.f32 %v2666, 0.0
  %v2924 = vmax.f32 %v2668, 0.0
  %v2925 = vmax.f32 %v2671, 0.0
  %v2926 = vmax.f32 %v2673, 0.0
  %v2927 = vmax.f32 %v2676, 0.0
  %v2928 = vmax.f32 %v2678, 0.0
  %v2929 = vmax.f32 %v2681, 0.0
  %v2930 = vmax.f32 %v2683, 0.0
  %v2931 = vmax.f32 %v2686, 0.0
  %v2932 = vmax.f32 %v2688, 0.0
  %v2933 = vmax.f32 %v2691, 0.0
  %v2934 = vmax.f32 %v2693, 0.0
  %v2935 = vmax.f32 %v2696, 0.0
  %v2936 = vmax.f32 %v2698, 0.0
  %v2937 = vmax.f32 %v2701, 0.0
  %v2938 = vmax.f32 %v2703, 0.0
  %v2939 = vmax.f32 %v2706, 0.0
  %v2940 = vmax.f32 %v2708, 0.0
  %v2941 = vmax.f32 %v2711, 0.0
  %v2942 = vmax.f32 %v2713, 0.0
  %v2943 = vmax.f32 %v2716, 0.0
  %v2944 = vmax.f32 %v2718, 0.0
  %v2945 = vmax.f32 %v2721, 0.0
  %v2946 = vmax.f32 %v2723, 0.0
  %v2947 = vmax.f32 %v2726, 0.0
  %v2948 = vmax.f32 %v2728, 0.0
  %v2949 = vmax.f32 %v2731, 0.0
  %v2950 = vmax.f32 %v2733, 0.0
  %v2951 = vmax.f32 %v2736, 0.0
  %v2952 = vmax.f32 %v2738, 0.0
  %v2953 = vmax.f32 %v2741, 0.0
  %v2954 = vmax.f32 %v2743, 0.0
  %v2955 = vmax.f32 %v2746, 0.0
  %v2956 = vmax.f32 %v2748, 0.0
  %v2957 = vmax.f32 %v2751, 0.0
  %v2958 = vmax.f32 %v2753, 0.0
  %v2959 = vmax.f32 %v2756, 0.0
  %v2960 = vmax.f32 %v2758, 0.0
  %v2961 = vmax.f32 %v2761, 0.0
  %v2962 = vmax.f32 %v2763, 0.0
  %v2963 = vmax.f32 %v2766, 0.0
  %v2964 = vmax.f32 %v2768, 0.0
  %v2965 = vmax.f32 %v2771, 0.0
  %v2966 = vmax.f32 %v2773, 0.0
  %v2967 = vmax.f32 %v2776, 0.0
  %v2968 = vmax.f32 %v2778, 0.0
  %v2969 = vmax.f32 %v2781, 0.0
  %v2970 = vmax.f32 %v2783, 0.0
  %v2971 = vmax.f32 %v2786, 0.0
  %v2972 = vmax.f32 %v2788, 0.0
  %v2973 = vmax.f32 %v2791, 0.0
  %v2974 = vmax.f32 %v2793, 0.0
  %v2975 = vmax.f32 %v2796, 0.0
  %v2976 = vmax.f32 %v2798, 0.0
  %v2977 = vmax.f32 %v2801, 0.0
  %v2978 = vmax.f32 %v2803, 0.0
  %v2979 = vmax.f32 %v2806, 0.0
  %v2980 = vmax.f32 %v2808, 0.0
  %v2981 = vmax.f32 %v2811, 0.0
  %v2982 = vmax.f32 %v2813, 0.0
  %v2983 = vmax.f32 %v2816, 0.0
  %v2984 = vmax.f32 %v2818, 0.0
  %v2985 = vmax.f32 %v2821, 0.0
  %v2986 = vmax.f32 %v2823, 0.0
  %v2987 = vmax.f32 %v2826, 0.0
  %v2988 = vmax.f32 %v2828, 0.0
  %v2989 = vmax.f32 %v2831, 0.0
  %v2990 = vmax.f32 %v2833, 0.0
  %v2991 = vmax.f32 %v2836, 0.0
  %v2992 = vmax.f32 %v2838, 0.0
  %v2993 = vmax.f32 %v2841, 0.0
  %v2994 = vmax.f32 %v2843, 0.0
  %v2995 = vmax.f32 %v2846, 0.0
  %v2996 = vmax.f32 %v2848, 0.0
  %v2997 = vmax.f32 %v2851, 0.0
  %v2998 = vmax.f32 %v2853, 0.0
  %v2999 = vmax.f32 %v2855, %v2891
  %v3000 = vmax.f32 %v2856, %v2892
  %v3001 = vmax.f32 %v2857, %v2893
  %v3002 = vmax.f32 %v2858, %v2894
  %v3003 = vmax.f32 %v2859, %v2895
  %v3004 = vmax.f32 %v2860, %v2896
  %v3005 = vmax.f32 %v2861, %v2897
  %v3006 = vmax.f32 %v2862, %v2898
  %v3007 = vmax.f32 %v2863, %v2899
  %v3008 = vmax.f32 %v2864, %v2900
  %v3009 = vmax.f32 %v2865, %v2901
  %v3010 = vmax.f32 %v2866, %v2902
  %v3011 = vmax.f32 %v2867, %v2903
  %v3012 = vmax.f32 %v2868, %v2904
  %v3013 = vmax.f32 %v2869, %v2905
  %v3014 = vmax.f32 %v2870, %v2906
  %v3015 = vmax.f32 %v2871, %v2907
  %v3016 = vmax.f32 %v2872, %v2908
  %v3017 = vmax.f32 %v2873, %v2909
  %v3018 = vmax.f32 %v2874, %v2910
  %v3019 = vmax.f32 %v2875, %v2911
  %v3020 = vmax.f32 %v2876, %v2912
  %v3021 = vmax.f32 %v2877, %v2913
  %v3022 = vmax.f32 %v2878, %v2914
  %v3023 = vmax.f32 %v2879, %v2915
  %v3024 = vmax.f32 %v2880, %v2916
  %v3025 = vmax.f32 %v2881, %v2917
  %v3026 = vmax.f32 %v2882, %v2918
  %v3027 = vmax.f32 %v2883, %v2919
  %v3028 = vmax.f32 %v2884, %v2920
  %v3029 = vmax.f32 %v2885, %v2921
  %v3030 = vmax.f32 %v2886, %v2922
  %v3031 = vmax.f32 %v2887, %v2923
  %v3032 = vmax.f32 %v2888, %v2924
  %v3033 = vmax.f32 %v2889, %v2925
  %v3034 = vmax.f32 %v2890, %v2926
  %v3035 = vmax.f32 %v2927, %v2963
  %v3036 = vmax.f32 %v2928, %v2964
  %v3037 = vmax.f32 %v2929, %v2965
  %v3038 = vmax.f32 %v2930, %v2966
  %v3039 = vmax.f32 %v2931, %v2967
  %v3040 = vmax.f32 %v2932, %v2968
  %v3041 = vmax.f32 %v2933, %v2969
  %v3042 = vmax.f32 %v2934, %v2970
  %v3043 = vmax.f32 %v2935, %v2971
  %v3044 = vmax.f32 %v2936, %v2972
  %v3045 = vmax.f32 %v2937, %v2973
  %v3046 = vmax.f32 %v2938, %v2974
  %v3047 = vmax.f32 %v2939, %v2975
  %v3048 = vmax.f32 %v2940, %v2976
  %v3049 = vmax.f32 %v2941, %v2977
  %v3050 = vmax.f32 %v2942, %v2978
  %v3051 = vmax.f32 %v2943, %v2979
  %v3052 = vmax.f32 %v2944, %v2980
  %v3053 = vmax.f32 %v2945, %v2981
  %v3054 = vmax.f32 %v2946, %v2982
  %v3055 = vmax.f32 %v2947, %v2983
  %v3056 = vmax.f32 %v2948, %v2984
  %v3057 = vmax.f32 %v2949, %v2985
  %v3058 = vmax.f32 %v2950, %v2986
  %v3059 = vmax.f32 %v2951, %v2987
  %v3060 = vmax.f32 %v2952, %v2988
  %v3061 = vmax.f32 %v2953, %v2989
  %v3062 = vmax.f32 %v2954, %v2990
  %v3063 = vmax.f32 %v2955, %v2991
  %v3064 = vmax.f32 %v2956, %v2992
  %v3065 = vmax.f32 %v2957, %v2993
  %v3066 = vmax.f32 %v2958, %v2994
  %v3067 = vmax.f32 %v2959, %v2995
  %v3068 = vmax.f32 %v2960, %v2996
  %v3069 = vmax.f32 %v2961, %v2997
  %v3070 = vmax.f32 %v2962, %v2998
  %v3071 = vmax.f32 %v2999, %v3035
  %v3072 = vmax.f32 %v3000, %v3036
  %v3073 = vmax.f32 %v3001, %v3037
  %v3074 = vmax.f32 %v3002, %v3038
  %v3075 = vmax.f32 %v3003, %v3039
  %v3076 = vmax.f32 %v3004, %v3040
  %v3077 = vmax.f32 %v3005, %v3041
  %v3078 = vmax.f32 %v3006, %v3042
  %v3079 = vmax.f32 %v3007, %v3043
  %v3080 = vmax.f32 %v3008, %v3044
  %v3081 = vmax.f32 %v3009, %v3045
  %v3082 = vmax.f32 %v3010, %v3046
  %v3083 = vmax.f32 %v3011, %v3047
  %v3084 = vmax.f32 %v3012, %v3048
  %v3085 = vmax.f32 %v3013, %v3049
  %v3086 = vmax.f32 %v3014, %v3050
  %v3087 = vmax.f32 %v3015, %v3051
  %v3088 = vmax.f32 %v3016, %v3052
  %v3089 = vmax.f32 %v3017, %v3053
  %v3090 = vmax.f32 %v3018, %v3054
  %v3091 = vmax.f32 %v3019, %v3055
  %v3092 = vmax.f32 %v3020, %v3056
  %v3093 = vmax.f32 %v3021, %v3057
  %v3094 = vmax.f32 %v3022, %v3058
  %v3095 = vmax.f32 %v3023, %v3059
  %v3096 = vmax.f32 %v3024, %v3060
  %v3097 = vmax.f32 %v3025, %v3061
  %v3098 = vmax.f32 %v3026, %v3062
  %v3099 = vmax.f32 %v3027, %v3063
  %v3100 = vmax.f32 %v3028, %v3064
  %v3101 = vmax.f32 %v3029, %v3065
  %v3102 = vmax.f32 %v3030, %v3066
  %v3103 = vmax.f32 %v3031, %v3067
  %v3104 = vmax.f32 %v3032, %v3068
  %v3105 = vmax.f32 %v3033, %v3069
  %v3106 = vmax.f32 %v3034, %v3070
  %v3107 = vpack.c.bf16 %v3071, %v3071
  %v3108 = vpack.c.bf16 %v3072, %v3072
  %v3109 = vpack.c.bf16 %v3073, %v3073
  %v3110 = vpack.c.bf16 %v3074, %v3074
  %v3111 = vpack.c.bf16 %v3075, %v3075
  %v3112 = vpack.c.bf16 %v3076, %v3076
  %v3113 = vpack.c.bf16 %v3077, %v3077
  %v3114 = vpack.c.bf16 %v3078, %v3078
  %v3115 = vpack.c.bf16 %v3079, %v3079
  %v3116 = vpack.c.bf16 %v3080, %v3080
  %v3117 = vpack.c.bf16 %v3081, %v3081
  %v3118 = vpack.c.bf16 %v3082, %v3082
  %v3119 = vpack.c.bf16 %v3083, %v3083
  %v3120 = vpack.c.bf16 %v3084, %v3084
  %v3121 = vpack.c.bf16 %v3085, %v3085
  %v3122 = vpack.c.bf16 %v3086, %v3086
  %v3123 = vpack.c.bf16 %v3087, %v3087
  %v3124 = vpack.c.bf16 %v3088, %v3088
  %v3125 = vpack.c.bf16 %v3089, %v3089
  %v3126 = vpack.c.bf16 %v3090, %v3090
  %v3127 = vpack.c.bf16 %v3091, %v3091
  %v3128 = vpack.c.bf16 %v3092, %v3092
  %v3129 = vpack.c.bf16 %v3093, %v3093
  %v3130 = vpack.c.bf16 %v3094, %v3094
  %v3131 = vpack.c.bf16 %v3095, %v3095
  %v3132 = vpack.c.bf16 %v3096, %v3096
  %v3133 = vpack.c.bf16 %v3097, %v3097
  %v3134 = vpack.c.bf16 %v3098, %v3098
  %v3135 = vpack.c.bf16 %v3099, %v3099
  %v3136 = vpack.c.bf16 %v3100, %v3100
  %v3137 = vpack.c.bf16 %v3101, %v3101
  %v3138 = vpack.c.bf16 %v3102, %v3102
  %v3139 = vpack.c.bf16 %v3103, %v3103
  %v3140 = vpack.c.bf16 %v3104, %v3104
  %v3141 = vpack.c.bf16 %v3105, %v3105
  %v3142 = vpack.c.bf16 %v3106, %v3106
  %vm3143 = vcmask 125952
  %3144 = vst.msk [vmem:[%s3] sm:$0xf] %vm3143, %v3107
  %3145 = vst.msk [vmem:[%s3 + $0x4] sm:$0xf] %vm3143, %v3108
  %3146 = vst.msk [vmem:[%s3 + $0x8] sm:$0xf] %vm3143, %v3109
  %3147 = vst.msk [vmem:[%s3 + $0xc] sm:$0xf] %vm3143, %v3110
  %3148 = vst.msk [vmem:[%s3 + $0x10] sm:$0xf] %vm3143, %v3111
  %3149 = vst.msk [vmem:[%s3 + $0x14] sm:$0xf] %vm3143, %v3112
  %3150 = vst.msk [vmem:[%s3 + $0x18] sm:$0xf] %vm3143, %v3113
  %3151 = vst.msk [vmem:[%s3 + $0x1c] sm:$0xf] %vm3143, %v3114
  %3152 = vst.msk [vmem:[%s3 + $0x20] sm:$0xf] %vm3143, %v3115
  %3153 = vst.msk [vmem:[%s3 + $0x24] sm:$0xf] %vm3143, %v3116
  %3154 = vst.msk [vmem:[%s3 + $0x28] sm:$0xf] %vm3143, %v3117
  %3155 = vst.msk [vmem:[%s3 + $0x2c] sm:$0xf] %vm3143, %v3118
  %3156 = vst.msk [vmem:[%s3 + $0x30] sm:$0xf] %vm3143, %v3119
  %3157 = vst.msk [vmem:[%s3 + $0x34] sm:$0xf] %vm3143, %v3120
  %3158 = vst.msk [vmem:[%s3 + $0x38] sm:$0xf] %vm3143, %v3121
  %3159 = vst.msk [vmem:[%s3 + $0x3c] sm:$0xf] %vm3143, %v3122
  %3160 = vst.msk [vmem:[%s3 + $0x40] sm:$0xf] %vm3143, %v3123
  %3161 = vst.msk [vmem:[%s3 + $0x44] sm:$0xf] %vm3143, %v3124
  %3162 = vst.msk [vmem:[%s3 + $0x48] sm:$0xf] %vm3143, %v3125
  %3163 = vst.msk [vmem:[%s3 + $0x4c] sm:$0xf] %vm3143, %v3126
  %3164 = vst.msk [vmem:[%s3 + $0x50] sm:$0xf] %vm3143, %v3127
  %3165 = vst.msk [vmem:[%s3 + $0x54] sm:$0xf] %vm3143, %v3128
  %3166 = vst.msk [vmem:[%s3 + $0x58] sm:$0xf] %vm3143, %v3129
  %3167 = vst.msk [vmem:[%s3 + $0x5c] sm:$0xf] %vm3143, %v3130
  %3168 = vst.msk [vmem:[%s3 + $0x60] sm:$0xf] %vm3143, %v3131
  %3169 = vst.msk [vmem:[%s3 + $0x64] sm:$0xf] %vm3143, %v3132
  %3170 = vst.msk [vmem:[%s3 + $0x68] sm:$0xf] %vm3143, %v3133
  %3171 = vst.msk [vmem:[%s3 + $0x6c] sm:$0xf] %vm3143, %v3134
  %3172 = vst.msk [vmem:[%s3 + $0x70] sm:$0xf] %vm3143, %v3135
  %3173 = vst.msk [vmem:[%s3 + $0x74] sm:$0xf] %vm3143, %v3136
  %3174 = vst.msk [vmem:[%s3 + $0x78] sm:$0xf] %vm3143, %v3137
  %3175 = vst.msk [vmem:[%s3 + $0x7c] sm:$0xf] %vm3143, %v3138
  %3176 = vst.msk [vmem:[%s3 + $0x80] sm:$0xf] %vm3143, %v3139
  %3177 = vst.msk [vmem:[%s3 + $0x84] sm:$0xf] %vm3143, %v3140
  %3178 = vst.msk [vmem:[%s3 + $0x88] sm:$0xf] %vm3143, %v3141
  %3179 = vst.msk [vmem:[%s3 + $0x8c] sm:$0xf] %vm3143, %v3142
  // Predicated region
  $region14: #{deconvvae_forward.6} parent=0 // pred_check
    _
  $region15: #{deconvvae_forward.6} parent=0 // pred_check_branch
    %3181 = sbr.rel (0) target = $region17
  $region16: #{deconvvae_forward.6} parent=0 // pred_region
    _
  $region17: #{deconvvae_forward.6} parent=0 // pred_fallthru
    _
  // Predicated region
  $region18: #{deconvvae_forward.6} parent=0 // pred_check
    _
  $region19: #{deconvvae_forward.6} parent=0 // pred_check_branch
    %3183 = sbr.rel (0) target = $region21
  $region20: #{deconvvae_forward.6} parent=0 // pred_region
    _
  $region21: #{deconvvae_forward.6} parent=0 // pred_fallthru
    _

// kernel: deconvvae_forward.7
$region0: #{deconvvae_forward.7}
  #allocation0 [shape = 'u32[]', space=smem, size = 0x4, offset = 0x4, fixed_abs, tag = 'smem constant byte address 0x4 - core index']
  #allocation1 [shape = 'u32[72,128]{1,0:T(1,128)}', space=vmem, size = 0x9000, scoped, tag = 'internal scratch']
  %s0 = inlined_call_operand.vmem [shape: bf16[2,2304], index: 0, kind: input, shape index: {}]
  %s1 = inlined_call_operand.vmem [shape: bf16[2304,64], index: 1, kind: input, shape index: {}]
  %s2 = inlined_call_operand.vmem [shape: f32[1,64], index: 2, kind: input, shape index: {}]
  %s3 = inlined_call_operand.vmem [shape: f32[2,32], index: 3, kind: input, shape index: {}]
  %s4 = inlined_call_operand.vmem [shape: bf16[32,2304], index: 4, kind: input, shape index: {}]
  %s5 = inlined_call_operand.vmem [shape: f32[1,2304], index: 5, kind: input, shape index: {}]
  %s6 = inlined_call_operand.hbm [shape: f32[2,32], index: 6, kind: output, shape index: {0}]
  %s7 = inlined_call_operand.hbm [shape: f32[2,32], index: 7, kind: output, shape index: {1}]
  %s8 = inlined_call_operand.vmem [shape: bf16[2,2304], index: 8, kind: output, shape index: {2}]
  %9 = xla_tuple %s6, %s7, %s8
  %s10 = sld [smem:[#allocation0]]
  $region50: #{deconvvae_forward.7} parent=0
    _
  %s12 = ssub.s32 1, %s10
  %s13 = scalar_select 0, %s12, %s10
  $region1: #{deconvvae_forward.7} parent=0
    #allocation2 [shape = 'u8[1024]{0}', space=vmem, size = 0x400, scoped, tag = 'output window, operand 0, single buffered']
    #allocation3 [shape = 's32[1]{0}', space=sflag, size = 0x4, scoped, tag = 'scoped memory for deconvvae_forward.7']
    #allocation4 [shape = 'u8[1024]{0}', space=vmem, size = 0x400, scoped, tag = 'output window, operand 1, single buffered']
    #allocation5 [shape = 's32[1]{0}', space=sflag, size = 0x4, scoped, tag = 'scoped memory for deconvvae_forward.7']
    %14 = vsyncpa [#allocation3], 0
    %15 = vsyncpa [#allocation5], 0
    // Predicated region
    $region2: #{deconvvae_forward.7} parent=1 // pred_check
      _
    $region3: #{deconvvae_forward.7} parent=1 // pred_check_branch
      %17 = sbr.rel (0) target = $region5
    $region4: #{deconvvae_forward.7} parent=1 // pred_region
      _
    $region5: #{deconvvae_forward.7} parent=1 // pred_fallthru
      _
    // Predicated region
    $region6: #{deconvvae_forward.7} parent=1 // pred_check
      _
    $region7: #{deconvvae_forward.7} parent=1 // pred_check_branch
      %19 = sbr.rel (0) target = $region9
    $region8: #{deconvvae_forward.7} parent=1 // pred_region
      _
    $region9: #{deconvvae_forward.7} parent=1 // pred_fallthru
      _
    // Predicated region
    $region10: #{deconvvae_forward.7} parent=1 // pred_check
      _
    $region11: #{deconvvae_forward.7} parent=1 // pred_check_branch
      %21 = sbr.rel (0) target = $region13
    $region12: #{deconvvae_forward.7} parent=1 // pred_region
      _
    $region13: #{deconvvae_forward.7} parent=1 // pred_fallthru
      _
    // Predicated region
    $region14: #{deconvvae_forward.7} parent=1 // pred_check
      _
    $region15: #{deconvvae_forward.7} parent=1 // pred_check_branch
      %23 = sbr.rel (0) target = $region17
    $region16: #{deconvvae_forward.7} parent=1 // pred_region
      _
    $region17: #{deconvvae_forward.7} parent=1 // pred_fallthru
      _
    // Predicated region
    $region18: #{deconvvae_forward.7} parent=1 // pred_check
      _
    $region19: #{deconvvae_forward.7} parent=1 // pred_check_branch
      %25 = sbr.rel (0) target = $region21
    $region20: #{deconvvae_forward.7} parent=1 // pred_region
      _
    $region21: #{deconvvae_forward.7} parent=1 // pred_fallthru
      _
    // Predicated region
    $region22: #{deconvvae_forward.7} parent=1 // pred_check
      _
    $region23: #{deconvvae_forward.7} parent=1 // pred_check_branch
      %27 = sbr.rel (0) target = $region25
    $region24: #{deconvvae_forward.7} parent=1 // pred_region
      _
    $region25: #{deconvvae_forward.7} parent=1 // pred_fallthru
      _
    %v29 = vld [vmem:[%s0] sm:$0xff]
    %v30 = vld [vmem:[%s0 + $0x8] sm:$0xff]
    %v31 = vld [vmem:[%s0 + $0x10] sm:$0x3]
    %v32 = vld [vmem:[%s1] sm:$0xf]
    %v33 = vld [vmem:[%s1 + $0x4] sm:$0xf]
    %v34 = vld [vmem:[%s1 + $0x8] sm:$0xf]
    %v35 = vld [vmem:[%s1 + $0xc] sm:$0xf]
    %v36 = vld [vmem:[%s1 + $0x10] sm:$0xf]
    %v37 = vld [vmem:[%s1 + $0x14] sm:$0xf]
    %v38 = vld [vmem:[%s1 + $0x18] sm:$0xf]
    %v39 = vld [vmem:[%s1 + $0x1c] sm:$0xf]
    %v40 = vld [vmem:[%s1 + $0x20] sm:$0xf]
    %v41 = vld [vmem:[%s1 + $0x24] sm:$0xf]
    %v42 = vld [vmem:[%s1 + $0x28] sm:$0xf]
    %v43 = vld [vmem:[%s1 + $0x2c] sm:$0xf]
    %v44 = vld [vmem:[%s1 + $0x30] sm:$0xf]
    %v45 = vld [vmem:[%s1 + $0x34] sm:$0xf]
    %v46 = vld [vmem:[%s1 + $0x38] sm:$0xf]
    %v47 = vld [vmem:[%s1 + $0x3c] sm:$0xf]
    %v48 = vld [vmem:[%s1 + $0x40] sm:$0xf]
    %v49 = vld [vmem:[%s1 + $0x44] sm:$0xf]
    %v50 = vld [vmem:[%s1 + $0x48] sm:$0xf]
    %v51 = vld [vmem:[%s1 + $0x4c] sm:$0xf]
    %v52 = vld [vmem:[%s1 + $0x50] sm:$0xf]
    %v53 = vld [vmem:[%s1 + $0x54] sm:$0xf]
    %v54 = vld [vmem:[%s1 + $0x58] sm:$0xf]
    %v55 = vld [vmem:[%s1 + $0x5c] sm:$0xf]
    %v56 = vld [vmem:[%s1 + $0x60] sm:$0xf]
    %v57 = vld [vmem:[%s1 + $0x64] sm:$0xf]
    %v58 = vld [vmem:[%s1 + $0x68] sm:$0xf]
    %v59 = vld [vmem:[%s1 + $0x6c] sm:$0xf]
    %v60 = vld [vmem:[%s1 + $0x70] sm:$0xf]
    %v61 = vld [vmem:[%s1 + $0x74] sm:$0xf]
    %v62 = vld [vmem:[%s1 + $0x78] sm:$0xf]
    %v63 = vld [vmem:[%s1 + $0x7c] sm:$0xf]
    %v64 = vld [vmem:[%s1 + $0x80] sm:$0xf]
    %v65 = vld [vmem:[%s1 + $0x84] sm:$0xf]
    %v66 = vld [vmem:[%s1 + $0x88] sm:$0xf]
    %v67 = vld [vmem:[%s1 + $0x8c] sm:$0xf]
    %v68 = vld [vmem:[%s1 + $0x90] sm:$0xf]
    %v69 = vld [vmem:[%s1 + $0x94] sm:$0xf]
    %v70 = vld [vmem:[%s1 + $0x98] sm:$0xf]
    %v71 = vld [vmem:[%s1 + $0x9c] sm:$0xf]
    %v72 = vld [vmem:[%s1 + $0xa0] sm:$0xf]
    %v73 = vld [vmem:[%s1 + $0xa4] sm:$0xf]
    %v74 = vld [vmem:[%s1 + $0xa8] sm:$0xf]
    %v75 = vld [vmem:[%s1 + $0xac] sm:$0xf]
    %v76 = vld [vmem:[%s1 + $0xb0] sm:$0xf]
    %v77 = vld [vmem:[%s1 + $0xb4] sm:$0xf]
    %v78 = vld [vmem:[%s1 + $0xb8] sm:$0xf]
    %v79 = vld [vmem:[%s1 + $0xbc] sm:$0xf]
    %v80 = vld [vmem:[%s1 + $0xc0] sm:$0xf]
    %v81 = vld [vmem:[%s1 + $0xc4] sm:$0xf]
    %v82 = vld [vmem:[%s1 + $0xc8] sm:$0xf]
    %v83 = vld [vmem:[%s1 + $0xcc] sm:$0xf]
    %v84 = vld [vmem:[%s1 + $0xd0] sm:$0xf]
    %v85 = vld [vmem:[%s1 + $0xd4] sm:$0xf]
    %v86 = vld [vmem:[%s1 + $0xd8] sm:$0xf]
    %v87 = vld [vmem:[%s1 + $0xdc] sm:$0xf]
    %v88 = vld [vmem:[%s1 + $0xe0] sm:$0xf]
    %v89 = vld [vmem:[%s1 + $0xe4] sm:$0xf]
    %v90 = vld [vmem:[%s1 + $0xe8] sm:$0xf]
    %v91 = vld [vmem:[%s1 + $0xec] sm:$0xf]
    %v92 = vld [vmem:[%s1 + $0xf0] sm:$0xf]
    %v93 = vld [vmem:[%s1 + $0xf4] sm:$0xf]
    %v94 = vld [vmem:[%s1 + $0xf8] sm:$0xf]
    %v95 = vld [vmem:[%s1 + $0xfc] sm:$0xf]
    %v96 = vld [vmem:[%s1 + $0x100] sm:$0xf]
    %v97 = vld [vmem:[%s1 + $0x104] sm:$0xf]
    %v98 = vld [vmem:[%s1 + $0x108] sm:$0xf]
    %v99 = vld [vmem:[%s1 + $0x10c] sm:$0xf]
    %v100 = vld [vmem:[%s1 + $0x110] sm:$0xf]
    %v101 = vld [vmem:[%s1 + $0x114] sm:$0xf]
    %v102 = vld [vmem:[%s1 + $0x118] sm:$0xf]
    %v103 = vld [vmem:[%s1 + $0x11c] sm:$0xf]
    %v104 = vld [vmem:[%s1 + $0x120] sm:$0xf]
    %v105 = vld [vmem:[%s1 + $0x124] sm:$0xf]
    %v106 = vld [vmem:[%s1 + $0x128] sm:$0xf]
    %v107 = vld [vmem:[%s1 + $0x12c] sm:$0xf]
    %v108 = vld [vmem:[%s1 + $0x130] sm:$0xf]
    %v109 = vld [vmem:[%s1 + $0x134] sm:$0xf]
    %v110 = vld [vmem:[%s1 + $0x138] sm:$0xf]
    %v111 = vld [vmem:[%s1 + $0x13c] sm:$0xf]
    %v112 = vld [vmem:[%s1 + $0x140] sm:$0xf]
    %v113 = vld [vmem:[%s1 + $0x144] sm:$0xf]
    %v114 = vld [vmem:[%s1 + $0x148] sm:$0xf]
    %v115 = vld [vmem:[%s1 + $0x14c] sm:$0xf]
    %v116 = vld [vmem:[%s1 + $0x150] sm:$0xf]
    %v117 = vld [vmem:[%s1 + $0x154] sm:$0xf]
    %v118 = vld [vmem:[%s1 + $0x158] sm:$0xf]
    %v119 = vld [vmem:[%s1 + $0x15c] sm:$0xf]
    %v120 = vld [vmem:[%s1 + $0x160] sm:$0xf]
    %v121 = vld [vmem:[%s1 + $0x164] sm:$0xf]
    %v122 = vld [vmem:[%s1 + $0x168] sm:$0xf]
    %v123 = vld [vmem:[%s1 + $0x16c] sm:$0xf]
    %v124 = vld [vmem:[%s1 + $0x170] sm:$0xf]
    %v125 = vld [vmem:[%s1 + $0x174] sm:$0xf]
    %v126 = vld [vmem:[%s1 + $0x178] sm:$0xf]
    %v127 = vld [vmem:[%s1 + $0x17c] sm:$0xf]
    %v128 = vld [vmem:[%s1 + $0x180] sm:$0xf]
    %v129 = vld [vmem:[%s1 + $0x184] sm:$0xf]
    %v130 = vld [vmem:[%s1 + $0x188] sm:$0xf]
    %v131 = vld [vmem:[%s1 + $0x18c] sm:$0xf]
    %v132 = vld [vmem:[%s1 + $0x190] sm:$0xf]
    %v133 = vld [vmem:[%s1 + $0x194] sm:$0xf]
    %v134 = vld [vmem:[%s1 + $0x198] sm:$0xf]
    %v135 = vld [vmem:[%s1 + $0x19c] sm:$0xf]
    %v136 = vld [vmem:[%s1 + $0x1a0] sm:$0xf]
    %v137 = vld [vmem:[%s1 + $0x1a4] sm:$0xf]
    %v138 = vld [vmem:[%s1 + $0x1a8] sm:$0xf]
    %v139 = vld [vmem:[%s1 + $0x1ac] sm:$0xf]
    %v140 = vld [vmem:[%s1 + $0x1b0] sm:$0xf]
    %v141 = vld [vmem:[%s1 + $0x1b4] sm:$0xf]
    %v142 = vld [vmem:[%s1 + $0x1b8] sm:$0xf]
    %v143 = vld [vmem:[%s1 + $0x1bc] sm:$0xf]
    %v144 = vld [vmem:[%s1 + $0x1c0] sm:$0xf]
    %v145 = vld [vmem:[%s1 + $0x1c4] sm:$0xf]
    %v146 = vld [vmem:[%s1 + $0x1c8] sm:$0xf]
    %v147 = vld [vmem:[%s1 + $0x1cc] sm:$0xf]
    %v148 = vld [vmem:[%s1 + $0x1d0] sm:$0xf]
    %v149 = vld [vmem:[%s1 + $0x1d4] sm:$0xf]
    %v150 = vld [vmem:[%s1 + $0x1d8] sm:$0xf]
    %v151 = vld [vmem:[%s1 + $0x1dc] sm:$0xf]
    %v152 = vld [vmem:[%s1 + $0x1e0] sm:$0xf]
    %v153 = vld [vmem:[%s1 + $0x1e4] sm:$0xf]
    %v154 = vld [vmem:[%s1 + $0x1e8] sm:$0xf]
    %v155 = vld [vmem:[%s1 + $0x1ec] sm:$0xf]
    %v156 = vld [vmem:[%s1 + $0x1f0] sm:$0xf]
    %v157 = vld [vmem:[%s1 + $0x1f4] sm:$0xf]
    %v158 = vld [vmem:[%s1 + $0x1f8] sm:$0xf]
    %v159 = vld [vmem:[%s1 + $0x1fc] sm:$0xf]
    %v160 = vld [vmem:[%s1 + $0x200] sm:$0xf]
    %v161 = vld [vmem:[%s1 + $0x204] sm:$0xf]
    %v162 = vld [vmem:[%s1 + $0x208] sm:$0xf]
    %v163 = vld [vmem:[%s1 + $0x20c] sm:$0xf]
    %v164 = vld [vmem:[%s1 + $0x210] sm:$0xf]
    %v165 = vld [vmem:[%s1 + $0x214] sm:$0xf]
    %v166 = vld [vmem:[%s1 + $0x218] sm:$0xf]
    %v167 = vld [vmem:[%s1 + $0x21c] sm:$0xf]
    %v168 = vld [vmem:[%s1 + $0x220] sm:$0xf]
    %v169 = vld [vmem:[%s1 + $0x224] sm:$0xf]
    %v170 = vld [vmem:[%s1 + $0x228] sm:$0xf]
    %v171 = vld [vmem:[%s1 + $0x22c] sm:$0xf]
    %v172 = vld [vmem:[%s1 + $0x230] sm:$0xf]
    %v173 = vld [vmem:[%s1 + $0x234] sm:$0xf]
    %v174 = vld [vmem:[%s1 + $0x238] sm:$0xf]
    %v175 = vld [vmem:[%s1 + $0x23c] sm:$0xf]
    %v176 = vld [vmem:[%s1 + $0x240] sm:$0xf]
    %v177 = vld [vmem:[%s1 + $0x244] sm:$0xf]
    %v178 = vld [vmem:[%s1 + $0x248] sm:$0xf]
    %v179 = vld [vmem:[%s1 + $0x24c] sm:$0xf]
    %v180 = vld [vmem:[%s1 + $0x250] sm:$0xf]
    %v181 = vld [vmem:[%s1 + $0x254] sm:$0xf]
    %v182 = vld [vmem:[%s1 + $0x258] sm:$0xf]
    %v183 = vld [vmem:[%s1 + $0x25c] sm:$0xf]
    %v184 = vld [vmem:[%s1 + $0x260] sm:$0xf]
    %v185 = vld [vmem:[%s1 + $0x264] sm:$0xf]
    %v186 = vld [vmem:[%s1 + $0x268] sm:$0xf]
    %v187 = vld [vmem:[%s1 + $0x26c] sm:$0xf]
    %v188 = vld [vmem:[%s1 + $0x270] sm:$0xf]
    %v189 = vld [vmem:[%s1 + $0x274] sm:$0xf]
    %v190 = vld [vmem:[%s1 + $0x278] sm:$0xf]
    %v191 = vld [vmem:[%s1 + $0x27c] sm:$0xf]
    %v192 = vld [vmem:[%s1 + $0x280] sm:$0xf]
    %v193 = vld [vmem:[%s1 + $0x284] sm:$0xf]
    %v194 = vld [vmem:[%s1 + $0x288] sm:$0xf]
    %v195 = vld [vmem:[%s1 + $0x28c] sm:$0xf]
    %v196 = vld [vmem:[%s1 + $0x290] sm:$0xf]
    %v197 = vld [vmem:[%s1 + $0x294] sm:$0xf]
    %v198 = vld [vmem:[%s1 + $0x298] sm:$0xf]
    %v199 = vld [vmem:[%s1 + $0x29c] sm:$0xf]
    %v200 = vld [vmem:[%s1 + $0x2a0] sm:$0xf]
    %v201 = vld [vmem:[%s1 + $0x2a4] sm:$0xf]
    %v202 = vld [vmem:[%s1 + $0x2a8] sm:$0xf]
    %v203 = vld [vmem:[%s1 + $0x2ac] sm:$0xf]
    %v204 = vld [vmem:[%s1 + $0x2b0] sm:$0xf]
    %v205 = vld [vmem:[%s1 + $0x2b4] sm:$0xf]
    %v206 = vld [vmem:[%s1 + $0x2b8] sm:$0xf]
    %v207 = vld [vmem:[%s1 + $0x2bc] sm:$0xf]
    %v208 = vld [vmem:[%s1 + $0x2c0] sm:$0xf]
    %v209 = vld [vmem:[%s1 + $0x2c4] sm:$0xf]
    %v210 = vld [vmem:[%s1 + $0x2c8] sm:$0xf]
    %v211 = vld [vmem:[%s1 + $0x2cc] sm:$0xf]
    %v212 = vld [vmem:[%s1 + $0x2d0] sm:$0xf]
    %v213 = vld [vmem:[%s1 + $0x2d4] sm:$0xf]
    %v214 = vld [vmem:[%s1 + $0x2d8] sm:$0xf]
    %v215 = vld [vmem:[%s1 + $0x2dc] sm:$0xf]
    %v216 = vld [vmem:[%s1 + $0x2e0] sm:$0xf]
    %v217 = vld [vmem:[%s1 + $0x2e4] sm:$0xf]
    %v218 = vld [vmem:[%s1 + $0x2e8] sm:$0xf]
    %v219 = vld [vmem:[%s1 + $0x2ec] sm:$0xf]
    %v220 = vld [vmem:[%s1 + $0x2f0] sm:$0xf]
    %v221 = vld [vmem:[%s1 + $0x2f4] sm:$0xf]
    %v222 = vld [vmem:[%s1 + $0x2f8] sm:$0xf]
    %v223 = vld [vmem:[%s1 + $0x2fc] sm:$0xf]
    %v224 = vld [vmem:[%s1 + $0x300] sm:$0xf]
    %v225 = vld [vmem:[%s1 + $0x304] sm:$0xf]
    %v226 = vld [vmem:[%s1 + $0x308] sm:$0xf]
    %v227 = vld [vmem:[%s1 + $0x30c] sm:$0xf]
    %v228 = vld [vmem:[%s1 + $0x310] sm:$0xf]
    %v229 = vld [vmem:[%s1 + $0x314] sm:$0xf]
    %v230 = vld [vmem:[%s1 + $0x318] sm:$0xf]
    %v231 = vld [vmem:[%s1 + $0x31c] sm:$0xf]
    %v232 = vld [vmem:[%s1 + $0x320] sm:$0xf]
    %v233 = vld [vmem:[%s1 + $0x324] sm:$0xf]
    %v234 = vld [vmem:[%s1 + $0x328] sm:$0xf]
    %v235 = vld [vmem:[%s1 + $0x32c] sm:$0xf]
    %v236 = vld [vmem:[%s1 + $0x330] sm:$0xf]
    %v237 = vld [vmem:[%s1 + $0x334] sm:$0xf]
    %v238 = vld [vmem:[%s1 + $0x338] sm:$0xf]
    %v239 = vld [vmem:[%s1 + $0x33c] sm:$0xf]
    %v240 = vld [vmem:[%s1 + $0x340] sm:$0xf]
    %v241 = vld [vmem:[%s1 + $0x344] sm:$0xf]
    %v242 = vld [vmem:[%s1 + $0x348] sm:$0xf]
    %v243 = vld [vmem:[%s1 + $0x34c] sm:$0xf]
    %v244 = vld [vmem:[%s1 + $0x350] sm:$0xf]
    %v245 = vld [vmem:[%s1 + $0x354] sm:$0xf]
    %v246 = vld [vmem:[%s1 + $0x358] sm:$0xf]
    %v247 = vld [vmem:[%s1 + $0x35c] sm:$0xf]
    %v248 = vld [vmem:[%s1 + $0x360] sm:$0xf]
    %v249 = vld [vmem:[%s1 + $0x364] sm:$0xf]
    %v250 = vld [vmem:[%s1 + $0x368] sm:$0xf]
    %v251 = vld [vmem:[%s1 + $0x36c] sm:$0xf]
    %v252 = vld [vmem:[%s1 + $0x370] sm:$0xf]
    %v253 = vld [vmem:[%s1 + $0x374] sm:$0xf]
    %v254 = vld [vmem:[%s1 + $0x378] sm:$0xf]
    %v255 = vld [vmem:[%s1 + $0x37c] sm:$0xf]
    %v256 = vld [vmem:[%s1 + $0x380] sm:$0xf]
    %v257 = vld [vmem:[%s1 + $0x384] sm:$0xf]
    %v258 = vld [vmem:[%s1 + $0x388] sm:$0xf]
    %v259 = vld [vmem:[%s1 + $0x38c] sm:$0xf]
    %v260 = vld [vmem:[%s1 + $0x390] sm:$0xf]
    %v261 = vld [vmem:[%s1 + $0x394] sm:$0xf]
    %v262 = vld [vmem:[%s1 + $0x398] sm:$0xf]
    %v263 = vld [vmem:[%s1 + $0x39c] sm:$0xf]
    %v264 = vld [vmem:[%s1 + $0x3a0] sm:$0xf]
    %v265 = vld [vmem:[%s1 + $0x3a4] sm:$0xf]
    %v266 = vld [vmem:[%s1 + $0x3a8] sm:$0xf]
    %v267 = vld [vmem:[%s1 + $0x3ac] sm:$0xf]
    %v268 = vld [vmem:[%s1 + $0x3b0] sm:$0xf]
    %v269 = vld [vmem:[%s1 + $0x3b4] sm:$0xf]
    %v270 = vld [vmem:[%s1 + $0x3b8] sm:$0xf]
    %v271 = vld [vmem:[%s1 + $0x3bc] sm:$0xf]
    %v272 = vld [vmem:[%s1 + $0x3c0] sm:$0xf]
    %v273 = vld [vmem:[%s1 + $0x3c4] sm:$0xf]
    %v274 = vld [vmem:[%s1 + $0x3c8] sm:$0xf]
    %v275 = vld [vmem:[%s1 + $0x3cc] sm:$0xf]
    %v276 = vld [vmem:[%s1 + $0x3d0] sm:$0xf]
    %v277 = vld [vmem:[%s1 + $0x3d4] sm:$0xf]
    %v278 = vld [vmem:[%s1 + $0x3d8] sm:$0xf]
    %v279 = vld [vmem:[%s1 + $0x3dc] sm:$0xf]
    %v280 = vld [vmem:[%s1 + $0x3e0] sm:$0xf]
    %v281 = vld [vmem:[%s1 + $0x3e4] sm:$0xf]
    %v282 = vld [vmem:[%s1 + $0x3e8] sm:$0xf]
    %v283 = vld [vmem:[%s1 + $0x3ec] sm:$0xf]
    %v284 = vld [vmem:[%s1 + $0x3f0] sm:$0xf]
    %v285 = vld [vmem:[%s1 + $0x3f4] sm:$0xf]
    %v286 = vld [vmem:[%s1 + $0x3f8] sm:$0xf]
    %v287 = vld [vmem:[%s1 + $0x3fc] sm:$0xf]
    %v288 = vld [vmem:[%s1 + $0x400] sm:$0xf]
    %v289 = vld [vmem:[%s1 + $0x404] sm:$0xf]
    %v290 = vld [vmem:[%s1 + $0x408] sm:$0xf]
    %v291 = vld [vmem:[%s1 + $0x40c] sm:$0xf]
    %v292 = vld [vmem:[%s1 + $0x410] sm:$0xf]
    %v293 = vld [vmem:[%s1 + $0x414] sm:$0xf]
    %v294 = vld [vmem:[%s1 + $0x418] sm:$0xf]
    %v295 = vld [vmem:[%s1 + $0x41c] sm:$0xf]
    %v296 = vld [vmem:[%s1 + $0x420] sm:$0xf]
    %v297 = vld [vmem:[%s1 + $0x424] sm:$0xf]
    %v298 = vld [vmem:[%s1 + $0x428] sm:$0xf]
    %v299 = vld [vmem:[%s1 + $0x42c] sm:$0xf]
    %v300 = vld [vmem:[%s1 + $0x430] sm:$0xf]
    %v301 = vld [vmem:[%s1 + $0x434] sm:$0xf]
    %v302 = vld [vmem:[%s1 + $0x438] sm:$0xf]
    %v303 = vld [vmem:[%s1 + $0x43c] sm:$0xf]
    %v304 = vld [vmem:[%s1 + $0x440] sm:$0xf]
    %v305 = vld [vmem:[%s1 + $0x444] sm:$0xf]
    %v306 = vld [vmem:[%s1 + $0x448] sm:$0xf]
    %v307 = vld [vmem:[%s1 + $0x44c] sm:$0xf]
    %v308 = vld [vmem:[%s1 + $0x450] sm:$0xf]
    %v309 = vld [vmem:[%s1 + $0x454] sm:$0xf]
    %v310 = vld [vmem:[%s1 + $0x458] sm:$0xf]
    %v311 = vld [vmem:[%s1 + $0x45c] sm:$0xf]
    %v312 = vld [vmem:[%s1 + $0x460] sm:$0xf]
    %v313 = vld [vmem:[%s1 + $0x464] sm:$0xf]
    %v314 = vld [vmem:[%s1 + $0x468] sm:$0xf]
    %v315 = vld [vmem:[%s1 + $0x46c] sm:$0xf]
    %v316 = vld [vmem:[%s1 + $0x470] sm:$0xf]
    %v317 = vld [vmem:[%s1 + $0x474] sm:$0xf]
    %v318 = vld [vmem:[%s1 + $0x478] sm:$0xf]
    %v319 = vld [vmem:[%s1 + $0x47c] sm:$0xf]
    %v320 = vld [vmem:[%s2] sm:$0x1]
    %v322 = vperm.slane %v320, 0
    %325 = vst [vmem:[#allocation1] ss:$9 sm:$0xff] %v29
    %v326 = vld [vmem:[#allocation1] sm:$0xff]
    %v327 = vld [vmem:[#allocation1 + $0x9] sm:$0xff]
    %v328 = vld [vmem:[#allocation1 + $0x12] sm:$0xff]
    %v329 = vld [vmem:[#allocation1 + $0x1b] sm:$0xff]
    %v330 = vld [vmem:[#allocation1 + $0x24] sm:$0xff]
    %v331 = vld [vmem:[#allocation1 + $0x2d] sm:$0xff]
    %v332 = vld [vmem:[#allocation1 + $0x36] sm:$0xff]
    %v333 = vld [vmem:[#allocation1 + $0x3f] sm:$0xff]
    %335 = vst [vmem:[#allocation1] ss:$9 sm:$0xff] %v30
    %v336 = vld [vmem:[#allocation1] sm:$0xff]
    %v337 = vld [vmem:[#allocation1 + $0x9] sm:$0xff]
    %v338 = vld [vmem:[#allocation1 + $0x12] sm:$0xff]
    %v339 = vld [vmem:[#allocation1 + $0x1b] sm:$0xff]
    %v340 = vld [vmem:[#allocation1 + $0x24] sm:$0xff]
    %v341 = vld [vmem:[#allocation1 + $0x2d] sm:$0xff]
    %v342 = vld [vmem:[#allocation1 + $0x36] sm:$0xff]
    %v343 = vld [vmem:[#allocation1 + $0x3f] sm:$0xff]
    %345 = vst [vmem:[#allocation1] ss:$9 sm:$0xff] %v31
    %v346 = vld [vmem:[#allocation1] sm:$0xff]
    %v347 = vld [vmem:[#allocation1 + $0x9] sm:$0xff]
    %v654 = vunpack.c.l.b16 %v32
    %v655 = vunpack.c.l.b16 %v33
    %v656 = vunpack.c.l.b16 %v34
    %v657 = vunpack.c.l.b16 %v35
    %v658 = vunpack.c.l.b16 %v36
    %v659 = vunpack.c.l.b16 %v37
    %v660 = vunpack.c.l.b16 %v38
    %v661 = vunpack.c.l.b16 %v39
    %v662 = vunpack.c.l.b16 %v40
    %v663 = vunpack.c.l.b16 %v41
    %v664 = vunpack.c.l.b16 %v42
    %v665 = vunpack.c.l.b16 %v43
    %v666 = vunpack.c.l.b16 %v44
    %v667 = vunpack.c.l.b16 %v45
    %v668 = vunpack.c.l.b16 %v46
    %v669 = vunpack.c.l.b16 %v47
    %v670 = vunpack.c.l.b16 %v48
    %v671 = vunpack.c.l.b16 %v49
    %v672 = vunpack.c.l.b16 %v50
    %v673 = vunpack.c.l.b16 %v51
    %v674 = vunpack.c.l.b16 %v52
    %v675 = vunpack.c.l.b16 %v53
    %v676 = vunpack.c.l.b16 %v54
    %v677 = vunpack.c.l.b16 %v55
    %v678 = vunpack.c.l.b16 %v56
    %v679 = vunpack.c.l.b16 %v57
    %v680 = vunpack.c.l.b16 %v58
    %v681 = vunpack.c.l.b16 %v59
    %v682 = vunpack.c.l.b16 %v60
    %v683 = vunpack.c.l.b16 %v61
    %v684 = vunpack.c.l.b16 %v62
    %v685 = vunpack.c.l.b16 %v63
    %v686 = vunpack.c.l.b16 %v64
    %v687 = vunpack.c.l.b16 %v65
    %v688 = vunpack.c.l.b16 %v66
    %v689 = vunpack.c.l.b16 %v67
    %v690 = vunpack.c.l.b16 %v68
    %v691 = vunpack.c.l.b16 %v69
    %v692 = vunpack.c.l.b16 %v70
    %v693 = vunpack.c.l.b16 %v71
    %v694 = vunpack.c.l.b16 %v72
    %v695 = vunpack.c.l.b16 %v73
    %v696 = vunpack.c.l.b16 %v74
    %v697 = vunpack.c.l.b16 %v75
    %v698 = vunpack.c.l.b16 %v76
    %v699 = vunpack.c.l.b16 %v77
    %v700 = vunpack.c.l.b16 %v78
    %v701 = vunpack.c.l.b16 %v79
    %v702 = vunpack.c.l.b16 %v80
    %v703 = vunpack.c.l.b16 %v81
    %v704 = vunpack.c.l.b16 %v82
    %v705 = vunpack.c.l.b16 %v83
    %v706 = vunpack.c.l.b16 %v84
    %v707 = vunpack.c.l.b16 %v85
    %v708 = vunpack.c.l.b16 %v86
    %v709 = vunpack.c.l.b16 %v87
    %v710 = vunpack.c.l.b16 %v88
    %v711 = vunpack.c.l.b16 %v89
    %v712 = vunpack.c.l.b16 %v90
    %v713 = vunpack.c.l.b16 %v91
    %v714 = vunpack.c.l.b16 %v92
    %v715 = vunpack.c.l.b16 %v93
    %v716 = vunpack.c.l.b16 %v94
    %v717 = vunpack.c.l.b16 %v95
    %v718 = vunpack.c.l.b16 %v96
    %v719 = vunpack.c.l.b16 %v97
    %v720 = vunpack.c.l.b16 %v98
    %v721 = vunpack.c.l.b16 %v99
    %v722 = vunpack.c.l.b16 %v100
    %v723 = vunpack.c.l.b16 %v101
    %v724 = vunpack.c.l.b16 %v102
    %v725 = vunpack.c.l.b16 %v103
    %v726 = vunpack.c.l.b16 %v104
    %v727 = vunpack.c.l.b16 %v105
    %v728 = vunpack.c.l.b16 %v106
    %v729 = vunpack.c.l.b16 %v107
    %v730 = vunpack.c.l.b16 %v108
    %v731 = vunpack.c.l.b16 %v109
    %v732 = vunpack.c.l.b16 %v110
    %v733 = vunpack.c.l.b16 %v111
    %v734 = vunpack.c.l.b16 %v112
    %v735 = vunpack.c.l.b16 %v113
    %v736 = vunpack.c.l.b16 %v114
    %v737 = vunpack.c.l.b16 %v115
    %v738 = vunpack.c.l.b16 %v116
    %v739 = vunpack.c.l.b16 %v117
    %v740 = vunpack.c.l.b16 %v118
    %v741 = vunpack.c.l.b16 %v119
    %v742 = vunpack.c.l.b16 %v120
    %v743 = vunpack.c.l.b16 %v121
    %v744 = vunpack.c.l.b16 %v122
    %v745 = vunpack.c.l.b16 %v123
    %v746 = vunpack.c.l.b16 %v124
    %v747 = vunpack.c.l.b16 %v125
    %v748 = vunpack.c.l.b16 %v126
    %v749 = vunpack.c.l.b16 %v127
    %v750 = vunpack.c.l.b16 %v128
    %v751 = vunpack.c.l.b16 %v129
    %v752 = vunpack.c.l.b16 %v130
    %v753 = vunpack.c.l.b16 %v131
    %v754 = vunpack.c.l.b16 %v132
    %v755 = vunpack.c.l.b16 %v133
    %v756 = vunpack.c.l.b16 %v134
    %v757 = vunpack.c.l.b16 %v135
    %v758 = vunpack.c.l.b16 %v136
    %v759 = vunpack.c.l.b16 %v137
    %v760 = vunpack.c.l.b16 %v138
    %v761 = vunpack.c.l.b16 %v139
    %v762 = vunpack.c.l.b16 %v140
    %v763 = vunpack.c.l.b16 %v141
    %v764 = vunpack.c.l.b16 %v142
    %v765 = vunpack.c.l.b16 %v143
    %v766 = vunpack.c.l.b16 %v144
    %v767 = vunpack.c.l.b16 %v145
    %v768 = vunpack.c.l.b16 %v146
    %v769 = vunpack.c.l.b16 %v147
    %v770 = vunpack.c.l.b16 %v148
    %v771 = vunpack.c.l.b16 %v149
    %v772 = vunpack.c.l.b16 %v150
    %v773 = vunpack.c.l.b16 %v151
    %v774 = vunpack.c.l.b16 %v152
    %v775 = vunpack.c.l.b16 %v153
    %v776 = vunpack.c.l.b16 %v154
    %v777 = vunpack.c.l.b16 %v155
    %v778 = vunpack.c.l.b16 %v156
    %v779 = vunpack.c.l.b16 %v157
    %v780 = vunpack.c.l.b16 %v158
    %v781 = vunpack.c.l.b16 %v159
    %v782 = vunpack.c.l.b16 %v160
    %v783 = vunpack.c.l.b16 %v161
    %v784 = vunpack.c.l.b16 %v162
    %v785 = vunpack.c.l.b16 %v163
    %v786 = vunpack.c.l.b16 %v164
    %v787 = vunpack.c.l.b16 %v165
    %v788 = vunpack.c.l.b16 %v166
    %v789 = vunpack.c.l.b16 %v167
    %v790 = vunpack.c.l.b16 %v168
    %v791 = vunpack.c.l.b16 %v169
    %v792 = vunpack.c.l.b16 %v170
    %v793 = vunpack.c.l.b16 %v171
    %v794 = vunpack.c.l.b16 %v172
    %v795 = vunpack.c.l.b16 %v173
    %v796 = vunpack.c.l.b16 %v174
    %v797 = vunpack.c.l.b16 %v175
    %v798 = vunpack.c.l.b16 %v176
    %v799 = vunpack.c.l.b16 %v177
    %v800 = vunpack.c.l.b16 %v178
    %v801 = vunpack.c.l.b16 %v179
    %v802 = vunpack.c.l.b16 %v180
    %v803 = vunpack.c.l.b16 %v181
    %v804 = vunpack.c.l.b16 %v182
    %v805 = vunpack.c.l.b16 %v183
    %v806 = vunpack.c.l.b16 %v184
    %v807 = vunpack.c.l.b16 %v185
    %v808 = vunpack.c.l.b16 %v186
    %v809 = vunpack.c.l.b16 %v187
    %v810 = vunpack.c.l.b16 %v188
    %v811 = vunpack.c.l.b16 %v189
    %v812 = vunpack.c.l.b16 %v190
    %v813 = vunpack.c.l.b16 %v191
    %v814 = vunpack.c.l.b16 %v192
    %v815 = vunpack.c.l.b16 %v193
    %v816 = vunpack.c.l.b16 %v194
    %v817 = vunpack.c.l.b16 %v195
    %v818 = vunpack.c.l.b16 %v196
    %v819 = vunpack.c.l.b16 %v197
    %v820 = vunpack.c.l.b16 %v198
    %v821 = vunpack.c.l.b16 %v199
    %v822 = vunpack.c.l.b16 %v200
    %v823 = vunpack.c.l.b16 %v201
    %v824 = vunpack.c.l.b16 %v202
    %v825 = vunpack.c.l.b16 %v203
    %v826 = vunpack.c.l.b16 %v204
    %v827 = vunpack.c.l.b16 %v205
    %v828 = vunpack.c.l.b16 %v206
    %v829 = vunpack.c.l.b16 %v207
    %v830 = vunpack.c.l.b16 %v208
    %v831 = vunpack.c.l.b16 %v209
    %v832 = vunpack.c.l.b16 %v210
    %v833 = vunpack.c.l.b16 %v211
    %v834 = vunpack.c.l.b16 %v212
    %v835 = vunpack.c.l.b16 %v213
    %v836 = vunpack.c.l.b16 %v214
    %v837 = vunpack.c.l.b16 %v215
    %v838 = vunpack.c.l.b16 %v216
    %v839 = vunpack.c.l.b16 %v217
    %v840 = vunpack.c.l.b16 %v218
    %v841 = vunpack.c.l.b16 %v219
    %v842 = vunpack.c.l.b16 %v220
    %v843 = vunpack.c.l.b16 %v221
    %v844 = vunpack.c.l.b16 %v222
    %v845 = vunpack.c.l.b16 %v223
    %v846 = vunpack.c.l.b16 %v224
    %v847 = vunpack.c.l.b16 %v225
    %v848 = vunpack.c.l.b16 %v226
    %v849 = vunpack.c.l.b16 %v227
    %v850 = vunpack.c.l.b16 %v228
    %v851 = vunpack.c.l.b16 %v229
    %v852 = vunpack.c.l.b16 %v230
    %v853 = vunpack.c.l.b16 %v231
    %v854 = vunpack.c.l.b16 %v232
    %v855 = vunpack.c.l.b16 %v233
    %v856 = vunpack.c.l.b16 %v234
    %v857 = vunpack.c.l.b16 %v235
    %v858 = vunpack.c.l.b16 %v236
    %v859 = vunpack.c.l.b16 %v237
    %v860 = vunpack.c.l.b16 %v238
    %v861 = vunpack.c.l.b16 %v239
    %v862 = vunpack.c.l.b16 %v240
    %v863 = vunpack.c.l.b16 %v241
    %v864 = vunpack.c.l.b16 %v242
    %v865 = vunpack.c.l.b16 %v243
    %v866 = vunpack.c.l.b16 %v244
    %v867 = vunpack.c.l.b16 %v245
    %v868 = vunpack.c.l.b16 %v246
    %v869 = vunpack.c.l.b16 %v247
    %v870 = vunpack.c.l.b16 %v248
    %v871 = vunpack.c.l.b16 %v249
    %v872 = vunpack.c.l.b16 %v250
    %v873 = vunpack.c.l.b16 %v251
    %v874 = vunpack.c.l.b16 %v252
    %v875 = vunpack.c.l.b16 %v253
    %v876 = vunpack.c.l.b16 %v254
    %v877 = vunpack.c.l.b16 %v255
    %v878 = vunpack.c.l.b16 %v256
    %v879 = vunpack.c.l.b16 %v257
    %v880 = vunpack.c.l.b16 %v258
    %v881 = vunpack.c.l.b16 %v259
    %v882 = vunpack.c.l.b16 %v260
    %v883 = vunpack.c.l.b16 %v261
    %v884 = vunpack.c.l.b16 %v262
    %v885 = vunpack.c.l.b16 %v263
    %v886 = vunpack.c.l.b16 %v264
    %v887 = vunpack.c.l.b16 %v265
    %v888 = vunpack.c.l.b16 %v266
    %v889 = vunpack.c.l.b16 %v267
    %v890 = vunpack.c.l.b16 %v268
    %v891 = vunpack.c.l.b16 %v269
    %v892 = vunpack.c.l.b16 %v270
    %v893 = vunpack.c.l.b16 %v271
    %v894 = vunpack.c.l.b16 %v272
    %v895 = vunpack.c.l.b16 %v273
    %v896 = vunpack.c.l.b16 %v274
    %v897 = vunpack.c.l.b16 %v275
    %v898 = vunpack.c.l.b16 %v276
    %v899 = vunpack.c.l.b16 %v277
    %v900 = vunpack.c.l.b16 %v278
    %v901 = vunpack.c.l.b16 %v279
    %v902 = vunpack.c.l.b16 %v280
    %v903 = vunpack.c.l.b16 %v281
    %v904 = vunpack.c.l.b16 %v282
    %v905 = vunpack.c.l.b16 %v283
    %v906 = vunpack.c.l.b16 %v284
    %v907 = vunpack.c.l.b16 %v285
    %v908 = vunpack.c.l.b16 %v286
    %v909 = vunpack.c.l.b16 %v287
    %v910 = vunpack.c.l.b16 %v288
    %v911 = vunpack.c.l.b16 %v289
    %v912 = vunpack.c.l.b16 %v290
    %v913 = vunpack.c.l.b16 %v291
    %v914 = vunpack.c.l.b16 %v292
    %v915 = vunpack.c.l.b16 %v293
    %v916 = vunpack.c.l.b16 %v294
    %v917 = vunpack.c.l.b16 %v295
    %v918 = vunpack.c.l.b16 %v296
    %v919 = vunpack.c.l.b16 %v297
    %v920 = vunpack.c.l.b16 %v298
    %v921 = vunpack.c.l.b16 %v299
    %v922 = vunpack.c.l.b16 %v300
    %v923 = vunpack.c.l.b16 %v301
    %v924 = vunpack.c.l.b16 %v302
    %v925 = vunpack.c.l.b16 %v303
    %v926 = vunpack.c.l.b16 %v304
    %v927 = vunpack.c.l.b16 %v305
    %v928 = vunpack.c.l.b16 %v306
    %v929 = vunpack.c.l.b16 %v307
    %v930 = vunpack.c.l.b16 %v308
    %v931 = vunpack.c.l.b16 %v309
    %v932 = vunpack.c.l.b16 %v310
    %v933 = vunpack.c.l.b16 %v311
    %v934 = vunpack.c.l.b16 %v312
    %v935 = vunpack.c.l.b16 %v313
    %v936 = vunpack.c.l.b16 %v314
    %v937 = vunpack.c.l.b16 %v315
    %v938 = vunpack.c.l.b16 %v316
    %v939 = vunpack.c.l.b16 %v317
    %v940 = vunpack.c.l.b16 %v318
    %v941 = vunpack.c.l.b16 %v319
    %v942 = vpack.c.b16 %v655, %v654
    %v943 = vpack.c.b16 %v657, %v656
    %v944 = vpack.c.b16 %v659, %v658
    %v945 = vpack.c.b16 %v661, %v660
    %v946 = vpack.c.b16 %v663, %v662
    %v947 = vpack.c.b16 %v665, %v664
    %v948 = vpack.c.b16 %v667, %v666
    %v949 = vpack.c.b16 %v669, %v668
    %v950 = vpack.c.b16 %v671, %v670
    %v951 = vpack.c.b16 %v673, %v672
    %v952 = vpack.c.b16 %v675, %v674
    %v953 = vpack.c.b16 %v677, %v676
    %v954 = vpack.c.b16 %v679, %v678
    %v955 = vpack.c.b16 %v681, %v680
    %v956 = vpack.c.b16 %v683, %v682
    %v957 = vpack.c.b16 %v685, %v684
    %v958 = vpack.c.b16 %v687, %v686
    %v959 = vpack.c.b16 %v689, %v688
    %v960 = vpack.c.b16 %v691, %v690
    %v961 = vpack.c.b16 %v693, %v692
    %v962 = vpack.c.b16 %v695, %v694
    %v963 = vpack.c.b16 %v697, %v696
    %v964 = vpack.c.b16 %v699, %v698
    %v965 = vpack.c.b16 %v701, %v700
    %v966 = vpack.c.b16 %v703, %v702
    %v967 = vpack.c.b16 %v705, %v704
    %v968 = vpack.c.b16 %v707, %v706
    %v969 = vpack.c.b16 %v709, %v708
    %v970 = vpack.c.b16 %v711, %v710
    %v971 = vpack.c.b16 %v713, %v712
    %v972 = vpack.c.b16 %v715, %v714
    %v973 = vpack.c.b16 %v717, %v716
    %v974 = vpack.c.b16 %v719, %v718
    %v975 = vpack.c.b16 %v721, %v720
    %v976 = vpack.c.b16 %v723, %v722
    %v977 = vpack.c.b16 %v725, %v724
    %v978 = vpack.c.b16 %v727, %v726
    %v979 = vpack.c.b16 %v729, %v728
    %v980 = vpack.c.b16 %v731, %v730
    %v981 = vpack.c.b16 %v733, %v732
    %v982 = vpack.c.b16 %v735, %v734
    %v983 = vpack.c.b16 %v737, %v736
    %v984 = vpack.c.b16 %v739, %v738
    %v985 = vpack.c.b16 %v741, %v740
    %v986 = vpack.c.b16 %v743, %v742
    %v987 = vpack.c.b16 %v745, %v744
    %v988 = vpack.c.b16 %v747, %v746
    %v989 = vpack.c.b16 %v749, %v748
    %v990 = vpack.c.b16 %v751, %v750
    %v991 = vpack.c.b16 %v753, %v752
    %v992 = vpack.c.b16 %v755, %v754
    %v993 = vpack.c.b16 %v757, %v756
    %v994 = vpack.c.b16 %v759, %v758
    %v995 = vpack.c.b16 %v761, %v760
    %v996 = vpack.c.b16 %v763, %v762
    %v997 = vpack.c.b16 %v765, %v764
    %v998 = vpack.c.b16 %v767, %v766
    %v999 = vpack.c.b16 %v769, %v768
    %v1000 = vpack.c.b16 %v771, %v770
    %v1001 = vpack.c.b16 %v773, %v772
    %v1002 = vpack.c.b16 %v775, %v774
    %v1003 = vpack.c.b16 %v777, %v776
    %v1004 = vpack.c.b16 %v779, %v778
    %v1005 = vpack.c.b16 %v781, %v780
    %v1006 = vpack.c.b16 %v783, %v782
    %v1007 = vpack.c.b16 %v785, %v784
    %v1008 = vpack.c.b16 %v787, %v786
    %v1009 = vpack.c.b16 %v789, %v788
    %v1010 = vpack.c.b16 %v791, %v790
    %v1011 = vpack.c.b16 %v793, %v792
    %v1012 = vpack.c.b16 %v795, %v794
    %v1013 = vpack.c.b16 %v797, %v796
    %v1014 = vpack.c.b16 %v799, %v798
    %v1015 = vpack.c.b16 %v801, %v800
    %v1016 = vpack.c.b16 %v803, %v802
    %v1017 = vpack.c.b16 %v805, %v804
    %v1018 = vpack.c.b16 %v807, %v806
    %v1019 = vpack.c.b16 %v809, %v808
    %v1020 = vpack.c.b16 %v811, %v810
    %v1021 = vpack.c.b16 %v813, %v812
    %v1022 = vpack.c.b16 %v815, %v814
    %v1023 = vpack.c.b16 %v817, %v816
    %v1024 = vpack.c.b16 %v819, %v818
    %v1025 = vpack.c.b16 %v821, %v820
    %v1026 = vpack.c.b16 %v823, %v822
    %v1027 = vpack.c.b16 %v825, %v824
    %v1028 = vpack.c.b16 %v827, %v826
    %v1029 = vpack.c.b16 %v829, %v828
    %v1030 = vpack.c.b16 %v831, %v830
    %v1031 = vpack.c.b16 %v833, %v832
    %v1032 = vpack.c.b16 %v835, %v834
    %v1033 = vpack.c.b16 %v837, %v836
    %v1034 = vpack.c.b16 %v839, %v838
    %v1035 = vpack.c.b16 %v841, %v840
    %v1036 = vpack.c.b16 %v843, %v842
    %v1037 = vpack.c.b16 %v845, %v844
    %v1038 = vpack.c.b16 %v847, %v846
    %v1039 = vpack.c.b16 %v849, %v848
    %v1040 = vpack.c.b16 %v851, %v850
    %v1041 = vpack.c.b16 %v853, %v852
    %v1042 = vpack.c.b16 %v855, %v854
    %v1043 = vpack.c.b16 %v857, %v856
    %v1044 = vpack.c.b16 %v859, %v858
    %v1045 = vpack.c.b16 %v861, %v860
    %v1046 = vpack.c.b16 %v863, %v862
    %v1047 = vpack.c.b16 %v865, %v864
    %v1048 = vpack.c.b16 %v867, %v866
    %v1049 = vpack.c.b16 %v869, %v868
    %v1050 = vpack.c.b16 %v871, %v870
    %v1051 = vpack.c.b16 %v873, %v872
    %v1052 = vpack.c.b16 %v875, %v874
    %v1053 = vpack.c.b16 %v877, %v876
    %v1054 = vpack.c.b16 %v879, %v878
    %v1055 = vpack.c.b16 %v881, %v880
    %v1056 = vpack.c.b16 %v883, %v882
    %v1057 = vpack.c.b16 %v885, %v884
    %v1058 = vpack.c.b16 %v887, %v886
    %v1059 = vpack.c.b16 %v889, %v888
    %v1060 = vpack.c.b16 %v891, %v890
    %v1061 = vpack.c.b16 %v893, %v892
    %v1062 = vpack.c.b16 %v895, %v894
    %v1063 = vpack.c.b16 %v897, %v896
    %v1064 = vpack.c.b16 %v899, %v898
    %v1065 = vpack.c.b16 %v901, %v900
    %v1066 = vpack.c.b16 %v903, %v902
    %v1067 = vpack.c.b16 %v905, %v904
    %v1068 = vpack.c.b16 %v907, %v906
    %v1069 = vpack.c.b16 %v909, %v908
    %v1070 = vpack.c.b16 %v911, %v910
    %v1071 = vpack.c.b16 %v913, %v912
    %v1072 = vpack.c.b16 %v915, %v914
    %v1073 = vpack.c.b16 %v917, %v916
    %v1074 = vpack.c.b16 %v919, %v918
    %v1075 = vpack.c.b16 %v921, %v920
    %v1076 = vpack.c.b16 %v923, %v922
    %v1077 = vpack.c.b16 %v925, %v924
    %v1078 = vpack.c.b16 %v927, %v926
    %v1079 = vpack.c.b16 %v929, %v928
    %v1080 = vpack.c.b16 %v931, %v930
    %v1081 = vpack.c.b16 %v933, %v932
    %v1082 = vpack.c.b16 %v935, %v934
    %v1083 = vpack.c.b16 %v937, %v936
    %v1084 = vpack.c.b16 %v939, %v938
    %v1085 = vpack.c.b16 %v941, %v940
    %1230 = vmatpush.bf16.msra.mxu0 %v949
    %1231 = vmatpush.bf16.msra.mxu0 %v948
    %1232 = vmatpush.bf16.msra.mxu0 %v947
    %1233 = vmatpush.bf16.msra.mxu0 %v946
    %1234 = vmatpush.bf16.msra.mxu0 %v945
    %1235 = vmatpush.bf16.msra.mxu0 %v944
    %1236 = vmatpush.bf16.msra.mxu0 %v943
    %1237 = vmatpush.bf16.msra.mxu0 %v942
    %1238 = vmatmul.bf16.gmra.mxu0 %v326
    %v1239 = vpop.f32.mrf.mxu0
    %v1240 = vadd.f32 %v322, %v1239
    %v1241 = vpop.f32.mrf.mxu0
    %1242 = vdwg.mxu0
    %1243 = vmatpush.bf16.msra.mxu0 %v957
    %1244 = vmatpush.bf16.msra.mxu0 %v956
    %1245 = vmatpush.bf16.msra.mxu0 %v955
    %1246 = vmatpush.bf16.msra.mxu0 %v954
    %1247 = vmatpush.bf16.msra.mxu0 %v953
    %1248 = vmatpush.bf16.msra.mxu0 %v952
    %1249 = vmatpush.bf16.msra.mxu0 %v951
    %1250 = vmatpush.bf16.msra.mxu0 %v950
    %1251 = vmatmul.bf16.gmra.mxu0 %v327
    %v1252 = vpop.f32.mrf.mxu0
    %v1253 = vadd.f32 %v1240, %v1252
    %v1254 = vpop.f32.mrf.mxu0
    %1255 = vdwg.mxu0
    %1256 = vmatpush.bf16.msra.mxu0 %v965
    %1257 = vmatpush.bf16.msra.mxu0 %v964
    %1258 = vmatpush.bf16.msra.mxu0 %v963
    %1259 = vmatpush.bf16.msra.mxu0 %v962
    %1260 = vmatpush.bf16.msra.mxu0 %v961
    %1261 = vmatpush.bf16.msra.mxu0 %v960
    %1262 = vmatpush.bf16.msra.mxu0 %v959
    %1263 = vmatpush.bf16.msra.mxu0 %v958
    %1264 = vmatmul.bf16.gmra.mxu0 %v328
    %v1265 = vpop.f32.mrf.mxu0
    %v1266 = vadd.f32 %v1253, %v1265
    %v1267 = vpop.f32.mrf.mxu0
    %1268 = vdwg.mxu0
    %1269 = vmatpush.bf16.msra.mxu0 %v973
    %1270 = vmatpush.bf16.msra.mxu0 %v972
    %1271 = vmatpush.bf16.msra.mxu0 %v971
    %1272 = vmatpush.bf16.msra.mxu0 %v970
    %1273 = vmatpush.bf16.msra.mxu0 %v969
    %1274 = vmatpush.bf16.msra.mxu0 %v968
    %1275 = vmatpush.bf16.msra.mxu0 %v967
    %1276 = vmatpush.bf16.msra.mxu0 %v966
    %1277 = vmatmul.bf16.gmra.mxu0 %v329
    %v1278 = vpop.f32.mrf.mxu0
    %v1279 = vadd.f32 %v1266, %v1278
    %v1280 = vpop.f32.mrf.mxu0
    %1281 = vdwg.mxu0
    %1282 = vmatpush.bf16.msra.mxu0 %v981
    %1283 = vmatpush.bf16.msra.mxu0 %v980
    %1284 = vmatpush.bf16.msra.mxu0 %v979
    %1285 = vmatpush.bf16.msra.mxu0 %v978
    %1286 = vmatpush.bf16.msra.mxu0 %v977
    %1287 = vmatpush.bf16.msra.mxu0 %v976
    %1288 = vmatpush.bf16.msra.mxu0 %v975
    %1289 = vmatpush.bf16.msra.mxu0 %v974
    %1290 = vmatmul.bf16.gmra.mxu0 %v330
    %v1291 = vpop.f32.mrf.mxu0
    %v1292 = vadd.f32 %v1279, %v1291
    %v1293 = vpop.f32.mrf.mxu0
    %1294 = vdwg.mxu0
    %1295 = vmatpush.bf16.msra.mxu0 %v989
    %1296 = vmatpush.bf16.msra.mxu0 %v988
    %1297 = vmatpush.bf16.msra.mxu0 %v987
    %1298 = vmatpush.bf16.msra.mxu0 %v986
    %1299 = vmatpush.bf16.msra.mxu0 %v985
    %1300 = vmatpush.bf16.msra.mxu0 %v984
    %1301 = vmatpush.bf16.msra.mxu0 %v983
    %1302 = vmatpush.bf16.msra.mxu0 %v982
    %1303 = vmatmul.bf16.gmra.mxu0 %v331
    %v1304 = vpop.f32.mrf.mxu0
    %v1305 = vadd.f32 %v1292, %v1304
    %v1306 = vpop.f32.mrf.mxu0
    %1307 = vdwg.mxu0
    %1308 = vmatpush.bf16.msra.mxu0 %v997
    %1309 = vmatpush.bf16.msra.mxu0 %v996
    %1310 = vmatpush.bf16.msra.mxu0 %v995
    %1311 = vmatpush.bf16.msra.mxu0 %v994
    %1312 = vmatpush.bf16.msra.mxu0 %v993
    %1313 = vmatpush.bf16.msra.mxu0 %v992
    %1314 = vmatpush.bf16.msra.mxu0 %v991
    %1315 = vmatpush.bf16.msra.mxu0 %v990
    %1316 = vmatmul.bf16.gmra.mxu0 %v332
    %v1317 = vpop.f32.mrf.mxu0
    %v1318 = vadd.f32 %v1305, %v1317
    %v1319 = vpop.f32.mrf.mxu0
    %1320 = vdwg.mxu0
    %1321 = vmatpush.bf16.msra.mxu0 %v1005
    %1322 = vmatpush.bf16.msra.mxu0 %v1004
    %1323 = vmatpush.bf16.msra.mxu0 %v1003
    %1324 = vmatpush.bf16.msra.mxu0 %v1002
    %1325 = vmatpush.bf16.msra.mxu0 %v1001
    %1326 = vmatpush.bf16.msra.mxu0 %v1000
    %1327 = vmatpush.bf16.msra.mxu0 %v999
    %1328 = vmatpush.bf16.msra.mxu0 %v998
    %1329 = vmatmul.bf16.gmra.mxu0 %v333
    %v1330 = vpop.f32.mrf.mxu0
    %v1331 = vadd.f32 %v1318, %v1330
    %v1332 = vpop.f32.mrf.mxu0
    %1333 = vdwg.mxu0
    %1334 = vmatpush.bf16.msra.mxu0 %v1013
    %1335 = vmatpush.bf16.msra.mxu0 %v1012
    %1336 = vmatpush.bf16.msra.mxu0 %v1011
    %1337 = vmatpush.bf16.msra.mxu0 %v1010
    %1338 = vmatpush.bf16.msra.mxu0 %v1009
    %1339 = vmatpush.bf16.msra.mxu0 %v1008
    %1340 = vmatpush.bf16.msra.mxu0 %v1007
    %1341 = vmatpush.bf16.msra.mxu0 %v1006
    %1342 = vmatmul.bf16.gmra.mxu0 %v336
    %v1343 = vpop.f32.mrf.mxu0
    %v1344 = vadd.f32 %v1331, %v1343
    %v1345 = vpop.f32.mrf.mxu0
    %1346 = vdwg.mxu0
    %1347 = vmatpush.bf16.msra.mxu0 %v1021
    %1348 = vmatpush.bf16.msra.mxu0 %v1020
    %1349 = vmatpush.bf16.msra.mxu0 %v1019
    %1350 = vmatpush.bf16.msra.mxu0 %v1018
    %1351 = vmatpush.bf16.msra.mxu0 %v1017
    %1352 = vmatpush.bf16.msra.mxu0 %v1016
    %1353 = vmatpush.bf16.msra.mxu0 %v1015
    %1354 = vmatpush.bf16.msra.mxu0 %v1014
    %1355 = vmatmul.bf16.gmra.mxu0 %v337
    %v1356 = vpop.f32.mrf.mxu0
    %v1357 = vadd.f32 %v1344, %v1356
    %v1358 = vpop.f32.mrf.mxu0
    %1359 = vdwg.mxu0
    %1360 = vmatpush.bf16.msra.mxu0 %v1029
    %1361 = vmatpush.bf16.msra.mxu0 %v1028
    %1362 = vmatpush.bf16.msra.mxu0 %v1027
    %1363 = vmatpush.bf16.msra.mxu0 %v1026
    %1364 = vmatpush.bf16.msra.mxu0 %v1025
    %1365 = vmatpush.bf16.msra.mxu0 %v1024
    %1366 = vmatpush.bf16.msra.mxu0 %v1023
    %1367 = vmatpush.bf16.msra.mxu0 %v1022
    %1368 = vmatmul.bf16.gmra.mxu0 %v338
    %v1369 = vpop.f32.mrf.mxu0
    %v1370 = vadd.f32 %v1357, %v1369
    %v1371 = vpop.f32.mrf.mxu0
    %1372 = vdwg.mxu0
    %1373 = vmatpush.bf16.msra.mxu0 %v1037
    %1374 = vmatpush.bf16.msra.mxu0 %v1036
    %1375 = vmatpush.bf16.msra.mxu0 %v1035
    %1376 = vmatpush.bf16.msra.mxu0 %v1034
    %1377 = vmatpush.bf16.msra.mxu0 %v1033
    %1378 = vmatpush.bf16.msra.mxu0 %v1032
    %1379 = vmatpush.bf16.msra.mxu0 %v1031
    %1380 = vmatpush.bf16.msra.mxu0 %v1030
    %1381 = vmatmul.bf16.gmra.mxu0 %v339
    %v1382 = vpop.f32.mrf.mxu0
    %v1383 = vadd.f32 %v1370, %v1382
    %v1384 = vpop.f32.mrf.mxu0
    %1385 = vdwg.mxu0
    %1386 = vmatpush.bf16.msra.mxu0 %v1045
    %1387 = vmatpush.bf16.msra.mxu0 %v1044
    %1388 = vmatpush.bf16.msra.mxu0 %v1043
    %1389 = vmatpush.bf16.msra.mxu0 %v1042
    %1390 = vmatpush.bf16.msra.mxu0 %v1041
    %1391 = vmatpush.bf16.msra.mxu0 %v1040
    %1392 = vmatpush.bf16.msra.mxu0 %v1039
    %1393 = vmatpush.bf16.msra.mxu0 %v1038
    %1394 = vmatmul.bf16.gmra.mxu0 %v340
    %v1395 = vpop.f32.mrf.mxu0
    %v1396 = vadd.f32 %v1383, %v1395
    %v1397 = vpop.f32.mrf.mxu0
    %1398 = vdwg.mxu0
    %1399 = vmatpush.bf16.msra.mxu0 %v1053
    %1400 = vmatpush.bf16.msra.mxu0 %v1052
    %1401 = vmatpush.bf16.msra.mxu0 %v1051
    %1402 = vmatpush.bf16.msra.mxu0 %v1050
    %1403 = vmatpush.bf16.msra.mxu0 %v1049
    %1404 = vmatpush.bf16.msra.mxu0 %v1048
    %1405 = vmatpush.bf16.msra.mxu0 %v1047
    %1406 = vmatpush.bf16.msra.mxu0 %v1046
    %1407 = vmatmul.bf16.gmra.mxu0 %v341
    %v1408 = vpop.f32.mrf.mxu0
    %v1409 = vadd.f32 %v1396, %v1408
    %v1410 = vpop.f32.mrf.mxu0
    %1411 = vdwg.mxu0
    %1412 = vmatpush.bf16.msra.mxu0 %v1061
    %1413 = vmatpush.bf16.msra.mxu0 %v1060
    %1414 = vmatpush.bf16.msra.mxu0 %v1059
    %1415 = vmatpush.bf16.msra.mxu0 %v1058
    %1416 = vmatpush.bf16.msra.mxu0 %v1057
    %1417 = vmatpush.bf16.msra.mxu0 %v1056
    %1418 = vmatpush.bf16.msra.mxu0 %v1055
    %1419 = vmatpush.bf16.msra.mxu0 %v1054
    %1420 = vmatmul.bf16.gmra.mxu0 %v342
    %v1421 = vpop.f32.mrf.mxu0
    %v1422 = vadd.f32 %v1409, %v1421
    %v1423 = vpop.f32.mrf.mxu0
    %1424 = vdwg.mxu0
    %1425 = vmatpush.bf16.msra.mxu0 %v1069
    %1426 = vmatpush.bf16.msra.mxu0 %v1068
    %1427 = vmatpush.bf16.msra.mxu0 %v1067
    %1428 = vmatpush.bf16.msra.mxu0 %v1066
    %1429 = vmatpush.bf16.msra.mxu0 %v1065
    %1430 = vmatpush.bf16.msra.mxu0 %v1064
    %1431 = vmatpush.bf16.msra.mxu0 %v1063
    %1432 = vmatpush.bf16.msra.mxu0 %v1062
    %1433 = vmatmul.bf16.gmra.mxu0 %v343
    %v1434 = vpop.f32.mrf.mxu0
    %v1435 = vadd.f32 %v1422, %v1434
    %v1436 = vpop.f32.mrf.mxu0
    %1437 = vdwg.mxu0
    %1438 = vmatpush.bf16.msra.mxu0 %v1077
    %1439 = vmatpush.bf16.msra.mxu0 %v1076
    %1440 = vmatpush.bf16.msra.mxu0 %v1075
    %1441 = vmatpush.bf16.msra.mxu0 %v1074
    %1442 = vmatpush.bf16.msra.mxu0 %v1073
    %1443 = vmatpush.bf16.msra.mxu0 %v1072
    %1444 = vmatpush.bf16.msra.mxu0 %v1071
    %1445 = vmatpush.bf16.msra.mxu0 %v1070
    %1446 = vmatmul.bf16.gmra.mxu0 %v346
    %v1447 = vpop.f32.mrf.mxu0
    %v1448 = vadd.f32 %v1435, %v1447
    %v1449 = vpop.f32.mrf.mxu0
    %1450 = vdwg.mxu0
    %1451 = vmatpush.bf16.msra.mxu0 %v1085
    %1452 = vmatpush.bf16.msra.mxu0 %v1084
    %1453 = vmatpush.bf16.msra.mxu0 %v1083
    %1454 = vmatpush.bf16.msra.mxu0 %v1082
    %1455 = vmatpush.bf16.msra.mxu0 %v1081
    %1456 = vmatpush.bf16.msra.mxu0 %v1080
    %1457 = vmatpush.bf16.msra.mxu0 %v1079
    %1458 = vmatpush.bf16.msra.mxu0 %v1078
    %1459 = vmatmul.bf16.gmra.mxu0 %v347
    %v1460 = vpop.f32.mrf.mxu0
    %v1461 = vadd.f32 %v1448, %v1460
    %v1462 = vpop.f32.mrf.mxu0
    %1463 = vdwg.mxu0
    %v1464 = vld [vmem:[%s3] sm:$0x3]
    %v1465 = vmul.f32 %v1461, 0.5
    %v1466 = vmul.f32 %v1465, 1.442695
    %v1467 = vpow.pop %v1466
    %1469 = vrot.lane.b32.xlu0 %v1467, 96
    %v1470 = vpop.permute.xlu0 %1469
    %v1472 = vmul.f32 %v1464, %v1470
    %v1473 = vadd.f32 %v1461, %v1472
    %v1474 = vpack.c.bf16 %v1473, %v1473
    %v1475 = vld [vmem:[%s4] sm:$0xff]
    %v1476 = vld [vmem:[%s4 + $0x8] sm:$0xff]
    %v1477 = vld [vmem:[%s4 + $0x10] sm:$0xff]
    %v1478 = vld [vmem:[%s4 + $0x18] sm:$0xff]
    %v1479 = vld [vmem:[%s4 + $0x20] sm:$0xff]
    %v1480 = vld [vmem:[%s4 + $0x28] sm:$0xff]
    %v1481 = vld [vmem:[%s4 + $0x30] sm:$0xff]
    %v1482 = vld [vmem:[%s4 + $0x38] sm:$0xff]
    %v1483 = vld [vmem:[%s4 + $0x40] sm:$0xff]
    %v1484 = vld [vmem:[%s4 + $0x48] sm:$0xff]
    %v1485 = vld [vmem:[%s4 + $0x50] sm:$0xff]
    %v1486 = vld [vmem:[%s4 + $0x58] sm:$0xff]
    %v1487 = vld [vmem:[%s4 + $0x60] sm:$0xff]
    %v1488 = vld [vmem:[%s4 + $0x68] sm:$0xff]
    %v1489 = vld [vmem:[%s4 + $0x70] sm:$0xff]
    %v1490 = vld [vmem:[%s4 + $0x78] sm:$0xff]
    %v1491 = vld [vmem:[%s4 + $0x80] sm:$0xff]
    %v1492 = vld [vmem:[%s4 + $0x88] sm:$0xff]
    %v1493 = vld [vmem:[%s4 + $0x90] sm:$0xff]
    %v1494 = vld [vmem:[%s4 + $0x98] sm:$0xff]
    %v1495 = vld [vmem:[%s4 + $0xa0] sm:$0xff]
    %v1496 = vld [vmem:[%s4 + $0xa8] sm:$0xff]
    %v1497 = vld [vmem:[%s4 + $0xb0] sm:$0xff]
    %v1498 = vld [vmem:[%s4 + $0xb8] sm:$0xff]
    %v1499 = vld [vmem:[%s4 + $0xc0] sm:$0xff]
    %v1500 = vld [vmem:[%s4 + $0xc8] sm:$0xff]
    %v1501 = vld [vmem:[%s4 + $0xd0] sm:$0xff]
    %v1502 = vld [vmem:[%s4 + $0xd8] sm:$0xff]
    %v1503 = vld [vmem:[%s4 + $0xe0] sm:$0xff]
    %v1504 = vld [vmem:[%s4 + $0xe8] sm:$0xff]
    %v1505 = vld [vmem:[%s4 + $0xf0] sm:$0xff]
    %v1506 = vld [vmem:[%s4 + $0xf8] sm:$0xff]
    %v1507 = vld [vmem:[%s4 + $0x100] sm:$0xff]
    %v1508 = vld [vmem:[%s4 + $0x108] sm:$0xff]
    %v1509 = vld [vmem:[%s4 + $0x110] sm:$0xff]
    %v1510 = vld [vmem:[%s4 + $0x118] sm:$0xff]
    %v1511 = vld [vmem:[%s5] sm:$0xff]
    %v1512 = vld [vmem:[%s5 + $0x8] sm:$0xff]
    %v1513 = vld [vmem:[%s5 + $0x10] sm:$0x3]
    %v1517 = vperm.slane %v1511, 0
    %v1518 = vperm.slane %v1511, 1
    %v1519 = vperm.slane %v1511, 2
    %v1520 = vperm.slane %v1511, 3
    %v1521 = vperm.slane %v1511, 4
    %v1522 = vperm.slane %v1511, 5
    %v1523 = vperm.slane %v1511, 6
    %v1524 = vperm.slane %v1511, 7
    %v1525 = vperm.slane %v1512, 0
    %v1526 = vperm.slane %v1512, 1
    %v1527 = vperm.slane %v1512, 2
    %v1528 = vperm.slane %v1512, 3
    %v1529 = vperm.slane %v1512, 4
    %v1530 = vperm.slane %v1512, 5
    %v1531 = vperm.slane %v1512, 6
    %v1532 = vperm.slane %v1512, 7
    %v1533 = vperm.slane %v1513, 0
    %v1534 = vperm.slane %v1513, 1
    %v1589 = vunpack.c.l.b16 %v1475
    %v1590 = vunpack.c.h.b16 %v1475
    %v1591 = vunpack.c.l.b16 %v1476
    %v1592 = vunpack.c.h.b16 %v1476
    %v1593 = vunpack.c.l.b16 %v1477
    %v1594 = vunpack.c.h.b16 %v1477
    %v1595 = vunpack.c.l.b16 %v1478
    %v1596 = vunpack.c.h.b16 %v1478
    %v1597 = vunpack.c.l.b16 %v1479
    %v1598 = vunpack.c.h.b16 %v1479
    %v1599 = vunpack.c.l.b16 %v1480
    %v1600 = vunpack.c.h.b16 %v1480
    %v1601 = vunpack.c.l.b16 %v1481
    %v1602 = vunpack.c.h.b16 %v1481
    %v1603 = vunpack.c.l.b16 %v1482
    %v1604 = vunpack.c.h.b16 %v1482
    %v1605 = vunpack.c.l.b16 %v1483
    %v1606 = vunpack.c.h.b16 %v1483
    %v1607 = vunpack.c.l.b16 %v1484
    %v1608 = vunpack.c.h.b16 %v1484
    %v1609 = vunpack.c.l.b16 %v1485
    %v1610 = vunpack.c.h.b16 %v1485
    %v1611 = vunpack.c.l.b16 %v1486
    %v1612 = vunpack.c.h.b16 %v1486
    %v1613 = vunpack.c.l.b16 %v1487
    %v1614 = vunpack.c.h.b16 %v1487
    %v1615 = vunpack.c.l.b16 %v1488
    %v1616 = vunpack.c.h.b16 %v1488
    %v1617 = vunpack.c.l.b16 %v1489
    %v1618 = vunpack.c.h.b16 %v1489
    %v1619 = vunpack.c.l.b16 %v1490
    %v1620 = vunpack.c.h.b16 %v1490
    %v1621 = vunpack.c.l.b16 %v1491
    %v1622 = vunpack.c.h.b16 %v1491
    %v1623 = vunpack.c.l.b16 %v1492
    %v1624 = vunpack.c.h.b16 %v1492
    %v1625 = vunpack.c.l.b16 %v1493
    %v1626 = vunpack.c.h.b16 %v1493
    %v1627 = vunpack.c.l.b16 %v1494
    %v1628 = vunpack.c.h.b16 %v1494
    %v1629 = vunpack.c.l.b16 %v1495
    %v1630 = vunpack.c.h.b16 %v1495
    %v1631 = vunpack.c.l.b16 %v1496
    %v1632 = vunpack.c.h.b16 %v1496
    %v1633 = vunpack.c.l.b16 %v1497
    %v1634 = vunpack.c.h.b16 %v1497
    %v1635 = vunpack.c.l.b16 %v1498
    %v1636 = vunpack.c.h.b16 %v1498
    %v1637 = vunpack.c.l.b16 %v1499
    %v1638 = vunpack.c.h.b16 %v1499
    %v1639 = vunpack.c.l.b16 %v1500
    %v1640 = vunpack.c.h.b16 %v1500
    %v1641 = vunpack.c.l.b16 %v1501
    %v1642 = vunpack.c.h.b16 %v1501
    %v1643 = vunpack.c.l.b16 %v1502
    %v1644 = vunpack.c.h.b16 %v1502
    %v1645 = vunpack.c.l.b16 %v1503
    %v1646 = vunpack.c.h.b16 %v1503
    %v1647 = vunpack.c.l.b16 %v1504
    %v1648 = vunpack.c.h.b16 %v1504
    %v1649 = vunpack.c.l.b16 %v1505
    %v1650 = vunpack.c.h.b16 %v1505
    %v1651 = vunpack.c.l.b16 %v1506
    %v1652 = vunpack.c.h.b16 %v1506
    %v1653 = vunpack.c.l.b16 %v1507
    %v1654 = vunpack.c.h.b16 %v1507
    %v1655 = vunpack.c.l.b16 %v1508
    %v1656 = vunpack.c.h.b16 %v1508
    %v1657 = vunpack.c.l.b16 %v1509
    %v1658 = vunpack.c.h.b16 %v1509
    %v1659 = vunpack.c.l.b16 %v1510
    %v1660 = vunpack.c.h.b16 %v1510
    %v1661 = vpack.c.b16 %v1607, %v1589
    %v1662 = vpack.c.b16 %v1608, %v1590
    %v1663 = vpack.c.b16 %v1609, %v1591
    %v1664 = vpack.c.b16 %v1610, %v1592
    %v1665 = vpack.c.b16 %v1611, %v1593
    %v1666 = vpack.c.b16 %v1612, %v1594
    %v1667 = vpack.c.b16 %v1613, %v1595
    %v1668 = vpack.c.b16 %v1614, %v1596
    %v1669 = vpack.c.b16 %v1615, %v1597
    %v1670 = vpack.c.b16 %v1616, %v1598
    %v1671 = vpack.c.b16 %v1617, %v1599
    %v1672 = vpack.c.b16 %v1618, %v1600
    %v1673 = vpack.c.b16 %v1619, %v1601
    %v1674 = vpack.c.b16 %v1620, %v1602
    %v1675 = vpack.c.b16 %v1621, %v1603
    %v1676 = vpack.c.b16 %v1622, %v1604
    %v1677 = vpack.c.b16 %v1623, %v1605
    %v1678 = vpack.c.b16 %v1624, %v1606
    %v1679 = vpack.c.b16 %v1643, %v1625
    %v1680 = vpack.c.b16 %v1644, %v1626
    %v1681 = vpack.c.b16 %v1645, %v1627
    %v1682 = vpack.c.b16 %v1646, %v1628
    %v1683 = vpack.c.b16 %v1647, %v1629
    %v1684 = vpack.c.b16 %v1648, %v1630
    %v1685 = vpack.c.b16 %v1649, %v1631
    %v1686 = vpack.c.b16 %v1650, %v1632
    %v1687 = vpack.c.b16 %v1651, %v1633
    %v1688 = vpack.c.b16 %v1652, %v1634
    %v1689 = vpack.c.b16 %v1653, %v1635
    %v1690 = vpack.c.b16 %v1654, %v1636
    %v1691 = vpack.c.b16 %v1655, %v1637
    %v1692 = vpack.c.b16 %v1656, %v1638
    %v1693 = vpack.c.b16 %v1657, %v1639
    %v1694 = vpack.c.b16 %v1658, %v1640
    %v1695 = vpack.c.b16 %v1659, %v1641
    %v1696 = vpack.c.b16 %v1660, %v1642
    %vm1733 = vcmask 261120
    %v1735 = vsel %vm1733, %v1474, 0
    %1737 = vmatpush.bf16.msra.mxu0 0
    %1738 = vmatpush.bf16.msra.mxu0 0
    %1739 = vmatpush.bf16.msra.mxu0 0
    %1740 = vmatpush.bf16.msra.mxu0 0
    %1741 = vmatpush.bf16.msra.mxu0 0
    %1742 = vmatpush.bf16.msra.mxu0 0
    %1743 = vmatpush.bf16.msra.mxu0 %v1679
    %1744 = vmatpush.bf16.msra.mxu0 %v1661
    %1745 = vmatmul.bf16.gmra.mxu0 %v1735
    %v1746 = vpop.f32.mrf.mxu0
    %v1747 = vadd.f32 %v1517, %v1746
    %v1748 = vpop.f32.mrf.mxu0
    %1749 = vdwg.mxu0
    %1750 = vmatpush.bf16.msra.mxu0 0
    %1751 = vmatpush.bf16.msra.mxu0 0
    %1752 = vmatpush.bf16.msra.mxu0 0
    %1753 = vmatpush.bf16.msra.mxu0 0
    %1754 = vmatpush.bf16.msra.mxu0 0
    %1755 = vmatpush.bf16.msra.mxu0 0
    %1756 = vmatpush.bf16.msra.mxu0 %v1680
    %1757 = vmatpush.bf16.msra.mxu0 %v1662
    %1758 = vmatmul.bf16.gmra.mxu0 %v1735
    %v1759 = vpop.f32.mrf.mxu0
    %v1760 = vadd.f32 %v1518, %v1759
    %v1761 = vpop.f32.mrf.mxu0
    %1762 = vdwg.mxu0
    %1763 = vmatpush.bf16.msra.mxu0 0
    %1764 = vmatpush.bf16.msra.mxu0 0
    %1765 = vmatpush.bf16.msra.mxu0 0
    %1766 = vmatpush.bf16.msra.mxu0 0
    %1767 = vmatpush.bf16.msra.mxu0 0
    %1768 = vmatpush.bf16.msra.mxu0 0
    %1769 = vmatpush.bf16.msra.mxu0 %v1681
    %1770 = vmatpush.bf16.msra.mxu0 %v1663
    %1771 = vmatmul.bf16.gmra.mxu0 %v1735
    %v1772 = vpop.f32.mrf.mxu0
    %v1773 = vadd.f32 %v1519, %v1772
    %v1774 = vpop.f32.mrf.mxu0
    %1775 = vdwg.mxu0
    %1776 = vmatpush.bf16.msra.mxu0 0
    %1777 = vmatpush.bf16.msra.mxu0 0
    %1778 = vmatpush.bf16.msra.mxu0 0
    %1779 = vmatpush.bf16.msra.mxu0 0
    %1780 = vmatpush.bf16.msra.mxu0 0
    %1781 = vmatpush.bf16.msra.mxu0 0
    %1782 = vmatpush.bf16.msra.mxu0 %v1682
    %1783 = vmatpush.bf16.msra.mxu0 %v1664
    %1784 = vmatmul.bf16.gmra.mxu0 %v1735
    %v1785 = vpop.f32.mrf.mxu0
    %v1786 = vadd.f32 %v1520, %v1785
    %v1787 = vpop.f32.mrf.mxu0
    %1788 = vdwg.mxu0
    %1789 = vmatpush.bf16.msra.mxu0 0
    %1790 = vmatpush.bf16.msra.mxu0 0
    %1791 = vmatpush.bf16.msra.mxu0 0
    %1792 = vmatpush.bf16.msra.mxu0 0
    %1793 = vmatpush.bf16.msra.mxu0 0
    %1794 = vmatpush.bf16.msra.mxu0 0
    %1795 = vmatpush.bf16.msra.mxu0 %v1683
    %1796 = vmatpush.bf16.msra.mxu0 %v1665
    %1797 = vmatmul.bf16.gmra.mxu0 %v1735
    %v1798 = vpop.f32.mrf.mxu0
    %v1799 = vadd.f32 %v1521, %v1798
    %v1800 = vpop.f32.mrf.mxu0
    %1801 = vdwg.mxu0
    %1802 = vmatpush.bf16.msra.mxu0 0
    %1803 = vmatpush.bf16.msra.mxu0 0
    %1804 = vmatpush.bf16.msra.mxu0 0
    %1805 = vmatpush.bf16.msra.mxu0 0
    %1806 = vmatpush.bf16.msra.mxu0 0
    %1807 = vmatpush.bf16.msra.mxu0 0
    %1808 = vmatpush.bf16.msra.mxu0 %v1684
    %1809 = vmatpush.bf16.msra.mxu0 %v1666
    %1810 = vmatmul.bf16.gmra.mxu0 %v1735
    %v1811 = vpop.f32.mrf.mxu0
    %v1812 = vadd.f32 %v1522, %v1811
    %v1813 = vpop.f32.mrf.mxu0
    %1814 = vdwg.mxu0
    %1815 = vmatpush.bf16.msra.mxu0 0
    %1816 = vmatpush.bf16.msra.mxu0 0
    %1817 = vmatpush.bf16.msra.mxu0 0
    %1818 = vmatpush.bf16.msra.mxu0 0
    %1819 = vmatpush.bf16.msra.mxu0 0
    %1820 = vmatpush.bf16.msra.mxu0 0
    %1821 = vmatpush.bf16.msra.mxu0 %v1685
    %1822 = vmatpush.bf16.msra.mxu0 %v1667
    %1823 = vmatmul.bf16.gmra.mxu0 %v1735
    %v1824 = vpop.f32.mrf.mxu0
    %v1825 = vadd.f32 %v1523, %v1824
    %v1826 = vpop.f32.mrf.mxu0
    %1827 = vdwg.mxu0
    %1828 = vmatpush.bf16.msra.mxu0 0
    %1829 = vmatpush.bf16.msra.mxu0 0
    %1830 = vmatpush.bf16.msra.mxu0 0
    %1831 = vmatpush.bf16.msra.mxu0 0
    %1832 = vmatpush.bf16.msra.mxu0 0
    %1833 = vmatpush.bf16.msra.mxu0 0
    %1834 = vmatpush.bf16.msra.mxu0 %v1686
    %1835 = vmatpush.bf16.msra.mxu0 %v1668
    %1836 = vmatmul.bf16.gmra.mxu0 %v1735
    %v1837 = vpop.f32.mrf.mxu0
    %v1838 = vadd.f32 %v1524, %v1837
    %v1839 = vpop.f32.mrf.mxu0
    %1840 = vdwg.mxu0
    %1841 = vmatpush.bf16.msra.mxu0 0
    %1842 = vmatpush.bf16.msra.mxu0 0
    %1843 = vmatpush.bf16.msra.mxu0 0
    %1844 = vmatpush.bf16.msra.mxu0 0
    %1845 = vmatpush.bf16.msra.mxu0 0
    %1846 = vmatpush.bf16.msra.mxu0 0
    %1847 = vmatpush.bf16.msra.mxu0 %v1687
    %1848 = vmatpush.bf16.msra.mxu0 %v1669
    %1849 = vmatmul.bf16.gmra.mxu0 %v1735
    %v1850 = vpop.f32.mrf.mxu0
    %v1851 = vadd.f32 %v1525, %v1850
    %v1852 = vpop.f32.mrf.mxu0
    %1853 = vdwg.mxu0
    %1854 = vmatpush.bf16.msra.mxu0 0
    %1855 = vmatpush.bf16.msra.mxu0 0
    %1856 = vmatpush.bf16.msra.mxu0 0
    %1857 = vmatpush.bf16.msra.mxu0 0
    %1858 = vmatpush.bf16.msra.mxu0 0
    %1859 = vmatpush.bf16.msra.mxu0 0
    %1860 = vmatpush.bf16.msra.mxu0 %v1688
    %1861 = vmatpush.bf16.msra.mxu0 %v1670
    %1862 = vmatmul.bf16.gmra.mxu0 %v1735
    %v1863 = vpop.f32.mrf.mxu0
    %v1864 = vadd.f32 %v1526, %v1863
    %v1865 = vpop.f32.mrf.mxu0
    %1866 = vdwg.mxu0
    %1867 = vmatpush.bf16.msra.mxu0 0
    %1868 = vmatpush.bf16.msra.mxu0 0
    %1869 = vmatpush.bf16.msra.mxu0 0
    %1870 = vmatpush.bf16.msra.mxu0 0
    %1871 = vmatpush.bf16.msra.mxu0 0
    %1872 = vmatpush.bf16.msra.mxu0 0
    %1873 = vmatpush.bf16.msra.mxu0 %v1689
    %1874 = vmatpush.bf16.msra.mxu0 %v1671
    %1875 = vmatmul.bf16.gmra.mxu0 %v1735
    %v1876 = vpop.f32.mrf.mxu0
    %v1877 = vadd.f32 %v1527, %v1876
    %v1878 = vpop.f32.mrf.mxu0
    %1879 = vdwg.mxu0
    %1880 = vmatpush.bf16.msra.mxu0 0
    %1881 = vmatpush.bf16.msra.mxu0 0
    %1882 = vmatpush.bf16.msra.mxu0 0
    %1883 = vmatpush.bf16.msra.mxu0 0
    %1884 = vmatpush.bf16.msra.mxu0 0
    %1885 = vmatpush.bf16.msra.mxu0 0
    %1886 = vmatpush.bf16.msra.mxu0 %v1690
    %1887 = vmatpush.bf16.msra.mxu0 %v1672
    %1888 = vmatmul.bf16.gmra.mxu0 %v1735
    %v1889 = vpop.f32.mrf.mxu0
    %v1890 = vadd.f32 %v1528, %v1889
    %v1891 = vpop.f32.mrf.mxu0
    %1892 = vdwg.mxu0
    %1893 = vmatpush.bf16.msra.mxu0 0
    %1894 = vmatpush.bf16.msra.mxu0 0
    %1895 = vmatpush.bf16.msra.mxu0 0
    %1896 = vmatpush.bf16.msra.mxu0 0
    %1897 = vmatpush.bf16.msra.mxu0 0
    %1898 = vmatpush.bf16.msra.mxu0 0
    %1899 = vmatpush.bf16.msra.mxu0 %v1691
    %1900 = vmatpush.bf16.msra.mxu0 %v1673
    %1901 = vmatmul.bf16.gmra.mxu0 %v1735
    %v1902 = vpop.f32.mrf.mxu0
    %v1903 = vadd.f32 %v1529, %v1902
    %v1904 = vpop.f32.mrf.mxu0
    %1905 = vdwg.mxu0
    %1906 = vmatpush.bf16.msra.mxu0 0
    %1907 = vmatpush.bf16.msra.mxu0 0
    %1908 = vmatpush.bf16.msra.mxu0 0
    %1909 = vmatpush.bf16.msra.mxu0 0
    %1910 = vmatpush.bf16.msra.mxu0 0
    %1911 = vmatpush.bf16.msra.mxu0 0
    %1912 = vmatpush.bf16.msra.mxu0 %v1692
    %1913 = vmatpush.bf16.msra.mxu0 %v1674
    %1914 = vmatmul.bf16.gmra.mxu0 %v1735
    %v1915 = vpop.f32.mrf.mxu0
    %v1916 = vadd.f32 %v1530, %v1915
    %v1917 = vpop.f32.mrf.mxu0
    %1918 = vdwg.mxu0
    %1919 = vmatpush.bf16.msra.mxu0 0
    %1920 = vmatpush.bf16.msra.mxu0 0
    %1921 = vmatpush.bf16.msra.mxu0 0
    %1922 = vmatpush.bf16.msra.mxu0 0
    %1923 = vmatpush.bf16.msra.mxu0 0
    %1924 = vmatpush.bf16.msra.mxu0 0
    %1925 = vmatpush.bf16.msra.mxu0 %v1693
    %1926 = vmatpush.bf16.msra.mxu0 %v1675
    %1927 = vmatmul.bf16.gmra.mxu0 %v1735
    %v1928 = vpop.f32.mrf.mxu0
    %v1929 = vadd.f32 %v1531, %v1928
    %v1930 = vpop.f32.mrf.mxu0
    %1931 = vdwg.mxu0
    %1932 = vmatpush.bf16.msra.mxu0 0
    %1933 = vmatpush.bf16.msra.mxu0 0
    %1934 = vmatpush.bf16.msra.mxu0 0
    %1935 = vmatpush.bf16.msra.mxu0 0
    %1936 = vmatpush.bf16.msra.mxu0 0
    %1937 = vmatpush.bf16.msra.mxu0 0
    %1938 = vmatpush.bf16.msra.mxu0 %v1694
    %1939 = vmatpush.bf16.msra.mxu0 %v1676
    %1940 = vmatmul.bf16.gmra.mxu0 %v1735
    %v1941 = vpop.f32.mrf.mxu0
    %v1942 = vadd.f32 %v1532, %v1941
    %v1943 = vpop.f32.mrf.mxu0
    %1944 = vdwg.mxu0
    %1945 = vmatpush.bf16.msra.mxu0 0
    %1946 = vmatpush.bf16.msra.mxu0 0
    %1947 = vmatpush.bf16.msra.mxu0 0
    %1948 = vmatpush.bf16.msra.mxu0 0
    %1949 = vmatpush.bf16.msra.mxu0 0
    %1950 = vmatpush.bf16.msra.mxu0 0
    %1951 = vmatpush.bf16.msra.mxu0 %v1695
    %1952 = vmatpush.bf16.msra.mxu0 %v1677
    %1953 = vmatmul.bf16.gmra.mxu0 %v1735
    %v1954 = vpop.f32.mrf.mxu0
    %v1955 = vadd.f32 %v1533, %v1954
    %v1956 = vpop.f32.mrf.mxu0
    %1957 = vdwg.mxu0
    %1958 = vmatpush.bf16.msra.mxu0 0
    %1959 = vmatpush.bf16.msra.mxu0 0
    %1960 = vmatpush.bf16.msra.mxu0 0
    %1961 = vmatpush.bf16.msra.mxu0 0
    %1962 = vmatpush.bf16.msra.mxu0 0
    %1963 = vmatpush.bf16.msra.mxu0 0
    %1964 = vmatpush.bf16.msra.mxu0 %v1696
    %1965 = vmatpush.bf16.msra.mxu0 %v1678
    %1966 = vmatmul.bf16.gmra.mxu0 %v1735
    %v1967 = vpop.f32.mrf.mxu0
    %v1968 = vadd.f32 %v1534, %v1967
    %v1969 = vpop.f32.mrf.mxu0
    %1970 = vdwg.mxu0
    %v1971 = vmax.f32 %v1747, 0.0
    %v1972 = vmax.f32 %v1760, 0.0
    %v1973 = vmax.f32 %v1773, 0.0
    %v1974 = vmax.f32 %v1786, 0.0
    %v1975 = vmax.f32 %v1799, 0.0
    %v1976 = vmax.f32 %v1812, 0.0
    %v1977 = vmax.f32 %v1825, 0.0
    %v1978 = vmax.f32 %v1838, 0.0
    %v1979 = vmax.f32 %v1851, 0.0
    %v1980 = vmax.f32 %v1864, 0.0
    %v1981 = vmax.f32 %v1877, 0.0
    %v1982 = vmax.f32 %v1890, 0.0
    %v1983 = vmax.f32 %v1903, 0.0
    %v1984 = vmax.f32 %v1916, 0.0
    %v1985 = vmax.f32 %v1929, 0.0
    %v1986 = vmax.f32 %v1942, 0.0
    %v1987 = vmax.f32 %v1955, 0.0
    %v1988 = vmax.f32 %v1968, 0.0
    %vm1989 = vcmask 254976
    %1990 = vst.msk [vmem:[#allocation2] sm:$0x3] %vm1989, %v1461
    %1992 = vrot.lane.b32.xlu0 %v1461, 96
    %v1993 = vpop.permute.xlu0 %1992
    %1995 = vst.msk [vmem:[#allocation4] sm:$0x3] %vm1989, %v1993
    %v1996 = vpack.c.bf16 %v1972, %v1971
    %v1997 = vpack.c.bf16 %v1974, %v1973
    %v1998 = vpack.c.bf16 %v1976, %v1975
    %v1999 = vpack.c.bf16 %v1978, %v1977
    %v2000 = vpack.c.bf16 %v1980, %v1979
    %v2001 = vpack.c.bf16 %v1982, %v1981
    %v2002 = vpack.c.bf16 %v1984, %v1983
    %v2003 = vpack.c.bf16 %v1986, %v1985
    %v2004 = vpack.c.bf16 %v1988, %v1987
    %v2014 = vrot.slane %v1996, 3
    %v2015 = vrot.slane %v1997, 6
    %v2016 = vrot.slane %v1997, 1
    %v2017 = vrot.slane %v1998, 4
    %v2018 = vrot.slane %v1998, 7
    %v2019 = vrot.slane %v1999, 2
    %v2020 = vrot.slane %v1999, 5
    %v2021 = vrot.slane %v2000, 3
    %v2022 = vrot.slane %v2001, 6
    %v2023 = vrot.slane %v2001, 1
    %v2024 = vrot.slane %v2002, 4
    %v2025 = vrot.slane %v2002, 7
    %v2026 = vrot.slane %v2003, 2
    %v2027 = vrot.slane %v2003, 5
    %v2028 = vrot.slane %v2004, 3
    %vm2029 = vcmask 1040384
    %v2032 = vsel %vm2029, %v1996, %v2014
    %vm2033 = vcmask 1042434
    %v2036 = vsel %vm2033, %v2015, %v2016
    %vm2037 = vcmask 1041408
    %v2038 = vsel %vm2037, %v2032, %v2036
    %vm2039 = vcmask 1044484
    %v2042 = vsel %vm2039, %v2017, %v2018
    %vm2043 = vcmask 1046534
    %v2046 = vsel %vm2043, %v2019, %v2020
    %vm2047 = vcmask 1045508
    %v2048 = vsel %vm2047, %v2042, %v2046
    %vm2049 = vcmask 1043456
    %v2050 = vsel %vm2049, %v2038, %v2048
    %v2053 = vsel %vm2029, %v2000, %v2021
    %v2056 = vsel %vm2033, %v2022, %v2023
    %v2057 = vsel %vm2037, %v2053, %v2056
    %v2060 = vsel %vm2039, %v2024, %v2025
    %v2063 = vsel %vm2043, %v2026, %v2027
    %v2064 = vsel %vm2047, %v2060, %v2063
    %v2065 = vsel %vm2049, %v2057, %v2064
    %v2068 = vsel %vm2029, %v2004, %v2028
    %2072 = vst [vmem:[%s8] sm:$0xff] %v2050
    %2073 = vst [vmem:[%s8 + $0x8] sm:$0xff] %v2065
    %2074 = vst [vmem:[%s8 + $0x10] sm:$0x3] %v2068
    // Predicated region
    $region26: #{deconvvae_forward.7} parent=1 // pred_check
      _
    $region27: #{deconvvae_forward.7} parent=1 // pred_check_branch
      %2076 = sbr.rel (0) target = $region29
    $region28: #{deconvvae_forward.7} parent=1 // pred_region
      %2078 = vsyncadd [#allocation3], 0
      %s2080 = sshll.u32 [#allocation2], 4
      %s2081 = int_to_ptr.vmem [resolvable:$true] %s2080
      %s2082 = sshll.u32 %s6, 4
      %s2083 = int_to_ptr.hbm [resolvable:$true] %s2082
      %2085 = dma.vmem_to_hbm [thread:$0]  %s2081, 32, %s2083, [#allocation3]
    $region29: #{deconvvae_forward.7} parent=1 // pred_fallthru
      _
    // Predicated region
    $region30: #{deconvvae_forward.7} parent=1 // pred_check
      _
    $region31: #{deconvvae_forward.7} parent=1 // pred_check_branch
      %2087 = sbr.rel (0) target = $region33
    $region32: #{deconvvae_forward.7} parent=1 // pred_region
      %2089 = vsyncadd [#allocation5], 0
      %s2091 = sshll.u32 [#allocation4], 4
      %s2092 = int_to_ptr.vmem [resolvable:$true] %s2091
      %s2093 = sshll.u32 %s7, 4
      %s2094 = int_to_ptr.hbm [resolvable:$true] %s2093
      %2096 = dma.vmem_to_hbm [thread:$0]  %s2092, 32, %s2094, [#allocation5]
    $region33: #{deconvvae_forward.7} parent=1 // pred_fallthru
      _
    // Predicated region
    $region34: #{deconvvae_forward.7} parent=1 // pred_check
      _
    $region35: #{deconvvae_forward.7} parent=1 // pred_check_branch
      %2098 = sbr.rel (0) target = $region37
    $region36: #{deconvvae_forward.7} parent=1 // pred_region
      _
    $region37: #{deconvvae_forward.7} parent=1 // pred_fallthru
      _
    // Predicated region
    $region38: #{deconvvae_forward.7} parent=1 // pred_check
      _
    $region39: #{deconvvae_forward.7} parent=1 // pred_check_branch
      %2100 = sbr.rel (0) target = $region41
    $region40: #{deconvvae_forward.7} parent=1 // pred_region
      %2102 = dma.done [#allocation3], 32
    $region41: #{deconvvae_forward.7} parent=1 // pred_fallthru
      _
    // Predicated region
    $region42: #{deconvvae_forward.7} parent=1 // pred_check
      _
    $region43: #{deconvvae_forward.7} parent=1 // pred_check_branch
      %2104 = sbr.rel (0) target = $region45
    $region44: #{deconvvae_forward.7} parent=1 // pred_region
      %2106 = dma.done [#allocation5], 32
    $region45: #{deconvvae_forward.7} parent=1 // pred_fallthru
      _
    // Predicated region
    $region46: #{deconvvae_forward.7} parent=1 // pred_check
      _
    $region47: #{deconvvae_forward.7} parent=1 // pred_check_branch
      %2108 = sbr.rel (0) target = $region49
    $region48: #{deconvvae_forward.7} parent=1 // pred_region
      _
    $region49: #{deconvvae_forward.7} parent=1 // pred_fallthru
      _
    %2109 = vsyncpa [#allocation3], 1
    %2110 = vsyncpa [#allocation5], 1

// kernel: deconvvae_forward.8
$region0: #{deconvvae_forward.8}
  #allocation0 [shape = 'u32[]', space=smem, size = 0x4, offset = 0x4, fixed_abs, tag = 'smem constant byte address 0x4 - core index']
  #allocation1 [shape = 'u32[72,128]{1,0:T(1,128)}', space=vmem, size = 0x9000, scoped, tag = 'internal scratch']
  %s0 = inlined_call_operand.vmem [shape: bf16[1352,144], index: 0, kind: input, shape index: {}]
  %s1 = inlined_call_operand.vmem [shape: bf16[144,32], index: 1, kind: input, shape index: {}]
  %s2 = inlined_call_operand.vmem [shape: f32[1,32], index: 2, kind: input, shape index: {}]
  %s3 = inlined_call_operand.vmem [shape: bf16[1352,32], index: 3, kind: output, shape index: {}]
  %s4 = sld [smem:[#allocation0]]
  $region22: #{deconvvae_forward.8} parent=0
    _
  %s6 = ssub.s32 1, %s4
  %s7 = scalar_select 0, %s6, %s4
  // Predicated region
  $region2: #{deconvvae_forward.8} parent=0 // pred_check
    _
  $region3: #{deconvvae_forward.8} parent=0 // pred_check_branch
    %9 = sbr.rel (0) target = $region5
  $region4: #{deconvvae_forward.8} parent=0 // pred_region
    _
  $region5: #{deconvvae_forward.8} parent=0 // pred_fallthru
    _
  // Predicated region
  $region6: #{deconvvae_forward.8} parent=0 // pred_check
    _
  $region7: #{deconvvae_forward.8} parent=0 // pred_check_branch
    %11 = sbr.rel (0) target = $region9
  $region8: #{deconvvae_forward.8} parent=0 // pred_region
    _
  $region9: #{deconvvae_forward.8} parent=0 // pred_fallthru
    _
  // Predicated region
  $region10: #{deconvvae_forward.8} parent=0 // pred_check
    _
  $region11: #{deconvvae_forward.8} parent=0 // pred_check_branch
    %13 = sbr.rel (0) target = $region13
  $region12: #{deconvvae_forward.8} parent=0 // pred_region
    _
  $region13: #{deconvvae_forward.8} parent=0 // pred_fallthru
    _
  %v15 = vld [vmem:[%s0] sm:$0xff]
  %v16 = vld [vmem:[%s0 + $0x8] sm:$0xff]
  %v17 = vld [vmem:[%s0 + $0x10] sm:$0xff]
  %v18 = vld [vmem:[%s0 + $0x18] sm:$0xff]
  %v19 = vld [vmem:[%s0 + $0x20] sm:$0xff]
  %v20 = vld [vmem:[%s0 + $0x28] sm:$0xff]
  %v21 = vld [vmem:[%s0 + $0x30] sm:$0xff]
  %v22 = vld [vmem:[%s0 + $0x38] sm:$0xff]
  %v23 = vld [vmem:[%s0 + $0x40] sm:$0xff]
  %v24 = vld [vmem:[%s0 + $0x48] sm:$0xff]
  %v25 = vld [vmem:[%s0 + $0x50] sm:$0xff]
  %v26 = vld [vmem:[%s0 + $0x58] sm:$0xff]
  %v27 = vld [vmem:[%s0 + $0x60] sm:$0xff]
  %v28 = vld [vmem:[%s0 + $0x68] sm:$0xff]
  %v29 = vld [vmem:[%s0 + $0x70] sm:$0xff]
  %v30 = vld [vmem:[%s0 + $0x78] sm:$0xff]
  %v31 = vld [vmem:[%s0 + $0x80] sm:$0xff]
  %v32 = vld [vmem:[%s0 + $0x88] sm:$0xff]
  %v33 = vld [vmem:[%s0 + $0x90] sm:$0xff]
  %v34 = vld [vmem:[%s0 + $0x98] sm:$0xff]
  %v35 = vld [vmem:[%s0 + $0xa0] sm:$0xff]
  %v36 = vld [vmem:[%s0 + $0xa8] sm:$0xff]
  %v37 = vld [vmem:[%s0 + $0xb0] sm:$0xff]
  %v38 = vld [vmem:[%s0 + $0xb8] sm:$0xff]
  %v39 = vld [vmem:[%s0 + $0xc0] sm:$0xff]
  %v40 = vld [vmem:[%s0 + $0xc8] sm:$0xff]
  %v41 = vld [vmem:[%s0 + $0xd0] sm:$0xff]
  %v42 = vld [vmem:[%s0 + $0xd8] sm:$0xff]
  %v43 = vld [vmem:[%s0 + $0xe0] sm:$0xff]
  %v44 = vld [vmem:[%s0 + $0xe8] sm:$0xff]
  %v45 = vld [vmem:[%s0 + $0xf0] sm:$0xff]
  %v46 = vld [vmem:[%s0 + $0xf8] sm:$0xff]
  %v47 = vld [vmem:[%s0 + $0x100] sm:$0xff]
  %v48 = vld [vmem:[%s0 + $0x108] sm:$0xff]
  %v49 = vld [vmem:[%s0 + $0x110] sm:$0xff]
  %v50 = vld [vmem:[%s0 + $0x118] sm:$0xff]
  %v51 = vld [vmem:[%s0 + $0x120] sm:$0xff]
  %v52 = vld [vmem:[%s0 + $0x128] sm:$0xff]
  %v53 = vld [vmem:[%s0 + $0x130] sm:$0xff]
  %v54 = vld [vmem:[%s0 + $0x138] sm:$0xff]
  %v55 = vld [vmem:[%s0 + $0x140] sm:$0xff]
  %v56 = vld [vmem:[%s0 + $0x148] sm:$0xff]
  %v57 = vld [vmem:[%s0 + $0x150] sm:$0xff]
  %v58 = vld [vmem:[%s0 + $0x158] sm:$0xff]
  %v59 = vld [vmem:[%s0 + $0x160] sm:$0xff]
  %v60 = vld [vmem:[%s0 + $0x168] sm:$0xff]
  %v61 = vld [vmem:[%s0 + $0x170] sm:$0xff]
  %v62 = vld [vmem:[%s0 + $0x178] sm:$0xff]
  %v63 = vld [vmem:[%s0 + $0x180] sm:$0xff]
  %v64 = vld [vmem:[%s0 + $0x188] sm:$0xff]
  %v65 = vld [vmem:[%s0 + $0x190] sm:$0xff]
  %v66 = vld [vmem:[%s0 + $0x198] sm:$0xff]
  %v67 = vld [vmem:[%s0 + $0x1a0] sm:$0xff]
  %v68 = vld [vmem:[%s0 + $0x1a8] sm:$0xff]
  %v69 = vld [vmem:[%s0 + $0x1b0] sm:$0xff]
  %v70 = vld [vmem:[%s0 + $0x1b8] sm:$0xff]
  %v71 = vld [vmem:[%s0 + $0x1c0] sm:$0xff]
  %v72 = vld [vmem:[%s0 + $0x1c8] sm:$0xff]
  %v73 = vld [vmem:[%s0 + $0x1d0] sm:$0xff]
  %v74 = vld [vmem:[%s0 + $0x1d8] sm:$0xff]
  %v75 = vld [vmem:[%s0 + $0x1e0] sm:$0xff]
  %v76 = vld [vmem:[%s0 + $0x1e8] sm:$0xff]
  %v77 = vld [vmem:[%s0 + $0x1f0] sm:$0xff]
  %v78 = vld [vmem:[%s0 + $0x1f8] sm:$0xff]
  %v79 = vld [vmem:[%s0 + $0x200] sm:$0xff]
  %v80 = vld [vmem:[%s0 + $0x208] sm:$0xff]
  %v81 = vld [vmem:[%s0 + $0x210] sm:$0xff]
  %v82 = vld [vmem:[%s0 + $0x218] sm:$0xff]
  %v83 = vld [vmem:[%s0 + $0x220] sm:$0xff]
  %v84 = vld [vmem:[%s0 + $0x228] sm:$0xff]
  %v85 = vld [vmem:[%s0 + $0x230] sm:$0xff]
  %v86 = vld [vmem:[%s0 + $0x238] sm:$0xff]
  %v87 = vld [vmem:[%s0 + $0x240] sm:$0xff]
  %v88 = vld [vmem:[%s0 + $0x248] sm:$0xff]
  %v89 = vld [vmem:[%s0 + $0x250] sm:$0xff]
  %v90 = vld [vmem:[%s0 + $0x258] sm:$0xff]
  %v91 = vld [vmem:[%s0 + $0x260] sm:$0xff]
  %v92 = vld [vmem:[%s0 + $0x268] sm:$0xff]
  %v93 = vld [vmem:[%s0 + $0x270] sm:$0xff]
  %v94 = vld [vmem:[%s0 + $0x278] sm:$0xff]
  %v95 = vld [vmem:[%s0 + $0x280] sm:$0xff]
  %v96 = vld [vmem:[%s0 + $0x288] sm:$0xff]
  %v97 = vld [vmem:[%s0 + $0x290] sm:$0xff]
  %v98 = vld [vmem:[%s0 + $0x298] sm:$0xff]
  %v99 = vld [vmem:[%s0 + $0x2a0] sm:$0xff]
  %v100 = vld [vmem:[%s0 + $0x2a8] sm:$0xff]
  %v101 = vld [vmem:[%s0 + $0x2b0] sm:$0xff]
  %v102 = vld [vmem:[%s0 + $0x2b8] sm:$0xff]
  %v103 = vld [vmem:[%s0 + $0x2c0] sm:$0xff]
  %v104 = vld [vmem:[%s0 + $0x2c8] sm:$0xff]
  %v105 = vld [vmem:[%s0 + $0x2d0] sm:$0xff]
  %v106 = vld [vmem:[%s0 + $0x2d8] sm:$0xff]
  %v107 = vld [vmem:[%s0 + $0x2e0] sm:$0xff]
  %v108 = vld [vmem:[%s0 + $0x2e8] sm:$0xff]
  %v109 = vld [vmem:[%s0 + $0x2f0] sm:$0xff]
  %v110 = vld [vmem:[%s0 + $0x2f8] sm:$0xff]
  %v111 = vld [vmem:[%s0 + $0x300] sm:$0xff]
  %v112 = vld [vmem:[%s0 + $0x308] sm:$0xff]
  %v113 = vld [vmem:[%s0 + $0x310] sm:$0xff]
  %v114 = vld [vmem:[%s0 + $0x318] sm:$0xff]
  %v115 = vld [vmem:[%s0 + $0x320] sm:$0xff]
  %v116 = vld [vmem:[%s0 + $0x328] sm:$0xff]
  %v117 = vld [vmem:[%s0 + $0x330] sm:$0xff]
  %v118 = vld [vmem:[%s0 + $0x338] sm:$0xff]
  %v119 = vld [vmem:[%s0 + $0x340] sm:$0xff]
  %v120 = vld [vmem:[%s0 + $0x348] sm:$0xff]
  %v121 = vld [vmem:[%s0 + $0x350] sm:$0xff]
  %v122 = vld [vmem:[%s0 + $0x358] sm:$0xff]
  %v123 = vld [vmem:[%s0 + $0x360] sm:$0xff]
  %v124 = vld [vmem:[%s0 + $0x368] sm:$0xff]
  %v125 = vld [vmem:[%s0 + $0x370] sm:$0xff]
  %v126 = vld [vmem:[%s0 + $0x378] sm:$0xff]
  %v127 = vld [vmem:[%s0 + $0x380] sm:$0xff]
  %v128 = vld [vmem:[%s0 + $0x388] sm:$0xff]
  %v129 = vld [vmem:[%s0 + $0x390] sm:$0xff]
  %v130 = vld [vmem:[%s0 + $0x398] sm:$0xff]
  %v131 = vld [vmem:[%s0 + $0x3a0] sm:$0xff]
  %v132 = vld [vmem:[%s0 + $0x3a8] sm:$0xff]
  %v133 = vld [vmem:[%s0 + $0x3b0] sm:$0xff]
  %v134 = vld [vmem:[%s0 + $0x3b8] sm:$0xff]
  %v135 = vld [vmem:[%s0 + $0x3c0] sm:$0xff]
  %v136 = vld [vmem:[%s0 + $0x3c8] sm:$0xff]
  %v137 = vld [vmem:[%s0 + $0x3d0] sm:$0xff]
  %v138 = vld [vmem:[%s0 + $0x3d8] sm:$0xff]
  %v139 = vld [vmem:[%s0 + $0x3e0] sm:$0xff]
  %v140 = vld [vmem:[%s0 + $0x3e8] sm:$0xff]
  %v141 = vld [vmem:[%s0 + $0x3f0] sm:$0xff]
  %v142 = vld [vmem:[%s0 + $0x3f8] sm:$0xff]
  %v143 = vld [vmem:[%s0 + $0x400] sm:$0xff]
  %v144 = vld [vmem:[%s0 + $0x408] sm:$0xff]
  %v145 = vld [vmem:[%s0 + $0x410] sm:$0xff]
  %v146 = vld [vmem:[%s0 + $0x418] sm:$0xff]
  %v147 = vld [vmem:[%s0 + $0x420] sm:$0xff]
  %v148 = vld [vmem:[%s0 + $0x428] sm:$0xff]
  %v149 = vld [vmem:[%s0 + $0x430] sm:$0xff]
  %v150 = vld [vmem:[%s0 + $0x438] sm:$0xff]
  %v151 = vld [vmem:[%s0 + $0x440] sm:$0xff]
  %v152 = vld [vmem:[%s0 + $0x448] sm:$0xff]
  %v153 = vld [vmem:[%s0 + $0x450] sm:$0xff]
  %v154 = vld [vmem:[%s0 + $0x458] sm:$0xff]
  %v155 = vld [vmem:[%s0 + $0x460] sm:$0xff]
  %v156 = vld [vmem:[%s0 + $0x468] sm:$0xff]
  %v157 = vld [vmem:[%s0 + $0x470] sm:$0xff]
  %v158 = vld [vmem:[%s0 + $0x478] sm:$0xff]
  %v159 = vld [vmem:[%s0 + $0x480] sm:$0xff]
  %v160 = vld [vmem:[%s0 + $0x488] sm:$0xff]
  %v161 = vld [vmem:[%s0 + $0x490] sm:$0xff]
  %v162 = vld [vmem:[%s0 + $0x498] sm:$0xff]
  %v163 = vld [vmem:[%s0 + $0x4a0] sm:$0xff]
  %v164 = vld [vmem:[%s0 + $0x4a8] sm:$0xff]
  %v165 = vld [vmem:[%s0 + $0x4b0] sm:$0xff]
  %v166 = vld [vmem:[%s0 + $0x4b8] sm:$0xff]
  %v167 = vld [vmem:[%s0 + $0x4c0] sm:$0xff]
  %v168 = vld [vmem:[%s0 + $0x4c8] sm:$0xff]
  %v169 = vld [vmem:[%s0 + $0x4d0] sm:$0xff]
  %v170 = vld [vmem:[%s0 + $0x4d8] sm:$0xff]
  %v171 = vld [vmem:[%s0 + $0x4e0] sm:$0xff]
  %v172 = vld [vmem:[%s0 + $0x4e8] sm:$0xff]
  %v173 = vld [vmem:[%s0 + $0x4f0] sm:$0xff]
  %v174 = vld [vmem:[%s0 + $0x4f8] sm:$0xff]
  %v175 = vld [vmem:[%s0 + $0x500] sm:$0xff]
  %v176 = vld [vmem:[%s0 + $0x508] sm:$0xff]
  %v177 = vld [vmem:[%s0 + $0x510] sm:$0xff]
  %v178 = vld [vmem:[%s0 + $0x518] sm:$0xff]
  %v179 = vld [vmem:[%s0 + $0x520] sm:$0xff]
  %v180 = vld [vmem:[%s0 + $0x528] sm:$0xff]
  %v181 = vld [vmem:[%s0 + $0x530] sm:$0xff]
  %v182 = vld [vmem:[%s0 + $0x538] sm:$0xff]
  %v183 = vld [vmem:[%s0 + $0x540] sm:$0xff]
  %v184 = vld [vmem:[%s1] sm:$0xf]
  %v185 = vld [vmem:[%s1 + $0x4] sm:$0xf]
  %v186 = vld [vmem:[%s1 + $0x8] sm:$0xf]
  %v187 = vld [vmem:[%s1 + $0xc] sm:$0xf]
  %v188 = vld [vmem:[%s1 + $0x10] sm:$0xf]
  %v189 = vld [vmem:[%s1 + $0x14] sm:$0xf]
  %v190 = vld [vmem:[%s1 + $0x18] sm:$0xf]
  %v191 = vld [vmem:[%s1 + $0x1c] sm:$0xf]
  %v192 = vld [vmem:[%s1 + $0x20] sm:$0xf]
  %v193 = vld [vmem:[%s1 + $0x24] sm:$0xf]
  %v194 = vld [vmem:[%s1 + $0x28] sm:$0xf]
  %v195 = vld [vmem:[%s1 + $0x2c] sm:$0xf]
  %v196 = vld [vmem:[%s1 + $0x30] sm:$0xf]
  %v197 = vld [vmem:[%s1 + $0x34] sm:$0xf]
  %v198 = vld [vmem:[%s1 + $0x38] sm:$0xf]
  %v199 = vld [vmem:[%s1 + $0x3c] sm:$0xf]
  %v200 = vld [vmem:[%s1 + $0x40] sm:$0xf]
  %v201 = vld [vmem:[%s1 + $0x44] sm:$0xf]
  %v202 = vld [vmem:[%s2] sm:$0x1]
  %v204 = vperm.slane %v202, 0
  %v375 = vunpack.c.l.b16 %v15
  %v376 = vunpack.c.h.b16 %v15
  %v377 = vunpack.c.l.b16 %v16
  %v378 = vunpack.c.h.b16 %v16
  %v379 = vunpack.c.l.b16 %v17
  %v380 = vunpack.c.h.b16 %v17
  %v381 = vunpack.c.l.b16 %v18
  %v382 = vunpack.c.h.b16 %v18
  %v383 = vunpack.c.l.b16 %v19
  %v384 = vunpack.c.h.b16 %v19
  %v385 = vunpack.c.l.b16 %v20
  %v386 = vunpack.c.h.b16 %v20
  %v387 = vunpack.c.l.b16 %v21
  %v388 = vunpack.c.h.b16 %v21
  %v389 = vunpack.c.l.b16 %v22
  %v390 = vunpack.c.h.b16 %v22
  %v391 = vunpack.c.l.b16 %v23
  %v392 = vunpack.c.h.b16 %v23
  %v393 = vunpack.c.l.b16 %v24
  %v394 = vunpack.c.h.b16 %v24
  %v395 = vunpack.c.l.b16 %v25
  %v396 = vunpack.c.h.b16 %v25
  %v397 = vunpack.c.l.b16 %v26
  %v398 = vunpack.c.h.b16 %v26
  %v399 = vunpack.c.l.b16 %v27
  %v400 = vunpack.c.h.b16 %v27
  %v401 = vunpack.c.l.b16 %v28
  %v402 = vunpack.c.h.b16 %v28
  %v403 = vunpack.c.l.b16 %v29
  %v404 = vunpack.c.h.b16 %v29
  %v405 = vunpack.c.l.b16 %v30
  %v406 = vunpack.c.h.b16 %v30
  %v407 = vunpack.c.l.b16 %v31
  %v408 = vunpack.c.h.b16 %v31
  %v409 = vunpack.c.l.b16 %v32
  %v410 = vunpack.c.h.b16 %v32
  %v411 = vunpack.c.l.b16 %v33
  %v412 = vunpack.c.h.b16 %v33
  %v413 = vunpack.c.l.b16 %v34
  %v414 = vunpack.c.h.b16 %v34
  %v415 = vunpack.c.l.b16 %v35
  %v416 = vunpack.c.h.b16 %v35
  %v417 = vunpack.c.l.b16 %v36
  %v418 = vunpack.c.h.b16 %v36
  %v419 = vunpack.c.l.b16 %v37
  %v420 = vunpack.c.h.b16 %v37
  %v421 = vunpack.c.l.b16 %v38
  %v422 = vunpack.c.h.b16 %v38
  %v423 = vunpack.c.l.b16 %v39
  %v424 = vunpack.c.h.b16 %v39
  %v425 = vunpack.c.l.b16 %v40
  %v426 = vunpack.c.h.b16 %v40
  %v427 = vunpack.c.l.b16 %v41
  %v428 = vunpack.c.h.b16 %v41
  %v429 = vunpack.c.l.b16 %v42
  %v430 = vunpack.c.h.b16 %v42
  %v431 = vunpack.c.l.b16 %v43
  %v432 = vunpack.c.h.b16 %v43
  %v433 = vunpack.c.l.b16 %v44
  %v434 = vunpack.c.h.b16 %v44
  %v435 = vunpack.c.l.b16 %v45
  %v436 = vunpack.c.h.b16 %v45
  %v437 = vunpack.c.l.b16 %v46
  %v438 = vunpack.c.h.b16 %v46
  %v439 = vunpack.c.l.b16 %v47
  %v440 = vunpack.c.h.b16 %v47
  %v441 = vunpack.c.l.b16 %v48
  %v442 = vunpack.c.h.b16 %v48
  %v443 = vunpack.c.l.b16 %v49
  %v444 = vunpack.c.h.b16 %v49
  %v445 = vunpack.c.l.b16 %v50
  %v446 = vunpack.c.h.b16 %v50
  %v447 = vunpack.c.l.b16 %v51
  %v448 = vunpack.c.h.b16 %v51
  %v449 = vunpack.c.l.b16 %v52
  %v450 = vunpack.c.h.b16 %v52
  %v451 = vunpack.c.l.b16 %v53
  %v452 = vunpack.c.h.b16 %v53
  %v453 = vunpack.c.l.b16 %v54
  %v454 = vunpack.c.h.b16 %v54
  %v455 = vunpack.c.l.b16 %v55
  %v456 = vunpack.c.h.b16 %v55
  %v457 = vunpack.c.l.b16 %v56
  %v458 = vunpack.c.h.b16 %v56
  %v459 = vunpack.c.l.b16 %v57
  %v460 = vunpack.c.h.b16 %v57
  %v461 = vunpack.c.l.b16 %v58
  %v462 = vunpack.c.h.b16 %v58
  %v463 = vunpack.c.l.b16 %v59
  %v464 = vunpack.c.h.b16 %v59
  %v465 = vunpack.c.l.b16 %v60
  %v466 = vunpack.c.h.b16 %v60
  %v467 = vunpack.c.l.b16 %v61
  %v468 = vunpack.c.h.b16 %v61
  %v469 = vunpack.c.l.b16 %v62
  %v470 = vunpack.c.h.b16 %v62
  %v471 = vunpack.c.l.b16 %v63
  %v472 = vunpack.c.h.b16 %v63
  %v473 = vunpack.c.l.b16 %v64
  %v474 = vunpack.c.h.b16 %v64
  %v475 = vunpack.c.l.b16 %v65
  %v476 = vunpack.c.h.b16 %v65
  %v477 = vunpack.c.l.b16 %v66
  %v478 = vunpack.c.h.b16 %v66
  %v479 = vunpack.c.l.b16 %v67
  %v480 = vunpack.c.h.b16 %v67
  %v481 = vunpack.c.l.b16 %v68
  %v482 = vunpack.c.h.b16 %v68
  %v483 = vunpack.c.l.b16 %v69
  %v484 = vunpack.c.h.b16 %v69
  %v485 = vunpack.c.l.b16 %v70
  %v486 = vunpack.c.h.b16 %v70
  %v487 = vunpack.c.l.b16 %v71
  %v488 = vunpack.c.h.b16 %v71
  %v489 = vunpack.c.l.b16 %v72
  %v490 = vunpack.c.h.b16 %v72
  %v491 = vunpack.c.l.b16 %v73
  %v492 = vunpack.c.h.b16 %v73
  %v493 = vunpack.c.l.b16 %v74
  %v494 = vunpack.c.h.b16 %v74
  %v495 = vunpack.c.l.b16 %v75
  %v496 = vunpack.c.h.b16 %v75
  %v497 = vunpack.c.l.b16 %v76
  %v498 = vunpack.c.h.b16 %v76
  %v499 = vunpack.c.l.b16 %v77
  %v500 = vunpack.c.h.b16 %v77
  %v501 = vunpack.c.l.b16 %v78
  %v502 = vunpack.c.h.b16 %v78
  %v503 = vunpack.c.l.b16 %v79
  %v504 = vunpack.c.h.b16 %v79
  %v505 = vunpack.c.l.b16 %v80
  %v506 = vunpack.c.h.b16 %v80
  %v507 = vunpack.c.l.b16 %v81
  %v508 = vunpack.c.h.b16 %v81
  %v509 = vunpack.c.l.b16 %v82
  %v510 = vunpack.c.h.b16 %v82
  %v511 = vunpack.c.l.b16 %v83
  %v512 = vunpack.c.h.b16 %v83
  %v513 = vunpack.c.l.b16 %v84
  %v514 = vunpack.c.h.b16 %v84
  %v515 = vunpack.c.l.b16 %v85
  %v516 = vunpack.c.h.b16 %v85
  %v517 = vunpack.c.l.b16 %v86
  %v518 = vunpack.c.h.b16 %v86
  %v519 = vunpack.c.l.b16 %v87
  %v520 = vunpack.c.h.b16 %v87
  %v521 = vunpack.c.l.b16 %v88
  %v522 = vunpack.c.h.b16 %v88
  %v523 = vunpack.c.l.b16 %v89
  %v524 = vunpack.c.h.b16 %v89
  %v525 = vunpack.c.l.b16 %v90
  %v526 = vunpack.c.h.b16 %v90
  %v527 = vunpack.c.l.b16 %v91
  %v528 = vunpack.c.h.b16 %v91
  %v529 = vunpack.c.l.b16 %v92
  %v530 = vunpack.c.h.b16 %v92
  %v531 = vunpack.c.l.b16 %v93
  %v532 = vunpack.c.h.b16 %v93
  %v533 = vunpack.c.l.b16 %v94
  %v534 = vunpack.c.h.b16 %v94
  %v535 = vunpack.c.l.b16 %v95
  %v536 = vunpack.c.h.b16 %v95
  %v537 = vunpack.c.l.b16 %v96
  %v538 = vunpack.c.h.b16 %v96
  %v539 = vunpack.c.l.b16 %v97
  %v540 = vunpack.c.h.b16 %v97
  %v541 = vunpack.c.l.b16 %v98
  %v542 = vunpack.c.h.b16 %v98
  %v543 = vunpack.c.l.b16 %v99
  %v544 = vunpack.c.h.b16 %v99
  %v545 = vunpack.c.l.b16 %v100
  %v546 = vunpack.c.h.b16 %v100
  %v547 = vunpack.c.l.b16 %v101
  %v548 = vunpack.c.h.b16 %v101
  %v549 = vunpack.c.l.b16 %v102
  %v550 = vunpack.c.h.b16 %v102
  %v551 = vunpack.c.l.b16 %v103
  %v552 = vunpack.c.h.b16 %v103
  %v553 = vunpack.c.l.b16 %v104
  %v554 = vunpack.c.h.b16 %v104
  %v555 = vunpack.c.l.b16 %v105
  %v556 = vunpack.c.h.b16 %v105
  %v557 = vunpack.c.l.b16 %v106
  %v558 = vunpack.c.h.b16 %v106
  %v559 = vunpack.c.l.b16 %v107
  %v560 = vunpack.c.h.b16 %v107
  %v561 = vunpack.c.l.b16 %v108
  %v562 = vunpack.c.h.b16 %v108
  %v563 = vunpack.c.l.b16 %v109
  %v564 = vunpack.c.h.b16 %v109
  %v565 = vunpack.c.l.b16 %v110
  %v566 = vunpack.c.h.b16 %v110
  %v567 = vunpack.c.l.b16 %v111
  %v568 = vunpack.c.h.b16 %v111
  %v569 = vunpack.c.l.b16 %v112
  %v570 = vunpack.c.h.b16 %v112
  %v571 = vunpack.c.l.b16 %v113
  %v572 = vunpack.c.h.b16 %v113
  %v573 = vunpack.c.l.b16 %v114
  %v574 = vunpack.c.h.b16 %v114
  %v575 = vunpack.c.l.b16 %v115
  %v576 = vunpack.c.h.b16 %v115
  %v577 = vunpack.c.l.b16 %v116
  %v578 = vunpack.c.h.b16 %v116
  %v579 = vunpack.c.l.b16 %v117
  %v580 = vunpack.c.h.b16 %v117
  %v581 = vunpack.c.l.b16 %v118
  %v582 = vunpack.c.h.b16 %v118
  %v583 = vunpack.c.l.b16 %v119
  %v584 = vunpack.c.h.b16 %v119
  %v585 = vunpack.c.l.b16 %v120
  %v586 = vunpack.c.h.b16 %v120
  %v587 = vunpack.c.l.b16 %v121
  %v588 = vunpack.c.h.b16 %v121
  %v589 = vunpack.c.l.b16 %v122
  %v590 = vunpack.c.h.b16 %v122
  %v591 = vunpack.c.l.b16 %v123
  %v592 = vunpack.c.h.b16 %v123
  %v593 = vunpack.c.l.b16 %v124
  %v594 = vunpack.c.h.b16 %v124
  %v595 = vunpack.c.l.b16 %v125
  %v596 = vunpack.c.h.b16 %v125
  %v597 = vunpack.c.l.b16 %v126
  %v598 = vunpack.c.h.b16 %v126
  %v599 = vunpack.c.l.b16 %v127
  %v600 = vunpack.c.h.b16 %v127
  %v601 = vunpack.c.l.b16 %v128
  %v602 = vunpack.c.h.b16 %v128
  %v603 = vunpack.c.l.b16 %v129
  %v604 = vunpack.c.h.b16 %v129
  %v605 = vunpack.c.l.b16 %v130
  %v606 = vunpack.c.h.b16 %v130
  %v607 = vunpack.c.l.b16 %v131
  %v608 = vunpack.c.h.b16 %v131
  %v609 = vunpack.c.l.b16 %v132
  %v610 = vunpack.c.h.b16 %v132
  %v611 = vunpack.c.l.b16 %v133
  %v612 = vunpack.c.h.b16 %v133
  %v613 = vunpack.c.l.b16 %v134
  %v614 = vunpack.c.h.b16 %v134
  %v615 = vunpack.c.l.b16 %v135
  %v616 = vunpack.c.h.b16 %v135
  %v617 = vunpack.c.l.b16 %v136
  %v618 = vunpack.c.h.b16 %v136
  %v619 = vunpack.c.l.b16 %v137
  %v620 = vunpack.c.h.b16 %v137
  %v621 = vunpack.c.l.b16 %v138
  %v622 = vunpack.c.h.b16 %v138
  %v623 = vunpack.c.l.b16 %v139
  %v624 = vunpack.c.h.b16 %v139
  %v625 = vunpack.c.l.b16 %v140
  %v626 = vunpack.c.h.b16 %v140
  %v627 = vunpack.c.l.b16 %v141
  %v628 = vunpack.c.h.b16 %v141
  %v629 = vunpack.c.l.b16 %v142
  %v630 = vunpack.c.h.b16 %v142
  %v631 = vunpack.c.l.b16 %v143
  %v632 = vunpack.c.h.b16 %v143
  %v633 = vunpack.c.l.b16 %v144
  %v634 = vunpack.c.h.b16 %v144
  %v635 = vunpack.c.l.b16 %v145
  %v636 = vunpack.c.h.b16 %v145
  %v637 = vunpack.c.l.b16 %v146
  %v638 = vunpack.c.h.b16 %v146
  %v639 = vunpack.c.l.b16 %v147
  %v640 = vunpack.c.h.b16 %v147
  %v641 = vunpack.c.l.b16 %v148
  %v642 = vunpack.c.h.b16 %v148
  %v643 = vunpack.c.l.b16 %v149
  %v644 = vunpack.c.h.b16 %v149
  %v645 = vunpack.c.l.b16 %v150
  %v646 = vunpack.c.h.b16 %v150
  %v647 = vunpack.c.l.b16 %v151
  %v648 = vunpack.c.h.b16 %v151
  %v649 = vunpack.c.l.b16 %v152
  %v650 = vunpack.c.h.b16 %v152
  %v651 = vunpack.c.l.b16 %v153
  %v652 = vunpack.c.h.b16 %v153
  %v653 = vunpack.c.l.b16 %v154
  %v654 = vunpack.c.h.b16 %v154
  %v655 = vunpack.c.l.b16 %v155
  %v656 = vunpack.c.h.b16 %v155
  %v657 = vunpack.c.l.b16 %v156
  %v658 = vunpack.c.h.b16 %v156
  %v659 = vunpack.c.l.b16 %v157
  %v660 = vunpack.c.h.b16 %v157
  %v661 = vunpack.c.l.b16 %v158
  %v662 = vunpack.c.h.b16 %v158
  %v663 = vunpack.c.l.b16 %v159
  %v664 = vunpack.c.h.b16 %v159
  %v665 = vunpack.c.l.b16 %v160
  %v666 = vunpack.c.h.b16 %v160
  %v667 = vunpack.c.l.b16 %v161
  %v668 = vunpack.c.h.b16 %v161
  %v669 = vunpack.c.l.b16 %v162
  %v670 = vunpack.c.h.b16 %v162
  %v671 = vunpack.c.l.b16 %v163
  %v672 = vunpack.c.h.b16 %v163
  %v673 = vunpack.c.l.b16 %v164
  %v674 = vunpack.c.h.b16 %v164
  %v675 = vunpack.c.l.b16 %v165
  %v676 = vunpack.c.h.b16 %v165
  %v677 = vunpack.c.l.b16 %v166
  %v678 = vunpack.c.h.b16 %v166
  %v679 = vunpack.c.l.b16 %v167
  %v680 = vunpack.c.h.b16 %v167
  %v681 = vunpack.c.l.b16 %v168
  %v682 = vunpack.c.h.b16 %v168
  %v683 = vunpack.c.l.b16 %v169
  %v684 = vunpack.c.h.b16 %v169
  %v685 = vunpack.c.l.b16 %v170
  %v686 = vunpack.c.h.b16 %v170
  %v687 = vunpack.c.l.b16 %v171
  %v688 = vunpack.c.h.b16 %v171
  %v689 = vunpack.c.l.b16 %v172
  %v690 = vunpack.c.h.b16 %v172
  %v691 = vunpack.c.l.b16 %v173
  %v692 = vunpack.c.h.b16 %v173
  %v693 = vunpack.c.l.b16 %v174
  %v694 = vunpack.c.h.b16 %v174
  %v695 = vunpack.c.l.b16 %v175
  %v696 = vunpack.c.h.b16 %v175
  %v697 = vunpack.c.l.b16 %v176
  %v698 = vunpack.c.h.b16 %v176
  %v699 = vunpack.c.l.b16 %v177
  %v700 = vunpack.c.h.b16 %v177
  %v701 = vunpack.c.l.b16 %v178
  %v702 = vunpack.c.h.b16 %v178
  %v703 = vunpack.c.l.b16 %v179
  %v704 = vunpack.c.h.b16 %v179
  %v705 = vunpack.c.l.b16 %v180
  %v706 = vunpack.c.h.b16 %v180
  %v707 = vunpack.c.l.b16 %v181
  %v708 = vunpack.c.h.b16 %v181
  %v709 = vunpack.c.l.b16 %v182
  %v710 = vunpack.c.h.b16 %v182
  %v711 = vunpack.c.l.b16 %v183
  %v712 = vunpack.c.h.b16 %v183
  %v713 = vpack.c.b16 %v377, %v375
  %v714 = vpack.c.b16 %v378, %v376
  %v715 = vpack.c.b16 %v381, %v379
  %v716 = vpack.c.b16 %v382, %v380
  %v717 = vpack.c.b16 %v385, %v383
  %v718 = vpack.c.b16 %v386, %v384
  %v719 = vpack.c.b16 %v389, %v387
  %v720 = vpack.c.b16 %v390, %v388
  %v721 = vpack.c.b16 %v393, %v391
  %v722 = vpack.c.b16 %v394, %v392
  %v723 = vpack.c.b16 %v397, %v395
  %v724 = vpack.c.b16 %v398, %v396
  %v725 = vpack.c.b16 %v401, %v399
  %v726 = vpack.c.b16 %v402, %v400
  %v727 = vpack.c.b16 %v405, %v403
  %v728 = vpack.c.b16 %v406, %v404
  %v729 = vpack.c.b16 %v409, %v407
  %v730 = vpack.c.b16 %v410, %v408
  %v731 = vpack.c.b16 %v413, %v411
  %v732 = vpack.c.b16 %v414, %v412
  %v733 = vpack.c.b16 %v417, %v415
  %v734 = vpack.c.b16 %v418, %v416
  %v735 = vpack.c.b16 %v421, %v419
  %v736 = vpack.c.b16 %v422, %v420
  %v737 = vpack.c.b16 %v425, %v423
  %v738 = vpack.c.b16 %v426, %v424
  %v739 = vpack.c.b16 %v429, %v427
  %v740 = vpack.c.b16 %v430, %v428
  %v741 = vpack.c.b16 %v433, %v431
  %v742 = vpack.c.b16 %v434, %v432
  %v743 = vpack.c.b16 %v437, %v435
  %v744 = vpack.c.b16 %v438, %v436
  %v745 = vpack.c.b16 %v441, %v439
  %v746 = vpack.c.b16 %v442, %v440
  %v747 = vpack.c.b16 %v445, %v443
  %v748 = vpack.c.b16 %v446, %v444
  %v749 = vpack.c.b16 %v449, %v447
  %v750 = vpack.c.b16 %v450, %v448
  %v751 = vpack.c.b16 %v453, %v451
  %v752 = vpack.c.b16 %v454, %v452
  %v753 = vpack.c.b16 %v457, %v455
  %v754 = vpack.c.b16 %v458, %v456
  %v755 = vpack.c.b16 %v461, %v459
  %v756 = vpack.c.b16 %v462, %v460
  %v757 = vpack.c.b16 %v465, %v463
  %v758 = vpack.c.b16 %v466, %v464
  %v759 = vpack.c.b16 %v469, %v467
  %v760 = vpack.c.b16 %v470, %v468
  %v761 = vpack.c.b16 %v473, %v471
  %v762 = vpack.c.b16 %v474, %v472
  %v763 = vpack.c.b16 %v477, %v475
  %v764 = vpack.c.b16 %v478, %v476
  %v765 = vpack.c.b16 %v481, %v479
  %v766 = vpack.c.b16 %v482, %v480
  %v767 = vpack.c.b16 %v485, %v483
  %v768 = vpack.c.b16 %v486, %v484
  %v769 = vpack.c.b16 %v489, %v487
  %v770 = vpack.c.b16 %v490, %v488
  %v771 = vpack.c.b16 %v493, %v491
  %v772 = vpack.c.b16 %v494, %v492
  %v773 = vpack.c.b16 %v497, %v495
  %v774 = vpack.c.b16 %v498, %v496
  %v775 = vpack.c.b16 %v501, %v499
  %v776 = vpack.c.b16 %v502, %v500
  %v777 = vpack.c.b16 %v505, %v503
  %v778 = vpack.c.b16 %v506, %v504
  %v779 = vpack.c.b16 %v509, %v507
  %v780 = vpack.c.b16 %v510, %v508
  %v781 = vpack.c.b16 %v513, %v511
  %v782 = vpack.c.b16 %v514, %v512
  %v783 = vpack.c.b16 %v517, %v515
  %v784 = vpack.c.b16 %v518, %v516
  %v785 = vpack.c.b16 %v521, %v519
  %v786 = vpack.c.b16 %v522, %v520
  %v787 = vpack.c.b16 %v525, %v523
  %v788 = vpack.c.b16 %v526, %v524
  %v789 = vpack.c.b16 %v529, %v527
  %v790 = vpack.c.b16 %v530, %v528
  %v791 = vpack.c.b16 %v533, %v531
  %v792 = vpack.c.b16 %v534, %v532
  %v793 = vpack.c.b16 %v537, %v535
  %v794 = vpack.c.b16 %v538, %v536
  %v795 = vpack.c.b16 %v541, %v539
  %v796 = vpack.c.b16 %v542, %v540
  %v797 = vpack.c.b16 %v545, %v543
  %v798 = vpack.c.b16 %v546, %v544
  %v799 = vpack.c.b16 %v549, %v547
  %v800 = vpack.c.b16 %v550, %v548
  %v801 = vpack.c.b16 %v553, %v551
  %v802 = vpack.c.b16 %v554, %v552
  %v803 = vpack.c.b16 %v557, %v555
  %v804 = vpack.c.b16 %v558, %v556
  %v805 = vpack.c.b16 %v561, %v559
  %v806 = vpack.c.b16 %v562, %v560
  %v807 = vpack.c.b16 %v565, %v563
  %v808 = vpack.c.b16 %v566, %v564
  %v809 = vpack.c.b16 %v569, %v567
  %v810 = vpack.c.b16 %v570, %v568
  %v811 = vpack.c.b16 %v573, %v571
  %v812 = vpack.c.b16 %v574, %v572
  %v813 = vpack.c.b16 %v577, %v575
  %v814 = vpack.c.b16 %v578, %v576
  %v815 = vpack.c.b16 %v581, %v579
  %v816 = vpack.c.b16 %v582, %v580
  %v817 = vpack.c.b16 %v585, %v583
  %v818 = vpack.c.b16 %v586, %v584
  %v819 = vpack.c.b16 %v589, %v587
  %v820 = vpack.c.b16 %v590, %v588
  %v821 = vpack.c.b16 %v593, %v591
  %v822 = vpack.c.b16 %v594, %v592
  %v823 = vpack.c.b16 %v597, %v595
  %v824 = vpack.c.b16 %v598, %v596
  %v825 = vpack.c.b16 %v601, %v599
  %v826 = vpack.c.b16 %v602, %v600
  %v827 = vpack.c.b16 %v605, %v603
  %v828 = vpack.c.b16 %v606, %v604
  %v829 = vpack.c.b16 %v609, %v607
  %v830 = vpack.c.b16 %v610, %v608
  %v831 = vpack.c.b16 %v613, %v611
  %v832 = vpack.c.b16 %v614, %v612
  %v833 = vpack.c.b16 %v617, %v615
  %v834 = vpack.c.b16 %v618, %v616
  %v835 = vpack.c.b16 %v621, %v619
  %v836 = vpack.c.b16 %v622, %v620
  %v837 = vpack.c.b16 %v625, %v623
  %v838 = vpack.c.b16 %v626, %v624
  %v839 = vpack.c.b16 %v629, %v627
  %v840 = vpack.c.b16 %v630, %v628
  %v841 = vpack.c.b16 %v633, %v631
  %v842 = vpack.c.b16 %v634, %v632
  %v843 = vpack.c.b16 %v637, %v635
  %v844 = vpack.c.b16 %v638, %v636
  %v845 = vpack.c.b16 %v641, %v639
  %v846 = vpack.c.b16 %v642, %v640
  %v847 = vpack.c.b16 %v645, %v643
  %v848 = vpack.c.b16 %v646, %v644
  %v849 = vpack.c.b16 %v649, %v647
  %v850 = vpack.c.b16 %v650, %v648
  %v851 = vpack.c.b16 %v653, %v651
  %v852 = vpack.c.b16 %v654, %v652
  %v853 = vpack.c.b16 %v657, %v655
  %v854 = vpack.c.b16 %v658, %v656
  %v855 = vpack.c.b16 %v661, %v659
  %v856 = vpack.c.b16 %v662, %v660
  %v857 = vpack.c.b16 %v665, %v663
  %v858 = vpack.c.b16 %v666, %v664
  %v859 = vpack.c.b16 %v669, %v667
  %v860 = vpack.c.b16 %v670, %v668
  %v861 = vpack.c.b16 %v673, %v671
  %v862 = vpack.c.b16 %v674, %v672
  %v863 = vpack.c.b16 %v677, %v675
  %v864 = vpack.c.b16 %v678, %v676
  %v865 = vpack.c.b16 %v681, %v679
  %v866 = vpack.c.b16 %v682, %v680
  %v867 = vpack.c.b16 %v685, %v683
  %v868 = vpack.c.b16 %v686, %v684
  %v869 = vpack.c.b16 %v689, %v687
  %v870 = vpack.c.b16 %v690, %v688
  %v871 = vpack.c.b16 %v693, %v691
  %v872 = vpack.c.b16 %v694, %v692
  %v873 = vpack.c.b16 %v697, %v695
  %v874 = vpack.c.b16 %v698, %v696
  %v875 = vpack.c.b16 %v701, %v699
  %v876 = vpack.c.b16 %v702, %v700
  %v877 = vpack.c.b16 %v705, %v703
  %v878 = vpack.c.b16 %v706, %v704
  %v879 = vpack.c.b16 %v709, %v707
  %v880 = vpack.c.b16 %v710, %v708
  %v881 = vpack.c.b16 %v711, %v711
  %v882 = vpack.c.b16 %v712, %v712
  %v986 = vunpack.c.l.b16 %v184
  %v987 = vunpack.c.l.b16 %v185
  %v988 = vunpack.c.l.b16 %v186
  %v989 = vunpack.c.l.b16 %v187
  %v990 = vunpack.c.l.b16 %v188
  %v991 = vunpack.c.l.b16 %v189
  %v992 = vunpack.c.l.b16 %v190
  %v993 = vunpack.c.l.b16 %v191
  %v994 = vunpack.c.l.b16 %v192
  %v995 = vunpack.c.l.b16 %v193
  %v996 = vunpack.c.l.b16 %v194
  %v997 = vunpack.c.l.b16 %v195
  %v998 = vunpack.c.l.b16 %v196
  %v999 = vunpack.c.l.b16 %v197
  %v1000 = vunpack.c.l.b16 %v198
  %v1001 = vunpack.c.l.b16 %v199
  %v1002 = vunpack.c.l.b16 %v200
  %v1003 = vunpack.c.l.b16 %v201
  %v1004 = vpack.c.b16 %v987, %v986
  %v1005 = vpack.c.b16 %v989, %v988
  %v1006 = vpack.c.b16 %v991, %v990
  %v1007 = vpack.c.b16 %v993, %v992
  %v1008 = vpack.c.b16 %v995, %v994
  %v1009 = vpack.c.b16 %v997, %v996
  %v1010 = vpack.c.b16 %v999, %v998
  %v1011 = vpack.c.b16 %v1001, %v1000
  %v1012 = vpack.c.b16 %v1003, %v1002
  %vm1022 = vcmask 130048
  %v1024 = vsel %vm1022, %v714, 0
  %v1027 = vsel %vm1022, %v716, 0
  %v1030 = vsel %vm1022, %v718, 0
  %v1033 = vsel %vm1022, %v720, 0
  %v1036 = vsel %vm1022, %v722, 0
  %v1039 = vsel %vm1022, %v724, 0
  %v1042 = vsel %vm1022, %v726, 0
  %v1045 = vsel %vm1022, %v728, 0
  %v1048 = vsel %vm1022, %v730, 0
  %v1051 = vsel %vm1022, %v732, 0
  %v1054 = vsel %vm1022, %v734, 0
  %v1057 = vsel %vm1022, %v736, 0
  %v1060 = vsel %vm1022, %v738, 0
  %v1063 = vsel %vm1022, %v740, 0
  %v1066 = vsel %vm1022, %v742, 0
  %v1069 = vsel %vm1022, %v744, 0
  %v1072 = vsel %vm1022, %v746, 0
  %v1075 = vsel %vm1022, %v748, 0
  %v1078 = vsel %vm1022, %v750, 0
  %v1081 = vsel %vm1022, %v752, 0
  %v1084 = vsel %vm1022, %v754, 0
  %v1087 = vsel %vm1022, %v756, 0
  %v1090 = vsel %vm1022, %v758, 0
  %v1093 = vsel %vm1022, %v760, 0
  %v1096 = vsel %vm1022, %v762, 0
  %v1099 = vsel %vm1022, %v764, 0
  %v1102 = vsel %vm1022, %v766, 0
  %v1105 = vsel %vm1022, %v768, 0
  %v1108 = vsel %vm1022, %v770, 0
  %v1111 = vsel %vm1022, %v772, 0
  %v1114 = vsel %vm1022, %v774, 0
  %v1117 = vsel %vm1022, %v776, 0
  %v1120 = vsel %vm1022, %v778, 0
  %v1123 = vsel %vm1022, %v780, 0
  %v1126 = vsel %vm1022, %v782, 0
  %v1129 = vsel %vm1022, %v784, 0
  %v1132 = vsel %vm1022, %v786, 0
  %v1135 = vsel %vm1022, %v788, 0
  %v1138 = vsel %vm1022, %v790, 0
  %v1141 = vsel %vm1022, %v792, 0
  %v1144 = vsel %vm1022, %v794, 0
  %v1147 = vsel %vm1022, %v796, 0
  %v1150 = vsel %vm1022, %v798, 0
  %v1153 = vsel %vm1022, %v800, 0
  %v1156 = vsel %vm1022, %v802, 0
  %v1159 = vsel %vm1022, %v804, 0
  %v1162 = vsel %vm1022, %v806, 0
  %v1165 = vsel %vm1022, %v808, 0
  %v1168 = vsel %vm1022, %v810, 0
  %v1171 = vsel %vm1022, %v812, 0
  %v1174 = vsel %vm1022, %v814, 0
  %v1177 = vsel %vm1022, %v816, 0
  %v1180 = vsel %vm1022, %v818, 0
  %v1183 = vsel %vm1022, %v820, 0
  %v1186 = vsel %vm1022, %v822, 0
  %v1189 = vsel %vm1022, %v824, 0
  %v1192 = vsel %vm1022, %v826, 0
  %v1195 = vsel %vm1022, %v828, 0
  %v1198 = vsel %vm1022, %v830, 0
  %v1201 = vsel %vm1022, %v832, 0
  %v1204 = vsel %vm1022, %v834, 0
  %v1207 = vsel %vm1022, %v836, 0
  %v1210 = vsel %vm1022, %v838, 0
  %v1213 = vsel %vm1022, %v840, 0
  %v1216 = vsel %vm1022, %v842, 0
  %v1219 = vsel %vm1022, %v844, 0
  %v1222 = vsel %vm1022, %v846, 0
  %v1225 = vsel %vm1022, %v848, 0
  %v1228 = vsel %vm1022, %v850, 0
  %v1231 = vsel %vm1022, %v852, 0
  %v1234 = vsel %vm1022, %v854, 0
  %v1237 = vsel %vm1022, %v856, 0
  %v1240 = vsel %vm1022, %v858, 0
  %v1243 = vsel %vm1022, %v860, 0
  %v1246 = vsel %vm1022, %v862, 0
  %v1249 = vsel %vm1022, %v864, 0
  %v1252 = vsel %vm1022, %v866, 0
  %v1255 = vsel %vm1022, %v868, 0
  %v1258 = vsel %vm1022, %v870, 0
  %v1261 = vsel %vm1022, %v872, 0
  %v1264 = vsel %vm1022, %v874, 0
  %v1267 = vsel %vm1022, %v876, 0
  %v1270 = vsel %vm1022, %v878, 0
  %v1273 = vsel %vm1022, %v880, 0
  %v1276 = vsel %vm1022, %v882, 0
  %1278 = vmatpush.bf16.msra.mxu0 %v1011
  %1279 = vmatpush.bf16.msra.mxu0 %v1010
  %1280 = vmatpush.bf16.msra.mxu0 %v1009
  %1281 = vmatpush.bf16.msra.mxu0 %v1008
  %1282 = vmatpush.bf16.msra.mxu0 %v1007
  %1283 = vmatpush.bf16.msra.mxu0 %v1006
  %1284 = vmatpush.bf16.msra.mxu0 %v1005
  %1285 = vmatpush.bf16.msra.mxu0 %v1004
  %1286 = vmatmul.bf16.gmra.mxu0 %v713
  %v1287 = vpop.f32.mrf.mxu0
  %v1288 = vadd.f32 %v204, %v1287
  %v1289 = vpop.f32.mrf.mxu0
  %v1290 = vadd.f32 %v204, %v1289
  %1291 = vmatmul.bf16.gmra.mxu0 %v715
  %v1292 = vpop.f32.mrf.mxu0
  %v1293 = vadd.f32 %v204, %v1292
  %v1294 = vpop.f32.mrf.mxu0
  %v1295 = vadd.f32 %v204, %v1294
  %1296 = vmatmul.bf16.gmra.mxu0 %v717
  %v1297 = vpop.f32.mrf.mxu0
  %v1298 = vadd.f32 %v204, %v1297
  %v1299 = vpop.f32.mrf.mxu0
  %v1300 = vadd.f32 %v204, %v1299
  %1301 = vmatmul.bf16.gmra.mxu0 %v719
  %v1302 = vpop.f32.mrf.mxu0
  %v1303 = vadd.f32 %v204, %v1302
  %v1304 = vpop.f32.mrf.mxu0
  %v1305 = vadd.f32 %v204, %v1304
  %1306 = vmatmul.bf16.gmra.mxu0 %v721
  %v1307 = vpop.f32.mrf.mxu0
  %v1308 = vadd.f32 %v204, %v1307
  %v1309 = vpop.f32.mrf.mxu0
  %v1310 = vadd.f32 %v204, %v1309
  %1311 = vmatmul.bf16.gmra.mxu0 %v723
  %v1312 = vpop.f32.mrf.mxu0
  %v1313 = vadd.f32 %v204, %v1312
  %v1314 = vpop.f32.mrf.mxu0
  %v1315 = vadd.f32 %v204, %v1314
  %1316 = vmatmul.bf16.gmra.mxu0 %v725
  %v1317 = vpop.f32.mrf.mxu0
  %v1318 = vadd.f32 %v204, %v1317
  %v1319 = vpop.f32.mrf.mxu0
  %v1320 = vadd.f32 %v204, %v1319
  %1321 = vmatmul.bf16.gmra.mxu0 %v727
  %v1322 = vpop.f32.mrf.mxu0
  %v1323 = vadd.f32 %v204, %v1322
  %v1324 = vpop.f32.mrf.mxu0
  %v1325 = vadd.f32 %v204, %v1324
  %1326 = vmatmul.bf16.gmra.mxu0 %v729
  %v1327 = vpop.f32.mrf.mxu0
  %v1328 = vadd.f32 %v204, %v1327
  %v1329 = vpop.f32.mrf.mxu0
  %v1330 = vadd.f32 %v204, %v1329
  %1331 = vmatmul.bf16.gmra.mxu0 %v731
  %v1332 = vpop.f32.mrf.mxu0
  %v1333 = vadd.f32 %v204, %v1332
  %v1334 = vpop.f32.mrf.mxu0
  %v1335 = vadd.f32 %v204, %v1334
  %1336 = vmatmul.bf16.gmra.mxu0 %v733
  %v1337 = vpop.f32.mrf.mxu0
  %v1338 = vadd.f32 %v204, %v1337
  %v1339 = vpop.f32.mrf.mxu0
  %v1340 = vadd.f32 %v204, %v1339
  %1341 = vmatmul.bf16.gmra.mxu0 %v735
  %v1342 = vpop.f32.mrf.mxu0
  %v1343 = vadd.f32 %v204, %v1342
  %v1344 = vpop.f32.mrf.mxu0
  %v1345 = vadd.f32 %v204, %v1344
  %1346 = vmatmul.bf16.gmra.mxu0 %v737
  %v1347 = vpop.f32.mrf.mxu0
  %v1348 = vadd.f32 %v204, %v1347
  %v1349 = vpop.f32.mrf.mxu0
  %v1350 = vadd.f32 %v204, %v1349
  %1351 = vmatmul.bf16.gmra.mxu0 %v739
  %v1352 = vpop.f32.mrf.mxu0
  %v1353 = vadd.f32 %v204, %v1352
  %v1354 = vpop.f32.mrf.mxu0
  %v1355 = vadd.f32 %v204, %v1354
  %1356 = vmatmul.bf16.gmra.mxu0 %v741
  %v1357 = vpop.f32.mrf.mxu0
  %v1358 = vadd.f32 %v204, %v1357
  %v1359 = vpop.f32.mrf.mxu0
  %v1360 = vadd.f32 %v204, %v1359
  %1361 = vmatmul.bf16.gmra.mxu0 %v743
  %v1362 = vpop.f32.mrf.mxu0
  %v1363 = vadd.f32 %v204, %v1362
  %v1364 = vpop.f32.mrf.mxu0
  %v1365 = vadd.f32 %v204, %v1364
  %1366 = vmatmul.bf16.gmra.mxu0 %v745
  %v1367 = vpop.f32.mrf.mxu0
  %v1368 = vadd.f32 %v204, %v1367
  %v1369 = vpop.f32.mrf.mxu0
  %v1370 = vadd.f32 %v204, %v1369
  %1371 = vmatmul.bf16.gmra.mxu0 %v747
  %v1372 = vpop.f32.mrf.mxu0
  %v1373 = vadd.f32 %v204, %v1372
  %v1374 = vpop.f32.mrf.mxu0
  %v1375 = vadd.f32 %v204, %v1374
  %1376 = vmatmul.bf16.gmra.mxu0 %v749
  %v1377 = vpop.f32.mrf.mxu0
  %v1378 = vadd.f32 %v204, %v1377
  %v1379 = vpop.f32.mrf.mxu0
  %v1380 = vadd.f32 %v204, %v1379
  %1381 = vmatmul.bf16.gmra.mxu0 %v751
  %v1382 = vpop.f32.mrf.mxu0
  %v1383 = vadd.f32 %v204, %v1382
  %v1384 = vpop.f32.mrf.mxu0
  %v1385 = vadd.f32 %v204, %v1384
  %1386 = vmatmul.bf16.gmra.mxu0 %v753
  %v1387 = vpop.f32.mrf.mxu0
  %v1388 = vadd.f32 %v204, %v1387
  %v1389 = vpop.f32.mrf.mxu0
  %v1390 = vadd.f32 %v204, %v1389
  %1391 = vmatmul.bf16.gmra.mxu0 %v755
  %v1392 = vpop.f32.mrf.mxu0
  %v1393 = vadd.f32 %v204, %v1392
  %v1394 = vpop.f32.mrf.mxu0
  %v1395 = vadd.f32 %v204, %v1394
  %1396 = vmatmul.bf16.gmra.mxu0 %v757
  %v1397 = vpop.f32.mrf.mxu0
  %v1398 = vadd.f32 %v204, %v1397
  %v1399 = vpop.f32.mrf.mxu0
  %v1400 = vadd.f32 %v204, %v1399
  %1401 = vmatmul.bf16.gmra.mxu0 %v759
  %v1402 = vpop.f32.mrf.mxu0
  %v1403 = vadd.f32 %v204, %v1402
  %v1404 = vpop.f32.mrf.mxu0
  %v1405 = vadd.f32 %v204, %v1404
  %1406 = vmatmul.bf16.gmra.mxu0 %v761
  %v1407 = vpop.f32.mrf.mxu0
  %v1408 = vadd.f32 %v204, %v1407
  %v1409 = vpop.f32.mrf.mxu0
  %v1410 = vadd.f32 %v204, %v1409
  %1411 = vmatmul.bf16.gmra.mxu0 %v763
  %v1412 = vpop.f32.mrf.mxu0
  %v1413 = vadd.f32 %v204, %v1412
  %v1414 = vpop.f32.mrf.mxu0
  %v1415 = vadd.f32 %v204, %v1414
  %1416 = vmatmul.bf16.gmra.mxu0 %v765
  %v1417 = vpop.f32.mrf.mxu0
  %v1418 = vadd.f32 %v204, %v1417
  %v1419 = vpop.f32.mrf.mxu0
  %v1420 = vadd.f32 %v204, %v1419
  %1421 = vmatmul.bf16.gmra.mxu0 %v767
  %v1422 = vpop.f32.mrf.mxu0
  %v1423 = vadd.f32 %v204, %v1422
  %v1424 = vpop.f32.mrf.mxu0
  %v1425 = vadd.f32 %v204, %v1424
  %1426 = vmatmul.bf16.gmra.mxu0 %v769
  %v1427 = vpop.f32.mrf.mxu0
  %v1428 = vadd.f32 %v204, %v1427
  %v1429 = vpop.f32.mrf.mxu0
  %v1430 = vadd.f32 %v204, %v1429
  %1431 = vmatmul.bf16.gmra.mxu0 %v771
  %v1432 = vpop.f32.mrf.mxu0
  %v1433 = vadd.f32 %v204, %v1432
  %v1434 = vpop.f32.mrf.mxu0
  %v1435 = vadd.f32 %v204, %v1434
  %1436 = vmatmul.bf16.gmra.mxu0 %v773
  %v1437 = vpop.f32.mrf.mxu0
  %v1438 = vadd.f32 %v204, %v1437
  %v1439 = vpop.f32.mrf.mxu0
  %v1440 = vadd.f32 %v204, %v1439
  %1441 = vmatmul.bf16.gmra.mxu0 %v775
  %v1442 = vpop.f32.mrf.mxu0
  %v1443 = vadd.f32 %v204, %v1442
  %v1444 = vpop.f32.mrf.mxu0
  %v1445 = vadd.f32 %v204, %v1444
  %1446 = vmatmul.bf16.gmra.mxu0 %v777
  %v1447 = vpop.f32.mrf.mxu0
  %v1448 = vadd.f32 %v204, %v1447
  %v1449 = vpop.f32.mrf.mxu0
  %v1450 = vadd.f32 %v204, %v1449
  %1451 = vmatmul.bf16.gmra.mxu0 %v779
  %v1452 = vpop.f32.mrf.mxu0
  %v1453 = vadd.f32 %v204, %v1452
  %v1454 = vpop.f32.mrf.mxu0
  %v1455 = vadd.f32 %v204, %v1454
  %1456 = vmatmul.bf16.gmra.mxu0 %v781
  %v1457 = vpop.f32.mrf.mxu0
  %v1458 = vadd.f32 %v204, %v1457
  %v1459 = vpop.f32.mrf.mxu0
  %v1460 = vadd.f32 %v204, %v1459
  %1461 = vmatmul.bf16.gmra.mxu0 %v783
  %v1462 = vpop.f32.mrf.mxu0
  %v1463 = vadd.f32 %v204, %v1462
  %v1464 = vpop.f32.mrf.mxu0
  %v1465 = vadd.f32 %v204, %v1464
  %1466 = vmatmul.bf16.gmra.mxu0 %v785
  %v1467 = vpop.f32.mrf.mxu0
  %v1468 = vadd.f32 %v204, %v1467
  %v1469 = vpop.f32.mrf.mxu0
  %v1470 = vadd.f32 %v204, %v1469
  %1471 = vmatmul.bf16.gmra.mxu0 %v787
  %v1472 = vpop.f32.mrf.mxu0
  %v1473 = vadd.f32 %v204, %v1472
  %v1474 = vpop.f32.mrf.mxu0
  %v1475 = vadd.f32 %v204, %v1474
  %1476 = vmatmul.bf16.gmra.mxu0 %v789
  %v1477 = vpop.f32.mrf.mxu0
  %v1478 = vadd.f32 %v204, %v1477
  %v1479 = vpop.f32.mrf.mxu0
  %v1480 = vadd.f32 %v204, %v1479
  %1481 = vmatmul.bf16.gmra.mxu0 %v791
  %v1482 = vpop.f32.mrf.mxu0
  %v1483 = vadd.f32 %v204, %v1482
  %v1484 = vpop.f32.mrf.mxu0
  %v1485 = vadd.f32 %v204, %v1484
  %1486 = vmatmul.bf16.gmra.mxu0 %v793
  %v1487 = vpop.f32.mrf.mxu0
  %v1488 = vadd.f32 %v204, %v1487
  %v1489 = vpop.f32.mrf.mxu0
  %v1490 = vadd.f32 %v204, %v1489
  %1491 = vmatmul.bf16.gmra.mxu0 %v795
  %v1492 = vpop.f32.mrf.mxu0
  %v1493 = vadd.f32 %v204, %v1492
  %v1494 = vpop.f32.mrf.mxu0
  %v1495 = vadd.f32 %v204, %v1494
  %1496 = vmatmul.bf16.gmra.mxu0 %v797
  %v1497 = vpop.f32.mrf.mxu0
  %v1498 = vadd.f32 %v204, %v1497
  %v1499 = vpop.f32.mrf.mxu0
  %v1500 = vadd.f32 %v204, %v1499
  %1501 = vmatmul.bf16.gmra.mxu0 %v799
  %v1502 = vpop.f32.mrf.mxu0
  %v1503 = vadd.f32 %v204, %v1502
  %v1504 = vpop.f32.mrf.mxu0
  %v1505 = vadd.f32 %v204, %v1504
  %1506 = vmatmul.bf16.gmra.mxu0 %v801
  %v1507 = vpop.f32.mrf.mxu0
  %v1508 = vadd.f32 %v204, %v1507
  %v1509 = vpop.f32.mrf.mxu0
  %v1510 = vadd.f32 %v204, %v1509
  %1511 = vmatmul.bf16.gmra.mxu0 %v803
  %v1512 = vpop.f32.mrf.mxu0
  %v1513 = vadd.f32 %v204, %v1512
  %v1514 = vpop.f32.mrf.mxu0
  %v1515 = vadd.f32 %v204, %v1514
  %1516 = vmatmul.bf16.gmra.mxu0 %v805
  %v1517 = vpop.f32.mrf.mxu0
  %v1518 = vadd.f32 %v204, %v1517
  %v1519 = vpop.f32.mrf.mxu0
  %v1520 = vadd.f32 %v204, %v1519
  %1521 = vmatmul.bf16.gmra.mxu0 %v807
  %v1522 = vpop.f32.mrf.mxu0
  %v1523 = vadd.f32 %v204, %v1522
  %v1524 = vpop.f32.mrf.mxu0
  %v1525 = vadd.f32 %v204, %v1524
  %1526 = vmatmul.bf16.gmra.mxu0 %v809
  %v1527 = vpop.f32.mrf.mxu0
  %v1528 = vadd.f32 %v204, %v1527
  %v1529 = vpop.f32.mrf.mxu0
  %v1530 = vadd.f32 %v204, %v1529
  %1531 = vmatmul.bf16.gmra.mxu0 %v811
  %v1532 = vpop.f32.mrf.mxu0
  %v1533 = vadd.f32 %v204, %v1532
  %v1534 = vpop.f32.mrf.mxu0
  %v1535 = vadd.f32 %v204, %v1534
  %1536 = vmatmul.bf16.gmra.mxu0 %v813
  %v1537 = vpop.f32.mrf.mxu0
  %v1538 = vadd.f32 %v204, %v1537
  %v1539 = vpop.f32.mrf.mxu0
  %v1540 = vadd.f32 %v204, %v1539
  %1541 = vmatmul.bf16.gmra.mxu0 %v815
  %v1542 = vpop.f32.mrf.mxu0
  %v1543 = vadd.f32 %v204, %v1542
  %v1544 = vpop.f32.mrf.mxu0
  %v1545 = vadd.f32 %v204, %v1544
  %1546 = vmatmul.bf16.gmra.mxu0 %v817
  %v1547 = vpop.f32.mrf.mxu0
  %v1548 = vadd.f32 %v204, %v1547
  %v1549 = vpop.f32.mrf.mxu0
  %v1550 = vadd.f32 %v204, %v1549
  %1551 = vmatmul.bf16.gmra.mxu0 %v819
  %v1552 = vpop.f32.mrf.mxu0
  %v1553 = vadd.f32 %v204, %v1552
  %v1554 = vpop.f32.mrf.mxu0
  %v1555 = vadd.f32 %v204, %v1554
  %1556 = vmatmul.bf16.gmra.mxu0 %v821
  %v1557 = vpop.f32.mrf.mxu0
  %v1558 = vadd.f32 %v204, %v1557
  %v1559 = vpop.f32.mrf.mxu0
  %v1560 = vadd.f32 %v204, %v1559
  %1561 = vmatmul.bf16.gmra.mxu0 %v823
  %v1562 = vpop.f32.mrf.mxu0
  %v1563 = vadd.f32 %v204, %v1562
  %v1564 = vpop.f32.mrf.mxu0
  %v1565 = vadd.f32 %v204, %v1564
  %1566 = vmatmul.bf16.gmra.mxu0 %v825
  %v1567 = vpop.f32.mrf.mxu0
  %v1568 = vadd.f32 %v204, %v1567
  %v1569 = vpop.f32.mrf.mxu0
  %v1570 = vadd.f32 %v204, %v1569
  %1571 = vmatmul.bf16.gmra.mxu0 %v827
  %v1572 = vpop.f32.mrf.mxu0
  %v1573 = vadd.f32 %v204, %v1572
  %v1574 = vpop.f32.mrf.mxu0
  %v1575 = vadd.f32 %v204, %v1574
  %1576 = vmatmul.bf16.gmra.mxu0 %v829
  %v1577 = vpop.f32.mrf.mxu0
  %v1578 = vadd.f32 %v204, %v1577
  %v1579 = vpop.f32.mrf.mxu0
  %v1580 = vadd.f32 %v204, %v1579
  %1581 = vmatmul.bf16.gmra.mxu0 %v831
  %v1582 = vpop.f32.mrf.mxu0
  %v1583 = vadd.f32 %v204, %v1582
  %v1584 = vpop.f32.mrf.mxu0
  %v1585 = vadd.f32 %v204, %v1584
  %1586 = vmatmul.bf16.gmra.mxu0 %v833
  %v1587 = vpop.f32.mrf.mxu0
  %v1588 = vadd.f32 %v204, %v1587
  %v1589 = vpop.f32.mrf.mxu0
  %v1590 = vadd.f32 %v204, %v1589
  %1591 = vmatmul.bf16.gmra.mxu0 %v835
  %v1592 = vpop.f32.mrf.mxu0
  %v1593 = vadd.f32 %v204, %v1592
  %v1594 = vpop.f32.mrf.mxu0
  %v1595 = vadd.f32 %v204, %v1594
  %1596 = vmatmul.bf16.gmra.mxu0 %v837
  %v1597 = vpop.f32.mrf.mxu0
  %v1598 = vadd.f32 %v204, %v1597
  %v1599 = vpop.f32.mrf.mxu0
  %v1600 = vadd.f32 %v204, %v1599
  %1601 = vmatmul.bf16.gmra.mxu0 %v839
  %v1602 = vpop.f32.mrf.mxu0
  %v1603 = vadd.f32 %v204, %v1602
  %v1604 = vpop.f32.mrf.mxu0
  %v1605 = vadd.f32 %v204, %v1604
  %1606 = vmatmul.bf16.gmra.mxu0 %v841
  %v1607 = vpop.f32.mrf.mxu0
  %v1608 = vadd.f32 %v204, %v1607
  %v1609 = vpop.f32.mrf.mxu0
  %v1610 = vadd.f32 %v204, %v1609
  %1611 = vmatmul.bf16.gmra.mxu0 %v843
  %v1612 = vpop.f32.mrf.mxu0
  %v1613 = vadd.f32 %v204, %v1612
  %v1614 = vpop.f32.mrf.mxu0
  %v1615 = vadd.f32 %v204, %v1614
  %1616 = vmatmul.bf16.gmra.mxu0 %v845
  %v1617 = vpop.f32.mrf.mxu0
  %v1618 = vadd.f32 %v204, %v1617
  %v1619 = vpop.f32.mrf.mxu0
  %v1620 = vadd.f32 %v204, %v1619
  %1621 = vmatmul.bf16.gmra.mxu0 %v847
  %v1622 = vpop.f32.mrf.mxu0
  %v1623 = vadd.f32 %v204, %v1622
  %v1624 = vpop.f32.mrf.mxu0
  %v1625 = vadd.f32 %v204, %v1624
  %1626 = vmatmul.bf16.gmra.mxu0 %v849
  %v1627 = vpop.f32.mrf.mxu0
  %v1628 = vadd.f32 %v204, %v1627
  %v1629 = vpop.f32.mrf.mxu0
  %v1630 = vadd.f32 %v204, %v1629
  %1631 = vmatmul.bf16.gmra.mxu0 %v851
  %v1632 = vpop.f32.mrf.mxu0
  %v1633 = vadd.f32 %v204, %v1632
  %v1634 = vpop.f32.mrf.mxu0
  %v1635 = vadd.f32 %v204, %v1634
  %1636 = vmatmul.bf16.gmra.mxu0 %v853
  %v1637 = vpop.f32.mrf.mxu0
  %v1638 = vadd.f32 %v204, %v1637
  %v1639 = vpop.f32.mrf.mxu0
  %v1640 = vadd.f32 %v204, %v1639
  %1641 = vmatmul.bf16.gmra.mxu0 %v855
  %v1642 = vpop.f32.mrf.mxu0
  %v1643 = vadd.f32 %v204, %v1642
  %v1644 = vpop.f32.mrf.mxu0
  %v1645 = vadd.f32 %v204, %v1644
  %1646 = vmatmul.bf16.gmra.mxu0 %v857
  %v1647 = vpop.f32.mrf.mxu0
  %v1648 = vadd.f32 %v204, %v1647
  %v1649 = vpop.f32.mrf.mxu0
  %v1650 = vadd.f32 %v204, %v1649
  %1651 = vmatmul.bf16.gmra.mxu0 %v859
  %v1652 = vpop.f32.mrf.mxu0
  %v1653 = vadd.f32 %v204, %v1652
  %v1654 = vpop.f32.mrf.mxu0
  %v1655 = vadd.f32 %v204, %v1654
  %1656 = vmatmul.bf16.gmra.mxu0 %v861
  %v1657 = vpop.f32.mrf.mxu0
  %v1658 = vadd.f32 %v204, %v1657
  %v1659 = vpop.f32.mrf.mxu0
  %v1660 = vadd.f32 %v204, %v1659
  %1661 = vmatmul.bf16.gmra.mxu0 %v863
  %v1662 = vpop.f32.mrf.mxu0
  %v1663 = vadd.f32 %v204, %v1662
  %v1664 = vpop.f32.mrf.mxu0
  %v1665 = vadd.f32 %v204, %v1664
  %1666 = vmatmul.bf16.gmra.mxu0 %v865
  %v1667 = vpop.f32.mrf.mxu0
  %v1668 = vadd.f32 %v204, %v1667
  %v1669 = vpop.f32.mrf.mxu0
  %v1670 = vadd.f32 %v204, %v1669
  %1671 = vmatmul.bf16.gmra.mxu0 %v867
  %v1672 = vpop.f32.mrf.mxu0
  %v1673 = vadd.f32 %v204, %v1672
  %v1674 = vpop.f32.mrf.mxu0
  %v1675 = vadd.f32 %v204, %v1674
  %1676 = vmatmul.bf16.gmra.mxu0 %v869
  %v1677 = vpop.f32.mrf.mxu0
  %v1678 = vadd.f32 %v204, %v1677
  %v1679 = vpop.f32.mrf.mxu0
  %v1680 = vadd.f32 %v204, %v1679
  %1681 = vmatmul.bf16.gmra.mxu0 %v871
  %v1682 = vpop.f32.mrf.mxu0
  %v1683 = vadd.f32 %v204, %v1682
  %v1684 = vpop.f32.mrf.mxu0
  %v1685 = vadd.f32 %v204, %v1684
  %1686 = vmatmul.bf16.gmra.mxu0 %v873
  %v1687 = vpop.f32.mrf.mxu0
  %v1688 = vadd.f32 %v204, %v1687
  %v1689 = vpop.f32.mrf.mxu0
  %v1690 = vadd.f32 %v204, %v1689
  %1691 = vmatmul.bf16.gmra.mxu0 %v875
  %v1692 = vpop.f32.mrf.mxu0
  %v1693 = vadd.f32 %v204, %v1692
  %v1694 = vpop.f32.mrf.mxu0
  %v1695 = vadd.f32 %v204, %v1694
  %1696 = vmatmul.bf16.gmra.mxu0 %v877
  %v1697 = vpop.f32.mrf.mxu0
  %v1698 = vadd.f32 %v204, %v1697
  %v1699 = vpop.f32.mrf.mxu0
  %v1700 = vadd.f32 %v204, %v1699
  %1701 = vmatmul.bf16.gmra.mxu0 %v879
  %v1702 = vpop.f32.mrf.mxu0
  %v1703 = vadd.f32 %v204, %v1702
  %v1704 = vpop.f32.mrf.mxu0
  %v1705 = vadd.f32 %v204, %v1704
  %1706 = vmatmul.bf16.gmra.mxu0 %v881
  %v1707 = vpop.f32.mrf.mxu0
  %v1708 = vadd.f32 %v204, %v1707
  %v1709 = vpop.f32.mrf.mxu0
  %1710 = vdwg.mxu0
  %1711 = vmatpush.bf16.msra.mxu0 0
  %1712 = vmatpush.bf16.msra.mxu0 0
  %1713 = vmatpush.bf16.msra.mxu0 0
  %1714 = vmatpush.bf16.msra.mxu0 0
  %1715 = vmatpush.bf16.msra.mxu0 0
  %1716 = vmatpush.bf16.msra.mxu0 0
  %1717 = vmatpush.bf16.msra.mxu0 0
  %1718 = vmatpush.bf16.msra.mxu0 %v1012
  %1719 = vmatmul.bf16.gmra.mxu0 %v1024
  %v1720 = vpop.f32.mrf.mxu0
  %v1721 = vadd.f32 %v1288, %v1720
  %v1722 = vpop.f32.mrf.mxu0
  %v1723 = vadd.f32 %v1290, %v1722
  %1724 = vmatmul.bf16.gmra.mxu0 %v1027
  %v1725 = vpop.f32.mrf.mxu0
  %v1726 = vadd.f32 %v1293, %v1725
  %v1727 = vpop.f32.mrf.mxu0
  %v1728 = vadd.f32 %v1295, %v1727
  %1729 = vmatmul.bf16.gmra.mxu0 %v1030
  %v1730 = vpop.f32.mrf.mxu0
  %v1731 = vadd.f32 %v1298, %v1730
  %v1732 = vpop.f32.mrf.mxu0
  %v1733 = vadd.f32 %v1300, %v1732
  %1734 = vmatmul.bf16.gmra.mxu0 %v1033
  %v1735 = vpop.f32.mrf.mxu0
  %v1736 = vadd.f32 %v1303, %v1735
  %v1737 = vpop.f32.mrf.mxu0
  %v1738 = vadd.f32 %v1305, %v1737
  %1739 = vmatmul.bf16.gmra.mxu0 %v1036
  %v1740 = vpop.f32.mrf.mxu0
  %v1741 = vadd.f32 %v1308, %v1740
  %v1742 = vpop.f32.mrf.mxu0
  %v1743 = vadd.f32 %v1310, %v1742
  %1744 = vmatmul.bf16.gmra.mxu0 %v1039
  %v1745 = vpop.f32.mrf.mxu0
  %v1746 = vadd.f32 %v1313, %v1745
  %v1747 = vpop.f32.mrf.mxu0
  %v1748 = vadd.f32 %v1315, %v1747
  %1749 = vmatmul.bf16.gmra.mxu0 %v1042
  %v1750 = vpop.f32.mrf.mxu0
  %v1751 = vadd.f32 %v1318, %v1750
  %v1752 = vpop.f32.mrf.mxu0
  %v1753 = vadd.f32 %v1320, %v1752
  %1754 = vmatmul.bf16.gmra.mxu0 %v1045
  %v1755 = vpop.f32.mrf.mxu0
  %v1756 = vadd.f32 %v1323, %v1755
  %v1757 = vpop.f32.mrf.mxu0
  %v1758 = vadd.f32 %v1325, %v1757
  %1759 = vmatmul.bf16.gmra.mxu0 %v1048
  %v1760 = vpop.f32.mrf.mxu0
  %v1761 = vadd.f32 %v1328, %v1760
  %v1762 = vpop.f32.mrf.mxu0
  %v1763 = vadd.f32 %v1330, %v1762
  %1764 = vmatmul.bf16.gmra.mxu0 %v1051
  %v1765 = vpop.f32.mrf.mxu0
  %v1766 = vadd.f32 %v1333, %v1765
  %v1767 = vpop.f32.mrf.mxu0
  %v1768 = vadd.f32 %v1335, %v1767
  %1769 = vmatmul.bf16.gmra.mxu0 %v1054
  %v1770 = vpop.f32.mrf.mxu0
  %v1771 = vadd.f32 %v1338, %v1770
  %v1772 = vpop.f32.mrf.mxu0
  %v1773 = vadd.f32 %v1340, %v1772
  %1774 = vmatmul.bf16.gmra.mxu0 %v1057
  %v1775 = vpop.f32.mrf.mxu0
  %v1776 = vadd.f32 %v1343, %v1775
  %v1777 = vpop.f32.mrf.mxu0
  %v1778 = vadd.f32 %v1345, %v1777
  %1779 = vmatmul.bf16.gmra.mxu0 %v1060
  %v1780 = vpop.f32.mrf.mxu0
  %v1781 = vadd.f32 %v1348, %v1780
  %v1782 = vpop.f32.mrf.mxu0
  %v1783 = vadd.f32 %v1350, %v1782
  %1784 = vmatmul.bf16.gmra.mxu0 %v1063
  %v1785 = vpop.f32.mrf.mxu0
  %v1786 = vadd.f32 %v1353, %v1785
  %v1787 = vpop.f32.mrf.mxu0
  %v1788 = vadd.f32 %v1355, %v1787
  %1789 = vmatmul.bf16.gmra.mxu0 %v1066
  %v1790 = vpop.f32.mrf.mxu0
  %v1791 = vadd.f32 %v1358, %v1790
  %v1792 = vpop.f32.mrf.mxu0
  %v1793 = vadd.f32 %v1360, %v1792
  %1794 = vmatmul.bf16.gmra.mxu0 %v1069
  %v1795 = vpop.f32.mrf.mxu0
  %v1796 = vadd.f32 %v1363, %v1795
  %v1797 = vpop.f32.mrf.mxu0
  %v1798 = vadd.f32 %v1365, %v1797
  %1799 = vmatmul.bf16.gmra.mxu0 %v1072
  %v1800 = vpop.f32.mrf.mxu0
  %v1801 = vadd.f32 %v1368, %v1800
  %v1802 = vpop.f32.mrf.mxu0
  %v1803 = vadd.f32 %v1370, %v1802
  %1804 = vmatmul.bf16.gmra.mxu0 %v1075
  %v1805 = vpop.f32.mrf.mxu0
  %v1806 = vadd.f32 %v1373, %v1805
  %v1807 = vpop.f32.mrf.mxu0
  %v1808 = vadd.f32 %v1375, %v1807
  %1809 = vmatmul.bf16.gmra.mxu0 %v1078
  %v1810 = vpop.f32.mrf.mxu0
  %v1811 = vadd.f32 %v1378, %v1810
  %v1812 = vpop.f32.mrf.mxu0
  %v1813 = vadd.f32 %v1380, %v1812
  %1814 = vmatmul.bf16.gmra.mxu0 %v1081
  %v1815 = vpop.f32.mrf.mxu0
  %v1816 = vadd.f32 %v1383, %v1815
  %v1817 = vpop.f32.mrf.mxu0
  %v1818 = vadd.f32 %v1385, %v1817
  %1819 = vmatmul.bf16.gmra.mxu0 %v1084
  %v1820 = vpop.f32.mrf.mxu0
  %v1821 = vadd.f32 %v1388, %v1820
  %v1822 = vpop.f32.mrf.mxu0
  %v1823 = vadd.f32 %v1390, %v1822
  %1824 = vmatmul.bf16.gmra.mxu0 %v1087
  %v1825 = vpop.f32.mrf.mxu0
  %v1826 = vadd.f32 %v1393, %v1825
  %v1827 = vpop.f32.mrf.mxu0
  %v1828 = vadd.f32 %v1395, %v1827
  %1829 = vmatmul.bf16.gmra.mxu0 %v1090
  %v1830 = vpop.f32.mrf.mxu0
  %v1831 = vadd.f32 %v1398, %v1830
  %v1832 = vpop.f32.mrf.mxu0
  %v1833 = vadd.f32 %v1400, %v1832
  %1834 = vmatmul.bf16.gmra.mxu0 %v1093
  %v1835 = vpop.f32.mrf.mxu0
  %v1836 = vadd.f32 %v1403, %v1835
  %v1837 = vpop.f32.mrf.mxu0
  %v1838 = vadd.f32 %v1405, %v1837
  %1839 = vmatmul.bf16.gmra.mxu0 %v1096
  %v1840 = vpop.f32.mrf.mxu0
  %v1841 = vadd.f32 %v1408, %v1840
  %v1842 = vpop.f32.mrf.mxu0
  %v1843 = vadd.f32 %v1410, %v1842
  %1844 = vmatmul.bf16.gmra.mxu0 %v1099
  %v1845 = vpop.f32.mrf.mxu0
  %v1846 = vadd.f32 %v1413, %v1845
  %v1847 = vpop.f32.mrf.mxu0
  %v1848 = vadd.f32 %v1415, %v1847
  %1849 = vmatmul.bf16.gmra.mxu0 %v1102
  %v1850 = vpop.f32.mrf.mxu0
  %v1851 = vadd.f32 %v1418, %v1850
  %v1852 = vpop.f32.mrf.mxu0
  %v1853 = vadd.f32 %v1420, %v1852
  %1854 = vmatmul.bf16.gmra.mxu0 %v1105
  %v1855 = vpop.f32.mrf.mxu0
  %v1856 = vadd.f32 %v1423, %v1855
  %v1857 = vpop.f32.mrf.mxu0
  %v1858 = vadd.f32 %v1425, %v1857
  %1859 = vmatmul.bf16.gmra.mxu0 %v1108
  %v1860 = vpop.f32.mrf.mxu0
  %v1861 = vadd.f32 %v1428, %v1860
  %v1862 = vpop.f32.mrf.mxu0
  %v1863 = vadd.f32 %v1430, %v1862
  %1864 = vmatmul.bf16.gmra.mxu0 %v1111
  %v1865 = vpop.f32.mrf.mxu0
  %v1866 = vadd.f32 %v1433, %v1865
  %v1867 = vpop.f32.mrf.mxu0
  %v1868 = vadd.f32 %v1435, %v1867
  %1869 = vmatmul.bf16.gmra.mxu0 %v1114
  %v1870 = vpop.f32.mrf.mxu0
  %v1871 = vadd.f32 %v1438, %v1870
  %v1872 = vpop.f32.mrf.mxu0
  %v1873 = vadd.f32 %v1440, %v1872
  %1874 = vmatmul.bf16.gmra.mxu0 %v1117
  %v1875 = vpop.f32.mrf.mxu0
  %v1876 = vadd.f32 %v1443, %v1875
  %v1877 = vpop.f32.mrf.mxu0
  %v1878 = vadd.f32 %v1445, %v1877
  %1879 = vmatmul.bf16.gmra.mxu0 %v1120
  %v1880 = vpop.f32.mrf.mxu0
  %v1881 = vadd.f32 %v1448, %v1880
  %v1882 = vpop.f32.mrf.mxu0
  %v1883 = vadd.f32 %v1450, %v1882
  %1884 = vmatmul.bf16.gmra.mxu0 %v1123
  %v1885 = vpop.f32.mrf.mxu0
  %v1886 = vadd.f32 %v1453, %v1885
  %v1887 = vpop.f32.mrf.mxu0
  %v1888 = vadd.f32 %v1455, %v1887
  %1889 = vmatmul.bf16.gmra.mxu0 %v1126
  %v1890 = vpop.f32.mrf.mxu0
  %v1891 = vadd.f32 %v1458, %v1890
  %v1892 = vpop.f32.mrf.mxu0
  %v1893 = vadd.f32 %v1460, %v1892
  %1894 = vmatmul.bf16.gmra.mxu0 %v1129
  %v1895 = vpop.f32.mrf.mxu0
  %v1896 = vadd.f32 %v1463, %v1895
  %v1897 = vpop.f32.mrf.mxu0
  %v1898 = vadd.f32 %v1465, %v1897
  %1899 = vmatmul.bf16.gmra.mxu0 %v1132
  %v1900 = vpop.f32.mrf.mxu0
  %v1901 = vadd.f32 %v1468, %v1900
  %v1902 = vpop.f32.mrf.mxu0
  %v1903 = vadd.f32 %v1470, %v1902
  %1904 = vmatmul.bf16.gmra.mxu0 %v1135
  %v1905 = vpop.f32.mrf.mxu0
  %v1906 = vadd.f32 %v1473, %v1905
  %v1907 = vpop.f32.mrf.mxu0
  %v1908 = vadd.f32 %v1475, %v1907
  %1909 = vmatmul.bf16.gmra.mxu0 %v1138
  %v1910 = vpop.f32.mrf.mxu0
  %v1911 = vadd.f32 %v1478, %v1910
  %v1912 = vpop.f32.mrf.mxu0
  %v1913 = vadd.f32 %v1480, %v1912
  %1914 = vmatmul.bf16.gmra.mxu0 %v1141
  %v1915 = vpop.f32.mrf.mxu0
  %v1916 = vadd.f32 %v1483, %v1915
  %v1917 = vpop.f32.mrf.mxu0
  %v1918 = vadd.f32 %v1485, %v1917
  %1919 = vmatmul.bf16.gmra.mxu0 %v1144
  %v1920 = vpop.f32.mrf.mxu0
  %v1921 = vadd.f32 %v1488, %v1920
  %v1922 = vpop.f32.mrf.mxu0
  %v1923 = vadd.f32 %v1490, %v1922
  %1924 = vmatmul.bf16.gmra.mxu0 %v1147
  %v1925 = vpop.f32.mrf.mxu0
  %v1926 = vadd.f32 %v1493, %v1925
  %v1927 = vpop.f32.mrf.mxu0
  %v1928 = vadd.f32 %v1495, %v1927
  %1929 = vmatmul.bf16.gmra.mxu0 %v1150
  %v1930 = vpop.f32.mrf.mxu0
  %v1931 = vadd.f32 %v1498, %v1930
  %v1932 = vpop.f32.mrf.mxu0
  %v1933 = vadd.f32 %v1500, %v1932
  %1934 = vmatmul.bf16.gmra.mxu0 %v1153
  %v1935 = vpop.f32.mrf.mxu0
  %v1936 = vadd.f32 %v1503, %v1935
  %v1937 = vpop.f32.mrf.mxu0
  %v1938 = vadd.f32 %v1505, %v1937
  %1939 = vmatmul.bf16.gmra.mxu0 %v1156
  %v1940 = vpop.f32.mrf.mxu0
  %v1941 = vadd.f32 %v1508, %v1940
  %v1942 = vpop.f32.mrf.mxu0
  %v1943 = vadd.f32 %v1510, %v1942
  %1944 = vmatmul.bf16.gmra.mxu0 %v1159
  %v1945 = vpop.f32.mrf.mxu0
  %v1946 = vadd.f32 %v1513, %v1945
  %v1947 = vpop.f32.mrf.mxu0
  %v1948 = vadd.f32 %v1515, %v1947
  %1949 = vmatmul.bf16.gmra.mxu0 %v1162
  %v1950 = vpop.f32.mrf.mxu0
  %v1951 = vadd.f32 %v1518, %v1950
  %v1952 = vpop.f32.mrf.mxu0
  %v1953 = vadd.f32 %v1520, %v1952
  %1954 = vmatmul.bf16.gmra.mxu0 %v1165
  %v1955 = vpop.f32.mrf.mxu0
  %v1956 = vadd.f32 %v1523, %v1955
  %v1957 = vpop.f32.mrf.mxu0
  %v1958 = vadd.f32 %v1525, %v1957
  %1959 = vmatmul.bf16.gmra.mxu0 %v1168
  %v1960 = vpop.f32.mrf.mxu0
  %v1961 = vadd.f32 %v1528, %v1960
  %v1962 = vpop.f32.mrf.mxu0
  %v1963 = vadd.f32 %v1530, %v1962
  %1964 = vmatmul.bf16.gmra.mxu0 %v1171
  %v1965 = vpop.f32.mrf.mxu0
  %v1966 = vadd.f32 %v1533, %v1965
  %v1967 = vpop.f32.mrf.mxu0
  %v1968 = vadd.f32 %v1535, %v1967
  %1969 = vmatmul.bf16.gmra.mxu0 %v1174
  %v1970 = vpop.f32.mrf.mxu0
  %v1971 = vadd.f32 %v1538, %v1970
  %v1972 = vpop.f32.mrf.mxu0
  %v1973 = vadd.f32 %v1540, %v1972
  %1974 = vmatmul.bf16.gmra.mxu0 %v1177
  %v1975 = vpop.f32.mrf.mxu0
  %v1976 = vadd.f32 %v1543, %v1975
  %v1977 = vpop.f32.mrf.mxu0
  %v1978 = vadd.f32 %v1545, %v1977
  %1979 = vmatmul.bf16.gmra.mxu0 %v1180
  %v1980 = vpop.f32.mrf.mxu0
  %v1981 = vadd.f32 %v1548, %v1980
  %v1982 = vpop.f32.mrf.mxu0
  %v1983 = vadd.f32 %v1550, %v1982
  %1984 = vmatmul.bf16.gmra.mxu0 %v1183
  %v1985 = vpop.f32.mrf.mxu0
  %v1986 = vadd.f32 %v1553, %v1985
  %v1987 = vpop.f32.mrf.mxu0
  %v1988 = vadd.f32 %v1555, %v1987
  %1989 = vmatmul.bf16.gmra.mxu0 %v1186
  %v1990 = vpop.f32.mrf.mxu0
  %v1991 = vadd.f32 %v1558, %v1990
  %v1992 = vpop.f32.mrf.mxu0
  %v1993 = vadd.f32 %v1560, %v1992
  %1994 = vmatmul.bf16.gmra.mxu0 %v1189
  %v1995 = vpop.f32.mrf.mxu0
  %v1996 = vadd.f32 %v1563, %v1995
  %v1997 = vpop.f32.mrf.mxu0
  %v1998 = vadd.f32 %v1565, %v1997
  %1999 = vmatmul.bf16.gmra.mxu0 %v1192
  %v2000 = vpop.f32.mrf.mxu0
  %v2001 = vadd.f32 %v1568, %v2000
  %v2002 = vpop.f32.mrf.mxu0
  %v2003 = vadd.f32 %v1570, %v2002
  %2004 = vmatmul.bf16.gmra.mxu0 %v1195
  %v2005 = vpop.f32.mrf.mxu0
  %v2006 = vadd.f32 %v1573, %v2005
  %v2007 = vpop.f32.mrf.mxu0
  %v2008 = vadd.f32 %v1575, %v2007
  %2009 = vmatmul.bf16.gmra.mxu0 %v1198
  %v2010 = vpop.f32.mrf.mxu0
  %v2011 = vadd.f32 %v1578, %v2010
  %v2012 = vpop.f32.mrf.mxu0
  %v2013 = vadd.f32 %v1580, %v2012
  %2014 = vmatmul.bf16.gmra.mxu0 %v1201
  %v2015 = vpop.f32.mrf.mxu0
  %v2016 = vadd.f32 %v1583, %v2015
  %v2017 = vpop.f32.mrf.mxu0
  %v2018 = vadd.f32 %v1585, %v2017
  %2019 = vmatmul.bf16.gmra.mxu0 %v1204
  %v2020 = vpop.f32.mrf.mxu0
  %v2021 = vadd.f32 %v1588, %v2020
  %v2022 = vpop.f32.mrf.mxu0
  %v2023 = vadd.f32 %v1590, %v2022
  %2024 = vmatmul.bf16.gmra.mxu0 %v1207
  %v2025 = vpop.f32.mrf.mxu0
  %v2026 = vadd.f32 %v1593, %v2025
  %v2027 = vpop.f32.mrf.mxu0
  %v2028 = vadd.f32 %v1595, %v2027
  %2029 = vmatmul.bf16.gmra.mxu0 %v1210
  %v2030 = vpop.f32.mrf.mxu0
  %v2031 = vadd.f32 %v1598, %v2030
  %v2032 = vpop.f32.mrf.mxu0
  %v2033 = vadd.f32 %v1600, %v2032
  %2034 = vmatmul.bf16.gmra.mxu0 %v1213
  %v2035 = vpop.f32.mrf.mxu0
  %v2036 = vadd.f32 %v1603, %v2035
  %v2037 = vpop.f32.mrf.mxu0
  %v2038 = vadd.f32 %v1605, %v2037
  %2039 = vmatmul.bf16.gmra.mxu0 %v1216
  %v2040 = vpop.f32.mrf.mxu0
  %v2041 = vadd.f32 %v1608, %v2040
  %v2042 = vpop.f32.mrf.mxu0
  %v2043 = vadd.f32 %v1610, %v2042
  %2044 = vmatmul.bf16.gmra.mxu0 %v1219
  %v2045 = vpop.f32.mrf.mxu0
  %v2046 = vadd.f32 %v1613, %v2045
  %v2047 = vpop.f32.mrf.mxu0
  %v2048 = vadd.f32 %v1615, %v2047
  %2049 = vmatmul.bf16.gmra.mxu0 %v1222
  %v2050 = vpop.f32.mrf.mxu0
  %v2051 = vadd.f32 %v1618, %v2050
  %v2052 = vpop.f32.mrf.mxu0
  %v2053 = vadd.f32 %v1620, %v2052
  %2054 = vmatmul.bf16.gmra.mxu0 %v1225
  %v2055 = vpop.f32.mrf.mxu0
  %v2056 = vadd.f32 %v1623, %v2055
  %v2057 = vpop.f32.mrf.mxu0
  %v2058 = vadd.f32 %v1625, %v2057
  %2059 = vmatmul.bf16.gmra.mxu0 %v1228
  %v2060 = vpop.f32.mrf.mxu0
  %v2061 = vadd.f32 %v1628, %v2060
  %v2062 = vpop.f32.mrf.mxu0
  %v2063 = vadd.f32 %v1630, %v2062
  %2064 = vmatmul.bf16.gmra.mxu0 %v1231
  %v2065 = vpop.f32.mrf.mxu0
  %v2066 = vadd.f32 %v1633, %v2065
  %v2067 = vpop.f32.mrf.mxu0
  %v2068 = vadd.f32 %v1635, %v2067
  %2069 = vmatmul.bf16.gmra.mxu0 %v1234
  %v2070 = vpop.f32.mrf.mxu0
  %v2071 = vadd.f32 %v1638, %v2070
  %v2072 = vpop.f32.mrf.mxu0
  %v2073 = vadd.f32 %v1640, %v2072
  %2074 = vmatmul.bf16.gmra.mxu0 %v1237
  %v2075 = vpop.f32.mrf.mxu0
  %v2076 = vadd.f32 %v1643, %v2075
  %v2077 = vpop.f32.mrf.mxu0
  %v2078 = vadd.f32 %v1645, %v2077
  %2079 = vmatmul.bf16.gmra.mxu0 %v1240
  %v2080 = vpop.f32.mrf.mxu0
  %v2081 = vadd.f32 %v1648, %v2080
  %v2082 = vpop.f32.mrf.mxu0
  %v2083 = vadd.f32 %v1650, %v2082
  %2084 = vmatmul.bf16.gmra.mxu0 %v1243
  %v2085 = vpop.f32.mrf.mxu0
  %v2086 = vadd.f32 %v1653, %v2085
  %v2087 = vpop.f32.mrf.mxu0
  %v2088 = vadd.f32 %v1655, %v2087
  %2089 = vmatmul.bf16.gmra.mxu0 %v1246
  %v2090 = vpop.f32.mrf.mxu0
  %v2091 = vadd.f32 %v1658, %v2090
  %v2092 = vpop.f32.mrf.mxu0
  %v2093 = vadd.f32 %v1660, %v2092
  %2094 = vmatmul.bf16.gmra.mxu0 %v1249
  %v2095 = vpop.f32.mrf.mxu0
  %v2096 = vadd.f32 %v1663, %v2095
  %v2097 = vpop.f32.mrf.mxu0
  %v2098 = vadd.f32 %v1665, %v2097
  %2099 = vmatmul.bf16.gmra.mxu0 %v1252
  %v2100 = vpop.f32.mrf.mxu0
  %v2101 = vadd.f32 %v1668, %v2100
  %v2102 = vpop.f32.mrf.mxu0
  %v2103 = vadd.f32 %v1670, %v2102
  %2104 = vmatmul.bf16.gmra.mxu0 %v1255
  %v2105 = vpop.f32.mrf.mxu0
  %v2106 = vadd.f32 %v1673, %v2105
  %v2107 = vpop.f32.mrf.mxu0
  %v2108 = vadd.f32 %v1675, %v2107
  %2109 = vmatmul.bf16.gmra.mxu0 %v1258
  %v2110 = vpop.f32.mrf.mxu0
  %v2111 = vadd.f32 %v1678, %v2110
  %v2112 = vpop.f32.mrf.mxu0
  %v2113 = vadd.f32 %v1680, %v2112
  %2114 = vmatmul.bf16.gmra.mxu0 %v1261
  %v2115 = vpop.f32.mrf.mxu0
  %v2116 = vadd.f32 %v1683, %v2115
  %v2117 = vpop.f32.mrf.mxu0
  %v2118 = vadd.f32 %v1685, %v2117
  %2119 = vmatmul.bf16.gmra.mxu0 %v1264
  %v2120 = vpop.f32.mrf.mxu0
  %v2121 = vadd.f32 %v1688, %v2120
  %v2122 = vpop.f32.mrf.mxu0
  %v2123 = vadd.f32 %v1690, %v2122
  %2124 = vmatmul.bf16.gmra.mxu0 %v1267
  %v2125 = vpop.f32.mrf.mxu0
  %v2126 = vadd.f32 %v1693, %v2125
  %v2127 = vpop.f32.mrf.mxu0
  %v2128 = vadd.f32 %v1695, %v2127
  %2129 = vmatmul.bf16.gmra.mxu0 %v1270
  %v2130 = vpop.f32.mrf.mxu0
  %v2131 = vadd.f32 %v1698, %v2130
  %v2132 = vpop.f32.mrf.mxu0
  %v2133 = vadd.f32 %v1700, %v2132
  %2134 = vmatmul.bf16.gmra.mxu0 %v1273
  %v2135 = vpop.f32.mrf.mxu0
  %v2136 = vadd.f32 %v1703, %v2135
  %v2137 = vpop.f32.mrf.mxu0
  %v2138 = vadd.f32 %v1705, %v2137
  %2139 = vmatmul.bf16.gmra.mxu0 %v1276
  %v2140 = vpop.f32.mrf.mxu0
  %v2141 = vadd.f32 %v1708, %v2140
  %v2142 = vpop.f32.mrf.mxu0
  %2143 = vdwg.mxu0
  %v2144 = vmax.f32 %v1721, 0.0
  %v2145 = vmax.f32 %v1723, 0.0
  %v2146 = vmax.f32 %v1726, 0.0
  %v2147 = vmax.f32 %v1728, 0.0
  %v2148 = vmax.f32 %v1731, 0.0
  %v2149 = vmax.f32 %v1733, 0.0
  %v2150 = vmax.f32 %v1736, 0.0
  %v2151 = vmax.f32 %v1738, 0.0
  %v2152 = vmax.f32 %v1741, 0.0
  %v2153 = vmax.f32 %v1743, 0.0
  %v2154 = vmax.f32 %v1746, 0.0
  %v2155 = vmax.f32 %v1748, 0.0
  %v2156 = vmax.f32 %v1751, 0.0
  %v2157 = vmax.f32 %v1753, 0.0
  %v2158 = vmax.f32 %v1756, 0.0
  %v2159 = vmax.f32 %v1758, 0.0
  %v2160 = vmax.f32 %v1761, 0.0
  %v2161 = vmax.f32 %v1763, 0.0
  %v2162 = vmax.f32 %v1766, 0.0
  %v2163 = vmax.f32 %v1768, 0.0
  %v2164 = vmax.f32 %v1771, 0.0
  %v2165 = vmax.f32 %v1773, 0.0
  %v2166 = vmax.f32 %v1776, 0.0
  %v2167 = vmax.f32 %v1778, 0.0
  %v2168 = vmax.f32 %v1781, 0.0
  %v2169 = vmax.f32 %v1783, 0.0
  %v2170 = vmax.f32 %v1786, 0.0
  %v2171 = vmax.f32 %v1788, 0.0
  %v2172 = vmax.f32 %v1791, 0.0
  %v2173 = vmax.f32 %v1793, 0.0
  %v2174 = vmax.f32 %v1796, 0.0
  %v2175 = vmax.f32 %v1798, 0.0
  %v2176 = vmax.f32 %v1801, 0.0
  %v2177 = vmax.f32 %v1803, 0.0
  %v2178 = vmax.f32 %v1806, 0.0
  %v2179 = vmax.f32 %v1808, 0.0
  %v2180 = vmax.f32 %v1811, 0.0
  %v2181 = vmax.f32 %v1813, 0.0
  %v2182 = vmax.f32 %v1816, 0.0
  %v2183 = vmax.f32 %v1818, 0.0
  %v2184 = vmax.f32 %v1821, 0.0
  %v2185 = vmax.f32 %v1823, 0.0
  %v2186 = vmax.f32 %v1826, 0.0
  %v2187 = vmax.f32 %v1828, 0.0
  %v2188 = vmax.f32 %v1831, 0.0
  %v2189 = vmax.f32 %v1833, 0.0
  %v2190 = vmax.f32 %v1836, 0.0
  %v2191 = vmax.f32 %v1838, 0.0
  %v2192 = vmax.f32 %v1841, 0.0
  %v2193 = vmax.f32 %v1843, 0.0
  %v2194 = vmax.f32 %v1846, 0.0
  %v2195 = vmax.f32 %v1848, 0.0
  %v2196 = vmax.f32 %v1851, 0.0
  %v2197 = vmax.f32 %v1853, 0.0
  %v2198 = vmax.f32 %v1856, 0.0
  %v2199 = vmax.f32 %v1858, 0.0
  %v2200 = vmax.f32 %v1861, 0.0
  %v2201 = vmax.f32 %v1863, 0.0
  %v2202 = vmax.f32 %v1866, 0.0
  %v2203 = vmax.f32 %v1868, 0.0
  %v2204 = vmax.f32 %v1871, 0.0
  %v2205 = vmax.f32 %v1873, 0.0
  %v2206 = vmax.f32 %v1876, 0.0
  %v2207 = vmax.f32 %v1878, 0.0
  %v2208 = vmax.f32 %v1881, 0.0
  %v2209 = vmax.f32 %v1883, 0.0
  %v2210 = vmax.f32 %v1886, 0.0
  %v2211 = vmax.f32 %v1888, 0.0
  %v2212 = vmax.f32 %v1891, 0.0
  %v2213 = vmax.f32 %v1893, 0.0
  %v2214 = vmax.f32 %v1896, 0.0
  %v2215 = vmax.f32 %v1898, 0.0
  %v2216 = vmax.f32 %v1901, 0.0
  %v2217 = vmax.f32 %v1903, 0.0
  %v2218 = vmax.f32 %v1906, 0.0
  %v2219 = vmax.f32 %v1908, 0.0
  %v2220 = vmax.f32 %v1911, 0.0
  %v2221 = vmax.f32 %v1913, 0.0
  %v2222 = vmax.f32 %v1916, 0.0
  %v2223 = vmax.f32 %v1918, 0.0
  %v2224 = vmax.f32 %v1921, 0.0
  %v2225 = vmax.f32 %v1923, 0.0
  %v2226 = vmax.f32 %v1926, 0.0
  %v2227 = vmax.f32 %v1928, 0.0
  %v2228 = vmax.f32 %v1931, 0.0
  %v2229 = vmax.f32 %v1933, 0.0
  %v2230 = vmax.f32 %v1936, 0.0
  %v2231 = vmax.f32 %v1938, 0.0
  %v2232 = vmax.f32 %v1941, 0.0
  %v2233 = vmax.f32 %v1943, 0.0
  %v2234 = vmax.f32 %v1946, 0.0
  %v2235 = vmax.f32 %v1948, 0.0
  %v2236 = vmax.f32 %v1951, 0.0
  %v2237 = vmax.f32 %v1953, 0.0
  %v2238 = vmax.f32 %v1956, 0.0
  %v2239 = vmax.f32 %v1958, 0.0
  %v2240 = vmax.f32 %v1961, 0.0
  %v2241 = vmax.f32 %v1963, 0.0
  %v2242 = vmax.f32 %v1966, 0.0
  %v2243 = vmax.f32 %v1968, 0.0
  %v2244 = vmax.f32 %v1971, 0.0
  %v2245 = vmax.f32 %v1973, 0.0
  %v2246 = vmax.f32 %v1976, 0.0
  %v2247 = vmax.f32 %v1978, 0.0
  %v2248 = vmax.f32 %v1981, 0.0
  %v2249 = vmax.f32 %v1983, 0.0
  %v2250 = vmax.f32 %v1986, 0.0
  %v2251 = vmax.f32 %v1988, 0.0
  %v2252 = vmax.f32 %v1991, 0.0
  %v2253 = vmax.f32 %v1993, 0.0
  %v2254 = vmax.f32 %v1996, 0.0
  %v2255 = vmax.f32 %v1998, 0.0
  %v2256 = vmax.f32 %v2001, 0.0
  %v2257 = vmax.f32 %v2003, 0.0
  %v2258 = vmax.f32 %v2006, 0.0
  %v2259 = vmax.f32 %v2008, 0.0
  %v2260 = vmax.f32 %v2011, 0.0
  %v2261 = vmax.f32 %v2013, 0.0
  %v2262 = vmax.f32 %v2016, 0.0
  %v2263 = vmax.f32 %v2018, 0.0
  %v2264 = vmax.f32 %v2021, 0.0
  %v2265 = vmax.f32 %v2023, 0.0
  %v2266 = vmax.f32 %v2026, 0.0
  %v2267 = vmax.f32 %v2028, 0.0
  %v2268 = vmax.f32 %v2031, 0.0
  %v2269 = vmax.f32 %v2033, 0.0
  %v2270 = vmax.f32 %v2036, 0.0
  %v2271 = vmax.f32 %v2038, 0.0
  %v2272 = vmax.f32 %v2041, 0.0
  %v2273 = vmax.f32 %v2043, 0.0
  %v2274 = vmax.f32 %v2046, 0.0
  %v2275 = vmax.f32 %v2048, 0.0
  %v2276 = vmax.f32 %v2051, 0.0
  %v2277 = vmax.f32 %v2053, 0.0
  %v2278 = vmax.f32 %v2056, 0.0
  %v2279 = vmax.f32 %v2058, 0.0
  %v2280 = vmax.f32 %v2061, 0.0
  %v2281 = vmax.f32 %v2063, 0.0
  %v2282 = vmax.f32 %v2066, 0.0
  %v2283 = vmax.f32 %v2068, 0.0
  %v2284 = vmax.f32 %v2071, 0.0
  %v2285 = vmax.f32 %v2073, 0.0
  %v2286 = vmax.f32 %v2076, 0.0
  %v2287 = vmax.f32 %v2078, 0.0
  %v2288 = vmax.f32 %v2081, 0.0
  %v2289 = vmax.f32 %v2083, 0.0
  %v2290 = vmax.f32 %v2086, 0.0
  %v2291 = vmax.f32 %v2088, 0.0
  %v2292 = vmax.f32 %v2091, 0.0
  %v2293 = vmax.f32 %v2093, 0.0
  %v2294 = vmax.f32 %v2096, 0.0
  %v2295 = vmax.f32 %v2098, 0.0
  %v2296 = vmax.f32 %v2101, 0.0
  %v2297 = vmax.f32 %v2103, 0.0
  %v2298 = vmax.f32 %v2106, 0.0
  %v2299 = vmax.f32 %v2108, 0.0
  %v2300 = vmax.f32 %v2111, 0.0
  %v2301 = vmax.f32 %v2113, 0.0
  %v2302 = vmax.f32 %v2116, 0.0
  %v2303 = vmax.f32 %v2118, 0.0
  %v2304 = vmax.f32 %v2121, 0.0
  %v2305 = vmax.f32 %v2123, 0.0
  %v2306 = vmax.f32 %v2126, 0.0
  %v2307 = vmax.f32 %v2128, 0.0
  %v2308 = vmax.f32 %v2131, 0.0
  %v2309 = vmax.f32 %v2133, 0.0
  %v2310 = vmax.f32 %v2136, 0.0
  %v2311 = vmax.f32 %v2138, 0.0
  %v2312 = vmax.f32 %v2141, 0.0
  %v2313 = vpack.c.bf16 %v2144, %v2144
  %v2314 = vpack.c.bf16 %v2145, %v2145
  %v2315 = vpack.c.bf16 %v2146, %v2146
  %v2316 = vpack.c.bf16 %v2147, %v2147
  %v2317 = vpack.c.bf16 %v2148, %v2148
  %v2318 = vpack.c.bf16 %v2149, %v2149
  %v2319 = vpack.c.bf16 %v2150, %v2150
  %v2320 = vpack.c.bf16 %v2151, %v2151
  %v2321 = vpack.c.bf16 %v2152, %v2152
  %v2322 = vpack.c.bf16 %v2153, %v2153
  %v2323 = vpack.c.bf16 %v2154, %v2154
  %v2324 = vpack.c.bf16 %v2155, %v2155
  %v2325 = vpack.c.bf16 %v2156, %v2156
  %v2326 = vpack.c.bf16 %v2157, %v2157
  %v2327 = vpack.c.bf16 %v2158, %v2158
  %v2328 = vpack.c.bf16 %v2159, %v2159
  %v2329 = vpack.c.bf16 %v2160, %v2160
  %v2330 = vpack.c.bf16 %v2161, %v2161
  %v2331 = vpack.c.bf16 %v2162, %v2162
  %v2332 = vpack.c.bf16 %v2163, %v2163
  %v2333 = vpack.c.bf16 %v2164, %v2164
  %v2334 = vpack.c.bf16 %v2165, %v2165
  %v2335 = vpack.c.bf16 %v2166, %v2166
  %v2336 = vpack.c.bf16 %v2167, %v2167
  %v2337 = vpack.c.bf16 %v2168, %v2168
  %v2338 = vpack.c.bf16 %v2169, %v2169
  %v2339 = vpack.c.bf16 %v2170, %v2170
  %v2340 = vpack.c.bf16 %v2171, %v2171
  %v2341 = vpack.c.bf16 %v2172, %v2172
  %v2342 = vpack.c.bf16 %v2173, %v2173
  %v2343 = vpack.c.bf16 %v2174, %v2174
  %v2344 = vpack.c.bf16 %v2175, %v2175
  %v2345 = vpack.c.bf16 %v2176, %v2176
  %v2346 = vpack.c.bf16 %v2177, %v2177
  %v2347 = vpack.c.bf16 %v2178, %v2178
  %v2348 = vpack.c.bf16 %v2179, %v2179
  %v2349 = vpack.c.bf16 %v2180, %v2180
  %v2350 = vpack.c.bf16 %v2181, %v2181
  %v2351 = vpack.c.bf16 %v2182, %v2182
  %v2352 = vpack.c.bf16 %v2183, %v2183
  %v2353 = vpack.c.bf16 %v2184, %v2184
  %v2354 = vpack.c.bf16 %v2185, %v2185
  %v2355 = vpack.c.bf16 %v2186, %v2186
  %v2356 = vpack.c.bf16 %v2187, %v2187
  %v2357 = vpack.c.bf16 %v2188, %v2188
  %v2358 = vpack.c.bf16 %v2189, %v2189
  %v2359 = vpack.c.bf16 %v2190, %v2190
  %v2360 = vpack.c.bf16 %v2191, %v2191
  %v2361 = vpack.c.bf16 %v2192, %v2192
  %v2362 = vpack.c.bf16 %v2193, %v2193
  %v2363 = vpack.c.bf16 %v2194, %v2194
  %v2364 = vpack.c.bf16 %v2195, %v2195
  %v2365 = vpack.c.bf16 %v2196, %v2196
  %v2366 = vpack.c.bf16 %v2197, %v2197
  %v2367 = vpack.c.bf16 %v2198, %v2198
  %v2368 = vpack.c.bf16 %v2199, %v2199
  %v2369 = vpack.c.bf16 %v2200, %v2200
  %v2370 = vpack.c.bf16 %v2201, %v2201
  %v2371 = vpack.c.bf16 %v2202, %v2202
  %v2372 = vpack.c.bf16 %v2203, %v2203
  %v2373 = vpack.c.bf16 %v2204, %v2204
  %v2374 = vpack.c.bf16 %v2205, %v2205
  %v2375 = vpack.c.bf16 %v2206, %v2206
  %v2376 = vpack.c.bf16 %v2207, %v2207
  %v2377 = vpack.c.bf16 %v2208, %v2208
  %v2378 = vpack.c.bf16 %v2209, %v2209
  %v2379 = vpack.c.bf16 %v2210, %v2210
  %v2380 = vpack.c.bf16 %v2211, %v2211
  %v2381 = vpack.c.bf16 %v2212, %v2212
  %v2382 = vpack.c.bf16 %v2213, %v2213
  %v2383 = vpack.c.bf16 %v2214, %v2214
  %v2384 = vpack.c.bf16 %v2215, %v2215
  %v2385 = vpack.c.bf16 %v2216, %v2216
  %v2386 = vpack.c.bf16 %v2217, %v2217
  %v2387 = vpack.c.bf16 %v2218, %v2218
  %v2388 = vpack.c.bf16 %v2219, %v2219
  %v2389 = vpack.c.bf16 %v2220, %v2220
  %v2390 = vpack.c.bf16 %v2221, %v2221
  %v2391 = vpack.c.bf16 %v2222, %v2222
  %v2392 = vpack.c.bf16 %v2223, %v2223
  %v2393 = vpack.c.bf16 %v2224, %v2224
  %v2394 = vpack.c.bf16 %v2225, %v2225
  %v2395 = vpack.c.bf16 %v2226, %v2226
  %v2396 = vpack.c.bf16 %v2227, %v2227
  %v2397 = vpack.c.bf16 %v2228, %v2228
  %v2398 = vpack.c.bf16 %v2229, %v2229
  %v2399 = vpack.c.bf16 %v2230, %v2230
  %v2400 = vpack.c.bf16 %v2231, %v2231
  %v2401 = vpack.c.bf16 %v2232, %v2232
  %v2402 = vpack.c.bf16 %v2233, %v2233
  %v2403 = vpack.c.bf16 %v2234, %v2234
  %v2404 = vpack.c.bf16 %v2235, %v2235
  %v2405 = vpack.c.bf16 %v2236, %v2236
  %v2406 = vpack.c.bf16 %v2237, %v2237
  %v2407 = vpack.c.bf16 %v2238, %v2238
  %v2408 = vpack.c.bf16 %v2239, %v2239
  %v2409 = vpack.c.bf16 %v2240, %v2240
  %v2410 = vpack.c.bf16 %v2241, %v2241
  %v2411 = vpack.c.bf16 %v2242, %v2242
  %v2412 = vpack.c.bf16 %v2243, %v2243
  %v2413 = vpack.c.bf16 %v2244, %v2244
  %v2414 = vpack.c.bf16 %v2245, %v2245
  %v2415 = vpack.c.bf16 %v2246, %v2246
  %v2416 = vpack.c.bf16 %v2247, %v2247
  %v2417 = vpack.c.bf16 %v2248, %v2248
  %v2418 = vpack.c.bf16 %v2249, %v2249
  %v2419 = vpack.c.bf16 %v2250, %v2250
  %v2420 = vpack.c.bf16 %v2251, %v2251
  %v2421 = vpack.c.bf16 %v2252, %v2252
  %v2422 = vpack.c.bf16 %v2253, %v2253
  %v2423 = vpack.c.bf16 %v2254, %v2254
  %v2424 = vpack.c.bf16 %v2255, %v2255
  %v2425 = vpack.c.bf16 %v2256, %v2256
  %v2426 = vpack.c.bf16 %v2257, %v2257
  %v2427 = vpack.c.bf16 %v2258, %v2258
  %v2428 = vpack.c.bf16 %v2259, %v2259
  %v2429 = vpack.c.bf16 %v2260, %v2260
  %v2430 = vpack.c.bf16 %v2261, %v2261
  %v2431 = vpack.c.bf16 %v2262, %v2262
  %v2432 = vpack.c.bf16 %v2263, %v2263
  %v2433 = vpack.c.bf16 %v2264, %v2264
  %v2434 = vpack.c.bf16 %v2265, %v2265
  %v2435 = vpack.c.bf16 %v2266, %v2266
  %v2436 = vpack.c.bf16 %v2267, %v2267
  %v2437 = vpack.c.bf16 %v2268, %v2268
  %v2438 = vpack.c.bf16 %v2269, %v2269
  %v2439 = vpack.c.bf16 %v2270, %v2270
  %v2440 = vpack.c.bf16 %v2271, %v2271
  %v2441 = vpack.c.bf16 %v2272, %v2272
  %v2442 = vpack.c.bf16 %v2273, %v2273
  %v2443 = vpack.c.bf16 %v2274, %v2274
  %v2444 = vpack.c.bf16 %v2275, %v2275
  %v2445 = vpack.c.bf16 %v2276, %v2276
  %v2446 = vpack.c.bf16 %v2277, %v2277
  %v2447 = vpack.c.bf16 %v2278, %v2278
  %v2448 = vpack.c.bf16 %v2279, %v2279
  %v2449 = vpack.c.bf16 %v2280, %v2280
  %v2450 = vpack.c.bf16 %v2281, %v2281
  %v2451 = vpack.c.bf16 %v2282, %v2282
  %v2452 = vpack.c.bf16 %v2283, %v2283
  %v2453 = vpack.c.bf16 %v2284, %v2284
  %v2454 = vpack.c.bf16 %v2285, %v2285
  %v2455 = vpack.c.bf16 %v2286, %v2286
  %v2456 = vpack.c.bf16 %v2287, %v2287
  %v2457 = vpack.c.bf16 %v2288, %v2288
  %v2458 = vpack.c.bf16 %v2289, %v2289
  %v2459 = vpack.c.bf16 %v2290, %v2290
  %v2460 = vpack.c.bf16 %v2291, %v2291
  %v2461 = vpack.c.bf16 %v2292, %v2292
  %v2462 = vpack.c.bf16 %v2293, %v2293
  %v2463 = vpack.c.bf16 %v2294, %v2294
  %v2464 = vpack.c.bf16 %v2295, %v2295
  %v2465 = vpack.c.bf16 %v2296, %v2296
  %v2466 = vpack.c.bf16 %v2297, %v2297
  %v2467 = vpack.c.bf16 %v2298, %v2298
  %v2468 = vpack.c.bf16 %v2299, %v2299
  %v2469 = vpack.c.bf16 %v2300, %v2300
  %v2470 = vpack.c.bf16 %v2301, %v2301
  %v2471 = vpack.c.bf16 %v2302, %v2302
  %v2472 = vpack.c.bf16 %v2303, %v2303
  %v2473 = vpack.c.bf16 %v2304, %v2304
  %v2474 = vpack.c.bf16 %v2305, %v2305
  %v2475 = vpack.c.bf16 %v2306, %v2306
  %v2476 = vpack.c.bf16 %v2307, %v2307
  %v2477 = vpack.c.bf16 %v2308, %v2308
  %v2478 = vpack.c.bf16 %v2309, %v2309
  %v2479 = vpack.c.bf16 %v2310, %v2310
  %v2480 = vpack.c.bf16 %v2311, %v2311
  %v2481 = vpack.c.bf16 %v2312, %v2312
  %vm2482 = vcmask 257024
  %2483 = vst.msk [vmem:[%s3] sm:$0xf] %vm2482, %v2313
  %2484 = vst.msk [vmem:[%s3 + $0x4] sm:$0xf] %vm2482, %v2314
  %2485 = vst.msk [vmem:[%s3 + $0x8] sm:$0xf] %vm2482, %v2315
  %2486 = vst.msk [vmem:[%s3 + $0xc] sm:$0xf] %vm2482, %v2316
  %2487 = vst.msk [vmem:[%s3 + $0x10] sm:$0xf] %vm2482, %v2317
  %2488 = vst.msk [vmem:[%s3 + $0x14] sm:$0xf] %vm2482, %v2318
  %2489 = vst.msk [vmem:[%s3 + $0x18] sm:$0xf] %vm2482, %v2319
  %2490 = vst.msk [vmem:[%s3 + $0x1c] sm:$0xf] %vm2482, %v2320
  %2491 = vst.msk [vmem:[%s3 + $0x20] sm:$0xf] %vm2482, %v2321
  %2492 = vst.msk [vmem:[%s3 + $0x24] sm:$0xf] %vm2482, %v2322
  %2493 = vst.msk [vmem:[%s3 + $0x28] sm:$0xf] %vm2482, %v2323
  %2494 = vst.msk [vmem:[%s3 + $0x2c] sm:$0xf] %vm2482, %v2324
  %2495 = vst.msk [vmem:[%s3 + $0x30] sm:$0xf] %vm2482, %v2325
  %2496 = vst.msk [vmem:[%s3 + $0x34] sm:$0xf] %vm2482, %v2326
  %2497 = vst.msk [vmem:[%s3 + $0x38] sm:$0xf] %vm2482, %v2327
  %2498 = vst.msk [vmem:[%s3 + $0x3c] sm:$0xf] %vm2482, %v2328
  %2499 = vst.msk [vmem:[%s3 + $0x40] sm:$0xf] %vm2482, %v2329
  %2500 = vst.msk [vmem:[%s3 + $0x44] sm:$0xf] %vm2482, %v2330
  %2501 = vst.msk [vmem:[%s3 + $0x48] sm:$0xf] %vm2482, %v2331
  %2502 = vst.msk [vmem:[%s3 + $0x4c] sm:$0xf] %vm2482, %v2332
  %2503 = vst.msk [vmem:[%s3 + $0x50] sm:$0xf] %vm2482, %v2333
  %2504 = vst.msk [vmem:[%s3 + $0x54] sm:$0xf] %vm2482, %v2334
  %2505 = vst.msk [vmem:[%s3 + $0x58] sm:$0xf] %vm2482, %v2335
  %2506 = vst.msk [vmem:[%s3 + $0x5c] sm:$0xf] %vm2482, %v2336
  %2507 = vst.msk [vmem:[%s3 + $0x60] sm:$0xf] %vm2482, %v2337
  %2508 = vst.msk [vmem:[%s3 + $0x64] sm:$0xf] %vm2482, %v2338
  %2509 = vst.msk [vmem:[%s3 + $0x68] sm:$0xf] %vm2482, %v2339
  %2510 = vst.msk [vmem:[%s3 + $0x6c] sm:$0xf] %vm2482, %v2340
  %2511 = vst.msk [vmem:[%s3 + $0x70] sm:$0xf] %vm2482, %v2341
  %2512 = vst.msk [vmem:[%s3 + $0x74] sm:$0xf] %vm2482, %v2342
  %2513 = vst.msk [vmem:[%s3 + $0x78] sm:$0xf] %vm2482, %v2343
  %2514 = vst.msk [vmem:[%s3 + $0x7c] sm:$0xf] %vm2482, %v2344
  %2515 = vst.msk [vmem:[%s3 + $0x80] sm:$0xf] %vm2482, %v2345
  %2516 = vst.msk [vmem:[%s3 + $0x84] sm:$0xf] %vm2482, %v2346
  %2517 = vst.msk [vmem:[%s3 + $0x88] sm:$0xf] %vm2482, %v2347
  %2518 = vst.msk [vmem:[%s3 + $0x8c] sm:$0xf] %vm2482, %v2348
  %2519 = vst.msk [vmem:[%s3 + $0x90] sm:$0xf] %vm2482, %v2349
  %2520 = vst.msk [vmem:[%s3 + $0x94] sm:$0xf] %vm2482, %v2350
  %2521 = vst.msk [vmem:[%s3 + $0x98] sm:$0xf] %vm2482, %v2351
  %2522 = vst.msk [vmem:[%s3 + $0x9c] sm:$0xf] %vm2482, %v2352
  %2523 = vst.msk [vmem:[%s3 + $0xa0] sm:$0xf] %vm2482, %v2353
  %2524 = vst.msk [vmem:[%s3 + $0xa4] sm:$0xf] %vm2482, %v2354
  %2525 = vst.msk [vmem:[%s3 + $0xa8] sm:$0xf] %vm2482, %v2355
  %2526 = vst.msk [vmem:[%s3 + $0xac] sm:$0xf] %vm2482, %v2356
  %2527 = vst.msk [vmem:[%s3 + $0xb0] sm:$0xf] %vm2482, %v2357
  %2528 = vst.msk [vmem:[%s3 + $0xb4] sm:$0xf] %vm2482, %v2358
  %2529 = vst.msk [vmem:[%s3 + $0xb8] sm:$0xf] %vm2482, %v2359
  %2530 = vst.msk [vmem:[%s3 + $0xbc] sm:$0xf] %vm2482, %v2360
  %2531 = vst.msk [vmem:[%s3 + $0xc0] sm:$0xf] %vm2482, %v2361
  %2532 = vst.msk [vmem:[%s3 + $0xc4] sm:$0xf] %vm2482, %v2362
  %2533 = vst.msk [vmem:[%s3 + $0xc8] sm:$0xf] %vm2482, %v2363
  %2534 = vst.msk [vmem:[%s3 + $0xcc] sm:$0xf] %vm2482, %v2364
  %2535 = vst.msk [vmem:[%s3 + $0xd0] sm:$0xf] %vm2482, %v2365
  %2536 = vst.msk [vmem:[%s3 + $0xd4] sm:$0xf] %vm2482, %v2366
  %2537 = vst.msk [vmem:[%s3 + $0xd8] sm:$0xf] %vm2482, %v2367
  %2538 = vst.msk [vmem:[%s3 + $0xdc] sm:$0xf] %vm2482, %v2368
  %2539 = vst.msk [vmem:[%s3 + $0xe0] sm:$0xf] %vm2482, %v2369
  %2540 = vst.msk [vmem:[%s3 + $0xe4] sm:$0xf] %vm2482, %v2370
  %2541 = vst.msk [vmem:[%s3 + $0xe8] sm:$0xf] %vm2482, %v2371
  %2542 = vst.msk [vmem:[%s3 + $0xec] sm:$0xf] %vm2482, %v2372
  %2543 = vst.msk [vmem:[%s3 + $0xf0] sm:$0xf] %vm2482, %v2373
  %2544 = vst.msk [vmem:[%s3 + $0xf4] sm:$0xf] %vm2482, %v2374
  %2545 = vst.msk [vmem:[%s3 + $0xf8] sm:$0xf] %vm2482, %v2375
  %2546 = vst.msk [vmem:[%s3 + $0xfc] sm:$0xf] %vm2482, %v2376
  %2547 = vst.msk [vmem:[%s3 + $0x100] sm:$0xf] %vm2482, %v2377
  %2548 = vst.msk [vmem:[%s3 + $0x104] sm:$0xf] %vm2482, %v2378
  %2549 = vst.msk [vmem:[%s3 + $0x108] sm:$0xf] %vm2482, %v2379
  %2550 = vst.msk [vmem:[%s3 + $0x10c] sm:$0xf] %vm2482, %v2380
  %2551 = vst.msk [vmem:[%s3 + $0x110] sm:$0xf] %vm2482, %v2381
  %2552 = vst.msk [vmem:[%s3 + $0x114] sm:$0xf] %vm2482, %v2382
  %2553 = vst.msk [vmem:[%s3 + $0x118] sm:$0xf] %vm2482, %v2383
  %2554 = vst.msk [vmem:[%s3 + $0x11c] sm:$0xf] %vm2482, %v2384
  %2555 = vst.msk [vmem:[%s3 + $0x120] sm:$0xf] %vm2482, %v2385
  %2556 = vst.msk [vmem:[%s3 + $0x124] sm:$0xf] %vm2482, %v2386
  %2557 = vst.msk [vmem:[%s3 + $0x128] sm:$0xf] %vm2482, %v2387
  %2558 = vst.msk [vmem:[%s3 + $0x12c] sm:$0xf] %vm2482, %v2388
  %2559 = vst.msk [vmem:[%s3 + $0x130] sm:$0xf] %vm2482, %v2389
  %2560 = vst.msk [vmem:[%s3 + $0x134] sm:$0xf] %vm2482, %v2390
  %2561 = vst.msk [vmem:[%s3 + $0x138] sm:$0xf] %vm2482, %v2391
  %2562 = vst.msk [vmem:[%s3 + $0x13c] sm:$0xf] %vm2482, %v2392
  %2563 = vst.msk [vmem:[%s3 + $0x140] sm:$0xf] %vm2482, %v2393
  %2564 = vst.msk [vmem:[%s3 + $0x144] sm:$0xf] %vm2482, %v2394
  %2565 = vst.msk [vmem:[%s3 + $0x148] sm:$0xf] %vm2482, %v2395
  %2566 = vst.msk [vmem:[%s3 + $0x14c] sm:$0xf] %vm2482, %v2396
  %2567 = vst.msk [vmem:[%s3 + $0x150] sm:$0xf] %vm2482, %v2397
  %2568 = vst.msk [vmem:[%s3 + $0x154] sm:$0xf] %vm2482, %v2398
  %2569 = vst.msk [vmem:[%s3 + $0x158] sm:$0xf] %vm2482, %v2399
  %2570 = vst.msk [vmem:[%s3 + $0x15c] sm:$0xf] %vm2482, %v2400
  %2571 = vst.msk [vmem:[%s3 + $0x160] sm:$0xf] %vm2482, %v2401
  %2572 = vst.msk [vmem:[%s3 + $0x164] sm:$0xf] %vm2482, %v2402
  %2573 = vst.msk [vmem:[%s3 + $0x168] sm:$0xf] %vm2482, %v2403
  %2574 = vst.msk [vmem:[%s3 + $0x16c] sm:$0xf] %vm2482, %v2404
  %2575 = vst.msk [vmem:[%s3 + $0x170] sm:$0xf] %vm2482, %v2405
  %2576 = vst.msk [vmem:[%s3 + $0x174] sm:$0xf] %vm2482, %v2406
  %2577 = vst.msk [vmem:[%s3 + $0x178] sm:$0xf] %vm2482, %v2407
  %2578 = vst.msk [vmem:[%s3 + $0x17c] sm:$0xf] %vm2482, %v2408
  %2579 = vst.msk [vmem:[%s3 + $0x180] sm:$0xf] %vm2482, %v2409
  %2580 = vst.msk [vmem:[%s3 + $0x184] sm:$0xf] %vm2482, %v2410
  %2581 = vst.msk [vmem:[%s3 + $0x188] sm:$0xf] %vm2482, %v2411
  %2582 = vst.msk [vmem:[%s3 + $0x18c] sm:$0xf] %vm2482, %v2412
  %2583 = vst.msk [vmem:[%s3 + $0x190] sm:$0xf] %vm2482, %v2413
  %2584 = vst.msk [vmem:[%s3 + $0x194] sm:$0xf] %vm2482, %v2414
  %2585 = vst.msk [vmem:[%s3 + $0x198] sm:$0xf] %vm2482, %v2415
  %2586 = vst.msk [vmem:[%s3 + $0x19c] sm:$0xf] %vm2482, %v2416
  %2587 = vst.msk [vmem:[%s3 + $0x1a0] sm:$0xf] %vm2482, %v2417
  %2588 = vst.msk [vmem:[%s3 + $0x1a4] sm:$0xf] %vm2482, %v2418
  %2589 = vst.msk [vmem:[%s3 + $0x1a8] sm:$0xf] %vm2482, %v2419
  %2590 = vst.msk [vmem:[%s3 + $0x1ac] sm:$0xf] %vm2482, %v2420
  %2591 = vst.msk [vmem:[%s3 + $0x1b0] sm:$0xf] %vm2482, %v2421
  %2592 = vst.msk [vmem:[%s3 + $0x1b4] sm:$0xf] %vm2482, %v2422
  %2593 = vst.msk [vmem:[%s3 + $0x1b8] sm:$0xf] %vm2482, %v2423
  %2594 = vst.msk [vmem:[%s3 + $0x1bc] sm:$0xf] %vm2482, %v2424
  %2595 = vst.msk [vmem:[%s3 + $0x1c0] sm:$0xf] %vm2482, %v2425
  %2596 = vst.msk [vmem:[%s3 + $0x1c4] sm:$0xf] %vm2482, %v2426
  %2597 = vst.msk [vmem:[%s3 + $0x1c8] sm:$0xf] %vm2482, %v2427
  %2598 = vst.msk [vmem:[%s3 + $0x1cc] sm:$0xf] %vm2482, %v2428
  %2599 = vst.msk [vmem:[%s3 + $0x1d0] sm:$0xf] %vm2482, %v2429
  %2600 = vst.msk [vmem:[%s3 + $0x1d4] sm:$0xf] %vm2482, %v2430
  %2601 = vst.msk [vmem:[%s3 + $0x1d8] sm:$0xf] %vm2482, %v2431
  %2602 = vst.msk [vmem:[%s3 + $0x1dc] sm:$0xf] %vm2482, %v2432
  %2603 = vst.msk [vmem:[%s3 + $0x1e0] sm:$0xf] %vm2482, %v2433
  %2604 = vst.msk [vmem:[%s3 + $0x1e4] sm:$0xf] %vm2482, %v2434
  %2605 = vst.msk [vmem:[%s3 + $0x1e8] sm:$0xf] %vm2482, %v2435
  %2606 = vst.msk [vmem:[%s3 + $0x1ec] sm:$0xf] %vm2482, %v2436
  %2607 = vst.msk [vmem:[%s3 + $0x1f0] sm:$0xf] %vm2482, %v2437
  %2608 = vst.msk [vmem:[%s3 + $0x1f4] sm:$0xf] %vm2482, %v2438
  %2609 = vst.msk [vmem:[%s3 + $0x1f8] sm:$0xf] %vm2482, %v2439
  %2610 = vst.msk [vmem:[%s3 + $0x1fc] sm:$0xf] %vm2482, %v2440
  %2611 = vst.msk [vmem:[%s3 + $0x200] sm:$0xf] %vm2482, %v2441
  %2612 = vst.msk [vmem:[%s3 + $0x204] sm:$0xf] %vm2482, %v2442
  %2613 = vst.msk [vmem:[%s3 + $0x208] sm:$0xf] %vm2482, %v2443
  %2614 = vst.msk [vmem:[%s3 + $0x20c] sm:$0xf] %vm2482, %v2444
  %2615 = vst.msk [vmem:[%s3 + $0x210] sm:$0xf] %vm2482, %v2445
  %2616 = vst.msk [vmem:[%s3 + $0x214] sm:$0xf] %vm2482, %v2446
  %2617 = vst.msk [vmem:[%s3 + $0x218] sm:$0xf] %vm2482, %v2447
  %2618 = vst.msk [vmem:[%s3 + $0x21c] sm:$0xf] %vm2482, %v2448
  %2619 = vst.msk [vmem:[%s3 + $0x220] sm:$0xf] %vm2482, %v2449
  %2620 = vst.msk [vmem:[%s3 + $0x224] sm:$0xf] %vm2482, %v2450
  %2621 = vst.msk [vmem:[%s3 + $0x228] sm:$0xf] %vm2482, %v2451
  %2622 = vst.msk [vmem:[%s3 + $0x22c] sm:$0xf] %vm2482, %v2452
  %2623 = vst.msk [vmem:[%s3 + $0x230] sm:$0xf] %vm2482, %v2453
  %2624 = vst.msk [vmem:[%s3 + $0x234] sm:$0xf] %vm2482, %v2454
  %2625 = vst.msk [vmem:[%s3 + $0x238] sm:$0xf] %vm2482, %v2455
  %2626 = vst.msk [vmem:[%s3 + $0x23c] sm:$0xf] %vm2482, %v2456
  %2627 = vst.msk [vmem:[%s3 + $0x240] sm:$0xf] %vm2482, %v2457
  %2628 = vst.msk [vmem:[%s3 + $0x244] sm:$0xf] %vm2482, %v2458
  %2629 = vst.msk [vmem:[%s3 + $0x248] sm:$0xf] %vm2482, %v2459
  %2630 = vst.msk [vmem:[%s3 + $0x24c] sm:$0xf] %vm2482, %v2460
  %2631 = vst.msk [vmem:[%s3 + $0x250] sm:$0xf] %vm2482, %v2461
  %2632 = vst.msk [vmem:[%s3 + $0x254] sm:$0xf] %vm2482, %v2462
  %2633 = vst.msk [vmem:[%s3 + $0x258] sm:$0xf] %vm2482, %v2463
  %2634 = vst.msk [vmem:[%s3 + $0x25c] sm:$0xf] %vm2482, %v2464
  %2635 = vst.msk [vmem:[%s3 + $0x260] sm:$0xf] %vm2482, %v2465
  %2636 = vst.msk [vmem:[%s3 + $0x264] sm:$0xf] %vm2482, %v2466
  %2637 = vst.msk [vmem:[%s3 + $0x268] sm:$0xf] %vm2482, %v2467
  %2638 = vst.msk [vmem:[%s3 + $0x26c] sm:$0xf] %vm2482, %v2468
  %2639 = vst.msk [vmem:[%s3 + $0x270] sm:$0xf] %vm2482, %v2469
  %2640 = vst.msk [vmem:[%s3 + $0x274] sm:$0xf] %vm2482, %v2470
  %2641 = vst.msk [vmem:[%s3 + $0x278] sm:$0xf] %vm2482, %v2471
  %2642 = vst.msk [vmem:[%s3 + $0x27c] sm:$0xf] %vm2482, %v2472
  %2643 = vst.msk [vmem:[%s3 + $0x280] sm:$0xf] %vm2482, %v2473
  %2644 = vst.msk [vmem:[%s3 + $0x284] sm:$0xf] %vm2482, %v2474
  %2645 = vst.msk [vmem:[%s3 + $0x288] sm:$0xf] %vm2482, %v2475
  %2646 = vst.msk [vmem:[%s3 + $0x28c] sm:$0xf] %vm2482, %v2476
  %2647 = vst.msk [vmem:[%s3 + $0x290] sm:$0xf] %vm2482, %v2477
  %2648 = vst.msk [vmem:[%s3 + $0x294] sm:$0xf] %vm2482, %v2478
  %2649 = vst.msk [vmem:[%s3 + $0x298] sm:$0xf] %vm2482, %v2479
  %2650 = vst.msk [vmem:[%s3 + $0x29c] sm:$0xf] %vm2482, %v2480
  %2651 = vst.msk [vmem:[%s3 + $0x2a0] sm:$0xf] %vm2482, %v2481
  // Predicated region
  $region14: #{deconvvae_forward.8} parent=0 // pred_check
    _
  $region15: #{deconvvae_forward.8} parent=0 // pred_check_branch
    %2653 = sbr.rel (0) target = $region17
  $region16: #{deconvvae_forward.8} parent=0 // pred_region
    _
  $region17: #{deconvvae_forward.8} parent=0 // pred_fallthru
    _
  // Predicated region
  $region18: #{deconvvae_forward.8} parent=0 // pred_check
    _
  $region19: #{deconvvae_forward.8} parent=0 // pred_check_branch
    %2655 = sbr.rel (0) target = $region21
  $region20: #{deconvvae_forward.8} parent=0 // pred_region
    _
  $region21: #{deconvvae_forward.8} parent=0 // pred_fallthru
    _

// kernel: deconvvae_forward.9
$region0: #{deconvvae_forward.9}
  #allocation0 [shape = 'u32[]', space=smem, size = 0x4, offset = 0x4, fixed_abs, tag = 'smem constant byte address 0x4 - core index']
  #allocation1 [shape = 'u32[72,128]{1,0:T(1,128)}', space=vmem, size = 0x9000, scoped, tag = 'internal scratch']
  #allocation2 [shape = 'f32[1,1]{1,0:T(1,128)S(1)}', space=vmem, size = 0x200, scoped, tag = 'scoped memory for deconvvae_forward.9']
  %s0 = inlined_call_operand.vmem [shape: bf16[1,288], index: 0, kind: input, shape index: {}]
  %s1 = inlined_call_operand.vmem [shape: bf16[288,1568], index: 1, kind: input, shape index: {}]
  %s2 = inlined_call_operand.<no memory space> [shape: f32[1,1], index: 2, kind: input, shape index: {}]
  %s3 = inlined_call_operand.vmem [shape: f32[1,1568], index: 3, kind: output, shape index: {}]
  %s4 = sld [smem:[#allocation0]]
  $region22: #{deconvvae_forward.9} parent=0
    _
  %s6 = ssub.s32 1, %s4
  %s7 = scalar_select 0, %s6, %s4
  %v8 = vstv %s2
  %9 = vst [vmem:[#allocation2] sm:$0x1] %v8
  // Predicated region
  $region2: #{deconvvae_forward.9} parent=0 // pred_check
    _
  $region3: #{deconvvae_forward.9} parent=0 // pred_check_branch
    %11 = sbr.rel (0) target = $region5
  $region4: #{deconvvae_forward.9} parent=0 // pred_region
    _
  $region5: #{deconvvae_forward.9} parent=0 // pred_fallthru
    _
  // Predicated region
  $region6: #{deconvvae_forward.9} parent=0 // pred_check
    _
  $region7: #{deconvvae_forward.9} parent=0 // pred_check_branch
    %13 = sbr.rel (0) target = $region9
  $region8: #{deconvvae_forward.9} parent=0 // pred_region
    _
  $region9: #{deconvvae_forward.9} parent=0 // pred_fallthru
    _
  // Predicated region
  $region10: #{deconvvae_forward.9} parent=0 // pred_check
    _
  $region11: #{deconvvae_forward.9} parent=0 // pred_check_branch
    %15 = sbr.rel (0) target = $region13
  $region12: #{deconvvae_forward.9} parent=0 // pred_region
    _
  $region13: #{deconvvae_forward.9} parent=0 // pred_fallthru
    _
  %v17 = vld [vmem:[%s0] sm:$0x7]
  %v18 = vld [vmem:[%s1] sm:$0xff]
  %v19 = vld [vmem:[%s1 + $0x8] sm:$0xff]
  %v20 = vld [vmem:[%s1 + $0x10] sm:$0xff]
  %v21 = vld [vmem:[%s1 + $0x18] sm:$0xff]
  %v22 = vld [vmem:[%s1 + $0x20] sm:$0xff]
  %v23 = vld [vmem:[%s1 + $0x28] sm:$0xff]
  %v24 = vld [vmem:[%s1 + $0x30] sm:$0xf]
  %v25 = vld [vmem:[%s1 + $0x34] sm:$0xff]
  %v26 = vld [vmem:[%s1 + $0x3c] sm:$0xff]
  %v27 = vld [vmem:[%s1 + $0x44] sm:$0xff]
  %v28 = vld [vmem:[%s1 + $0x4c] sm:$0xff]
  %v29 = vld [vmem:[%s1 + $0x54] sm:$0xff]
  %v30 = vld [vmem:[%s1 + $0x5c] sm:$0xff]
  %v31 = vld [vmem:[%s1 + $0x64] sm:$0xf]
  %v32 = vld [vmem:[%s1 + $0x68] sm:$0xff]
  %v33 = vld [vmem:[%s1 + $0x70] sm:$0xff]
  %v34 = vld [vmem:[%s1 + $0x78] sm:$0xff]
  %v35 = vld [vmem:[%s1 + $0x80] sm:$0xff]
  %v36 = vld [vmem:[%s1 + $0x88] sm:$0xff]
  %v37 = vld [vmem:[%s1 + $0x90] sm:$0xff]
  %v38 = vld [vmem:[%s1 + $0x98] sm:$0xf]
  %v39 = vld [vmem:[%s1 + $0x9c] sm:$0xff]
  %v40 = vld [vmem:[%s1 + $0xa4] sm:$0xff]
  %v41 = vld [vmem:[%s1 + $0xac] sm:$0xff]
  %v42 = vld [vmem:[%s1 + $0xb4] sm:$0xff]
  %v43 = vld [vmem:[%s1 + $0xbc] sm:$0xff]
  %v44 = vld [vmem:[%s1 + $0xc4] sm:$0xff]
  %v45 = vld [vmem:[%s1 + $0xcc] sm:$0xf]
  %v46 = vld [vmem:[%s1 + $0xd0] sm:$0xff]
  %v47 = vld [vmem:[%s1 + $0xd8] sm:$0xff]
  %v48 = vld [vmem:[%s1 + $0xe0] sm:$0xff]
  %v49 = vld [vmem:[%s1 + $0xe8] sm:$0xff]
  %v50 = vld [vmem:[%s1 + $0xf0] sm:$0xff]
  %v51 = vld [vmem:[%s1 + $0xf8] sm:$0xff]
  %v52 = vld [vmem:[%s1 + $0x100] sm:$0xf]
  %v53 = vld [vmem:[%s1 + $0x104] sm:$0xff]
  %v54 = vld [vmem:[%s1 + $0x10c] sm:$0xff]
  %v55 = vld [vmem:[%s1 + $0x114] sm:$0xff]
  %v56 = vld [vmem:[%s1 + $0x11c] sm:$0xff]
  %v57 = vld [vmem:[%s1 + $0x124] sm:$0xff]
  %v58 = vld [vmem:[%s1 + $0x12c] sm:$0xff]
  %v59 = vld [vmem:[%s1 + $0x134] sm:$0xf]
  %v60 = vld [vmem:[%s1 + $0x138] sm:$0xff]
  %v61 = vld [vmem:[%s1 + $0x140] sm:$0xff]
  %v62 = vld [vmem:[%s1 + $0x148] sm:$0xff]
  %v63 = vld [vmem:[%s1 + $0x150] sm:$0xff]
  %v64 = vld [vmem:[%s1 + $0x158] sm:$0xff]
  %v65 = vld [vmem:[%s1 + $0x160] sm:$0xff]
  %v66 = vld [vmem:[%s1 + $0x168] sm:$0xf]
  %v67 = vld [vmem:[%s1 + $0x16c] sm:$0xff]
  %v68 = vld [vmem:[%s1 + $0x174] sm:$0xff]
  %v69 = vld [vmem:[%s1 + $0x17c] sm:$0xff]
  %v70 = vld [vmem:[%s1 + $0x184] sm:$0xff]
  %v71 = vld [vmem:[%s1 + $0x18c] sm:$0xff]
  %v72 = vld [vmem:[%s1 + $0x194] sm:$0xff]
  %v73 = vld [vmem:[%s1 + $0x19c] sm:$0xf]
  %v74 = vld [vmem:[%s1 + $0x1a0] sm:$0xff]
  %v75 = vld [vmem:[%s1 + $0x1a8] sm:$0xff]
  %v76 = vld [vmem:[%s1 + $0x1b0] sm:$0xff]
  %v77 = vld [vmem:[%s1 + $0x1b8] sm:$0xff]
  %v78 = vld [vmem:[%s1 + $0x1c0] sm:$0xff]
  %v79 = vld [vmem:[%s1 + $0x1c8] sm:$0xff]
  %v80 = vld [vmem:[%s1 + $0x1d0] sm:$0xf]
  %v81 = vld [vmem:[%s1 + $0x1d4] sm:$0xff]
  %v82 = vld [vmem:[%s1 + $0x1dc] sm:$0xff]
  %v83 = vld [vmem:[%s1 + $0x1e4] sm:$0xff]
  %v84 = vld [vmem:[%s1 + $0x1ec] sm:$0xff]
  %v85 = vld [vmem:[%s1 + $0x1f4] sm:$0xff]
  %v86 = vld [vmem:[%s1 + $0x1fc] sm:$0xff]
  %v87 = vld [vmem:[%s1 + $0x204] sm:$0xf]
  %v88 = vld [vmem:[%s1 + $0x208] sm:$0xff]
  %v89 = vld [vmem:[%s1 + $0x210] sm:$0xff]
  %v90 = vld [vmem:[%s1 + $0x218] sm:$0xff]
  %v91 = vld [vmem:[%s1 + $0x220] sm:$0xff]
  %v92 = vld [vmem:[%s1 + $0x228] sm:$0xff]
  %v93 = vld [vmem:[%s1 + $0x230] sm:$0xff]
  %v94 = vld [vmem:[%s1 + $0x238] sm:$0xf]
  %v95 = vld [vmem:[%s1 + $0x23c] sm:$0xff]
  %v96 = vld [vmem:[%s1 + $0x244] sm:$0xff]
  %v97 = vld [vmem:[%s1 + $0x24c] sm:$0xff]
  %v98 = vld [vmem:[%s1 + $0x254] sm:$0xff]
  %v99 = vld [vmem:[%s1 + $0x25c] sm:$0xff]
  %v100 = vld [vmem:[%s1 + $0x264] sm:$0xff]
  %v101 = vld [vmem:[%s1 + $0x26c] sm:$0xf]
  %v102 = vld [vmem:[%s1 + $0x270] sm:$0xff]
  %v103 = vld [vmem:[%s1 + $0x278] sm:$0xff]
  %v104 = vld [vmem:[%s1 + $0x280] sm:$0xff]
  %v105 = vld [vmem:[%s1 + $0x288] sm:$0xff]
  %v106 = vld [vmem:[%s1 + $0x290] sm:$0xff]
  %v107 = vld [vmem:[%s1 + $0x298] sm:$0xff]
  %v108 = vld [vmem:[%s1 + $0x2a0] sm:$0xf]
  %v109 = vld [vmem:[%s1 + $0x2a4] sm:$0xff]
  %v110 = vld [vmem:[%s1 + $0x2ac] sm:$0xff]
  %v111 = vld [vmem:[%s1 + $0x2b4] sm:$0xff]
  %v112 = vld [vmem:[%s1 + $0x2bc] sm:$0xff]
  %v113 = vld [vmem:[%s1 + $0x2c4] sm:$0xff]
  %v114 = vld [vmem:[%s1 + $0x2cc] sm:$0xff]
  %v115 = vld [vmem:[%s1 + $0x2d4] sm:$0xf]
  %v116 = vld [vmem:[%s1 + $0x2d8] sm:$0xff]
  %v117 = vld [vmem:[%s1 + $0x2e0] sm:$0xff]
  %v118 = vld [vmem:[%s1 + $0x2e8] sm:$0xff]
  %v119 = vld [vmem:[%s1 + $0x2f0] sm:$0xff]
  %v120 = vld [vmem:[%s1 + $0x2f8] sm:$0xff]
  %v121 = vld [vmem:[%s1 + $0x300] sm:$0xff]
  %v122 = vld [vmem:[%s1 + $0x308] sm:$0xf]
  %v123 = vld [vmem:[%s1 + $0x30c] sm:$0xff]
  %v124 = vld [vmem:[%s1 + $0x314] sm:$0xff]
  %v125 = vld [vmem:[%s1 + $0x31c] sm:$0xff]
  %v126 = vld [vmem:[%s1 + $0x324] sm:$0xff]
  %v127 = vld [vmem:[%s1 + $0x32c] sm:$0xff]
  %v128 = vld [vmem:[%s1 + $0x334] sm:$0xff]
  %v129 = vld [vmem:[%s1 + $0x33c] sm:$0xf]
  %v130 = vld [vmem:[%s1 + $0x340] sm:$0xff]
  %v131 = vld [vmem:[%s1 + $0x348] sm:$0xff]
  %v132 = vld [vmem:[%s1 + $0x350] sm:$0xff]
  %v133 = vld [vmem:[%s1 + $0x358] sm:$0xff]
  %v134 = vld [vmem:[%s1 + $0x360] sm:$0xff]
  %v135 = vld [vmem:[%s1 + $0x368] sm:$0xff]
  %v136 = vld [vmem:[%s1 + $0x370] sm:$0xf]
  %v137 = vld [vmem:[%s1 + $0x374] sm:$0xff]
  %v138 = vld [vmem:[%s1 + $0x37c] sm:$0xff]
  %v139 = vld [vmem:[%s1 + $0x384] sm:$0xff]
  %v140 = vld [vmem:[%s1 + $0x38c] sm:$0xff]
  %v141 = vld [vmem:[%s1 + $0x394] sm:$0xff]
  %v142 = vld [vmem:[%s1 + $0x39c] sm:$0xff]
  %v143 = vld [vmem:[%s1 + $0x3a4] sm:$0xf]
  %v144 = vld [vmem:[%s1 + $0x3a8] sm:$0xff]
  %v145 = vld [vmem:[%s1 + $0x3b0] sm:$0xff]
  %v146 = vld [vmem:[%s1 + $0x3b8] sm:$0xff]
  %v147 = vld [vmem:[%s1 + $0x3c0] sm:$0xff]
  %v148 = vld [vmem:[%s1 + $0x3c8] sm:$0xff]
  %v149 = vld [vmem:[%s1 + $0x3d0] sm:$0xff]
  %v150 = vld [vmem:[%s1 + $0x3d8] sm:$0xf]
  %v151 = vld [vmem:[%s1 + $0x3dc] sm:$0xff]
  %v152 = vld [vmem:[%s1 + $0x3e4] sm:$0xff]
  %v153 = vld [vmem:[%s1 + $0x3ec] sm:$0xff]
  %v154 = vld [vmem:[%s1 + $0x3f4] sm:$0xff]
  %v155 = vld [vmem:[%s1 + $0x3fc] sm:$0xff]
  %v156 = vld [vmem:[%s1 + $0x404] sm:$0xff]
  %v157 = vld [vmem:[%s1 + $0x40c] sm:$0xf]
  %v158 = vld [vmem:[%s1 + $0x410] sm:$0xff]
  %v159 = vld [vmem:[%s1 + $0x418] sm:$0xff]
  %v160 = vld [vmem:[%s1 + $0x420] sm:$0xff]
  %v161 = vld [vmem:[%s1 + $0x428] sm:$0xff]
  %v162 = vld [vmem:[%s1 + $0x430] sm:$0xff]
  %v163 = vld [vmem:[%s1 + $0x438] sm:$0xff]
  %v164 = vld [vmem:[%s1 + $0x440] sm:$0xf]
  %v165 = vld [vmem:[%s1 + $0x444] sm:$0xff]
  %v166 = vld [vmem:[%s1 + $0x44c] sm:$0xff]
  %v167 = vld [vmem:[%s1 + $0x454] sm:$0xff]
  %v168 = vld [vmem:[%s1 + $0x45c] sm:$0xff]
  %v169 = vld [vmem:[%s1 + $0x464] sm:$0xff]
  %v170 = vld [vmem:[%s1 + $0x46c] sm:$0xff]
  %v171 = vld [vmem:[%s1 + $0x474] sm:$0xf]
  %v172 = vld [vmem:[%s1 + $0x478] sm:$0xff]
  %v173 = vld [vmem:[%s1 + $0x480] sm:$0xff]
  %v174 = vld [vmem:[%s1 + $0x488] sm:$0xff]
  %v175 = vld [vmem:[%s1 + $0x490] sm:$0xff]
  %v176 = vld [vmem:[%s1 + $0x498] sm:$0xff]
  %v177 = vld [vmem:[%s1 + $0x4a0] sm:$0xff]
  %v178 = vld [vmem:[%s1 + $0x4a8] sm:$0xf]
  %v179 = vld [vmem:[%s1 + $0x4ac] sm:$0xff]
  %v180 = vld [vmem:[%s1 + $0x4b4] sm:$0xff]
  %v181 = vld [vmem:[%s1 + $0x4bc] sm:$0xff]
  %v182 = vld [vmem:[%s1 + $0x4c4] sm:$0xff]
  %v183 = vld [vmem:[%s1 + $0x4cc] sm:$0xff]
  %v184 = vld [vmem:[%s1 + $0x4d4] sm:$0xff]
  %v185 = vld [vmem:[%s1 + $0x4dc] sm:$0xf]
  %v186 = vld [vmem:[%s1 + $0x4e0] sm:$0xff]
  %v187 = vld [vmem:[%s1 + $0x4e8] sm:$0xff]
  %v188 = vld [vmem:[%s1 + $0x4f0] sm:$0xff]
  %v189 = vld [vmem:[%s1 + $0x4f8] sm:$0xff]
  %v190 = vld [vmem:[%s1 + $0x500] sm:$0xff]
  %v191 = vld [vmem:[%s1 + $0x508] sm:$0xff]
  %v192 = vld [vmem:[%s1 + $0x510] sm:$0xf]
  %v193 = vld [vmem:[%s1 + $0x514] sm:$0xff]
  %v194 = vld [vmem:[%s1 + $0x51c] sm:$0xff]
  %v195 = vld [vmem:[%s1 + $0x524] sm:$0xff]
  %v196 = vld [vmem:[%s1 + $0x52c] sm:$0xff]
  %v197 = vld [vmem:[%s1 + $0x534] sm:$0xff]
  %v198 = vld [vmem:[%s1 + $0x53c] sm:$0xff]
  %v199 = vld [vmem:[%s1 + $0x544] sm:$0xf]
  %v200 = vld [vmem:[%s1 + $0x548] sm:$0xff]
  %v201 = vld [vmem:[%s1 + $0x550] sm:$0xff]
  %v202 = vld [vmem:[%s1 + $0x558] sm:$0xff]
  %v203 = vld [vmem:[%s1 + $0x560] sm:$0xff]
  %v204 = vld [vmem:[%s1 + $0x568] sm:$0xff]
  %v205 = vld [vmem:[%s1 + $0x570] sm:$0xff]
  %v206 = vld [vmem:[%s1 + $0x578] sm:$0xf]
  %v207 = vld [vmem:[%s1 + $0x57c] sm:$0xff]
  %v208 = vld [vmem:[%s1 + $0x584] sm:$0xff]
  %v209 = vld [vmem:[%s1 + $0x58c] sm:$0xff]
  %v210 = vld [vmem:[%s1 + $0x594] sm:$0xff]
  %v211 = vld [vmem:[%s1 + $0x59c] sm:$0xff]
  %v212 = vld [vmem:[%s1 + $0x5a4] sm:$0xff]
  %v213 = vld [vmem:[%s1 + $0x5ac] sm:$0xf]
  %v214 = vld [vmem:[%s1 + $0x5b0] sm:$0xff]
  %v215 = vld [vmem:[%s1 + $0x5b8] sm:$0xff]
  %v216 = vld [vmem:[%s1 + $0x5c0] sm:$0xff]
  %v217 = vld [vmem:[%s1 + $0x5c8] sm:$0xff]
  %v218 = vld [vmem:[%s1 + $0x5d0] sm:$0xff]
  %v219 = vld [vmem:[%s1 + $0x5d8] sm:$0xff]
  %v220 = vld [vmem:[%s1 + $0x5e0] sm:$0xf]
  %v221 = vld [vmem:[%s1 + $0x5e4] sm:$0xff]
  %v222 = vld [vmem:[%s1 + $0x5ec] sm:$0xff]
  %v223 = vld [vmem:[%s1 + $0x5f4] sm:$0xff]
  %v224 = vld [vmem:[%s1 + $0x5fc] sm:$0xff]
  %v225 = vld [vmem:[%s1 + $0x604] sm:$0xff]
  %v226 = vld [vmem:[%s1 + $0x60c] sm:$0xff]
  %v227 = vld [vmem:[%s1 + $0x614] sm:$0xf]
  %v228 = vld [vmem:[%s1 + $0x618] sm:$0xff]
  %v229 = vld [vmem:[%s1 + $0x620] sm:$0xff]
  %v230 = vld [vmem:[%s1 + $0x628] sm:$0xff]
  %v231 = vld [vmem:[%s1 + $0x630] sm:$0xff]
  %v232 = vld [vmem:[%s1 + $0x638] sm:$0xff]
  %v233 = vld [vmem:[%s1 + $0x640] sm:$0xff]
  %v234 = vld [vmem:[%s1 + $0x648] sm:$0xf]
  %v235 = vld [vmem:[%s1 + $0x64c] sm:$0xff]
  %v236 = vld [vmem:[%s1 + $0x654] sm:$0xff]
  %v237 = vld [vmem:[%s1 + $0x65c] sm:$0xff]
  %v238 = vld [vmem:[%s1 + $0x664] sm:$0xff]
  %v239 = vld [vmem:[%s1 + $0x66c] sm:$0xff]
  %v240 = vld [vmem:[%s1 + $0x674] sm:$0xff]
  %v241 = vld [vmem:[%s1 + $0x67c] sm:$0xf]
  %v242 = vld [vmem:[%s1 + $0x680] sm:$0xff]
  %v243 = vld [vmem:[%s1 + $0x688] sm:$0xff]
  %v244 = vld [vmem:[%s1 + $0x690] sm:$0xff]
  %v245 = vld [vmem:[%s1 + $0x698] sm:$0xff]
  %v246 = vld [vmem:[%s1 + $0x6a0] sm:$0xff]
  %v247 = vld [vmem:[%s1 + $0x6a8] sm:$0xff]
  %v248 = vld [vmem:[%s1 + $0x6b0] sm:$0xf]
  %v249 = vld [vmem:[%s1 + $0x6b4] sm:$0xff]
  %v250 = vld [vmem:[%s1 + $0x6bc] sm:$0xff]
  %v251 = vld [vmem:[%s1 + $0x6c4] sm:$0xff]
  %v252 = vld [vmem:[%s1 + $0x6cc] sm:$0xff]
  %v253 = vld [vmem:[%s1 + $0x6d4] sm:$0xff]
  %v254 = vld [vmem:[%s1 + $0x6dc] sm:$0xff]
  %v255 = vld [vmem:[%s1 + $0x6e4] sm:$0xf]
  %v256 = vld [vmem:[%s1 + $0x6e8] sm:$0xff]
  %v257 = vld [vmem:[%s1 + $0x6f0] sm:$0xff]
  %v258 = vld [vmem:[%s1 + $0x6f8] sm:$0xff]
  %v259 = vld [vmem:[%s1 + $0x700] sm:$0xff]
  %v260 = vld [vmem:[%s1 + $0x708] sm:$0xff]
  %v261 = vld [vmem:[%s1 + $0x710] sm:$0xff]
  %v262 = vld [vmem:[%s1 + $0x718] sm:$0xf]
  %v263 = vld [vmem:[%s1 + $0x71c] sm:$0xff]
  %v264 = vld [vmem:[%s1 + $0x724] sm:$0xff]
  %v265 = vld [vmem:[%s1 + $0x72c] sm:$0xff]
  %v266 = vld [vmem:[%s1 + $0x734] sm:$0xff]
  %v267 = vld [vmem:[%s1 + $0x73c] sm:$0xff]
  %v268 = vld [vmem:[%s1 + $0x744] sm:$0xff]
  %v269 = vld [vmem:[%s1 + $0x74c] sm:$0xf]
  %v270 = vld [vmem:[#allocation2] sm:$0x1]
  %272 = vset.pattern.permute.xlu0 0
  %273 = vperm.xlu0 %272, %v270
  %v274 = vpop.permute.xlu0 %273
  %v276 = vperm.slane %v274, 0
  %278 = vst [vmem:[#allocation1] ss:$9 sm:$0xff] %v17
  %v279 = vld [vmem:[#allocation1] sm:$0xff]
  %v280 = vld [vmem:[#allocation1 + $0x9] sm:$0xff]
  %v281 = vld [vmem:[#allocation1 + $0x12] sm:$0xff]
  %v536 = vunpack.c.l.b16 %v18
  %v537 = vunpack.c.h.b16 %v18
  %v538 = vunpack.c.l.b16 %v19
  %v539 = vunpack.c.h.b16 %v19
  %v540 = vunpack.c.l.b16 %v20
  %v541 = vunpack.c.h.b16 %v20
  %v542 = vunpack.c.l.b16 %v21
  %v543 = vunpack.c.h.b16 %v21
  %v544 = vunpack.c.l.b16 %v22
  %v545 = vunpack.c.h.b16 %v22
  %v546 = vunpack.c.l.b16 %v23
  %v547 = vunpack.c.h.b16 %v23
  %v548 = vunpack.c.l.b16 %v24
  %v549 = vunpack.c.l.b16 %v25
  %v550 = vunpack.c.h.b16 %v25
  %v551 = vunpack.c.l.b16 %v26
  %v552 = vunpack.c.h.b16 %v26
  %v553 = vunpack.c.l.b16 %v27
  %v554 = vunpack.c.h.b16 %v27
  %v555 = vunpack.c.l.b16 %v28
  %v556 = vunpack.c.h.b16 %v28
  %v557 = vunpack.c.l.b16 %v29
  %v558 = vunpack.c.h.b16 %v29
  %v559 = vunpack.c.l.b16 %v30
  %v560 = vunpack.c.h.b16 %v30
  %v561 = vunpack.c.l.b16 %v31
  %v562 = vunpack.c.l.b16 %v32
  %v563 = vunpack.c.h.b16 %v32
  %v564 = vunpack.c.l.b16 %v33
  %v565 = vunpack.c.h.b16 %v33
  %v566 = vunpack.c.l.b16 %v34
  %v567 = vunpack.c.h.b16 %v34
  %v568 = vunpack.c.l.b16 %v35
  %v569 = vunpack.c.h.b16 %v35
  %v570 = vunpack.c.l.b16 %v36
  %v571 = vunpack.c.h.b16 %v36
  %v572 = vunpack.c.l.b16 %v37
  %v573 = vunpack.c.h.b16 %v37
  %v574 = vunpack.c.l.b16 %v38
  %v575 = vunpack.c.l.b16 %v39
  %v576 = vunpack.c.h.b16 %v39
  %v577 = vunpack.c.l.b16 %v40
  %v578 = vunpack.c.h.b16 %v40
  %v579 = vunpack.c.l.b16 %v41
  %v580 = vunpack.c.h.b16 %v41
  %v581 = vunpack.c.l.b16 %v42
  %v582 = vunpack.c.h.b16 %v42
  %v583 = vunpack.c.l.b16 %v43
  %v584 = vunpack.c.h.b16 %v43
  %v585 = vunpack.c.l.b16 %v44
  %v586 = vunpack.c.h.b16 %v44
  %v587 = vunpack.c.l.b16 %v45
  %v588 = vunpack.c.l.b16 %v46
  %v589 = vunpack.c.h.b16 %v46
  %v590 = vunpack.c.l.b16 %v47
  %v591 = vunpack.c.h.b16 %v47
  %v592 = vunpack.c.l.b16 %v48
  %v593 = vunpack.c.h.b16 %v48
  %v594 = vunpack.c.l.b16 %v49
  %v595 = vunpack.c.h.b16 %v49
  %v596 = vunpack.c.l.b16 %v50
  %v597 = vunpack.c.h.b16 %v50
  %v598 = vunpack.c.l.b16 %v51
  %v599 = vunpack.c.h.b16 %v51
  %v600 = vunpack.c.l.b16 %v52
  %v601 = vunpack.c.l.b16 %v53
  %v602 = vunpack.c.h.b16 %v53
  %v603 = vunpack.c.l.b16 %v54
  %v604 = vunpack.c.h.b16 %v54
  %v605 = vunpack.c.l.b16 %v55
  %v606 = vunpack.c.h.b16 %v55
  %v607 = vunpack.c.l.b16 %v56
  %v608 = vunpack.c.h.b16 %v56
  %v609 = vunpack.c.l.b16 %v57
  %v610 = vunpack.c.h.b16 %v57
  %v611 = vunpack.c.l.b16 %v58
  %v612 = vunpack.c.h.b16 %v58
  %v613 = vunpack.c.l.b16 %v59
  %v614 = vunpack.c.l.b16 %v60
  %v615 = vunpack.c.h.b16 %v60
  %v616 = vunpack.c.l.b16 %v61
  %v617 = vunpack.c.h.b16 %v61
  %v618 = vunpack.c.l.b16 %v62
  %v619 = vunpack.c.h.b16 %v62
  %v620 = vunpack.c.l.b16 %v63
  %v621 = vunpack.c.h.b16 %v63
  %v622 = vunpack.c.l.b16 %v64
  %v623 = vunpack.c.h.b16 %v64
  %v624 = vunpack.c.l.b16 %v65
  %v625 = vunpack.c.h.b16 %v65
  %v626 = vunpack.c.l.b16 %v66
  %v627 = vunpack.c.l.b16 %v67
  %v628 = vunpack.c.h.b16 %v67
  %v629 = vunpack.c.l.b16 %v68
  %v630 = vunpack.c.h.b16 %v68
  %v631 = vunpack.c.l.b16 %v69
  %v632 = vunpack.c.h.b16 %v69
  %v633 = vunpack.c.l.b16 %v70
  %v634 = vunpack.c.h.b16 %v70
  %v635 = vunpack.c.l.b16 %v71
  %v636 = vunpack.c.h.b16 %v71
  %v637 = vunpack.c.l.b16 %v72
  %v638 = vunpack.c.h.b16 %v72
  %v639 = vunpack.c.l.b16 %v73
  %v640 = vunpack.c.l.b16 %v74
  %v641 = vunpack.c.h.b16 %v74
  %v642 = vunpack.c.l.b16 %v75
  %v643 = vunpack.c.h.b16 %v75
  %v644 = vunpack.c.l.b16 %v76
  %v645 = vunpack.c.h.b16 %v76
  %v646 = vunpack.c.l.b16 %v77
  %v647 = vunpack.c.h.b16 %v77
  %v648 = vunpack.c.l.b16 %v78
  %v649 = vunpack.c.h.b16 %v78
  %v650 = vunpack.c.l.b16 %v79
  %v651 = vunpack.c.h.b16 %v79
  %v652 = vunpack.c.l.b16 %v80
  %v653 = vunpack.c.l.b16 %v81
  %v654 = vunpack.c.h.b16 %v81
  %v655 = vunpack.c.l.b16 %v82
  %v656 = vunpack.c.h.b16 %v82
  %v657 = vunpack.c.l.b16 %v83
  %v658 = vunpack.c.h.b16 %v83
  %v659 = vunpack.c.l.b16 %v84
  %v660 = vunpack.c.h.b16 %v84
  %v661 = vunpack.c.l.b16 %v85
  %v662 = vunpack.c.h.b16 %v85
  %v663 = vunpack.c.l.b16 %v86
  %v664 = vunpack.c.h.b16 %v86
  %v665 = vunpack.c.l.b16 %v87
  %v666 = vunpack.c.l.b16 %v88
  %v667 = vunpack.c.h.b16 %v88
  %v668 = vunpack.c.l.b16 %v89
  %v669 = vunpack.c.h.b16 %v89
  %v670 = vunpack.c.l.b16 %v90
  %v671 = vunpack.c.h.b16 %v90
  %v672 = vunpack.c.l.b16 %v91
  %v673 = vunpack.c.h.b16 %v91
  %v674 = vunpack.c.l.b16 %v92
  %v675 = vunpack.c.h.b16 %v92
  %v676 = vunpack.c.l.b16 %v93
  %v677 = vunpack.c.h.b16 %v93
  %v678 = vunpack.c.l.b16 %v94
  %v679 = vunpack.c.l.b16 %v95
  %v680 = vunpack.c.h.b16 %v95
  %v681 = vunpack.c.l.b16 %v96
  %v682 = vunpack.c.h.b16 %v96
  %v683 = vunpack.c.l.b16 %v97
  %v684 = vunpack.c.h.b16 %v97
  %v685 = vunpack.c.l.b16 %v98
  %v686 = vunpack.c.h.b16 %v98
  %v687 = vunpack.c.l.b16 %v99
  %v688 = vunpack.c.h.b16 %v99
  %v689 = vunpack.c.l.b16 %v100
  %v690 = vunpack.c.h.b16 %v100
  %v691 = vunpack.c.l.b16 %v101
  %v692 = vunpack.c.l.b16 %v102
  %v693 = vunpack.c.h.b16 %v102
  %v694 = vunpack.c.l.b16 %v103
  %v695 = vunpack.c.h.b16 %v103
  %v696 = vunpack.c.l.b16 %v104
  %v697 = vunpack.c.h.b16 %v104
  %v698 = vunpack.c.l.b16 %v105
  %v699 = vunpack.c.h.b16 %v105
  %v700 = vunpack.c.l.b16 %v106
  %v701 = vunpack.c.h.b16 %v106
  %v702 = vunpack.c.l.b16 %v107
  %v703 = vunpack.c.h.b16 %v107
  %v704 = vunpack.c.l.b16 %v108
  %v705 = vunpack.c.l.b16 %v109
  %v706 = vunpack.c.h.b16 %v109
  %v707 = vunpack.c.l.b16 %v110
  %v708 = vunpack.c.h.b16 %v110
  %v709 = vunpack.c.l.b16 %v111
  %v710 = vunpack.c.h.b16 %v111
  %v711 = vunpack.c.l.b16 %v112
  %v712 = vunpack.c.h.b16 %v112
  %v713 = vunpack.c.l.b16 %v113
  %v714 = vunpack.c.h.b16 %v113
  %v715 = vunpack.c.l.b16 %v114
  %v716 = vunpack.c.h.b16 %v114
  %v717 = vunpack.c.l.b16 %v115
  %v718 = vunpack.c.l.b16 %v116
  %v719 = vunpack.c.h.b16 %v116
  %v720 = vunpack.c.l.b16 %v117
  %v721 = vunpack.c.h.b16 %v117
  %v722 = vunpack.c.l.b16 %v118
  %v723 = vunpack.c.h.b16 %v118
  %v724 = vunpack.c.l.b16 %v119
  %v725 = vunpack.c.h.b16 %v119
  %v726 = vunpack.c.l.b16 %v120
  %v727 = vunpack.c.h.b16 %v120
  %v728 = vunpack.c.l.b16 %v121
  %v729 = vunpack.c.h.b16 %v121
  %v730 = vunpack.c.l.b16 %v122
  %v731 = vunpack.c.l.b16 %v123
  %v732 = vunpack.c.h.b16 %v123
  %v733 = vunpack.c.l.b16 %v124
  %v734 = vunpack.c.h.b16 %v124
  %v735 = vunpack.c.l.b16 %v125
  %v736 = vunpack.c.h.b16 %v125
  %v737 = vunpack.c.l.b16 %v126
  %v738 = vunpack.c.h.b16 %v126
  %v739 = vunpack.c.l.b16 %v127
  %v740 = vunpack.c.h.b16 %v127
  %v741 = vunpack.c.l.b16 %v128
  %v742 = vunpack.c.h.b16 %v128
  %v743 = vunpack.c.l.b16 %v129
  %v744 = vunpack.c.l.b16 %v130
  %v745 = vunpack.c.h.b16 %v130
  %v746 = vunpack.c.l.b16 %v131
  %v747 = vunpack.c.h.b16 %v131
  %v748 = vunpack.c.l.b16 %v132
  %v749 = vunpack.c.h.b16 %v132
  %v750 = vunpack.c.l.b16 %v133
  %v751 = vunpack.c.h.b16 %v133
  %v752 = vunpack.c.l.b16 %v134
  %v753 = vunpack.c.h.b16 %v134
  %v754 = vunpack.c.l.b16 %v135
  %v755 = vunpack.c.h.b16 %v135
  %v756 = vunpack.c.l.b16 %v136
  %v757 = vunpack.c.l.b16 %v137
  %v758 = vunpack.c.h.b16 %v137
  %v759 = vunpack.c.l.b16 %v138
  %v760 = vunpack.c.h.b16 %v138
  %v761 = vunpack.c.l.b16 %v139
  %v762 = vunpack.c.h.b16 %v139
  %v763 = vunpack.c.l.b16 %v140
  %v764 = vunpack.c.h.b16 %v140
  %v765 = vunpack.c.l.b16 %v141
  %v766 = vunpack.c.h.b16 %v141
  %v767 = vunpack.c.l.b16 %v142
  %v768 = vunpack.c.h.b16 %v142
  %v769 = vunpack.c.l.b16 %v143
  %v770 = vunpack.c.l.b16 %v144
  %v771 = vunpack.c.h.b16 %v144
  %v772 = vunpack.c.l.b16 %v145
  %v773 = vunpack.c.h.b16 %v145
  %v774 = vunpack.c.l.b16 %v146
  %v775 = vunpack.c.h.b16 %v146
  %v776 = vunpack.c.l.b16 %v147
  %v777 = vunpack.c.h.b16 %v147
  %v778 = vunpack.c.l.b16 %v148
  %v779 = vunpack.c.h.b16 %v148
  %v780 = vunpack.c.l.b16 %v149
  %v781 = vunpack.c.h.b16 %v149
  %v782 = vunpack.c.l.b16 %v150
  %v783 = vunpack.c.l.b16 %v151
  %v784 = vunpack.c.h.b16 %v151
  %v785 = vunpack.c.l.b16 %v152
  %v786 = vunpack.c.h.b16 %v152
  %v787 = vunpack.c.l.b16 %v153
  %v788 = vunpack.c.h.b16 %v153
  %v789 = vunpack.c.l.b16 %v154
  %v790 = vunpack.c.h.b16 %v154
  %v791 = vunpack.c.l.b16 %v155
  %v792 = vunpack.c.h.b16 %v155
  %v793 = vunpack.c.l.b16 %v156
  %v794 = vunpack.c.h.b16 %v156
  %v795 = vunpack.c.l.b16 %v157
  %v796 = vunpack.c.l.b16 %v158
  %v797 = vunpack.c.h.b16 %v158
  %v798 = vunpack.c.l.b16 %v159
  %v799 = vunpack.c.h.b16 %v159
  %v800 = vunpack.c.l.b16 %v160
  %v801 = vunpack.c.h.b16 %v160
  %v802 = vunpack.c.l.b16 %v161
  %v803 = vunpack.c.h.b16 %v161
  %v804 = vunpack.c.l.b16 %v162
  %v805 = vunpack.c.h.b16 %v162
  %v806 = vunpack.c.l.b16 %v163
  %v807 = vunpack.c.h.b16 %v163
  %v808 = vunpack.c.l.b16 %v164
  %v809 = vunpack.c.l.b16 %v165
  %v810 = vunpack.c.h.b16 %v165
  %v811 = vunpack.c.l.b16 %v166
  %v812 = vunpack.c.h.b16 %v166
  %v813 = vunpack.c.l.b16 %v167
  %v814 = vunpack.c.h.b16 %v167
  %v815 = vunpack.c.l.b16 %v168
  %v816 = vunpack.c.h.b16 %v168
  %v817 = vunpack.c.l.b16 %v169
  %v818 = vunpack.c.h.b16 %v169
  %v819 = vunpack.c.l.b16 %v170
  %v820 = vunpack.c.h.b16 %v170
  %v821 = vunpack.c.l.b16 %v171
  %v822 = vunpack.c.l.b16 %v172
  %v823 = vunpack.c.h.b16 %v172
  %v824 = vunpack.c.l.b16 %v173
  %v825 = vunpack.c.h.b16 %v173
  %v826 = vunpack.c.l.b16 %v174
  %v827 = vunpack.c.h.b16 %v174
  %v828 = vunpack.c.l.b16 %v175
  %v829 = vunpack.c.h.b16 %v175
  %v830 = vunpack.c.l.b16 %v176
  %v831 = vunpack.c.h.b16 %v176
  %v832 = vunpack.c.l.b16 %v177
  %v833 = vunpack.c.h.b16 %v177
  %v834 = vunpack.c.l.b16 %v178
  %v835 = vunpack.c.l.b16 %v179
  %v836 = vunpack.c.h.b16 %v179
  %v837 = vunpack.c.l.b16 %v180
  %v838 = vunpack.c.h.b16 %v180
  %v839 = vunpack.c.l.b16 %v181
  %v840 = vunpack.c.h.b16 %v181
  %v841 = vunpack.c.l.b16 %v182
  %v842 = vunpack.c.h.b16 %v182
  %v843 = vunpack.c.l.b16 %v183
  %v844 = vunpack.c.h.b16 %v183
  %v845 = vunpack.c.l.b16 %v184
  %v846 = vunpack.c.h.b16 %v184
  %v847 = vunpack.c.l.b16 %v185
  %v848 = vunpack.c.l.b16 %v186
  %v849 = vunpack.c.h.b16 %v186
  %v850 = vunpack.c.l.b16 %v187
  %v851 = vunpack.c.h.b16 %v187
  %v852 = vunpack.c.l.b16 %v188
  %v853 = vunpack.c.h.b16 %v188
  %v854 = vunpack.c.l.b16 %v189
  %v855 = vunpack.c.h.b16 %v189
  %v856 = vunpack.c.l.b16 %v190
  %v857 = vunpack.c.h.b16 %v190
  %v858 = vunpack.c.l.b16 %v191
  %v859 = vunpack.c.h.b16 %v191
  %v860 = vunpack.c.l.b16 %v192
  %v861 = vunpack.c.l.b16 %v193
  %v862 = vunpack.c.h.b16 %v193
  %v863 = vunpack.c.l.b16 %v194
  %v864 = vunpack.c.h.b16 %v194
  %v865 = vunpack.c.l.b16 %v195
  %v866 = vunpack.c.h.b16 %v195
  %v867 = vunpack.c.l.b16 %v196
  %v868 = vunpack.c.h.b16 %v196
  %v869 = vunpack.c.l.b16 %v197
  %v870 = vunpack.c.h.b16 %v197
  %v871 = vunpack.c.l.b16 %v198
  %v872 = vunpack.c.h.b16 %v198
  %v873 = vunpack.c.l.b16 %v199
  %v874 = vunpack.c.l.b16 %v200
  %v875 = vunpack.c.h.b16 %v200
  %v876 = vunpack.c.l.b16 %v201
  %v877 = vunpack.c.h.b16 %v201
  %v878 = vunpack.c.l.b16 %v202
  %v879 = vunpack.c.h.b16 %v202
  %v880 = vunpack.c.l.b16 %v203
  %v881 = vunpack.c.h.b16 %v203
  %v882 = vunpack.c.l.b16 %v204
  %v883 = vunpack.c.h.b16 %v204
  %v884 = vunpack.c.l.b16 %v205
  %v885 = vunpack.c.h.b16 %v205
  %v886 = vunpack.c.l.b16 %v206
  %v887 = vunpack.c.l.b16 %v207
  %v888 = vunpack.c.h.b16 %v207
  %v889 = vunpack.c.l.b16 %v208
  %v890 = vunpack.c.h.b16 %v208
  %v891 = vunpack.c.l.b16 %v209
  %v892 = vunpack.c.h.b16 %v209
  %v893 = vunpack.c.l.b16 %v210
  %v894 = vunpack.c.h.b16 %v210
  %v895 = vunpack.c.l.b16 %v211
  %v896 = vunpack.c.h.b16 %v211
  %v897 = vunpack.c.l.b16 %v212
  %v898 = vunpack.c.h.b16 %v212
  %v899 = vunpack.c.l.b16 %v213
  %v900 = vunpack.c.l.b16 %v214
  %v901 = vunpack.c.h.b16 %v214
  %v902 = vunpack.c.l.b16 %v215
  %v903 = vunpack.c.h.b16 %v215
  %v904 = vunpack.c.l.b16 %v216
  %v905 = vunpack.c.h.b16 %v216
  %v906 = vunpack.c.l.b16 %v217
  %v907 = vunpack.c.h.b16 %v217
  %v908 = vunpack.c.l.b16 %v218
  %v909 = vunpack.c.h.b16 %v218
  %v910 = vunpack.c.l.b16 %v219
  %v911 = vunpack.c.h.b16 %v219
  %v912 = vunpack.c.l.b16 %v220
  %v913 = vunpack.c.l.b16 %v221
  %v914 = vunpack.c.h.b16 %v221
  %v915 = vunpack.c.l.b16 %v222
  %v916 = vunpack.c.h.b16 %v222
  %v917 = vunpack.c.l.b16 %v223
  %v918 = vunpack.c.h.b16 %v223
  %v919 = vunpack.c.l.b16 %v224
  %v920 = vunpack.c.h.b16 %v224
  %v921 = vunpack.c.l.b16 %v225
  %v922 = vunpack.c.h.b16 %v225
  %v923 = vunpack.c.l.b16 %v226
  %v924 = vunpack.c.h.b16 %v226
  %v925 = vunpack.c.l.b16 %v227
  %v926 = vunpack.c.l.b16 %v228
  %v927 = vunpack.c.h.b16 %v228
  %v928 = vunpack.c.l.b16 %v229
  %v929 = vunpack.c.h.b16 %v229
  %v930 = vunpack.c.l.b16 %v230
  %v931 = vunpack.c.h.b16 %v230
  %v932 = vunpack.c.l.b16 %v231
  %v933 = vunpack.c.h.b16 %v231
  %v934 = vunpack.c.l.b16 %v232
  %v935 = vunpack.c.h.b16 %v232
  %v936 = vunpack.c.l.b16 %v233
  %v937 = vunpack.c.h.b16 %v233
  %v938 = vunpack.c.l.b16 %v234
  %v939 = vunpack.c.l.b16 %v235
  %v940 = vunpack.c.h.b16 %v235
  %v941 = vunpack.c.l.b16 %v236
  %v942 = vunpack.c.h.b16 %v236
  %v943 = vunpack.c.l.b16 %v237
  %v944 = vunpack.c.h.b16 %v237
  %v945 = vunpack.c.l.b16 %v238
  %v946 = vunpack.c.h.b16 %v238
  %v947 = vunpack.c.l.b16 %v239
  %v948 = vunpack.c.h.b16 %v239
  %v949 = vunpack.c.l.b16 %v240
  %v950 = vunpack.c.h.b16 %v240
  %v951 = vunpack.c.l.b16 %v241
  %v952 = vunpack.c.l.b16 %v242
  %v953 = vunpack.c.h.b16 %v242
  %v954 = vunpack.c.l.b16 %v243
  %v955 = vunpack.c.h.b16 %v243
  %v956 = vunpack.c.l.b16 %v244
  %v957 = vunpack.c.h.b16 %v244
  %v958 = vunpack.c.l.b16 %v245
  %v959 = vunpack.c.h.b16 %v245
  %v960 = vunpack.c.l.b16 %v246
  %v961 = vunpack.c.h.b16 %v246
  %v962 = vunpack.c.l.b16 %v247
  %v963 = vunpack.c.h.b16 %v247
  %v964 = vunpack.c.l.b16 %v248
  %v965 = vunpack.c.l.b16 %v249
  %v966 = vunpack.c.h.b16 %v249
  %v967 = vunpack.c.l.b16 %v250
  %v968 = vunpack.c.h.b16 %v250
  %v969 = vunpack.c.l.b16 %v251
  %v970 = vunpack.c.h.b16 %v251
  %v971 = vunpack.c.l.b16 %v252
  %v972 = vunpack.c.h.b16 %v252
  %v973 = vunpack.c.l.b16 %v253
  %v974 = vunpack.c.h.b16 %v253
  %v975 = vunpack.c.l.b16 %v254
  %v976 = vunpack.c.h.b16 %v254
  %v977 = vunpack.c.l.b16 %v255
  %v978 = vunpack.c.l.b16 %v256
  %v979 = vunpack.c.h.b16 %v256
  %v980 = vunpack.c.l.b16 %v257
  %v981 = vunpack.c.h.b16 %v257
  %v982 = vunpack.c.l.b16 %v258
  %v983 = vunpack.c.h.b16 %v258
  %v984 = vunpack.c.l.b16 %v259
  %v985 = vunpack.c.h.b16 %v259
  %v986 = vunpack.c.l.b16 %v260
  %v987 = vunpack.c.h.b16 %v260
  %v988 = vunpack.c.l.b16 %v261
  %v989 = vunpack.c.h.b16 %v261
  %v990 = vunpack.c.l.b16 %v262
  %v991 = vunpack.c.l.b16 %v263
  %v992 = vunpack.c.h.b16 %v263
  %v993 = vunpack.c.l.b16 %v264
  %v994 = vunpack.c.h.b16 %v264
  %v995 = vunpack.c.l.b16 %v265
  %v996 = vunpack.c.h.b16 %v265
  %v997 = vunpack.c.l.b16 %v266
  %v998 = vunpack.c.h.b16 %v266
  %v999 = vunpack.c.l.b16 %v267
  %v1000 = vunpack.c.h.b16 %v267
  %v1001 = vunpack.c.l.b16 %v268
  %v1002 = vunpack.c.h.b16 %v268
  %v1003 = vunpack.c.l.b16 %v269
  %v1004 = vpack.c.b16 %v549, %v536
  %v1005 = vpack.c.b16 %v550, %v537
  %v1006 = vpack.c.b16 %v551, %v538
  %v1007 = vpack.c.b16 %v552, %v539
  %v1008 = vpack.c.b16 %v553, %v540
  %v1009 = vpack.c.b16 %v554, %v541
  %v1010 = vpack.c.b16 %v555, %v542
  %v1011 = vpack.c.b16 %v556, %v543
  %v1012 = vpack.c.b16 %v557, %v544
  %v1013 = vpack.c.b16 %v558, %v545
  %v1014 = vpack.c.b16 %v559, %v546
  %v1015 = vpack.c.b16 %v560, %v547
  %v1016 = vpack.c.b16 %v561, %v548
  %v1017 = vpack.c.b16 %v575, %v562
  %v1018 = vpack.c.b16 %v576, %v563
  %v1019 = vpack.c.b16 %v577, %v564
  %v1020 = vpack.c.b16 %v578, %v565
  %v1021 = vpack.c.b16 %v579, %v566
  %v1022 = vpack.c.b16 %v580, %v567
  %v1023 = vpack.c.b16 %v581, %v568
  %v1024 = vpack.c.b16 %v582, %v569
  %v1025 = vpack.c.b16 %v583, %v570
  %v1026 = vpack.c.b16 %v584, %v571
  %v1027 = vpack.c.b16 %v585, %v572
  %v1028 = vpack.c.b16 %v586, %v573
  %v1029 = vpack.c.b16 %v587, %v574
  %v1030 = vpack.c.b16 %v601, %v588
  %v1031 = vpack.c.b16 %v602, %v589
  %v1032 = vpack.c.b16 %v603, %v590
  %v1033 = vpack.c.b16 %v604, %v591
  %v1034 = vpack.c.b16 %v605, %v592
  %v1035 = vpack.c.b16 %v606, %v593
  %v1036 = vpack.c.b16 %v607, %v594
  %v1037 = vpack.c.b16 %v608, %v595
  %v1038 = vpack.c.b16 %v609, %v596
  %v1039 = vpack.c.b16 %v610, %v597
  %v1040 = vpack.c.b16 %v611, %v598
  %v1041 = vpack.c.b16 %v612, %v599
  %v1042 = vpack.c.b16 %v613, %v600
  %v1043 = vpack.c.b16 %v627, %v614
  %v1044 = vpack.c.b16 %v628, %v615
  %v1045 = vpack.c.b16 %v629, %v616
  %v1046 = vpack.c.b16 %v630, %v617
  %v1047 = vpack.c.b16 %v631, %v618
  %v1048 = vpack.c.b16 %v632, %v619
  %v1049 = vpack.c.b16 %v633, %v620
  %v1050 = vpack.c.b16 %v634, %v621
  %v1051 = vpack.c.b16 %v635, %v622
  %v1052 = vpack.c.b16 %v636, %v623
  %v1053 = vpack.c.b16 %v637, %v624
  %v1054 = vpack.c.b16 %v638, %v625
  %v1055 = vpack.c.b16 %v639, %v626
  %v1056 = vpack.c.b16 %v653, %v640
  %v1057 = vpack.c.b16 %v654, %v641
  %v1058 = vpack.c.b16 %v655, %v642
  %v1059 = vpack.c.b16 %v656, %v643
  %v1060 = vpack.c.b16 %v657, %v644
  %v1061 = vpack.c.b16 %v658, %v645
  %v1062 = vpack.c.b16 %v659, %v646
  %v1063 = vpack.c.b16 %v660, %v647
  %v1064 = vpack.c.b16 %v661, %v648
  %v1065 = vpack.c.b16 %v662, %v649
  %v1066 = vpack.c.b16 %v663, %v650
  %v1067 = vpack.c.b16 %v664, %v651
  %v1068 = vpack.c.b16 %v665, %v652
  %v1069 = vpack.c.b16 %v679, %v666
  %v1070 = vpack.c.b16 %v680, %v667
  %v1071 = vpack.c.b16 %v681, %v668
  %v1072 = vpack.c.b16 %v682, %v669
  %v1073 = vpack.c.b16 %v683, %v670
  %v1074 = vpack.c.b16 %v684, %v671
  %v1075 = vpack.c.b16 %v685, %v672
  %v1076 = vpack.c.b16 %v686, %v673
  %v1077 = vpack.c.b16 %v687, %v674
  %v1078 = vpack.c.b16 %v688, %v675
  %v1079 = vpack.c.b16 %v689, %v676
  %v1080 = vpack.c.b16 %v690, %v677
  %v1081 = vpack.c.b16 %v691, %v678
  %v1082 = vpack.c.b16 %v705, %v692
  %v1083 = vpack.c.b16 %v706, %v693
  %v1084 = vpack.c.b16 %v707, %v694
  %v1085 = vpack.c.b16 %v708, %v695
  %v1086 = vpack.c.b16 %v709, %v696
  %v1087 = vpack.c.b16 %v710, %v697
  %v1088 = vpack.c.b16 %v711, %v698
  %v1089 = vpack.c.b16 %v712, %v699
  %v1090 = vpack.c.b16 %v713, %v700
  %v1091 = vpack.c.b16 %v714, %v701
  %v1092 = vpack.c.b16 %v715, %v702
  %v1093 = vpack.c.b16 %v716, %v703
  %v1094 = vpack.c.b16 %v717, %v704
  %v1095 = vpack.c.b16 %v731, %v718
  %v1096 = vpack.c.b16 %v732, %v719
  %v1097 = vpack.c.b16 %v733, %v720
  %v1098 = vpack.c.b16 %v734, %v721
  %v1099 = vpack.c.b16 %v735, %v722
  %v1100 = vpack.c.b16 %v736, %v723
  %v1101 = vpack.c.b16 %v737, %v724
  %v1102 = vpack.c.b16 %v738, %v725
  %v1103 = vpack.c.b16 %v739, %v726
  %v1104 = vpack.c.b16 %v740, %v727
  %v1105 = vpack.c.b16 %v741, %v728
  %v1106 = vpack.c.b16 %v742, %v729
  %v1107 = vpack.c.b16 %v743, %v730
  %v1108 = vpack.c.b16 %v757, %v744
  %v1109 = vpack.c.b16 %v758, %v745
  %v1110 = vpack.c.b16 %v759, %v746
  %v1111 = vpack.c.b16 %v760, %v747
  %v1112 = vpack.c.b16 %v761, %v748
  %v1113 = vpack.c.b16 %v762, %v749
  %v1114 = vpack.c.b16 %v763, %v750
  %v1115 = vpack.c.b16 %v764, %v751
  %v1116 = vpack.c.b16 %v765, %v752
  %v1117 = vpack.c.b16 %v766, %v753
  %v1118 = vpack.c.b16 %v767, %v754
  %v1119 = vpack.c.b16 %v768, %v755
  %v1120 = vpack.c.b16 %v769, %v756
  %v1121 = vpack.c.b16 %v783, %v770
  %v1122 = vpack.c.b16 %v784, %v771
  %v1123 = vpack.c.b16 %v785, %v772
  %v1124 = vpack.c.b16 %v786, %v773
  %v1125 = vpack.c.b16 %v787, %v774
  %v1126 = vpack.c.b16 %v788, %v775
  %v1127 = vpack.c.b16 %v789, %v776
  %v1128 = vpack.c.b16 %v790, %v777
  %v1129 = vpack.c.b16 %v791, %v778
  %v1130 = vpack.c.b16 %v792, %v779
  %v1131 = vpack.c.b16 %v793, %v780
  %v1132 = vpack.c.b16 %v794, %v781
  %v1133 = vpack.c.b16 %v795, %v782
  %v1134 = vpack.c.b16 %v809, %v796
  %v1135 = vpack.c.b16 %v810, %v797
  %v1136 = vpack.c.b16 %v811, %v798
  %v1137 = vpack.c.b16 %v812, %v799
  %v1138 = vpack.c.b16 %v813, %v800
  %v1139 = vpack.c.b16 %v814, %v801
  %v1140 = vpack.c.b16 %v815, %v802
  %v1141 = vpack.c.b16 %v816, %v803
  %v1142 = vpack.c.b16 %v817, %v804
  %v1143 = vpack.c.b16 %v818, %v805
  %v1144 = vpack.c.b16 %v819, %v806
  %v1145 = vpack.c.b16 %v820, %v807
  %v1146 = vpack.c.b16 %v821, %v808
  %v1147 = vpack.c.b16 %v835, %v822
  %v1148 = vpack.c.b16 %v836, %v823
  %v1149 = vpack.c.b16 %v837, %v824
  %v1150 = vpack.c.b16 %v838, %v825
  %v1151 = vpack.c.b16 %v839, %v826
  %v1152 = vpack.c.b16 %v840, %v827
  %v1153 = vpack.c.b16 %v841, %v828
  %v1154 = vpack.c.b16 %v842, %v829
  %v1155 = vpack.c.b16 %v843, %v830
  %v1156 = vpack.c.b16 %v844, %v831
  %v1157 = vpack.c.b16 %v845, %v832
  %v1158 = vpack.c.b16 %v846, %v833
  %v1159 = vpack.c.b16 %v847, %v834
  %v1160 = vpack.c.b16 %v861, %v848
  %v1161 = vpack.c.b16 %v862, %v849
  %v1162 = vpack.c.b16 %v863, %v850
  %v1163 = vpack.c.b16 %v864, %v851
  %v1164 = vpack.c.b16 %v865, %v852
  %v1165 = vpack.c.b16 %v866, %v853
  %v1166 = vpack.c.b16 %v867, %v854
  %v1167 = vpack.c.b16 %v868, %v855
  %v1168 = vpack.c.b16 %v869, %v856
  %v1169 = vpack.c.b16 %v870, %v857
  %v1170 = vpack.c.b16 %v871, %v858
  %v1171 = vpack.c.b16 %v872, %v859
  %v1172 = vpack.c.b16 %v873, %v860
  %v1173 = vpack.c.b16 %v887, %v874
  %v1174 = vpack.c.b16 %v888, %v875
  %v1175 = vpack.c.b16 %v889, %v876
  %v1176 = vpack.c.b16 %v890, %v877
  %v1177 = vpack.c.b16 %v891, %v878
  %v1178 = vpack.c.b16 %v892, %v879
  %v1179 = vpack.c.b16 %v893, %v880
  %v1180 = vpack.c.b16 %v894, %v881
  %v1181 = vpack.c.b16 %v895, %v882
  %v1182 = vpack.c.b16 %v896, %v883
  %v1183 = vpack.c.b16 %v897, %v884
  %v1184 = vpack.c.b16 %v898, %v885
  %v1185 = vpack.c.b16 %v899, %v886
  %v1186 = vpack.c.b16 %v913, %v900
  %v1187 = vpack.c.b16 %v914, %v901
  %v1188 = vpack.c.b16 %v915, %v902
  %v1189 = vpack.c.b16 %v916, %v903
  %v1190 = vpack.c.b16 %v917, %v904
  %v1191 = vpack.c.b16 %v918, %v905
  %v1192 = vpack.c.b16 %v919, %v906
  %v1193 = vpack.c.b16 %v920, %v907
  %v1194 = vpack.c.b16 %v921, %v908
  %v1195 = vpack.c.b16 %v922, %v909
  %v1196 = vpack.c.b16 %v923, %v910
  %v1197 = vpack.c.b16 %v924, %v911
  %v1198 = vpack.c.b16 %v925, %v912
  %v1199 = vpack.c.b16 %v939, %v926
  %v1200 = vpack.c.b16 %v940, %v927
  %v1201 = vpack.c.b16 %v941, %v928
  %v1202 = vpack.c.b16 %v942, %v929
  %v1203 = vpack.c.b16 %v943, %v930
  %v1204 = vpack.c.b16 %v944, %v931
  %v1205 = vpack.c.b16 %v945, %v932
  %v1206 = vpack.c.b16 %v946, %v933
  %v1207 = vpack.c.b16 %v947, %v934
  %v1208 = vpack.c.b16 %v948, %v935
  %v1209 = vpack.c.b16 %v949, %v936
  %v1210 = vpack.c.b16 %v950, %v937
  %v1211 = vpack.c.b16 %v951, %v938
  %v1212 = vpack.c.b16 %v965, %v952
  %v1213 = vpack.c.b16 %v966, %v953
  %v1214 = vpack.c.b16 %v967, %v954
  %v1215 = vpack.c.b16 %v968, %v955
  %v1216 = vpack.c.b16 %v969, %v956
  %v1217 = vpack.c.b16 %v970, %v957
  %v1218 = vpack.c.b16 %v971, %v958
  %v1219 = vpack.c.b16 %v972, %v959
  %v1220 = vpack.c.b16 %v973, %v960
  %v1221 = vpack.c.b16 %v974, %v961
  %v1222 = vpack.c.b16 %v975, %v962
  %v1223 = vpack.c.b16 %v976, %v963
  %v1224 = vpack.c.b16 %v977, %v964
  %v1225 = vpack.c.b16 %v991, %v978
  %v1226 = vpack.c.b16 %v992, %v979
  %v1227 = vpack.c.b16 %v993, %v980
  %v1228 = vpack.c.b16 %v994, %v981
  %v1229 = vpack.c.b16 %v995, %v982
  %v1230 = vpack.c.b16 %v996, %v983
  %v1231 = vpack.c.b16 %v997, %v984
  %v1232 = vpack.c.b16 %v998, %v985
  %v1233 = vpack.c.b16 %v999, %v986
  %v1234 = vpack.c.b16 %v1000, %v987
  %v1235 = vpack.c.b16 %v1001, %v988
  %v1236 = vpack.c.b16 %v1002, %v989
  %v1237 = vpack.c.b16 %v1003, %v990
  %vm1472 = vcmask 261120
  %v1473 = vsel %vm1472, %v281, 0
  %1475 = vmatpush.bf16.msra.mxu0 %v1095
  %1476 = vmatpush.bf16.msra.mxu0 %v1082
  %1477 = vmatpush.bf16.msra.mxu0 %v1069
  %1478 = vmatpush.bf16.msra.mxu0 %v1056
  %1479 = vmatpush.bf16.msra.mxu0 %v1043
  %1480 = vmatpush.bf16.msra.mxu0 %v1030
  %1481 = vmatpush.bf16.msra.mxu0 %v1017
  %1482 = vmatpush.bf16.msra.mxu0 %v1004
  %1483 = vmatmul.bf16.gmra.mxu0 %v279
  %v1484 = vpop.f32.mrf.mxu0
  %v1485 = vadd.f32 %v276, %v1484
  %v1486 = vpop.f32.mrf.mxu0
  %1487 = vdwg.mxu0
  %1488 = vmatpush.bf16.msra.mxu0 %v1199
  %1489 = vmatpush.bf16.msra.mxu0 %v1186
  %1490 = vmatpush.bf16.msra.mxu0 %v1173
  %1491 = vmatpush.bf16.msra.mxu0 %v1160
  %1492 = vmatpush.bf16.msra.mxu0 %v1147
  %1493 = vmatpush.bf16.msra.mxu0 %v1134
  %1494 = vmatpush.bf16.msra.mxu0 %v1121
  %1495 = vmatpush.bf16.msra.mxu0 %v1108
  %1496 = vmatmul.bf16.gmra.mxu0 %v280
  %v1497 = vpop.f32.mrf.mxu0
  %v1498 = vadd.f32 %v1485, %v1497
  %v1499 = vpop.f32.mrf.mxu0
  %1500 = vdwg.mxu0
  %1501 = vmatpush.bf16.msra.mxu0 0
  %1502 = vmatpush.bf16.msra.mxu0 0
  %1503 = vmatpush.bf16.msra.mxu0 0
  %1504 = vmatpush.bf16.msra.mxu0 0
  %1505 = vmatpush.bf16.msra.mxu0 0
  %1506 = vmatpush.bf16.msra.mxu0 0
  %1507 = vmatpush.bf16.msra.mxu0 %v1225
  %1508 = vmatpush.bf16.msra.mxu0 %v1212
  %1509 = vmatmul.bf16.gmra.mxu0 %v1473
  %v1510 = vpop.f32.mrf.mxu0
  %v1511 = vadd.f32 %v1498, %v1510
  %v1512 = vpop.f32.mrf.mxu0
  %1513 = vdwg.mxu0
  %1514 = vmatpush.bf16.msra.mxu0 %v1096
  %1515 = vmatpush.bf16.msra.mxu0 %v1083
  %1516 = vmatpush.bf16.msra.mxu0 %v1070
  %1517 = vmatpush.bf16.msra.mxu0 %v1057
  %1518 = vmatpush.bf16.msra.mxu0 %v1044
  %1519 = vmatpush.bf16.msra.mxu0 %v1031
  %1520 = vmatpush.bf16.msra.mxu0 %v1018
  %1521 = vmatpush.bf16.msra.mxu0 %v1005
  %1522 = vmatmul.bf16.gmra.mxu0 %v279
  %v1523 = vpop.f32.mrf.mxu0
  %v1524 = vadd.f32 %v276, %v1523
  %v1525 = vpop.f32.mrf.mxu0
  %1526 = vdwg.mxu0
  %1527 = vmatpush.bf16.msra.mxu0 %v1200
  %1528 = vmatpush.bf16.msra.mxu0 %v1187
  %1529 = vmatpush.bf16.msra.mxu0 %v1174
  %1530 = vmatpush.bf16.msra.mxu0 %v1161
  %1531 = vmatpush.bf16.msra.mxu0 %v1148
  %1532 = vmatpush.bf16.msra.mxu0 %v1135
  %1533 = vmatpush.bf16.msra.mxu0 %v1122
  %1534 = vmatpush.bf16.msra.mxu0 %v1109
  %1535 = vmatmul.bf16.gmra.mxu0 %v280
  %v1536 = vpop.f32.mrf.mxu0
  %v1537 = vadd.f32 %v1524, %v1536
  %v1538 = vpop.f32.mrf.mxu0
  %1539 = vdwg.mxu0
  %1540 = vmatpush.bf16.msra.mxu0 0
  %1541 = vmatpush.bf16.msra.mxu0 0
  %1542 = vmatpush.bf16.msra.mxu0 0
  %1543 = vmatpush.bf16.msra.mxu0 0
  %1544 = vmatpush.bf16.msra.mxu0 0
  %1545 = vmatpush.bf16.msra.mxu0 0
  %1546 = vmatpush.bf16.msra.mxu0 %v1226
  %1547 = vmatpush.bf16.msra.mxu0 %v1213
  %1548 = vmatmul.bf16.gmra.mxu0 %v1473
  %v1549 = vpop.f32.mrf.mxu0
  %v1550 = vadd.f32 %v1537, %v1549
  %v1551 = vpop.f32.mrf.mxu0
  %1552 = vdwg.mxu0
  %1553 = vmatpush.bf16.msra.mxu0 %v1097
  %1554 = vmatpush.bf16.msra.mxu0 %v1084
  %1555 = vmatpush.bf16.msra.mxu0 %v1071
  %1556 = vmatpush.bf16.msra.mxu0 %v1058
  %1557 = vmatpush.bf16.msra.mxu0 %v1045
  %1558 = vmatpush.bf16.msra.mxu0 %v1032
  %1559 = vmatpush.bf16.msra.mxu0 %v1019
  %1560 = vmatpush.bf16.msra.mxu0 %v1006
  %1561 = vmatmul.bf16.gmra.mxu0 %v279
  %v1562 = vpop.f32.mrf.mxu0
  %v1563 = vadd.f32 %v276, %v1562
  %v1564 = vpop.f32.mrf.mxu0
  %1565 = vdwg.mxu0
  %1566 = vmatpush.bf16.msra.mxu0 %v1201
  %1567 = vmatpush.bf16.msra.mxu0 %v1188
  %1568 = vmatpush.bf16.msra.mxu0 %v1175
  %1569 = vmatpush.bf16.msra.mxu0 %v1162
  %1570 = vmatpush.bf16.msra.mxu0 %v1149
  %1571 = vmatpush.bf16.msra.mxu0 %v1136
  %1572 = vmatpush.bf16.msra.mxu0 %v1123
  %1573 = vmatpush.bf16.msra.mxu0 %v1110
  %1574 = vmatmul.bf16.gmra.mxu0 %v280
  %v1575 = vpop.f32.mrf.mxu0
  %v1576 = vadd.f32 %v1563, %v1575
  %v1577 = vpop.f32.mrf.mxu0
  %1578 = vdwg.mxu0
  %1579 = vmatpush.bf16.msra.mxu0 0
  %1580 = vmatpush.bf16.msra.mxu0 0
  %1581 = vmatpush.bf16.msra.mxu0 0
  %1582 = vmatpush.bf16.msra.mxu0 0
  %1583 = vmatpush.bf16.msra.mxu0 0
  %1584 = vmatpush.bf16.msra.mxu0 0
  %1585 = vmatpush.bf16.msra.mxu0 %v1227
  %1586 = vmatpush.bf16.msra.mxu0 %v1214
  %1587 = vmatmul.bf16.gmra.mxu0 %v1473
  %v1588 = vpop.f32.mrf.mxu0
  %v1589 = vadd.f32 %v1576, %v1588
  %v1590 = vpop.f32.mrf.mxu0
  %1591 = vdwg.mxu0
  %1592 = vmatpush.bf16.msra.mxu0 %v1098
  %1593 = vmatpush.bf16.msra.mxu0 %v1085
  %1594 = vmatpush.bf16.msra.mxu0 %v1072
  %1595 = vmatpush.bf16.msra.mxu0 %v1059
  %1596 = vmatpush.bf16.msra.mxu0 %v1046
  %1597 = vmatpush.bf16.msra.mxu0 %v1033
  %1598 = vmatpush.bf16.msra.mxu0 %v1020
  %1599 = vmatpush.bf16.msra.mxu0 %v1007
  %1600 = vmatmul.bf16.gmra.mxu0 %v279
  %v1601 = vpop.f32.mrf.mxu0
  %v1602 = vadd.f32 %v276, %v1601
  %v1603 = vpop.f32.mrf.mxu0
  %1604 = vdwg.mxu0
  %1605 = vmatpush.bf16.msra.mxu0 %v1202
  %1606 = vmatpush.bf16.msra.mxu0 %v1189
  %1607 = vmatpush.bf16.msra.mxu0 %v1176
  %1608 = vmatpush.bf16.msra.mxu0 %v1163
  %1609 = vmatpush.bf16.msra.mxu0 %v1150
  %1610 = vmatpush.bf16.msra.mxu0 %v1137
  %1611 = vmatpush.bf16.msra.mxu0 %v1124
  %1612 = vmatpush.bf16.msra.mxu0 %v1111
  %1613 = vmatmul.bf16.gmra.mxu0 %v280
  %v1614 = vpop.f32.mrf.mxu0
  %v1615 = vadd.f32 %v1602, %v1614
  %v1616 = vpop.f32.mrf.mxu0
  %1617 = vdwg.mxu0
  %1618 = vmatpush.bf16.msra.mxu0 0
  %1619 = vmatpush.bf16.msra.mxu0 0
  %1620 = vmatpush.bf16.msra.mxu0 0
  %1621 = vmatpush.bf16.msra.mxu0 0
  %1622 = vmatpush.bf16.msra.mxu0 0
  %1623 = vmatpush.bf16.msra.mxu0 0
  %1624 = vmatpush.bf16.msra.mxu0 %v1228
  %1625 = vmatpush.bf16.msra.mxu0 %v1215
  %1626 = vmatmul.bf16.gmra.mxu0 %v1473
  %v1627 = vpop.f32.mrf.mxu0
  %v1628 = vadd.f32 %v1615, %v1627
  %v1629 = vpop.f32.mrf.mxu0
  %1630 = vdwg.mxu0
  %1631 = vmatpush.bf16.msra.mxu0 %v1099
  %1632 = vmatpush.bf16.msra.mxu0 %v1086
  %1633 = vmatpush.bf16.msra.mxu0 %v1073
  %1634 = vmatpush.bf16.msra.mxu0 %v1060
  %1635 = vmatpush.bf16.msra.mxu0 %v1047
  %1636 = vmatpush.bf16.msra.mxu0 %v1034
  %1637 = vmatpush.bf16.msra.mxu0 %v1021
  %1638 = vmatpush.bf16.msra.mxu0 %v1008
  %1639 = vmatmul.bf16.gmra.mxu0 %v279
  %v1640 = vpop.f32.mrf.mxu0
  %v1641 = vadd.f32 %v276, %v1640
  %v1642 = vpop.f32.mrf.mxu0
  %1643 = vdwg.mxu0
  %1644 = vmatpush.bf16.msra.mxu0 %v1203
  %1645 = vmatpush.bf16.msra.mxu0 %v1190
  %1646 = vmatpush.bf16.msra.mxu0 %v1177
  %1647 = vmatpush.bf16.msra.mxu0 %v1164
  %1648 = vmatpush.bf16.msra.mxu0 %v1151
  %1649 = vmatpush.bf16.msra.mxu0 %v1138
  %1650 = vmatpush.bf16.msra.mxu0 %v1125
  %1651 = vmatpush.bf16.msra.mxu0 %v1112
  %1652 = vmatmul.bf16.gmra.mxu0 %v280
  %v1653 = vpop.f32.mrf.mxu0
  %v1654 = vadd.f32 %v1641, %v1653
  %v1655 = vpop.f32.mrf.mxu0
  %1656 = vdwg.mxu0
  %1657 = vmatpush.bf16.msra.mxu0 0
  %1658 = vmatpush.bf16.msra.mxu0 0
  %1659 = vmatpush.bf16.msra.mxu0 0
  %1660 = vmatpush.bf16.msra.mxu0 0
  %1661 = vmatpush.bf16.msra.mxu0 0
  %1662 = vmatpush.bf16.msra.mxu0 0
  %1663 = vmatpush.bf16.msra.mxu0 %v1229
  %1664 = vmatpush.bf16.msra.mxu0 %v1216
  %1665 = vmatmul.bf16.gmra.mxu0 %v1473
  %v1666 = vpop.f32.mrf.mxu0
  %v1667 = vadd.f32 %v1654, %v1666
  %v1668 = vpop.f32.mrf.mxu0
  %1669 = vdwg.mxu0
  %1670 = vmatpush.bf16.msra.mxu0 %v1100
  %1671 = vmatpush.bf16.msra.mxu0 %v1087
  %1672 = vmatpush.bf16.msra.mxu0 %v1074
  %1673 = vmatpush.bf16.msra.mxu0 %v1061
  %1674 = vmatpush.bf16.msra.mxu0 %v1048
  %1675 = vmatpush.bf16.msra.mxu0 %v1035
  %1676 = vmatpush.bf16.msra.mxu0 %v1022
  %1677 = vmatpush.bf16.msra.mxu0 %v1009
  %1678 = vmatmul.bf16.gmra.mxu0 %v279
  %v1679 = vpop.f32.mrf.mxu0
  %v1680 = vadd.f32 %v276, %v1679
  %v1681 = vpop.f32.mrf.mxu0
  %1682 = vdwg.mxu0
  %1683 = vmatpush.bf16.msra.mxu0 %v1204
  %1684 = vmatpush.bf16.msra.mxu0 %v1191
  %1685 = vmatpush.bf16.msra.mxu0 %v1178
  %1686 = vmatpush.bf16.msra.mxu0 %v1165
  %1687 = vmatpush.bf16.msra.mxu0 %v1152
  %1688 = vmatpush.bf16.msra.mxu0 %v1139
  %1689 = vmatpush.bf16.msra.mxu0 %v1126
  %1690 = vmatpush.bf16.msra.mxu0 %v1113
  %1691 = vmatmul.bf16.gmra.mxu0 %v280
  %v1692 = vpop.f32.mrf.mxu0
  %v1693 = vadd.f32 %v1680, %v1692
  %v1694 = vpop.f32.mrf.mxu0
  %1695 = vdwg.mxu0
  %1696 = vmatpush.bf16.msra.mxu0 0
  %1697 = vmatpush.bf16.msra.mxu0 0
  %1698 = vmatpush.bf16.msra.mxu0 0
  %1699 = vmatpush.bf16.msra.mxu0 0
  %1700 = vmatpush.bf16.msra.mxu0 0
  %1701 = vmatpush.bf16.msra.mxu0 0
  %1702 = vmatpush.bf16.msra.mxu0 %v1230
  %1703 = vmatpush.bf16.msra.mxu0 %v1217
  %1704 = vmatmul.bf16.gmra.mxu0 %v1473
  %v1705 = vpop.f32.mrf.mxu0
  %v1706 = vadd.f32 %v1693, %v1705
  %v1707 = vpop.f32.mrf.mxu0
  %1708 = vdwg.mxu0
  %1709 = vmatpush.bf16.msra.mxu0 %v1101
  %1710 = vmatpush.bf16.msra.mxu0 %v1088
  %1711 = vmatpush.bf16.msra.mxu0 %v1075
  %1712 = vmatpush.bf16.msra.mxu0 %v1062
  %1713 = vmatpush.bf16.msra.mxu0 %v1049
  %1714 = vmatpush.bf16.msra.mxu0 %v1036
  %1715 = vmatpush.bf16.msra.mxu0 %v1023
  %1716 = vmatpush.bf16.msra.mxu0 %v1010
  %1717 = vmatmul.bf16.gmra.mxu0 %v279
  %v1718 = vpop.f32.mrf.mxu0
  %v1719 = vadd.f32 %v276, %v1718
  %v1720 = vpop.f32.mrf.mxu0
  %1721 = vdwg.mxu0
  %1722 = vmatpush.bf16.msra.mxu0 %v1205
  %1723 = vmatpush.bf16.msra.mxu0 %v1192
  %1724 = vmatpush.bf16.msra.mxu0 %v1179
  %1725 = vmatpush.bf16.msra.mxu0 %v1166
  %1726 = vmatpush.bf16.msra.mxu0 %v1153
  %1727 = vmatpush.bf16.msra.mxu0 %v1140
  %1728 = vmatpush.bf16.msra.mxu0 %v1127
  %1729 = vmatpush.bf16.msra.mxu0 %v1114
  %1730 = vmatmul.bf16.gmra.mxu0 %v280
  %v1731 = vpop.f32.mrf.mxu0
  %v1732 = vadd.f32 %v1719, %v1731
  %v1733 = vpop.f32.mrf.mxu0
  %1734 = vdwg.mxu0
  %1735 = vmatpush.bf16.msra.mxu0 0
  %1736 = vmatpush.bf16.msra.mxu0 0
  %1737 = vmatpush.bf16.msra.mxu0 0
  %1738 = vmatpush.bf16.msra.mxu0 0
  %1739 = vmatpush.bf16.msra.mxu0 0
  %1740 = vmatpush.bf16.msra.mxu0 0
  %1741 = vmatpush.bf16.msra.mxu0 %v1231
  %1742 = vmatpush.bf16.msra.mxu0 %v1218
  %1743 = vmatmul.bf16.gmra.mxu0 %v1473
  %v1744 = vpop.f32.mrf.mxu0
  %v1745 = vadd.f32 %v1732, %v1744
  %v1746 = vpop.f32.mrf.mxu0
  %1747 = vdwg.mxu0
  %1748 = vmatpush.bf16.msra.mxu0 %v1102
  %1749 = vmatpush.bf16.msra.mxu0 %v1089
  %1750 = vmatpush.bf16.msra.mxu0 %v1076
  %1751 = vmatpush.bf16.msra.mxu0 %v1063
  %1752 = vmatpush.bf16.msra.mxu0 %v1050
  %1753 = vmatpush.bf16.msra.mxu0 %v1037
  %1754 = vmatpush.bf16.msra.mxu0 %v1024
  %1755 = vmatpush.bf16.msra.mxu0 %v1011
  %1756 = vmatmul.bf16.gmra.mxu0 %v279
  %v1757 = vpop.f32.mrf.mxu0
  %v1758 = vadd.f32 %v276, %v1757
  %v1759 = vpop.f32.mrf.mxu0
  %1760 = vdwg.mxu0
  %1761 = vmatpush.bf16.msra.mxu0 %v1206
  %1762 = vmatpush.bf16.msra.mxu0 %v1193
  %1763 = vmatpush.bf16.msra.mxu0 %v1180
  %1764 = vmatpush.bf16.msra.mxu0 %v1167
  %1765 = vmatpush.bf16.msra.mxu0 %v1154
  %1766 = vmatpush.bf16.msra.mxu0 %v1141
  %1767 = vmatpush.bf16.msra.mxu0 %v1128
  %1768 = vmatpush.bf16.msra.mxu0 %v1115
  %1769 = vmatmul.bf16.gmra.mxu0 %v280
  %v1770 = vpop.f32.mrf.mxu0
  %v1771 = vadd.f32 %v1758, %v1770
  %v1772 = vpop.f32.mrf.mxu0
  %1773 = vdwg.mxu0
  %1774 = vmatpush.bf16.msra.mxu0 0
  %1775 = vmatpush.bf16.msra.mxu0 0
  %1776 = vmatpush.bf16.msra.mxu0 0
  %1777 = vmatpush.bf16.msra.mxu0 0
  %1778 = vmatpush.bf16.msra.mxu0 0
  %1779 = vmatpush.bf16.msra.mxu0 0
  %1780 = vmatpush.bf16.msra.mxu0 %v1232
  %1781 = vmatpush.bf16.msra.mxu0 %v1219
  %1782 = vmatmul.bf16.gmra.mxu0 %v1473
  %v1783 = vpop.f32.mrf.mxu0
  %v1784 = vadd.f32 %v1771, %v1783
  %v1785 = vpop.f32.mrf.mxu0
  %1786 = vdwg.mxu0
  %1787 = vmatpush.bf16.msra.mxu0 %v1103
  %1788 = vmatpush.bf16.msra.mxu0 %v1090
  %1789 = vmatpush.bf16.msra.mxu0 %v1077
  %1790 = vmatpush.bf16.msra.mxu0 %v1064
  %1791 = vmatpush.bf16.msra.mxu0 %v1051
  %1792 = vmatpush.bf16.msra.mxu0 %v1038
  %1793 = vmatpush.bf16.msra.mxu0 %v1025
  %1794 = vmatpush.bf16.msra.mxu0 %v1012
  %1795 = vmatmul.bf16.gmra.mxu0 %v279
  %v1796 = vpop.f32.mrf.mxu0
  %v1797 = vadd.f32 %v276, %v1796
  %v1798 = vpop.f32.mrf.mxu0
  %1799 = vdwg.mxu0
  %1800 = vmatpush.bf16.msra.mxu0 %v1207
  %1801 = vmatpush.bf16.msra.mxu0 %v1194
  %1802 = vmatpush.bf16.msra.mxu0 %v1181
  %1803 = vmatpush.bf16.msra.mxu0 %v1168
  %1804 = vmatpush.bf16.msra.mxu0 %v1155
  %1805 = vmatpush.bf16.msra.mxu0 %v1142
  %1806 = vmatpush.bf16.msra.mxu0 %v1129
  %1807 = vmatpush.bf16.msra.mxu0 %v1116
  %1808 = vmatmul.bf16.gmra.mxu0 %v280
  %v1809 = vpop.f32.mrf.mxu0
  %v1810 = vadd.f32 %v1797, %v1809
  %v1811 = vpop.f32.mrf.mxu0
  %1812 = vdwg.mxu0
  %1813 = vmatpush.bf16.msra.mxu0 0
  %1814 = vmatpush.bf16.msra.mxu0 0
  %1815 = vmatpush.bf16.msra.mxu0 0
  %1816 = vmatpush.bf16.msra.mxu0 0
  %1817 = vmatpush.bf16.msra.mxu0 0
  %1818 = vmatpush.bf16.msra.mxu0 0
  %1819 = vmatpush.bf16.msra.mxu0 %v1233
  %1820 = vmatpush.bf16.msra.mxu0 %v1220
  %1821 = vmatmul.bf16.gmra.mxu0 %v1473
  %v1822 = vpop.f32.mrf.mxu0
  %v1823 = vadd.f32 %v1810, %v1822
  %v1824 = vpop.f32.mrf.mxu0
  %1825 = vdwg.mxu0
  %1826 = vmatpush.bf16.msra.mxu0 %v1104
  %1827 = vmatpush.bf16.msra.mxu0 %v1091
  %1828 = vmatpush.bf16.msra.mxu0 %v1078
  %1829 = vmatpush.bf16.msra.mxu0 %v1065
  %1830 = vmatpush.bf16.msra.mxu0 %v1052
  %1831 = vmatpush.bf16.msra.mxu0 %v1039
  %1832 = vmatpush.bf16.msra.mxu0 %v1026
  %1833 = vmatpush.bf16.msra.mxu0 %v1013
  %1834 = vmatmul.bf16.gmra.mxu0 %v279
  %v1835 = vpop.f32.mrf.mxu0
  %v1836 = vadd.f32 %v276, %v1835
  %v1837 = vpop.f32.mrf.mxu0
  %1838 = vdwg.mxu0
  %1839 = vmatpush.bf16.msra.mxu0 %v1208
  %1840 = vmatpush.bf16.msra.mxu0 %v1195
  %1841 = vmatpush.bf16.msra.mxu0 %v1182
  %1842 = vmatpush.bf16.msra.mxu0 %v1169
  %1843 = vmatpush.bf16.msra.mxu0 %v1156
  %1844 = vmatpush.bf16.msra.mxu0 %v1143
  %1845 = vmatpush.bf16.msra.mxu0 %v1130
  %1846 = vmatpush.bf16.msra.mxu0 %v1117
  %1847 = vmatmul.bf16.gmra.mxu0 %v280
  %v1848 = vpop.f32.mrf.mxu0
  %v1849 = vadd.f32 %v1836, %v1848
  %v1850 = vpop.f32.mrf.mxu0
  %1851 = vdwg.mxu0
  %1852 = vmatpush.bf16.msra.mxu0 0
  %1853 = vmatpush.bf16.msra.mxu0 0
  %1854 = vmatpush.bf16.msra.mxu0 0
  %1855 = vmatpush.bf16.msra.mxu0 0
  %1856 = vmatpush.bf16.msra.mxu0 0
  %1857 = vmatpush.bf16.msra.mxu0 0
  %1858 = vmatpush.bf16.msra.mxu0 %v1234
  %1859 = vmatpush.bf16.msra.mxu0 %v1221
  %1860 = vmatmul.bf16.gmra.mxu0 %v1473
  %v1861 = vpop.f32.mrf.mxu0
  %v1862 = vadd.f32 %v1849, %v1861
  %v1863 = vpop.f32.mrf.mxu0
  %1864 = vdwg.mxu0
  %1865 = vmatpush.bf16.msra.mxu0 %v1105
  %1866 = vmatpush.bf16.msra.mxu0 %v1092
  %1867 = vmatpush.bf16.msra.mxu0 %v1079
  %1868 = vmatpush.bf16.msra.mxu0 %v1066
  %1869 = vmatpush.bf16.msra.mxu0 %v1053
  %1870 = vmatpush.bf16.msra.mxu0 %v1040
  %1871 = vmatpush.bf16.msra.mxu0 %v1027
  %1872 = vmatpush.bf16.msra.mxu0 %v1014
  %1873 = vmatmul.bf16.gmra.mxu0 %v279
  %v1874 = vpop.f32.mrf.mxu0
  %v1875 = vadd.f32 %v276, %v1874
  %v1876 = vpop.f32.mrf.mxu0
  %1877 = vdwg.mxu0
  %1878 = vmatpush.bf16.msra.mxu0 %v1209
  %1879 = vmatpush.bf16.msra.mxu0 %v1196
  %1880 = vmatpush.bf16.msra.mxu0 %v1183
  %1881 = vmatpush.bf16.msra.mxu0 %v1170
  %1882 = vmatpush.bf16.msra.mxu0 %v1157
  %1883 = vmatpush.bf16.msra.mxu0 %v1144
  %1884 = vmatpush.bf16.msra.mxu0 %v1131
  %1885 = vmatpush.bf16.msra.mxu0 %v1118
  %1886 = vmatmul.bf16.gmra.mxu0 %v280
  %v1887 = vpop.f32.mrf.mxu0
  %v1888 = vadd.f32 %v1875, %v1887
  %v1889 = vpop.f32.mrf.mxu0
  %1890 = vdwg.mxu0
  %1891 = vmatpush.bf16.msra.mxu0 0
  %1892 = vmatpush.bf16.msra.mxu0 0
  %1893 = vmatpush.bf16.msra.mxu0 0
  %1894 = vmatpush.bf16.msra.mxu0 0
  %1895 = vmatpush.bf16.msra.mxu0 0
  %1896 = vmatpush.bf16.msra.mxu0 0
  %1897 = vmatpush.bf16.msra.mxu0 %v1235
  %1898 = vmatpush.bf16.msra.mxu0 %v1222
  %1899 = vmatmul.bf16.gmra.mxu0 %v1473
  %v1900 = vpop.f32.mrf.mxu0
  %v1901 = vadd.f32 %v1888, %v1900
  %v1902 = vpop.f32.mrf.mxu0
  %1903 = vdwg.mxu0
  %1904 = vmatpush.bf16.msra.mxu0 %v1106
  %1905 = vmatpush.bf16.msra.mxu0 %v1093
  %1906 = vmatpush.bf16.msra.mxu0 %v1080
  %1907 = vmatpush.bf16.msra.mxu0 %v1067
  %1908 = vmatpush.bf16.msra.mxu0 %v1054
  %1909 = vmatpush.bf16.msra.mxu0 %v1041
  %1910 = vmatpush.bf16.msra.mxu0 %v1028
  %1911 = vmatpush.bf16.msra.mxu0 %v1015
  %1912 = vmatmul.bf16.gmra.mxu0 %v279
  %v1913 = vpop.f32.mrf.mxu0
  %v1914 = vadd.f32 %v276, %v1913
  %v1915 = vpop.f32.mrf.mxu0
  %1916 = vdwg.mxu0
  %1917 = vmatpush.bf16.msra.mxu0 %v1210
  %1918 = vmatpush.bf16.msra.mxu0 %v1197
  %1919 = vmatpush.bf16.msra.mxu0 %v1184
  %1920 = vmatpush.bf16.msra.mxu0 %v1171
  %1921 = vmatpush.bf16.msra.mxu0 %v1158
  %1922 = vmatpush.bf16.msra.mxu0 %v1145
  %1923 = vmatpush.bf16.msra.mxu0 %v1132
  %1924 = vmatpush.bf16.msra.mxu0 %v1119
  %1925 = vmatmul.bf16.gmra.mxu0 %v280
  %v1926 = vpop.f32.mrf.mxu0
  %v1927 = vadd.f32 %v1914, %v1926
  %v1928 = vpop.f32.mrf.mxu0
  %1929 = vdwg.mxu0
  %1930 = vmatpush.bf16.msra.mxu0 0
  %1931 = vmatpush.bf16.msra.mxu0 0
  %1932 = vmatpush.bf16.msra.mxu0 0
  %1933 = vmatpush.bf16.msra.mxu0 0
  %1934 = vmatpush.bf16.msra.mxu0 0
  %1935 = vmatpush.bf16.msra.mxu0 0
  %1936 = vmatpush.bf16.msra.mxu0 %v1236
  %1937 = vmatpush.bf16.msra.mxu0 %v1223
  %1938 = vmatmul.bf16.gmra.mxu0 %v1473
  %v1939 = vpop.f32.mrf.mxu0
  %v1940 = vadd.f32 %v1927, %v1939
  %v1941 = vpop.f32.mrf.mxu0
  %1942 = vdwg.mxu0
  %1943 = vmatpush.bf16.msra.mxu0 %v1107
  %1944 = vmatpush.bf16.msra.mxu0 %v1094
  %1945 = vmatpush.bf16.msra.mxu0 %v1081
  %1946 = vmatpush.bf16.msra.mxu0 %v1068
  %1947 = vmatpush.bf16.msra.mxu0 %v1055
  %1948 = vmatpush.bf16.msra.mxu0 %v1042
  %1949 = vmatpush.bf16.msra.mxu0 %v1029
  %1950 = vmatpush.bf16.msra.mxu0 %v1016
  %1951 = vmatmul.bf16.gmra.mxu0 %v279
  %v1952 = vpop.f32.mrf.mxu0
  %v1953 = vadd.f32 %v276, %v1952
  %v1954 = vpop.f32.mrf.mxu0
  %1955 = vdwg.mxu0
  %1956 = vmatpush.bf16.msra.mxu0 %v1211
  %1957 = vmatpush.bf16.msra.mxu0 %v1198
  %1958 = vmatpush.bf16.msra.mxu0 %v1185
  %1959 = vmatpush.bf16.msra.mxu0 %v1172
  %1960 = vmatpush.bf16.msra.mxu0 %v1159
  %1961 = vmatpush.bf16.msra.mxu0 %v1146
  %1962 = vmatpush.bf16.msra.mxu0 %v1133
  %1963 = vmatpush.bf16.msra.mxu0 %v1120
  %1964 = vmatmul.bf16.gmra.mxu0 %v280
  %v1965 = vpop.f32.mrf.mxu0
  %v1966 = vadd.f32 %v1953, %v1965
  %v1967 = vpop.f32.mrf.mxu0
  %1968 = vdwg.mxu0
  %1969 = vmatpush.bf16.msra.mxu0 0
  %1970 = vmatpush.bf16.msra.mxu0 0
  %1971 = vmatpush.bf16.msra.mxu0 0
  %1972 = vmatpush.bf16.msra.mxu0 0
  %1973 = vmatpush.bf16.msra.mxu0 0
  %1974 = vmatpush.bf16.msra.mxu0 0
  %1975 = vmatpush.bf16.msra.mxu0 %v1237
  %1976 = vmatpush.bf16.msra.mxu0 %v1224
  %1977 = vmatmul.bf16.gmra.mxu0 %v1473
  %v1978 = vpop.f32.mrf.mxu0
  %v1979 = vadd.f32 %v1966, %v1978
  %v1980 = vpop.f32.mrf.mxu0
  %1981 = vdwg.mxu0
  %v1982 = vxor.u32 %v1511, 2147483648
  %v1983 = vxor.u32 %v1550, 2147483648
  %v1984 = vxor.u32 %v1589, 2147483648
  %v1985 = vxor.u32 %v1628, 2147483648
  %v1986 = vxor.u32 %v1667, 2147483648
  %v1987 = vxor.u32 %v1706, 2147483648
  %v1988 = vxor.u32 %v1745, 2147483648
  %v1989 = vxor.u32 %v1784, 2147483648
  %v1990 = vxor.u32 %v1823, 2147483648
  %v1991 = vxor.u32 %v1862, 2147483648
  %v1992 = vxor.u32 %v1901, 2147483648
  %v1993 = vxor.u32 %v1940, 2147483648
  %v1994 = vxor.u32 %v1979, 2147483648
  %v1995 = vmul.f32 %v1982, 1.442695
  %v1996 = vpow.pop %v1995
  %v1997 = vmul.f32 %v1983, 1.442695
  %v1998 = vpow.pop %v1997
  %v1999 = vmul.f32 %v1984, 1.442695
  %v2000 = vpow.pop %v1999
  %v2001 = vmul.f32 %v1985, 1.442695
  %v2002 = vpow.pop %v2001
  %v2003 = vmul.f32 %v1986, 1.442695
  %v2004 = vpow.pop %v2003
  %v2005 = vmul.f32 %v1987, 1.442695
  %v2006 = vpow.pop %v2005
  %v2007 = vmul.f32 %v1988, 1.442695
  %v2008 = vpow.pop %v2007
  %v2009 = vmul.f32 %v1989, 1.442695
  %v2010 = vpow.pop %v2009
  %v2011 = vmul.f32 %v1990, 1.442695
  %v2012 = vpow.pop %v2011
  %v2013 = vmul.f32 %v1991, 1.442695
  %v2014 = vpow.pop %v2013
  %v2015 = vmul.f32 %v1992, 1.442695
  %v2016 = vpow.pop %v2015
  %v2017 = vmul.f32 %v1993, 1.442695
  %v2018 = vpow.pop %v2017
  %v2019 = vmul.f32 %v1994, 1.442695
  %v2020 = vpow.pop %v2019
  %v2021 = vadd.f32 %v1996, 1.0
  %v2022 = vadd.f32 %v1998, 1.0
  %v2023 = vadd.f32 %v2000, 1.0
  %v2024 = vadd.f32 %v2002, 1.0
  %v2025 = vadd.f32 %v2004, 1.0
  %v2026 = vadd.f32 %v2006, 1.0
  %v2027 = vadd.f32 %v2008, 1.0
  %v2028 = vadd.f32 %v2010, 1.0
  %v2029 = vadd.f32 %v2012, 1.0
  %v2030 = vadd.f32 %v2014, 1.0
  %v2031 = vadd.f32 %v2016, 1.0
  %v2032 = vadd.f32 %v2018, 1.0
  %v2033 = vadd.f32 %v2020, 1.0
  %v2034 = vrcp.pop %v2021
  %v2035 = vmul.f32 %v2021, %v2034
  %v2036 = vsub.f32 1.0, %v2035
  %v2037 = vmul.f32 %v2034, %v2036
  %v2038 = vadd.f32 %v2034, %v2037
  %vm2039 = vweird.f32 %v2021
  %vm2040 = vweird.f32 %v2034
  %vm2041 = vmor %vm2039, %vm2040
  %v2042 = vsel %vm2041, %v2034, %v2038
  %v2043 = vand.u32 2147483647, %v2021
  %vm2044 = vcmp.eq.f32.partialorder %v2043, 8.507059e+37
  %v2045 = vand.u32 %v2021, 2147483648
  %v2046 = vor.u32 1.1754944e-38, %v2045
  %v2047 = vsel %vm2044, %v2046, %v2042
  %v2048 = vmul.f32 1.0, %v2047
  %v2049 = vrcp.pop %v2022
  %v2050 = vmul.f32 %v2022, %v2049
  %v2051 = vsub.f32 1.0, %v2050
  %v2052 = vmul.f32 %v2049, %v2051
  %v2053 = vadd.f32 %v2049, %v2052
  %vm2054 = vweird.f32 %v2022
  %vm2055 = vweird.f32 %v2049
  %vm2056 = vmor %vm2054, %vm2055
  %v2057 = vsel %vm2056, %v2049, %v2053
  %v2058 = vand.u32 2147483647, %v2022
  %vm2059 = vcmp.eq.f32.partialorder %v2058, 8.507059e+37
  %v2060 = vand.u32 %v2022, 2147483648
  %v2061 = vor.u32 1.1754944e-38, %v2060
  %v2062 = vsel %vm2059, %v2061, %v2057
  %v2063 = vmul.f32 1.0, %v2062
  %v2064 = vrcp.pop %v2023
  %v2065 = vmul.f32 %v2023, %v2064
  %v2066 = vsub.f32 1.0, %v2065
  %v2067 = vmul.f32 %v2064, %v2066
  %v2068 = vadd.f32 %v2064, %v2067
  %vm2069 = vweird.f32 %v2023
  %vm2070 = vweird.f32 %v2064
  %vm2071 = vmor %vm2069, %vm2070
  %v2072 = vsel %vm2071, %v2064, %v2068
  %v2073 = vand.u32 2147483647, %v2023
  %vm2074 = vcmp.eq.f32.partialorder %v2073, 8.507059e+37
  %v2075 = vand.u32 %v2023, 2147483648
  %v2076 = vor.u32 1.1754944e-38, %v2075
  %v2077 = vsel %vm2074, %v2076, %v2072
  %v2078 = vmul.f32 1.0, %v2077
  %v2079 = vrcp.pop %v2024
  %v2080 = vmul.f32 %v2024, %v2079
  %v2081 = vsub.f32 1.0, %v2080
  %v2082 = vmul.f32 %v2079, %v2081
  %v2083 = vadd.f32 %v2079, %v2082
  %vm2084 = vweird.f32 %v2024
  %vm2085 = vweird.f32 %v2079
  %vm2086 = vmor %vm2084, %vm2085
  %v2087 = vsel %vm2086, %v2079, %v2083
  %v2088 = vand.u32 2147483647, %v2024
  %vm2089 = vcmp.eq.f32.partialorder %v2088, 8.507059e+37
  %v2090 = vand.u32 %v2024, 2147483648
  %v2091 = vor.u32 1.1754944e-38, %v2090
  %v2092 = vsel %vm2089, %v2091, %v2087
  %v2093 = vmul.f32 1.0, %v2092
  %v2094 = vrcp.pop %v2025
  %v2095 = vmul.f32 %v2025, %v2094
  %v2096 = vsub.f32 1.0, %v2095
  %v2097 = vmul.f32 %v2094, %v2096
  %v2098 = vadd.f32 %v2094, %v2097
  %vm2099 = vweird.f32 %v2025
  %vm2100 = vweird.f32 %v2094
  %vm2101 = vmor %vm2099, %vm2100
  %v2102 = vsel %vm2101, %v2094, %v2098
  %v2103 = vand.u32 2147483647, %v2025
  %vm2104 = vcmp.eq.f32.partialorder %v2103, 8.507059e+37
  %v2105 = vand.u32 %v2025, 2147483648
  %v2106 = vor.u32 1.1754944e-38, %v2105
  %v2107 = vsel %vm2104, %v2106, %v2102
  %v2108 = vmul.f32 1.0, %v2107
  %v2109 = vrcp.pop %v2026
  %v2110 = vmul.f32 %v2026, %v2109
  %v2111 = vsub.f32 1.0, %v2110
  %v2112 = vmul.f32 %v2109, %v2111
  %v2113 = vadd.f32 %v2109, %v2112
  %vm2114 = vweird.f32 %v2026
  %vm2115 = vweird.f32 %v2109
  %vm2116 = vmor %vm2114, %vm2115
  %v2117 = vsel %vm2116, %v2109, %v2113
  %v2118 = vand.u32 2147483647, %v2026
  %vm2119 = vcmp.eq.f32.partialorder %v2118, 8.507059e+37
  %v2120 = vand.u32 %v2026, 2147483648
  %v2121 = vor.u32 1.1754944e-38, %v2120
  %v2122 = vsel %vm2119, %v2121, %v2117
  %v2123 = vmul.f32 1.0, %v2122
  %v2124 = vrcp.pop %v2027
  %v2125 = vmul.f32 %v2027, %v2124
  %v2126 = vsub.f32 1.0, %v2125
  %v2127 = vmul.f32 %v2124, %v2126
  %v2128 = vadd.f32 %v2124, %v2127
  %vm2129 = vweird.f32 %v2027
  %vm2130 = vweird.f32 %v2124
  %vm2131 = vmor %vm2129, %vm2130
  %v2132 = vsel %vm2131, %v2124, %v2128
  %v2133 = vand.u32 2147483647, %v2027
  %vm2134 = vcmp.eq.f32.partialorder %v2133, 8.507059e+37
  %v2135 = vand.u32 %v2027, 2147483648
  %v2136 = vor.u32 1.1754944e-38, %v2135
  %v2137 = vsel %vm2134, %v2136, %v2132
  %v2138 = vmul.f32 1.0, %v2137
  %v2139 = vrcp.pop %v2028
  %v2140 = vmul.f32 %v2028, %v2139
  %v2141 = vsub.f32 1.0, %v2140
  %v2142 = vmul.f32 %v2139, %v2141
  %v2143 = vadd.f32 %v2139, %v2142
  %vm2144 = vweird.f32 %v2028
  %vm2145 = vweird.f32 %v2139
  %vm2146 = vmor %vm2144, %vm2145
  %v2147 = vsel %vm2146, %v2139, %v2143
  %v2148 = vand.u32 2147483647, %v2028
  %vm2149 = vcmp.eq.f32.partialorder %v2148, 8.507059e+37
  %v2150 = vand.u32 %v2028, 2147483648
  %v2151 = vor.u32 1.1754944e-38, %v2150
  %v2152 = vsel %vm2149, %v2151, %v2147
  %v2153 = vmul.f32 1.0, %v2152
  %v2154 = vrcp.pop %v2029
  %v2155 = vmul.f32 %v2029, %v2154
  %v2156 = vsub.f32 1.0, %v2155
  %v2157 = vmul.f32 %v2154, %v2156
  %v2158 = vadd.f32 %v2154, %v2157
  %vm2159 = vweird.f32 %v2029
  %vm2160 = vweird.f32 %v2154
  %vm2161 = vmor %vm2159, %vm2160
  %v2162 = vsel %vm2161, %v2154, %v2158
  %v2163 = vand.u32 2147483647, %v2029
  %vm2164 = vcmp.eq.f32.partialorder %v2163, 8.507059e+37
  %v2165 = vand.u32 %v2029, 2147483648
  %v2166 = vor.u32 1.1754944e-38, %v2165
  %v2167 = vsel %vm2164, %v2166, %v2162
  %v2168 = vmul.f32 1.0, %v2167
  %v2169 = vrcp.pop %v2030
  %v2170 = vmul.f32 %v2030, %v2169
  %v2171 = vsub.f32 1.0, %v2170
  %v2172 = vmul.f32 %v2169, %v2171
  %v2173 = vadd.f32 %v2169, %v2172
  %vm2174 = vweird.f32 %v2030
  %vm2175 = vweird.f32 %v2169
  %vm2176 = vmor %vm2174, %vm2175
  %v2177 = vsel %vm2176, %v2169, %v2173
  %v2178 = vand.u32 2147483647, %v2030
  %vm2179 = vcmp.eq.f32.partialorder %v2178, 8.507059e+37
  %v2180 = vand.u32 %v2030, 2147483648
  %v2181 = vor.u32 1.1754944e-38, %v2180
  %v2182 = vsel %vm2179, %v2181, %v2177
  %v2183 = vmul.f32 1.0, %v2182
  %v2184 = vrcp.pop %v2031
  %v2185 = vmul.f32 %v2031, %v2184
  %v2186 = vsub.f32 1.0, %v2185
  %v2187 = vmul.f32 %v2184, %v2186
  %v2188 = vadd.f32 %v2184, %v2187
  %vm2189 = vweird.f32 %v2031
  %vm2190 = vweird.f32 %v2184
  %vm2191 = vmor %vm2189, %vm2190
  %v2192 = vsel %vm2191, %v2184, %v2188
  %v2193 = vand.u32 2147483647, %v2031
  %vm2194 = vcmp.eq.f32.partialorder %v2193, 8.507059e+37
  %v2195 = vand.u32 %v2031, 2147483648
  %v2196 = vor.u32 1.1754944e-38, %v2195
  %v2197 = vsel %vm2194, %v2196, %v2192
  %v2198 = vmul.f32 1.0, %v2197
  %v2199 = vrcp.pop %v2032
  %v2200 = vmul.f32 %v2032, %v2199
  %v2201 = vsub.f32 1.0, %v2200
  %v2202 = vmul.f32 %v2199, %v2201
  %v2203 = vadd.f32 %v2199, %v2202
  %vm2204 = vweird.f32 %v2032
  %vm2205 = vweird.f32 %v2199
  %vm2206 = vmor %vm2204, %vm2205
  %v2207 = vsel %vm2206, %v2199, %v2203
  %v2208 = vand.u32 2147483647, %v2032
  %vm2209 = vcmp.eq.f32.partialorder %v2208, 8.507059e+37
  %v2210 = vand.u32 %v2032, 2147483648
  %v2211 = vor.u32 1.1754944e-38, %v2210
  %v2212 = vsel %vm2209, %v2211, %v2207
  %v2213 = vmul.f32 1.0, %v2212
  %v2214 = vrcp.pop %v2033
  %v2215 = vmul.f32 %v2033, %v2214
  %v2216 = vsub.f32 1.0, %v2215
  %v2217 = vmul.f32 %v2214, %v2216
  %v2218 = vadd.f32 %v2214, %v2217
  %vm2219 = vweird.f32 %v2033
  %vm2220 = vweird.f32 %v2214
  %vm2221 = vmor %vm2219, %vm2220
  %v2222 = vsel %vm2221, %v2214, %v2218
  %v2223 = vand.u32 2147483647, %v2033
  %vm2224 = vcmp.eq.f32.partialorder %v2223, 8.507059e+37
  %v2225 = vand.u32 %v2033, 2147483648
  %v2226 = vor.u32 1.1754944e-38, %v2225
  %v2227 = vsel %vm2224, %v2226, %v2222
  %v2228 = vmul.f32 1.0, %v2227
  %v2242 = vrot.slane %v2063, 7
  %v2243 = vrot.slane %v2078, 6
  %v2244 = vrot.slane %v2093, 5
  %v2245 = vrot.slane %v2108, 4
  %v2246 = vrot.slane %v2123, 3
  %v2247 = vrot.slane %v2138, 2
  %v2248 = vrot.slane %v2153, 1
  %v2249 = vrot.slane %v2183, 7
  %v2250 = vrot.slane %v2198, 6
  %v2251 = vrot.slane %v2213, 5
  %v2252 = vrot.slane %v2228, 4
  %vm2253 = vcmask 1040384
  %v2254 = vsel %vm2253, %v2048, %v2242
  %vm2255 = vcmask 1042434
  %v2256 = vsel %vm2255, %v2243, %v2244
  %vm2257 = vcmask 1041408
  %v2258 = vsel %vm2257, %v2254, %v2256
  %vm2259 = vcmask 1044484
  %v2260 = vsel %vm2259, %v2245, %v2246
  %vm2261 = vcmask 1046534
  %v2262 = vsel %vm2261, %v2247, %v2248
  %vm2263 = vcmask 1045508
  %v2264 = vsel %vm2263, %v2260, %v2262
  %vm2265 = vcmask 1043456
  %v2266 = vsel %vm2265, %v2258, %v2264
  %v2267 = vsel %vm2253, %v2168, %v2249
  %v2268 = vsel %vm2257, %v2267, %v2250
  %vm2269 = vcmask 1043459
  %v2270 = vsel %vm2269, %v2251, %v2252
  %vm2271 = vcmask 1042432
  %v2272 = vsel %vm2271, %v2268, %v2270
  %2275 = vst [vmem:[%s3] sm:$0xff] %v2266
  %v2276 = vlaneseq
  %vm2277 = vcmp.ge.s32.totalorder %v2276, 0
  %vm2278 = vcmp.lt.s32.totalorder %v2276, 544
  %vm2279 = vmand %vm2277, %vm2278
  %2280 = vst.msk [vmem:[%s3 + $0x8] sm:$0x1f] %vm2279, %v2272
  // Predicated region
  $region14: #{deconvvae_forward.9} parent=0 // pred_check
    _
  $region15: #{deconvvae_forward.9} parent=0 // pred_check_branch
    %2282 = sbr.rel (0) target = $region17
  $region16: #{deconvvae_forward.9} parent=0 // pred_region
    _
  $region17: #{deconvvae_forward.9} parent=0 // pred_fallthru
    _
  // Predicated region
  $region18: #{deconvvae_forward.9} parent=0 // pred_check
    _
  $region19: #{deconvvae_forward.9} parent=0 // pred_check_branch
    %2284 = sbr.rel (0) target = $region21
  $region20: #{deconvvae_forward.9} parent=0 // pred_region
    _
  $region21: #{deconvvae_forward.9} parent=0 // pred_fallthru
    _

</llo_original>
